<compile_context>
chip_gen: v7x
topology: tpu7x:2x2x1
jax: 0.10.0
libtpu: 0.0.40
codegen_flags: <defaults>
</compile_context>

<pallas_src>
import functools

import jax
import jax.numpy as jnp
import numpy as np
from jax import lax
from jax.experimental import pallas as pl
from jax.experimental.pallas import tpu as pltpu

CP = 8              # channel slots per tile (sublanes); channels padded to this
LANES = 128         # lane pitch: one padded image row per (CP, LANES) tile
HMAX = 68           # scratch rows (>= largest padded image height, 67)
NUM_CONV_LAYERS = 6


# ---------------------------------------------------------------------------
# Fused Pallas kernel: the whole TinyVGG forward for one image per grid step.
# ---------------------------------------------------------------------------
def _tiny_vgg_kernel(x_ref, wconv_ref, bconv_ref, wcls_ref, dmask_ref,
                     kmat_ref, bcls_ref, out_ref, buf_a, buf_b, *, img_hw):
    f32 = jnp.float32
    row_i = lax.broadcasted_iota(jnp.int32, (LANES, LANES), 0)
    col_i = lax.broadcasted_iota(jnp.int32, (LANES, LANES), 1)
    # (x @ shift_l)[:, j] == x[:, j + 1]   (0 in the last lane)
    shift_l = jnp.where(row_i == col_i + 1, 1.0, 0.0)
    zero_row = jnp.zeros((CP, LANES), f32)

    def conv_layer(src, dst, layer, hp, wp, fuse_pool):
        """Conv2d(k=2, s=1, p=1) + ReLU (+ fused MaxPool2d(2)) on one image.

        `src` holds the padded input: src[r][c, l] = x_pad[r, l, c], zero in
        the halo (r=0, r=hp-1, l=0, l>=wp-1) and in unused channels/lanes.
        Writes the padded output (same convention) into `dst`.
        """
        ho, wo = hp - 1, wp - 1                       # conv output size
        w00 = wconv_ref[layer, 0]                     # (CP, CP) tap (dh, dw)
        w01 = wconv_ref[layer, 1]
        w10 = wconv_ref[layer, 2]
        w11 = wconv_ref[layer, 3]
        bias = bconv_ref[layer]                       # (CP, LANES)

        def conv_row(r0, r1):
            a0 = (jnp.dot(w00, r0, preferred_element_type=f32) +
                  jnp.dot(w10, r1, preferred_element_type=f32))
            a1 = (jnp.dot(w01, r0, preferred_element_type=f32) +
                  jnp.dot(w11, r1, preferred_element_type=f32))
            acc = a0 + jnp.dot(a1, shift_l, preferred_element_type=f32) + bias
            return jnp.maximum(acc, 0.0)

        if fuse_pool:
            out_h, out_w = ho // 2, wo // 2
            # stride-2 column select + shift into padded position + halo zero
            place = jnp.where((row_i == 2 * (col_i - 1)) & (col_i >= 1)
                              & (col_i <= out_w), 1.0, 0.0)
        else:
            out_h, out_w = ho, wo
            # shift into padded position (col j -> j + 1) + halo zero
            place = jnp.where((col_i == row_i + 1) & (col_i >= 1)
                              & (col_i <= out_w), 1.0, 0.0)

        # Top / bottom halo rows; interior rows are fully overwritten below
        # and rows past out_h + 1 are never read by the next layer.
        dst[0] = zero_row
        dst[out_h + 1] = zero_row

        if fuse_pool:
            def body(i, carry):
                r0 = src[2 * i]
                r1 = src[2 * i + 1]
                r2 = src[2 * i + 2]
                v = jnp.maximum(conv_row(r0, r1), conv_row(r1, r2))
                hmax = jnp.maximum(
                    v, jnp.dot(v, shift_l, preferred_element_type=f32))
                dst[i + 1] = jnp.dot(hmax, place, preferred_element_type=f32)
                return carry
        else:
            def body(i, carry):
                c = conv_row(src[i], src[i + 1])
                dst[i + 1] = jnp.dot(c, place, preferred_element_type=f32)
                return carry

        lax.fori_loop(0, out_h, body, 0)
        return out_h + 2, out_w + 2                   # padded output geometry

    # ---- conv trunk: 3 x (conv -> relu -> conv -> relu -> maxpool) --------
    hp = wp = img_hw + 2
    src = x_ref
    bufs = (buf_a, buf_b)
    t = 0
    for blk in range(NUM_CONV_LAYERS // 2):
        dst = bufs[t]; t ^= 1
        hp, wp = conv_layer(src, dst, 2 * blk, hp, wp, fuse_pool=False)
        src = dst
        dst = bufs[t]; t ^= 1
        hp, wp = conv_layer(src, dst, 2 * blk + 1, hp, wp, fuse_pool=True)
        src = dst

    # ---- classifier: Flatten in NCHW (c, h, w) order + Linear -------------
    final_hw = wcls_ref.shape[0]
    assert hp - 2 == final_hw and wp - 2 == final_hw
    num_out = kmat_ref.shape[1]
    t_acc = jnp.zeros((CP, CP * num_out), f32)
    for h in range(final_hw):
        t_acc = t_acc + jnp.dot(src[1 + h], wcls_ref[h],
                                preferred_element_type=f32)
    # Keep only channel-diagonal blocks, then collapse channels -> logits.
    masked = t_acc * dmask_ref[...]
    per_chan = jnp.dot(masked, kmat_ref[...], preferred_element_type=f32)
    logits = jnp.sum(per_chan, axis=0, keepdims=True)         # (1, num_out)
    out_ref[...] = logits + bcls_ref[...]


# ---------------------------------------------------------------------------
# Wrapper: one pallas_call over the batch.
# ---------------------------------------------------------------------------
def tiny_vgg_forward(x_nchw, packed):
    n, c, h, w = x_nchw.shape
    assert h == w, "square inputs expected by the classifier geometry"
    assert c <= CP and h + 3 <= HMAX
    num_out = packed["bcls"].shape[1]

    # The only JAX-side layout glue: place the NCHW image into the padded
    # (row, channel, lane) layout the kernel keeps in VMEM.
    xprep = jnp.zeros((n, HMAX, CP, LANES), jnp.float32)
    xprep = xprep.at[:, 1:h + 1, :c, 1:w + 1].set(
        jnp.transpose(x_nchw, (0, 2, 1, 3)).astype(jnp.float32))

    grid_spec = pltpu.PrefetchScalarGridSpec(
        num_scalar_prefetch=0,
        grid=(n,),
        in_specs=[
            pl.BlockSpec((None, HMAX, CP, LANES), lambda i: (i, 0, 0, 0)),
            pl.BlockSpec((NUM_CONV_LAYERS, 4, CP, CP), lambda i: (0, 0, 0, 0)),
            pl.BlockSpec((NUM_CONV_LAYERS, CP, LANES), lambda i: (0, 0, 0)),
            pl.BlockSpec(packed["wcls"].shape, lambda i: (0, 0, 0)),
            pl.BlockSpec(packed["dmask"].shape, lambda i: (0, 0)),
            pl.BlockSpec(packed["kmat"].shape, lambda i: (0, 0)),
            pl.BlockSpec(packed["bcls"].shape, lambda i: (0, 0)),
        ],
        out_specs=pl.BlockSpec((None, 1, num_out), lambda i: (i, 0, 0)),
        scratch_shapes=[pltpu.VMEM((HMAX, CP, LANES), jnp.float32),
                        pltpu.VMEM((HMAX, CP, LANES), jnp.float32)],
    )
    out = pl.pallas_call(
        functools.partial(_tiny_vgg_kernel, img_hw=h),
        out_shape=jax.ShapeDtypeStruct((n, 1, num_out), jnp.float32),
        grid_spec=grid_spec,
        compiler_params=pltpu.CompilerParams(
            dimension_semantics=("parallel",)),
    )(xprep, packed["wconv"], packed["bconv"], packed["wcls"],
      packed["dmask"], packed["kmat"], packed["bcls"])
    return out.reshape(n, num_out)


# ---------------------------------------------------------------------------
# Parameters (PyTorch layout) + one-time packing into kernel layouts.
# ---------------------------------------------------------------------------
def init_params(key, input_features, hidden_features, output_features):
    keys = jax.random.split(key, 8)

    def conv_init(k, cin, cout):
        fan_in = cin * 2 * 2
        bound = 1.0 / (fan_in ** 0.5)
        kw, kb = jax.random.split(k)
        wgt = jax.random.uniform(kw, (cout, cin, 2, 2), jnp.float32,
                                 -bound, bound)
        b = jax.random.uniform(kb, (cout,), jnp.float32, -bound, bound)
        return wgt, b

    chans = [input_features] + [hidden_features] * NUM_CONV_LAYERS
    convs = [conv_init(keys[i], chans[i], chans[i + 1])
             for i in range(NUM_CONV_LAYERS)]

    fan_in = hidden_features * 9 * 9
    bound = 1.0 / (fan_in ** 0.5)
    lw = jax.random.uniform(keys[6], (output_features, fan_in), jnp.float32,
                            -bound, bound)
    lb = jax.random.uniform(keys[7], (output_features,), jnp.float32,
                            -bound, bound)
    return convs, (lw, lb)


def pack_params(convs, linear):
    """One-time re-arrangement of PyTorch-layout params into kernel layouts."""
    wk = np.zeros((NUM_CONV_LAYERS, 4, CP, CP), np.float32)
    bk = np.zeros((NUM_CONV_LAYERS, CP), np.float32)
    for li, (w, b) in enumerate(convs):
        w = np.asarray(w, np.float32)                 # (cout, cin, 2, 2)
        b = np.asarray(b, np.float32)
        cout, cin = w.shape[:2]
        assert cout <= CP and cin <= CP
        # tap index t = dh * 2 + dw ; wk[li, t, co, ci] = w[co, ci, dh, dw]
        wk[li, :, :cout, :cin] = np.transpose(w, (2, 3, 0, 1)).reshape(
            4, cout, cin)
        bk[li, :cout] = b
    bconv = np.ascontiguousarray(
        np.broadcast_to(bk[:, :, None], (NUM_CONV_LAYERS, CP, LANES)))

    lw, lb = linear
    lw = np.asarray(lw, np.float32)                   # (out, hidden * 9 * 9)
    lb = np.asarray(lb, np.float32)
    num_out = lw.shape[0]
    hidden = lw.shape[1] // 81
    assert hidden * 81 == lw.shape[1] and hidden <= CP
    lw4 = lw.reshape(num_out, hidden, 9, 9)           # [o, c, h, w]
    # wcls[h, 1 + w, c*num_out + o] = lw[o, c*81 + h*9 + w]  (NCHW flatten)
    wcls = np.zeros((9, LANES, CP * num_out), np.float32)
    wcls[:, 1:10, :hidden * num_out] = np.transpose(
        lw4, (2, 3, 1, 0)).reshape(9, 9, hidden * num_out)
    c_idx = np.arange(CP)[:, None]
    j_idx = np.arange(CP * num_out)[None, :]
    dmask = ((j_idx >= c_idx * num_out)
             & (j_idx < (c_idx + 1) * num_out)).astype(np.float32)
    kmat = (np.arange(CP * num_out)[:, None] % num_out
            == np.arange(num_out)[None, :]).astype(np.float32)
    bcls = lb.reshape(1, num_out)
    return dict(wconv=jnp.asarray(wk), bconv=jnp.asarray(bconv),
                wcls=jnp.asarray(wcls), dmask=jnp.asarray(dmask),
                kmat=jnp.asarray(kmat), bcls=jnp.asarray(bcls))


# ---------------------------------------------------------------------------
# Pure-JAX reference (mirrors the PyTorch module) for a correctness check.
# ---------------------------------------------------------------------------
def reference_forward(x, convs, linear):
    dn = lax.conv_dimension_numbers(x.shape, convs[0][0].shape,
                                    ('NCHW', 'OIHW', 'NCHW'))

    def conv_relu(y, w, b):
        y = lax.conv_general_dilated(y, w, (1, 1), ((1, 1), (1, 1)),
                                     dimension_numbers=dn,
                                     precision=lax.Precision.HIGHEST)
        return jnp.maximum(y + b[None, :, None, None], 0.0)

    def maxpool2(y):
        return lax.reduce_window(y, -jnp.inf, lax.max, (1, 1, 2, 2),
                                 (1, 1, 2, 2), 'VALID')

    y = x
    for blk in range(NUM_CONV_LAYERS // 2):
        y = conv_relu(y, *convs[2 * blk])
        y = conv_relu(y, *convs[2 * blk + 1])
        y = maxpool2(y)
    lw, lb = linear
    flat = y.reshape(y.shape[0], -1)
    return jnp.dot(flat, lw.T, precision=lax.Precision.HIGHEST) + lb


if __name__ == "__main__":
    input_features, hidden_features, output_features = 3, 8, 3
    img = 64   # classifier expects hidden*9*9 features -> 64x64 input

    key = jax.random.PRNGKey(0)
    k_param, k_x = jax.random.split(key)
    convs, linear = init_params(k_param, input_features, hidden_features,
                                output_features)
    packed = pack_params(convs, linear)   # params pre-permuted once, not per fwd
    x = jax.random.normal(k_x, (2, input_features, img, img), jnp.float32)

    fwd = jax.jit(tiny_vgg_forward)
    out = jax.block_until_ready(fwd(x, packed))
    assert out.shape == (2, output_features), out.shape
    assert out.dtype == jnp.float32

    ref = jax.block_until_ready(reference_forward(x, convs, linear))
    np.testing.assert_allclose(np.asarray(out), np.asarray(ref),
                               rtol=2e-2, atol=2e-2)
    print("KERNEL_OK")
</pallas_src>

<mosaic_0001>
module attributes {stable_mosaic.version = 11 : i64} {
  func.func @_tiny_vgg_kernel(%arg0: i32, %arg1: memref<1x68x8x128xf32, #tpu.memory_space<vmem>>, %arg2: memref<6x4x8x8xf32, #tpu.memory_space<vmem>>, %arg3: memref<6x8x128xf32, #tpu.memory_space<vmem>>, %arg4: memref<9x128x24xf32, #tpu.memory_space<vmem>>, %arg5: memref<8x24xf32, #tpu.memory_space<vmem>>, %arg6: memref<24x3xf32, #tpu.memory_space<vmem>>, %arg7: memref<1x3xf32, #tpu.memory_space<vmem>>, %arg8: memref<1x1x3xf32, #tpu.memory_space<vmem>>, %arg9: memref<68x8x128xf32, #tpu.memory_space<vmem>>, %arg10: memref<68x8x128xf32, #tpu.memory_space<vmem>>) attributes {dimension_semantics = [#tpu.dimension_semantics<parallel>], iteration_bounds = array<i64: 2>, scalar_prefetch = 0 : i64, scratch_operands = 2 : i64, tpu.core_type = #tpu.core_type<tc>, window_params = [{transform_indices = @transform_0, window_bounds = array<i64: 1, 68, 8, 128>}, {pipeline_mode = #tpu.pipeline_mode<synchronous>, transform_indices = @transform_1, window_bounds = array<i64: 6, 4, 8, 8>}, {pipeline_mode = #tpu.pipeline_mode<synchronous>, transform_indices = @transform_2, window_bounds = array<i64: 6, 8, 128>}, {pipeline_mode = #tpu.pipeline_mode<synchronous>, transform_indices = @transform_3, window_bounds = array<i64: 9, 128, 24>}, {pipeline_mode = #tpu.pipeline_mode<synchronous>, transform_indices = @transform_4, window_bounds = array<i64: 8, 24>}, {pipeline_mode = #tpu.pipeline_mode<synchronous>, transform_indices = @transform_5, window_bounds = array<i64: 24, 3>}, {pipeline_mode = #tpu.pipeline_mode<synchronous>, transform_indices = @transform_6, window_bounds = array<i64: 1, 3>}, {transform_indices = @transform_7, window_bounds = array<i64: 1, 1, 3>}]} {
    %0 = tpu.iota {dimensions = array<i32: 0>} : vector<128x128xi32>
    %1 = tpu.iota {dimensions = array<i32: 1>} : vector<128x128xi32>
    %c1_i32 = arith.constant 1 : i32
    %2 = vector.broadcast %c1_i32 : i32 to vector<128x128xi32>
    %3 = arith.addi %1, %2 : vector<128x128xi32>
    %4 = arith.cmpi eq, %0, %3 : vector<128x128xi32>
    %cst = arith.constant 1.000000e+00 : f32
    %cst_0 = arith.constant 0.000000e+00 : f32
    %5 = vector.broadcast %cst : f32 to vector<128x128xf32>
    %6 = vector.broadcast %cst_0 : f32 to vector<128x128xf32>
    %7 = arith.select %4, %5, %6 : vector<128x128xi1>, vector<128x128xf32>
    %cst_1 = arith.constant 0.000000e+00 : f32
    %8 = vector.broadcast %cst_1 : f32 to vector<8x128xf32>
    %c0 = arith.constant 0 : index
    %c0_2 = arith.constant 0 : index
    %c0_3 = arith.constant 0 : index
    %c0_4 = arith.constant 0 : index
    %9 = vector.load %arg2[%c0, %c0_2, %c0_3, %c0_4] : memref<6x4x8x8xf32, #tpu.memory_space<vmem>>, vector<1x1x8x8xf32>
    %10 = vector.shape_cast %9 : vector<1x1x8x8xf32> to vector<8x8xf32>
    %c0_5 = arith.constant 0 : index
    %c1 = arith.constant 1 : index
    %c0_6 = arith.constant 0 : index
    %c0_7 = arith.constant 0 : index
    %11 = vector.load %arg2[%c0_5, %c1, %c0_6, %c0_7] : memref<6x4x8x8xf32, #tpu.memory_space<vmem>>, vector<1x1x8x8xf32>
    %12 = vector.shape_cast %11 : vector<1x1x8x8xf32> to vector<8x8xf32>
    %c0_8 = arith.constant 0 : index
    %c2 = arith.constant 2 : index
    %c0_9 = arith.constant 0 : index
    %c0_10 = arith.constant 0 : index
    %13 = vector.load %arg2[%c0_8, %c2, %c0_9, %c0_10] : memref<6x4x8x8xf32, #tpu.memory_space<vmem>>, vector<1x1x8x8xf32>
    %14 = vector.shape_cast %13 : vector<1x1x8x8xf32> to vector<8x8xf32>
    %c0_11 = arith.constant 0 : index
    %c3 = arith.constant 3 : index
    %c0_12 = arith.constant 0 : index
    %c0_13 = arith.constant 0 : index
    %15 = vector.load %arg2[%c0_11, %c3, %c0_12, %c0_13] : memref<6x4x8x8xf32, #tpu.memory_space<vmem>>, vector<1x1x8x8xf32>
    %16 = vector.shape_cast %15 : vector<1x1x8x8xf32> to vector<8x8xf32>
    %c0_14 = arith.constant 0 : index
    %c0_15 = arith.constant 0 : index
    %c0_16 = arith.constant 0 : index
    %17 = vector.load %arg3[%c0_14, %c0_15, %c0_16] : memref<6x8x128xf32, #tpu.memory_space<vmem>>, vector<1x8x128xf32>
    %18 = vector.shape_cast %17 : vector<1x8x128xf32> to vector<8x128xf32>
    %c1_i32_17 = arith.constant 1 : i32
    %19 = vector.broadcast %c1_i32_17 : i32 to vector<128x128xi32>
    %20 = arith.addi %0, %19 : vector<128x128xi32>
    %21 = arith.cmpi eq, %1, %20 : vector<128x128xi32>
    %c1_i32_18 = arith.constant 1 : i32
    %22 = vector.broadcast %c1_i32_18 : i32 to vector<128x128xi32>
    %23 = arith.cmpi sge, %1, %22 : vector<128x128xi32>
    %24 = arith.andi %21, %23 : vector<128x128xi1>
    %c65_i32 = arith.constant 65 : i32
    %25 = vector.broadcast %c65_i32 : i32 to vector<128x128xi32>
    %26 = arith.cmpi sle, %1, %25 : vector<128x128xi32>
    %27 = arith.andi %24, %26 : vector<128x128xi1>
    %cst_19 = arith.constant 1.000000e+00 : f32
    %cst_20 = arith.constant 0.000000e+00 : f32
    %28 = vector.broadcast %cst_19 : f32 to vector<128x128xf32>
    %29 = vector.broadcast %cst_20 : f32 to vector<128x128xf32>
    %30 = arith.select %27, %28, %29 : vector<128x128xi1>, vector<128x128xf32>
    %c0_21 = arith.constant 0 : index
    %c0_22 = arith.constant 0 : index
    %c0_23 = arith.constant 0 : index
    %31 = vector.load %arg9[%c0_21, %c0_22, %c0_23] : memref<68x8x128xf32, #tpu.memory_space<vmem>>, vector<1x8x128xf32>
    %32 = vector.shape_cast %31 : vector<1x8x128xf32> to vector<8x128xf32>
    %33 = vector.shape_cast %8 : vector<8x128xf32> to vector<1x8x128xf32>
    tpu.vector_store %arg9[%c0_21, %c0_22, %c0_23], %33 {strides = array<i32>} : memref<68x8x128xf32, #tpu.memory_space<vmem>>, vector<1x8x128xf32>,
    %c66 = arith.constant 66 : index
    %c0_24 = arith.constant 0 : index
    %c0_25 = arith.constant 0 : index
    %34 = vector.load %arg9[%c66, %c0_24, %c0_25] : memref<68x8x128xf32, #tpu.memory_space<vmem>>, vector<1x8x128xf32>
    %35 = vector.shape_cast %34 : vector<1x8x128xf32> to vector<8x128xf32>
    %36 = vector.shape_cast %8 : vector<8x128xf32> to vector<1x8x128xf32>
    tpu.vector_store %arg9[%c66, %c0_24, %c0_25], %36 {strides = array<i32>} : memref<68x8x128xf32, #tpu.memory_space<vmem>>, vector<1x8x128xf32>,
    %c0_i32 = arith.constant 0 : i32
    %c65_i32_26 = arith.constant 65 : i32
    %37 = arith.addi %c0_i32, %c65_i32_26 : i32
    %c1_i32_27 = arith.constant 1 : i32
    scf.for %arg11 = %c0_i32 to %37 step %c1_i32_27  : i32 {
      %c0_260 = arith.constant 0 : index
      %255 = arith.index_cast %arg11 : i32 to index
      %c0_261 = arith.constant 0 : index
      %c0_262 = arith.constant 0 : index
      %256 = vector.load %arg1[%c0_260, %255, %c0_261, %c0_262] : memref<1x68x8x128xf32, #tpu.memory_space<vmem>>, vector<1x1x8x128xf32>
      %257 = vector.shape_cast %256 : vector<1x1x8x128xf32> to vector<8x128xf32>
      %c1_i32_263 = arith.constant 1 : i32
      %258 = arith.addi %arg11, %c1_i32_263 : i32
      %c0_264 = arith.constant 0 : index
      %259 = arith.index_cast %258 : i32 to index
      %c0_265 = arith.constant 0 : index
      %c0_266 = arith.constant 0 : index
      %260 = vector.load %arg1[%c0_264, %259, %c0_265, %c0_266] : memref<1x68x8x128xf32, #tpu.memory_space<vmem>>, vector<1x1x8x128xf32>
      %261 = vector.shape_cast %260 : vector<1x1x8x128xf32> to vector<8x128xf32>
      %cst_267 = arith.constant dense<0.000000e+00> : vector<8x128xf32>
      %262 = tpu.matmul %10, %257, %cst_267 {dimension_numbers = #tpu.dot_dimension_numbers<[1], [0], [0], [1], [0, 0, 1, 1], [], []>} : vector<8x8xf32>, vector<8x128xf32>, vector<8x128xf32> -> vector<8x128xf32>
      %cst_268 = arith.constant dense<0.000000e+00> : vector<8x128xf32>
      %263 = tpu.matmul %14, %261, %cst_268 {dimension_numbers = #tpu.dot_dimension_numbers<[1], [0], [0], [1], [0, 0, 1, 1], [], []>} : vector<8x8xf32>, vector<8x128xf32>, vector<8x128xf32> -> vector<8x128xf32>
      %264 = arith.addf %262, %263 : vector<8x128xf32>
      %cst_269 = arith.constant dense<0.000000e+00> : vector<8x128xf32>
      %265 = tpu.matmul %12, %257, %cst_269 {dimension_numbers = #tpu.dot_dimension_numbers<[1], [0], [0], [1], [0, 0, 1, 1], [], []>} : vector<8x8xf32>, vector<8x128xf32>, vector<8x128xf32> -> vector<8x128xf32>
      %cst_270 = arith.constant dense<0.000000e+00> : vector<8x128xf32>
      %266 = tpu.matmul %16, %261, %cst_270 {dimension_numbers = #tpu.dot_dimension_numbers<[1], [0], [0], [1], [0, 0, 1, 1], [], []>} : vector<8x8xf32>, vector<8x128xf32>, vector<8x128xf32> -> vector<8x128xf32>
      %267 = arith.addf %265, %266 : vector<8x128xf32>
      %cst_271 = arith.constant dense<0.000000e+00> : vector<8x128xf32>
      %268 = tpu.matmul %267, %7, %cst_271 {dimension_numbers = #tpu.dot_dimension_numbers<[1], [0], [0], [1], [0, 0, 1, 1], [], []>} : vector<8x128xf32>, vector<128x128xf32>, vector<8x128xf32> -> vector<8x128xf32>
      %269 = arith.addf %264, %268 : vector<8x128xf32>
      %270 = arith.addf %269, %18 : vector<8x128xf32>
      %cst_272 = arith.constant 0.000000e+00 : f32
      %271 = vector.broadcast %cst_272 : f32 to vector<8x128xf32>
      %272 = arith.maximumf %270, %271 : vector<8x128xf32>
      %cst_273 = arith.constant dense<0.000000e+00> : vector<8x128xf32>
      %273 = tpu.matmul %272, %30, %cst_273 {dimension_numbers = #tpu.dot_dimension_numbers<[1], [0], [0], [1], [0, 0, 1, 1], [], []>} : vector<8x128xf32>, vector<128x128xf32>, vector<8x128xf32> -> vector<8x128xf32>
      %c1_i32_274 = arith.constant 1 : i32
      %274 = arith.addi %arg11, %c1_i32_274 : i32
      %275 = arith.index_cast %274 : i32 to index
      %c0_275 = arith.constant 0 : index
      %c0_276 = arith.constant 0 : index
      %276 = vector.load %arg9[%275, %c0_275, %c0_276] : memref<68x8x128xf32, #tpu.memory_space<vmem>>, vector<1x8x128xf32>
      %277 = vector.shape_cast %276 : vector<1x8x128xf32> to vector<8x128xf32>
      %278 = vector.shape_cast %273 : vector<8x128xf32> to vector<1x8x128xf32>
      tpu.vector_store %arg9[%275, %c0_275, %c0_276], %278 {strides = array<i32>} : memref<68x8x128xf32, #tpu.memory_space<vmem>>, vector<1x8x128xf32>,
    }
    %c65_i32_28 = arith.constant 65 : i32
    %c1_29 = arith.constant 1 : index
    %c0_30 = arith.constant 0 : index
    %c0_31 = arith.constant 0 : index
    %c0_32 = arith.constant 0 : index
    %38 = vector.load %arg2[%c1_29, %c0_30, %c0_31, %c0_32] : memref<6x4x8x8xf32, #tpu.memory_space<vmem>>, vector<1x1x8x8xf32>
    %39 = vector.shape_cast %38 : vector<1x1x8x8xf32> to vector<8x8xf32>
    %c1_33 = arith.constant 1 : index
    %c1_34 = arith.constant 1 : index
    %c0_35 = arith.constant 0 : index
    %c0_36 = arith.constant 0 : index
    %40 = vector.load %arg2[%c1_33, %c1_34, %c0_35, %c0_36] : memref<6x4x8x8xf32, #tpu.memory_space<vmem>>, vector<1x1x8x8xf32>
    %41 = vector.shape_cast %40 : vector<1x1x8x8xf32> to vector<8x8xf32>
    %c1_37 = arith.constant 1 : index
    %c2_38 = arith.constant 2 : index
    %c0_39 = arith.constant 0 : index
    %c0_40 = arith.constant 0 : index
    %42 = vector.load %arg2[%c1_37, %c2_38, %c0_39, %c0_40] : memref<6x4x8x8xf32, #tpu.memory_space<vmem>>, vector<1x1x8x8xf32>
    %43 = vector.shape_cast %42 : vector<1x1x8x8xf32> to vector<8x8xf32>
    %c1_41 = arith.constant 1 : index
    %c3_42 = arith.constant 3 : index
    %c0_43 = arith.constant 0 : index
    %c0_44 = arith.constant 0 : index
    %44 = vector.load %arg2[%c1_41, %c3_42, %c0_43, %c0_44] : memref<6x4x8x8xf32, #tpu.memory_space<vmem>>, vector<1x1x8x8xf32>
    %45 = vector.shape_cast %44 : vector<1x1x8x8xf32> to vector<8x8xf32>
    %c1_45 = arith.constant 1 : index
    %c0_46 = arith.constant 0 : index
    %c0_47 = arith.constant 0 : index
    %46 = vector.load %arg3[%c1_45, %c0_46, %c0_47] : memref<6x8x128xf32, #tpu.memory_space<vmem>>, vector<1x8x128xf32>
    %47 = vector.shape_cast %46 : vector<1x8x128xf32> to vector<8x128xf32>
    %c1_i32_48 = arith.constant 1 : i32
    %48 = vector.broadcast %c1_i32_48 : i32 to vector<128x128xi32>
    %49 = arith.subi %1, %48 : vector<128x128xi32>
    %c2_i32 = arith.constant 2 : i32
    %50 = vector.broadcast %c2_i32 : i32 to vector<128x128xi32>
    %51 = arith.muli %50, %49 : vector<128x128xi32>
    %52 = arith.cmpi eq, %0, %51 : vector<128x128xi32>
    %c1_i32_49 = arith.constant 1 : i32
    %53 = vector.broadcast %c1_i32_49 : i32 to vector<128x128xi32>
    %54 = arith.cmpi sge, %1, %53 : vector<128x128xi32>
    %55 = arith.andi %52, %54 : vector<128x128xi1>
    %c33_i32 = arith.constant 33 : i32
    %56 = vector.broadcast %c33_i32 : i32 to vector<128x128xi32>
    %57 = arith.cmpi sle, %1, %56 : vector<128x128xi32>
    %58 = arith.andi %55, %57 : vector<128x128xi1>
    %cst_50 = arith.constant 1.000000e+00 : f32
    %cst_51 = arith.constant 0.000000e+00 : f32
    %59 = vector.broadcast %cst_50 : f32 to vector<128x128xf32>
    %60 = vector.broadcast %cst_51 : f32 to vector<128x128xf32>
    %61 = arith.select %58, %59, %60 : vector<128x128xi1>, vector<128x128xf32>
    %c0_52 = arith.constant 0 : index
    %c0_53 = arith.constant 0 : index
    %c0_54 = arith.constant 0 : index
    %62 = vector.load %arg10[%c0_52, %c0_53, %c0_54] : memref<68x8x128xf32, #tpu.memory_space<vmem>>, vector<1x8x128xf32>
    %63 = vector.shape_cast %62 : vector<1x8x128xf32> to vector<8x128xf32>
    %64 = vector.shape_cast %8 : vector<8x128xf32> to vector<1x8x128xf32>
    tpu.vector_store %arg10[%c0_52, %c0_53, %c0_54], %64 {strides = array<i32>} : memref<68x8x128xf32, #tpu.memory_space<vmem>>, vector<1x8x128xf32>,
    %c34 = arith.constant 34 : index
    %c0_55 = arith.constant 0 : index
    %c0_56 = arith.constant 0 : index
    %65 = vector.load %arg10[%c34, %c0_55, %c0_56] : memref<68x8x128xf32, #tpu.memory_space<vmem>>, vector<1x8x128xf32>
    %66 = vector.shape_cast %65 : vector<1x8x128xf32> to vector<8x128xf32>
    %67 = vector.shape_cast %8 : vector<8x128xf32> to vector<1x8x128xf32>
    tpu.vector_store %arg10[%c34, %c0_55, %c0_56], %67 {strides = array<i32>} : memref<68x8x128xf32, #tpu.memory_space<vmem>>, vector<1x8x128xf32>,
    %c0_i32_57 = arith.constant 0 : i32
    %c33_i32_58 = arith.constant 33 : i32
    %68 = arith.addi %c0_i32_57, %c33_i32_58 : i32
    %c1_i32_59 = arith.constant 1 : i32
    scf.for %arg11 = %c0_i32_57 to %68 step %c1_i32_59  : i32 {
      %c2_i32_260 = arith.constant 2 : i32
      %255 = arith.muli %c2_i32_260, %arg11 : i32
      %256 = arith.index_cast %255 : i32 to index
      %c0_261 = arith.constant 0 : index
      %c0_262 = arith.constant 0 : index
      %257 = vector.load %arg9[%256, %c0_261, %c0_262] : memref<68x8x128xf32, #tpu.memory_space<vmem>>, vector<1x8x128xf32>
      %258 = vector.shape_cast %257 : vector<1x8x128xf32> to vector<8x128xf32>
      %c2_i32_263 = arith.constant 2 : i32
      %259 = arith.muli %c2_i32_263, %arg11 : i32
      %c1_i32_264 = arith.constant 1 : i32
      %260 = arith.addi %259, %c1_i32_264 : i32
      %261 = arith.index_cast %260 : i32 to index
      %c0_265 = arith.constant 0 : index
      %c0_266 = arith.constant 0 : index
      %262 = vector.load %arg9[%261, %c0_265, %c0_266] : memref<68x8x128xf32, #tpu.memory_space<vmem>>, vector<1x8x128xf32>
      %263 = vector.shape_cast %262 : vector<1x8x128xf32> to vector<8x128xf32>
      %c2_i32_267 = arith.constant 2 : i32
      %264 = arith.muli %c2_i32_267, %arg11 : i32
      %c2_i32_268 = arith.constant 2 : i32
      %265 = arith.addi %264, %c2_i32_268 : i32
      %266 = arith.index_cast %265 : i32 to index
      %c0_269 = arith.constant 0 : index
      %c0_270 = arith.constant 0 : index
      %267 = vector.load %arg9[%266, %c0_269, %c0_270] : memref<68x8x128xf32, #tpu.memory_space<vmem>>, vector<1x8x128xf32>
      %268 = vector.shape_cast %267 : vector<1x8x128xf32> to vector<8x128xf32>
      %cst_271 = arith.constant dense<0.000000e+00> : vector<8x128xf32>
      %269 = tpu.matmul %39, %258, %cst_271 {dimension_numbers = #tpu.dot_dimension_numbers<[1], [0], [0], [1], [0, 0, 1, 1], [], []>} : vector<8x8xf32>, vector<8x128xf32>, vector<8x128xf32> -> vector<8x128xf32>
      %cst_272 = arith.constant dense<0.000000e+00> : vector<8x128xf32>
      %270 = tpu.matmul %43, %263, %cst_272 {dimension_numbers = #tpu.dot_dimension_numbers<[1], [0], [0], [1], [0, 0, 1, 1], [], []>} : vector<8x8xf32>, vector<8x128xf32>, vector<8x128xf32> -> vector<8x128xf32>
      %271 = arith.addf %269, %270 : vector<8x128xf32>
      %cst_273 = arith.constant dense<0.000000e+00> : vector<8x128xf32>
      %272 = tpu.matmul %41, %258, %cst_273 {dimension_numbers = #tpu.dot_dimension_numbers<[1], [0], [0], [1], [0, 0, 1, 1], [], []>} : vector<8x8xf32>, vector<8x128xf32>, vector<8x128xf32> -> vector<8x128xf32>
      %cst_274 = arith.constant dense<0.000000e+00> : vector<8x128xf32>
      %273 = tpu.matmul %45, %263, %cst_274 {dimension_numbers = #tpu.dot_dimension_numbers<[1], [0], [0], [1], [0, 0, 1, 1], [], []>} : vector<8x8xf32>, vector<8x128xf32>, vector<8x128xf32> -> vector<8x128xf32>
      %274 = arith.addf %272, %273 : vector<8x128xf32>
      %cst_275 = arith.constant dense<0.000000e+00> : vector<8x128xf32>
      %275 = tpu.matmul %274, %7, %cst_275 {dimension_numbers = #tpu.dot_dimension_numbers<[1], [0], [0], [1], [0, 0, 1, 1], [], []>} : vector<8x128xf32>, vector<128x128xf32>, vector<8x128xf32> -> vector<8x128xf32>
      %276 = arith.addf %271, %275 : vector<8x128xf32>
      %277 = arith.addf %276, %47 : vector<8x128xf32>
      %cst_276 = arith.constant 0.000000e+00 : f32
      %278 = vector.broadcast %cst_276 : f32 to vector<8x128xf32>
      %279 = arith.maximumf %277, %278 : vector<8x128xf32>
      %cst_277 = arith.constant dense<0.000000e+00> : vector<8x128xf32>
      %280 = tpu.matmul %39, %263, %cst_277 {dimension_numbers = #tpu.dot_dimension_numbers<[1], [0], [0], [1], [0, 0, 1, 1], [], []>} : vector<8x8xf32>, vector<8x128xf32>, vector<8x128xf32> -> vector<8x128xf32>
      %cst_278 = arith.constant dense<0.000000e+00> : vector<8x128xf32>
      %281 = tpu.matmul %43, %268, %cst_278 {dimension_numbers = #tpu.dot_dimension_numbers<[1], [0], [0], [1], [0, 0, 1, 1], [], []>} : vector<8x8xf32>, vector<8x128xf32>, vector<8x128xf32> -> vector<8x128xf32>
      %282 = arith.addf %280, %281 : vector<8x128xf32>
      %cst_279 = arith.constant dense<0.000000e+00> : vector<8x128xf32>
      %283 = tpu.matmul %41, %263, %cst_279 {dimension_numbers = #tpu.dot_dimension_numbers<[1], [0], [0], [1], [0, 0, 1, 1], [], []>} : vector<8x8xf32>, vector<8x128xf32>, vector<8x128xf32> -> vector<8x128xf32>
      %cst_280 = arith.constant dense<0.000000e+00> : vector<8x128xf32>
      %284 = tpu.matmul %45, %268, %cst_280 {dimension_numbers = #tpu.dot_dimension_numbers<[1], [0], [0], [1], [0, 0, 1, 1], [], []>} : vector<8x8xf32>, vector<8x128xf32>, vector<8x128xf32> -> vector<8x128xf32>
      %285 = arith.addf %283, %284 : vector<8x128xf32>
      %cst_281 = arith.constant dense<0.000000e+00> : vector<8x128xf32>
      %286 = tpu.matmul %285, %7, %cst_281 {dimension_numbers = #tpu.dot_dimension_numbers<[1], [0], [0], [1], [0, 0, 1, 1], [], []>} : vector<8x128xf32>, vector<128x128xf32>, vector<8x128xf32> -> vector<8x128xf32>
      %287 = arith.addf %282, %286 : vector<8x128xf32>
      %288 = arith.addf %287, %47 : vector<8x128xf32>
      %cst_282 = arith.constant 0.000000e+00 : f32
      %289 = vector.broadcast %cst_282 : f32 to vector<8x128xf32>
      %290 = arith.maximumf %288, %289 : vector<8x128xf32>
      %291 = arith.maximumf %279, %290 : vector<8x128xf32>
      %cst_283 = arith.constant dense<0.000000e+00> : vector<8x128xf32>
      %292 = tpu.matmul %291, %7, %cst_283 {dimension_numbers = #tpu.dot_dimension_numbers<[1], [0], [0], [1], [0, 0, 1, 1], [], []>} : vector<8x128xf32>, vector<128x128xf32>, vector<8x128xf32> -> vector<8x128xf32>
      %293 = arith.maximumf %291, %292 : vector<8x128xf32>
      %cst_284 = arith.constant dense<0.000000e+00> : vector<8x128xf32>
      %294 = tpu.matmul %293, %61, %cst_284 {dimension_numbers = #tpu.dot_dimension_numbers<[1], [0], [0], [1], [0, 0, 1, 1], [], []>} : vector<8x128xf32>, vector<128x128xf32>, vector<8x128xf32> -> vector<8x128xf32>
      %c1_i32_285 = arith.constant 1 : i32
      %295 = arith.addi %arg11, %c1_i32_285 : i32
      %296 = arith.index_cast %295 : i32 to index
      %c0_286 = arith.constant 0 : index
      %c0_287 = arith.constant 0 : index
      %297 = vector.load %arg10[%296, %c0_286, %c0_287] : memref<68x8x128xf32, #tpu.memory_space<vmem>>, vector<1x8x128xf32>
      %298 = vector.shape_cast %297 : vector<1x8x128xf32> to vector<8x128xf32>
      %299 = vector.shape_cast %294 : vector<8x128xf32> to vector<1x8x128xf32>
      tpu.vector_store %arg10[%296, %c0_286, %c0_287], %299 {strides = array<i32>} : memref<68x8x128xf32, #tpu.memory_space<vmem>>, vector<1x8x128xf32>,
    }
    %c33_i32_60 = arith.constant 33 : i32
    %c2_61 = arith.constant 2 : index
    %c0_62 = arith.constant 0 : index
    %c0_63 = arith.constant 0 : index
    %c0_64 = arith.constant 0 : index
    %69 = vector.load %arg2[%c2_61, %c0_62, %c0_63, %c0_64] : memref<6x4x8x8xf32, #tpu.memory_space<vmem>>, vector<1x1x8x8xf32>
    %70 = vector.shape_cast %69 : vector<1x1x8x8xf32> to vector<8x8xf32>
    %c2_65 = arith.constant 2 : index
    %c1_66 = arith.constant 1 : index
    %c0_67 = arith.constant 0 : index
    %c0_68 = arith.constant 0 : index
    %71 = vector.load %arg2[%c2_65, %c1_66, %c0_67, %c0_68] : memref<6x4x8x8xf32, #tpu.memory_space<vmem>>, vector<1x1x8x8xf32>
    %72 = vector.shape_cast %71 : vector<1x1x8x8xf32> to vector<8x8xf32>
    %c2_69 = arith.constant 2 : index
    %c2_70 = arith.constant 2 : index
    %c0_71 = arith.constant 0 : index
    %c0_72 = arith.constant 0 : index
    %73 = vector.load %arg2[%c2_69, %c2_70, %c0_71, %c0_72] : memref<6x4x8x8xf32, #tpu.memory_space<vmem>>, vector<1x1x8x8xf32>
    %74 = vector.shape_cast %73 : vector<1x1x8x8xf32> to vector<8x8xf32>
    %c2_73 = arith.constant 2 : index
    %c3_74 = arith.constant 3 : index
    %c0_75 = arith.constant 0 : index
    %c0_76 = arith.constant 0 : index
    %75 = vector.load %arg2[%c2_73, %c3_74, %c0_75, %c0_76] : memref<6x4x8x8xf32, #tpu.memory_space<vmem>>, vector<1x1x8x8xf32>
    %76 = vector.shape_cast %75 : vector<1x1x8x8xf32> to vector<8x8xf32>
    %c2_77 = arith.constant 2 : index
    %c0_78 = arith.constant 0 : index
    %c0_79 = arith.constant 0 : index
    %77 = vector.load %arg3[%c2_77, %c0_78, %c0_79] : memref<6x8x128xf32, #tpu.memory_space<vmem>>, vector<1x8x128xf32>
    %78 = vector.shape_cast %77 : vector<1x8x128xf32> to vector<8x128xf32>
    %c1_i32_80 = arith.constant 1 : i32
    %79 = vector.broadcast %c1_i32_80 : i32 to vector<128x128xi32>
    %80 = arith.addi %0, %79 : vector<128x128xi32>
    %81 = arith.cmpi eq, %1, %80 : vector<128x128xi32>
    %c1_i32_81 = arith.constant 1 : i32
    %82 = vector.broadcast %c1_i32_81 : i32 to vector<128x128xi32>
    %83 = arith.cmpi sge, %1, %82 : vector<128x128xi32>
    %84 = arith.andi %81, %83 : vector<128x128xi1>
    %c34_i32 = arith.constant 34 : i32
    %85 = vector.broadcast %c34_i32 : i32 to vector<128x128xi32>
    %86 = arith.cmpi sle, %1, %85 : vector<128x128xi32>
    %87 = arith.andi %84, %86 : vector<128x128xi1>
    %cst_82 = arith.constant 1.000000e+00 : f32
    %cst_83 = arith.constant 0.000000e+00 : f32
    %88 = vector.broadcast %cst_82 : f32 to vector<128x128xf32>
    %89 = vector.broadcast %cst_83 : f32 to vector<128x128xf32>
    %90 = arith.select %87, %88, %89 : vector<128x128xi1>, vector<128x128xf32>
    %c0_84 = arith.constant 0 : index
    %c0_85 = arith.constant 0 : index
    %c0_86 = arith.constant 0 : index
    %91 = vector.load %arg9[%c0_84, %c0_85, %c0_86] : memref<68x8x128xf32, #tpu.memory_space<vmem>>, vector<1x8x128xf32>
    %92 = vector.shape_cast %91 : vector<1x8x128xf32> to vector<8x128xf32>
    %93 = vector.shape_cast %8 : vector<8x128xf32> to vector<1x8x128xf32>
    tpu.vector_store %arg9[%c0_84, %c0_85, %c0_86], %93 {strides = array<i32>} : memref<68x8x128xf32, #tpu.memory_space<vmem>>, vector<1x8x128xf32>,
    %c35 = arith.constant 35 : index
    %c0_87 = arith.constant 0 : index
    %c0_88 = arith.constant 0 : index
    %94 = vector.load %arg9[%c35, %c0_87, %c0_88] : memref<68x8x128xf32, #tpu.memory_space<vmem>>, vector<1x8x128xf32>
    %95 = vector.shape_cast %94 : vector<1x8x128xf32> to vector<8x128xf32>
    %96 = vector.shape_cast %8 : vector<8x128xf32> to vector<1x8x128xf32>
    tpu.vector_store %arg9[%c35, %c0_87, %c0_88], %96 {strides = array<i32>} : memref<68x8x128xf32, #tpu.memory_space<vmem>>, vector<1x8x128xf32>,
    %c0_i32_89 = arith.constant 0 : i32
    %c34_i32_90 = arith.constant 34 : i32
    %97 = arith.addi %c0_i32_89, %c34_i32_90 : i32
    %c1_i32_91 = arith.constant 1 : i32
    scf.for %arg11 = %c0_i32_89 to %97 step %c1_i32_91  : i32 {
      %255 = arith.index_cast %arg11 : i32 to index
      %c0_260 = arith.constant 0 : index
      %c0_261 = arith.constant 0 : index
      %256 = vector.load %arg10[%255, %c0_260, %c0_261] : memref<68x8x128xf32, #tpu.memory_space<vmem>>, vector<1x8x128xf32>
      %257 = vector.shape_cast %256 : vector<1x8x128xf32> to vector<8x128xf32>
      %c1_i32_262 = arith.constant 1 : i32
      %258 = arith.addi %arg11, %c1_i32_262 : i32
      %259 = arith.index_cast %258 : i32 to index
      %c0_263 = arith.constant 0 : index
      %c0_264 = arith.constant 0 : index
      %260 = vector.load %arg10[%259, %c0_263, %c0_264] : memref<68x8x128xf32, #tpu.memory_space<vmem>>, vector<1x8x128xf32>
      %261 = vector.shape_cast %260 : vector<1x8x128xf32> to vector<8x128xf32>
      %cst_265 = arith.constant dense<0.000000e+00> : vector<8x128xf32>
      %262 = tpu.matmul %70, %257, %cst_265 {dimension_numbers = #tpu.dot_dimension_numbers<[1], [0], [0], [1], [0, 0, 1, 1], [], []>} : vector<8x8xf32>, vector<8x128xf32>, vector<8x128xf32> -> vector<8x128xf32>
      %cst_266 = arith.constant dense<0.000000e+00> : vector<8x128xf32>
      %263 = tpu.matmul %74, %261, %cst_266 {dimension_numbers = #tpu.dot_dimension_numbers<[1], [0], [0], [1], [0, 0, 1, 1], [], []>} : vector<8x8xf32>, vector<8x128xf32>, vector<8x128xf32> -> vector<8x128xf32>
      %264 = arith.addf %262, %263 : vector<8x128xf32>
      %cst_267 = arith.constant dense<0.000000e+00> : vector<8x128xf32>
      %265 = tpu.matmul %72, %257, %cst_267 {dimension_numbers = #tpu.dot_dimension_numbers<[1], [0], [0], [1], [0, 0, 1, 1], [], []>} : vector<8x8xf32>, vector<8x128xf32>, vector<8x128xf32> -> vector<8x128xf32>
      %cst_268 = arith.constant dense<0.000000e+00> : vector<8x128xf32>
      %266 = tpu.matmul %76, %261, %cst_268 {dimension_numbers = #tpu.dot_dimension_numbers<[1], [0], [0], [1], [0, 0, 1, 1], [], []>} : vector<8x8xf32>, vector<8x128xf32>, vector<8x128xf32> -> vector<8x128xf32>
      %267 = arith.addf %265, %266 : vector<8x128xf32>
      %cst_269 = arith.constant dense<0.000000e+00> : vector<8x128xf32>
      %268 = tpu.matmul %267, %7, %cst_269 {dimension_numbers = #tpu.dot_dimension_numbers<[1], [0], [0], [1], [0, 0, 1, 1], [], []>} : vector<8x128xf32>, vector<128x128xf32>, vector<8x128xf32> -> vector<8x128xf32>
      %269 = arith.addf %264, %268 : vector<8x128xf32>
      %270 = arith.addf %269, %78 : vector<8x128xf32>
      %cst_270 = arith.constant 0.000000e+00 : f32
      %271 = vector.broadcast %cst_270 : f32 to vector<8x128xf32>
      %272 = arith.maximumf %270, %271 : vector<8x128xf32>
      %cst_271 = arith.constant dense<0.000000e+00> : vector<8x128xf32>
      %273 = tpu.matmul %272, %90, %cst_271 {dimension_numbers = #tpu.dot_dimension_numbers<[1], [0], [0], [1], [0, 0, 1, 1], [], []>} : vector<8x128xf32>, vector<128x128xf32>, vector<8x128xf32> -> vector<8x128xf32>
      %c1_i32_272 = arith.constant 1 : i32
      %274 = arith.addi %arg11, %c1_i32_272 : i32
      %275 = arith.index_cast %274 : i32 to index
      %c0_273 = arith.constant 0 : index
      %c0_274 = arith.constant 0 : index
      %276 = vector.load %arg9[%275, %c0_273, %c0_274] : memref<68x8x128xf32, #tpu.memory_space<vmem>>, vector<1x8x128xf32>
      %277 = vector.shape_cast %276 : vector<1x8x128xf32> to vector<8x128xf32>
      %278 = vector.shape_cast %273 : vector<8x128xf32> to vector<1x8x128xf32>
      tpu.vector_store %arg9[%275, %c0_273, %c0_274], %278 {strides = array<i32>} : memref<68x8x128xf32, #tpu.memory_space<vmem>>, vector<1x8x128xf32>,
    }
    %c34_i32_92 = arith.constant 34 : i32
    %c3_93 = arith.constant 3 : index
    %c0_94 = arith.constant 0 : index
    %c0_95 = arith.constant 0 : index
    %c0_96 = arith.constant 0 : index
    %98 = vector.load %arg2[%c3_93, %c0_94, %c0_95, %c0_96] : memref<6x4x8x8xf32, #tpu.memory_space<vmem>>, vector<1x1x8x8xf32>
    %99 = vector.shape_cast %98 : vector<1x1x8x8xf32> to vector<8x8xf32>
    %c3_97 = arith.constant 3 : index
    %c1_98 = arith.constant 1 : index
    %c0_99 = arith.constant 0 : index
    %c0_100 = arith.constant 0 : index
    %100 = vector.load %arg2[%c3_97, %c1_98, %c0_99, %c0_100] : memref<6x4x8x8xf32, #tpu.memory_space<vmem>>, vector<1x1x8x8xf32>
    %101 = vector.shape_cast %100 : vector<1x1x8x8xf32> to vector<8x8xf32>
    %c3_101 = arith.constant 3 : index
    %c2_102 = arith.constant 2 : index
    %c0_103 = arith.constant 0 : index
    %c0_104 = arith.constant 0 : index
    %102 = vector.load %arg2[%c3_101, %c2_102, %c0_103, %c0_104] : memref<6x4x8x8xf32, #tpu.memory_space<vmem>>, vector<1x1x8x8xf32>
    %103 = vector.shape_cast %102 : vector<1x1x8x8xf32> to vector<8x8xf32>
    %c3_105 = arith.constant 3 : index
    %c3_106 = arith.constant 3 : index
    %c0_107 = arith.constant 0 : index
    %c0_108 = arith.constant 0 : index
    %104 = vector.load %arg2[%c3_105, %c3_106, %c0_107, %c0_108] : memref<6x4x8x8xf32, #tpu.memory_space<vmem>>, vector<1x1x8x8xf32>
    %105 = vector.shape_cast %104 : vector<1x1x8x8xf32> to vector<8x8xf32>
    %c3_109 = arith.constant 3 : index
    %c0_110 = arith.constant 0 : index
    %c0_111 = arith.constant 0 : index
    %106 = vector.load %arg3[%c3_109, %c0_110, %c0_111] : memref<6x8x128xf32, #tpu.memory_space<vmem>>, vector<1x8x128xf32>
    %107 = vector.shape_cast %106 : vector<1x8x128xf32> to vector<8x128xf32>
    %c1_i32_112 = arith.constant 1 : i32
    %108 = vector.broadcast %c1_i32_112 : i32 to vector<128x128xi32>
    %109 = arith.subi %1, %108 : vector<128x128xi32>
    %c2_i32_113 = arith.constant 2 : i32
    %110 = vector.broadcast %c2_i32_113 : i32 to vector<128x128xi32>
    %111 = arith.muli %110, %109 : vector<128x128xi32>
    %112 = arith.cmpi eq, %0, %111 : vector<128x128xi32>
    %c1_i32_114 = arith.constant 1 : i32
    %113 = vector.broadcast %c1_i32_114 : i32 to vector<128x128xi32>
    %114 = arith.cmpi sge, %1, %113 : vector<128x128xi32>
    %115 = arith.andi %112, %114 : vector<128x128xi1>
    %c17_i32 = arith.constant 17 : i32
    %116 = vector.broadcast %c17_i32 : i32 to vector<128x128xi32>
    %117 = arith.cmpi sle, %1, %116 : vector<128x128xi32>
    %118 = arith.andi %115, %117 : vector<128x128xi1>
    %cst_115 = arith.constant 1.000000e+00 : f32
    %cst_116 = arith.constant 0.000000e+00 : f32
    %119 = vector.broadcast %cst_115 : f32 to vector<128x128xf32>
    %120 = vector.broadcast %cst_116 : f32 to vector<128x128xf32>
    %121 = arith.select %118, %119, %120 : vector<128x128xi1>, vector<128x128xf32>
    %c0_117 = arith.constant 0 : index
    %c0_118 = arith.constant 0 : index
    %c0_119 = arith.constant 0 : index
    %122 = vector.load %arg10[%c0_117, %c0_118, %c0_119] : memref<68x8x128xf32, #tpu.memory_space<vmem>>, vector<1x8x128xf32>
    %123 = vector.shape_cast %122 : vector<1x8x128xf32> to vector<8x128xf32>
    %124 = vector.shape_cast %8 : vector<8x128xf32> to vector<1x8x128xf32>
    tpu.vector_store %arg10[%c0_117, %c0_118, %c0_119], %124 {strides = array<i32>} : memref<68x8x128xf32, #tpu.memory_space<vmem>>, vector<1x8x128xf32>,
    %c18 = arith.constant 18 : index
    %c0_120 = arith.constant 0 : index
    %c0_121 = arith.constant 0 : index
    %125 = vector.load %arg10[%c18, %c0_120, %c0_121] : memref<68x8x128xf32, #tpu.memory_space<vmem>>, vector<1x8x128xf32>
    %126 = vector.shape_cast %125 : vector<1x8x128xf32> to vector<8x128xf32>
    %127 = vector.shape_cast %8 : vector<8x128xf32> to vector<1x8x128xf32>
    tpu.vector_store %arg10[%c18, %c0_120, %c0_121], %127 {strides = array<i32>} : memref<68x8x128xf32, #tpu.memory_space<vmem>>, vector<1x8x128xf32>,
    %c0_i32_122 = arith.constant 0 : i32
    %c17_i32_123 = arith.constant 17 : i32
    %128 = arith.addi %c0_i32_122, %c17_i32_123 : i32
    %c1_i32_124 = arith.constant 1 : i32
    scf.for %arg11 = %c0_i32_122 to %128 step %c1_i32_124  : i32 {
      %c2_i32_260 = arith.constant 2 : i32
      %255 = arith.muli %c2_i32_260, %arg11 : i32
      %256 = arith.index_cast %255 : i32 to index
      %c0_261 = arith.constant 0 : index
      %c0_262 = arith.constant 0 : index
      %257 = vector.load %arg9[%256, %c0_261, %c0_262] : memref<68x8x128xf32, #tpu.memory_space<vmem>>, vector<1x8x128xf32>
      %258 = vector.shape_cast %257 : vector<1x8x128xf32> to vector<8x128xf32>
      %c2_i32_263 = arith.constant 2 : i32
      %259 = arith.muli %c2_i32_263, %arg11 : i32
      %c1_i32_264 = arith.constant 1 : i32
      %260 = arith.addi %259, %c1_i32_264 : i32
      %261 = arith.index_cast %260 : i32 to index
      %c0_265 = arith.constant 0 : index
      %c0_266 = arith.constant 0 : index
      %262 = vector.load %arg9[%261, %c0_265, %c0_266] : memref<68x8x128xf32, #tpu.memory_space<vmem>>, vector<1x8x128xf32>
      %263 = vector.shape_cast %262 : vector<1x8x128xf32> to vector<8x128xf32>
      %c2_i32_267 = arith.constant 2 : i32
      %264 = arith.muli %c2_i32_267, %arg11 : i32
      %c2_i32_268 = arith.constant 2 : i32
      %265 = arith.addi %264, %c2_i32_268 : i32
      %266 = arith.index_cast %265 : i32 to index
      %c0_269 = arith.constant 0 : index
      %c0_270 = arith.constant 0 : index
      %267 = vector.load %arg9[%266, %c0_269, %c0_270] : memref<68x8x128xf32, #tpu.memory_space<vmem>>, vector<1x8x128xf32>
      %268 = vector.shape_cast %267 : vector<1x8x128xf32> to vector<8x128xf32>
      %cst_271 = arith.constant dense<0.000000e+00> : vector<8x128xf32>
      %269 = tpu.matmul %99, %258, %cst_271 {dimension_numbers = #tpu.dot_dimension_numbers<[1], [0], [0], [1], [0, 0, 1, 1], [], []>} : vector<8x8xf32>, vector<8x128xf32>, vector<8x128xf32> -> vector<8x128xf32>
      %cst_272 = arith.constant dense<0.000000e+00> : vector<8x128xf32>
      %270 = tpu.matmul %103, %263, %cst_272 {dimension_numbers = #tpu.dot_dimension_numbers<[1], [0], [0], [1], [0, 0, 1, 1], [], []>} : vector<8x8xf32>, vector<8x128xf32>, vector<8x128xf32> -> vector<8x128xf32>
      %271 = arith.addf %269, %270 : vector<8x128xf32>
      %cst_273 = arith.constant dense<0.000000e+00> : vector<8x128xf32>
      %272 = tpu.matmul %101, %258, %cst_273 {dimension_numbers = #tpu.dot_dimension_numbers<[1], [0], [0], [1], [0, 0, 1, 1], [], []>} : vector<8x8xf32>, vector<8x128xf32>, vector<8x128xf32> -> vector<8x128xf32>
      %cst_274 = arith.constant dense<0.000000e+00> : vector<8x128xf32>
      %273 = tpu.matmul %105, %263, %cst_274 {dimension_numbers = #tpu.dot_dimension_numbers<[1], [0], [0], [1], [0, 0, 1, 1], [], []>} : vector<8x8xf32>, vector<8x128xf32>, vector<8x128xf32> -> vector<8x128xf32>
      %274 = arith.addf %272, %273 : vector<8x128xf32>
      %cst_275 = arith.constant dense<0.000000e+00> : vector<8x128xf32>
      %275 = tpu.matmul %274, %7, %cst_275 {dimension_numbers = #tpu.dot_dimension_numbers<[1], [0], [0], [1], [0, 0, 1, 1], [], []>} : vector<8x128xf32>, vector<128x128xf32>, vector<8x128xf32> -> vector<8x128xf32>
      %276 = arith.addf %271, %275 : vector<8x128xf32>
      %277 = arith.addf %276, %107 : vector<8x128xf32>
      %cst_276 = arith.constant 0.000000e+00 : f32
      %278 = vector.broadcast %cst_276 : f32 to vector<8x128xf32>
      %279 = arith.maximumf %277, %278 : vector<8x128xf32>
      %cst_277 = arith.constant dense<0.000000e+00> : vector<8x128xf32>
      %280 = tpu.matmul %99, %263, %cst_277 {dimension_numbers = #tpu.dot_dimension_numbers<[1], [0], [0], [1], [0, 0, 1, 1], [], []>} : vector<8x8xf32>, vector<8x128xf32>, vector<8x128xf32> -> vector<8x128xf32>
      %cst_278 = arith.constant dense<0.000000e+00> : vector<8x128xf32>
      %281 = tpu.matmul %103, %268, %cst_278 {dimension_numbers = #tpu.dot_dimension_numbers<[1], [0], [0], [1], [0, 0, 1, 1], [], []>} : vector<8x8xf32>, vector<8x128xf32>, vector<8x128xf32> -> vector<8x128xf32>
      %282 = arith.addf %280, %281 : vector<8x128xf32>
      %cst_279 = arith.constant dense<0.000000e+00> : vector<8x128xf32>
      %283 = tpu.matmul %101, %263, %cst_279 {dimension_numbers = #tpu.dot_dimension_numbers<[1], [0], [0], [1], [0, 0, 1, 1], [], []>} : vector<8x8xf32>, vector<8x128xf32>, vector<8x128xf32> -> vector<8x128xf32>
      %cst_280 = arith.constant dense<0.000000e+00> : vector<8x128xf32>
      %284 = tpu.matmul %105, %268, %cst_280 {dimension_numbers = #tpu.dot_dimension_numbers<[1], [0], [0], [1], [0, 0, 1, 1], [], []>} : vector<8x8xf32>, vector<8x128xf32>, vector<8x128xf32> -> vector<8x128xf32>
      %285 = arith.addf %283, %284 : vector<8x128xf32>
      %cst_281 = arith.constant dense<0.000000e+00> : vector<8x128xf32>
      %286 = tpu.matmul %285, %7, %cst_281 {dimension_numbers = #tpu.dot_dimension_numbers<[1], [0], [0], [1], [0, 0, 1, 1], [], []>} : vector<8x128xf32>, vector<128x128xf32>, vector<8x128xf32> -> vector<8x128xf32>
      %287 = arith.addf %282, %286 : vector<8x128xf32>
      %288 = arith.addf %287, %107 : vector<8x128xf32>
      %cst_282 = arith.constant 0.000000e+00 : f32
      %289 = vector.broadcast %cst_282 : f32 to vector<8x128xf32>
      %290 = arith.maximumf %288, %289 : vector<8x128xf32>
      %291 = arith.maximumf %279, %290 : vector<8x128xf32>
      %cst_283 = arith.constant dense<0.000000e+00> : vector<8x128xf32>
      %292 = tpu.matmul %291, %7, %cst_283 {dimension_numbers = #tpu.dot_dimension_numbers<[1], [0], [0], [1], [0, 0, 1, 1], [], []>} : vector<8x128xf32>, vector<128x128xf32>, vector<8x128xf32> -> vector<8x128xf32>
      %293 = arith.maximumf %291, %292 : vector<8x128xf32>
      %cst_284 = arith.constant dense<0.000000e+00> : vector<8x128xf32>
      %294 = tpu.matmul %293, %121, %cst_284 {dimension_numbers = #tpu.dot_dimension_numbers<[1], [0], [0], [1], [0, 0, 1, 1], [], []>} : vector<8x128xf32>, vector<128x128xf32>, vector<8x128xf32> -> vector<8x128xf32>
      %c1_i32_285 = arith.constant 1 : i32
      %295 = arith.addi %arg11, %c1_i32_285 : i32
      %296 = arith.index_cast %295 : i32 to index
      %c0_286 = arith.constant 0 : index
      %c0_287 = arith.constant 0 : index
      %297 = vector.load %arg10[%296, %c0_286, %c0_287] : memref<68x8x128xf32, #tpu.memory_space<vmem>>, vector<1x8x128xf32>
      %298 = vector.shape_cast %297 : vector<1x8x128xf32> to vector<8x128xf32>
      %299 = vector.shape_cast %294 : vector<8x128xf32> to vector<1x8x128xf32>
      tpu.vector_store %arg10[%296, %c0_286, %c0_287], %299 {strides = array<i32>} : memref<68x8x128xf32, #tpu.memory_space<vmem>>, vector<1x8x128xf32>,
    }
    %c17_i32_125 = arith.constant 17 : i32
    %c4 = arith.constant 4 : index
    %c0_126 = arith.constant 0 : index
    %c0_127 = arith.constant 0 : index
    %c0_128 = arith.constant 0 : index
    %129 = vector.load %arg2[%c4, %c0_126, %c0_127, %c0_128] : memref<6x4x8x8xf32, #tpu.memory_space<vmem>>, vector<1x1x8x8xf32>
    %130 = vector.shape_cast %129 : vector<1x1x8x8xf32> to vector<8x8xf32>
    %c4_129 = arith.constant 4 : index
    %c1_130 = arith.constant 1 : index
    %c0_131 = arith.constant 0 : index
    %c0_132 = arith.constant 0 : index
    %131 = vector.load %arg2[%c4_129, %c1_130, %c0_131, %c0_132] : memref<6x4x8x8xf32, #tpu.memory_space<vmem>>, vector<1x1x8x8xf32>
    %132 = vector.shape_cast %131 : vector<1x1x8x8xf32> to vector<8x8xf32>
    %c4_133 = arith.constant 4 : index
    %c2_134 = arith.constant 2 : index
    %c0_135 = arith.constant 0 : index
    %c0_136 = arith.constant 0 : index
    %133 = vector.load %arg2[%c4_133, %c2_134, %c0_135, %c0_136] : memref<6x4x8x8xf32, #tpu.memory_space<vmem>>, vector<1x1x8x8xf32>
    %134 = vector.shape_cast %133 : vector<1x1x8x8xf32> to vector<8x8xf32>
    %c4_137 = arith.constant 4 : index
    %c3_138 = arith.constant 3 : index
    %c0_139 = arith.constant 0 : index
    %c0_140 = arith.constant 0 : index
    %135 = vector.load %arg2[%c4_137, %c3_138, %c0_139, %c0_140] : memref<6x4x8x8xf32, #tpu.memory_space<vmem>>, vector<1x1x8x8xf32>
    %136 = vector.shape_cast %135 : vector<1x1x8x8xf32> to vector<8x8xf32>
    %c4_141 = arith.constant 4 : index
    %c0_142 = arith.constant 0 : index
    %c0_143 = arith.constant 0 : index
    %137 = vector.load %arg3[%c4_141, %c0_142, %c0_143] : memref<6x8x128xf32, #tpu.memory_space<vmem>>, vector<1x8x128xf32>
    %138 = vector.shape_cast %137 : vector<1x8x128xf32> to vector<8x128xf32>
    %c1_i32_144 = arith.constant 1 : i32
    %139 = vector.broadcast %c1_i32_144 : i32 to vector<128x128xi32>
    %140 = arith.addi %0, %139 : vector<128x128xi32>
    %141 = arith.cmpi eq, %1, %140 : vector<128x128xi32>
    %c1_i32_145 = arith.constant 1 : i32
    %142 = vector.broadcast %c1_i32_145 : i32 to vector<128x128xi32>
    %143 = arith.cmpi sge, %1, %142 : vector<128x128xi32>
    %144 = arith.andi %141, %143 : vector<128x128xi1>
    %c18_i32 = arith.constant 18 : i32
    %145 = vector.broadcast %c18_i32 : i32 to vector<128x128xi32>
    %146 = arith.cmpi sle, %1, %145 : vector<128x128xi32>
    %147 = arith.andi %144, %146 : vector<128x128xi1>
    %cst_146 = arith.constant 1.000000e+00 : f32
    %cst_147 = arith.constant 0.000000e+00 : f32
    %148 = vector.broadcast %cst_146 : f32 to vector<128x128xf32>
    %149 = vector.broadcast %cst_147 : f32 to vector<128x128xf32>
    %150 = arith.select %147, %148, %149 : vector<128x128xi1>, vector<128x128xf32>
    %c0_148 = arith.constant 0 : index
    %c0_149 = arith.constant 0 : index
    %c0_150 = arith.constant 0 : index
    %151 = vector.load %arg9[%c0_148, %c0_149, %c0_150] : memref<68x8x128xf32, #tpu.memory_space<vmem>>, vector<1x8x128xf32>
    %152 = vector.shape_cast %151 : vector<1x8x128xf32> to vector<8x128xf32>
    %153 = vector.shape_cast %8 : vector<8x128xf32> to vector<1x8x128xf32>
    tpu.vector_store %arg9[%c0_148, %c0_149, %c0_150], %153 {strides = array<i32>} : memref<68x8x128xf32, #tpu.memory_space<vmem>>, vector<1x8x128xf32>,
    %c19 = arith.constant 19 : index
    %c0_151 = arith.constant 0 : index
    %c0_152 = arith.constant 0 : index
    %154 = vector.load %arg9[%c19, %c0_151, %c0_152] : memref<68x8x128xf32, #tpu.memory_space<vmem>>, vector<1x8x128xf32>
    %155 = vector.shape_cast %154 : vector<1x8x128xf32> to vector<8x128xf32>
    %156 = vector.shape_cast %8 : vector<8x128xf32> to vector<1x8x128xf32>
    tpu.vector_store %arg9[%c19, %c0_151, %c0_152], %156 {strides = array<i32>} : memref<68x8x128xf32, #tpu.memory_space<vmem>>, vector<1x8x128xf32>,
    %c0_i32_153 = arith.constant 0 : i32
    %c18_i32_154 = arith.constant 18 : i32
    %157 = arith.addi %c0_i32_153, %c18_i32_154 : i32
    %c1_i32_155 = arith.constant 1 : i32
    scf.for %arg11 = %c0_i32_153 to %157 step %c1_i32_155  : i32 {
      %255 = arith.index_cast %arg11 : i32 to index
      %c0_260 = arith.constant 0 : index
      %c0_261 = arith.constant 0 : index
      %256 = vector.load %arg10[%255, %c0_260, %c0_261] : memref<68x8x128xf32, #tpu.memory_space<vmem>>, vector<1x8x128xf32>
      %257 = vector.shape_cast %256 : vector<1x8x128xf32> to vector<8x128xf32>
      %c1_i32_262 = arith.constant 1 : i32
      %258 = arith.addi %arg11, %c1_i32_262 : i32
      %259 = arith.index_cast %258 : i32 to index
      %c0_263 = arith.constant 0 : index
      %c0_264 = arith.constant 0 : index
      %260 = vector.load %arg10[%259, %c0_263, %c0_264] : memref<68x8x128xf32, #tpu.memory_space<vmem>>, vector<1x8x128xf32>
      %261 = vector.shape_cast %260 : vector<1x8x128xf32> to vector<8x128xf32>
      %cst_265 = arith.constant dense<0.000000e+00> : vector<8x128xf32>
      %262 = tpu.matmul %130, %257, %cst_265 {dimension_numbers = #tpu.dot_dimension_numbers<[1], [0], [0], [1], [0, 0, 1, 1], [], []>} : vector<8x8xf32>, vector<8x128xf32>, vector<8x128xf32> -> vector<8x128xf32>
      %cst_266 = arith.constant dense<0.000000e+00> : vector<8x128xf32>
      %263 = tpu.matmul %134, %261, %cst_266 {dimension_numbers = #tpu.dot_dimension_numbers<[1], [0], [0], [1], [0, 0, 1, 1], [], []>} : vector<8x8xf32>, vector<8x128xf32>, vector<8x128xf32> -> vector<8x128xf32>
      %264 = arith.addf %262, %263 : vector<8x128xf32>
      %cst_267 = arith.constant dense<0.000000e+00> : vector<8x128xf32>
      %265 = tpu.matmul %132, %257, %cst_267 {dimension_numbers = #tpu.dot_dimension_numbers<[1], [0], [0], [1], [0, 0, 1, 1], [], []>} : vector<8x8xf32>, vector<8x128xf32>, vector<8x128xf32> -> vector<8x128xf32>
      %cst_268 = arith.constant dense<0.000000e+00> : vector<8x128xf32>
      %266 = tpu.matmul %136, %261, %cst_268 {dimension_numbers = #tpu.dot_dimension_numbers<[1], [0], [0], [1], [0, 0, 1, 1], [], []>} : vector<8x8xf32>, vector<8x128xf32>, vector<8x128xf32> -> vector<8x128xf32>
      %267 = arith.addf %265, %266 : vector<8x128xf32>
      %cst_269 = arith.constant dense<0.000000e+00> : vector<8x128xf32>
      %268 = tpu.matmul %267, %7, %cst_269 {dimension_numbers = #tpu.dot_dimension_numbers<[1], [0], [0], [1], [0, 0, 1, 1], [], []>} : vector<8x128xf32>, vector<128x128xf32>, vector<8x128xf32> -> vector<8x128xf32>
      %269 = arith.addf %264, %268 : vector<8x128xf32>
      %270 = arith.addf %269, %138 : vector<8x128xf32>
      %cst_270 = arith.constant 0.000000e+00 : f32
      %271 = vector.broadcast %cst_270 : f32 to vector<8x128xf32>
      %272 = arith.maximumf %270, %271 : vector<8x128xf32>
      %cst_271 = arith.constant dense<0.000000e+00> : vector<8x128xf32>
      %273 = tpu.matmul %272, %150, %cst_271 {dimension_numbers = #tpu.dot_dimension_numbers<[1], [0], [0], [1], [0, 0, 1, 1], [], []>} : vector<8x128xf32>, vector<128x128xf32>, vector<8x128xf32> -> vector<8x128xf32>
      %c1_i32_272 = arith.constant 1 : i32
      %274 = arith.addi %arg11, %c1_i32_272 : i32
      %275 = arith.index_cast %274 : i32 to index
      %c0_273 = arith.constant 0 : index
      %c0_274 = arith.constant 0 : index
      %276 = vector.load %arg9[%275, %c0_273, %c0_274] : memref<68x8x128xf32, #tpu.memory_space<vmem>>, vector<1x8x128xf32>
      %277 = vector.shape_cast %276 : vector<1x8x128xf32> to vector<8x128xf32>
      %278 = vector.shape_cast %273 : vector<8x128xf32> to vector<1x8x128xf32>
      tpu.vector_store %arg9[%275, %c0_273, %c0_274], %278 {strides = array<i32>} : memref<68x8x128xf32, #tpu.memory_space<vmem>>, vector<1x8x128xf32>,
    }
    %c18_i32_156 = arith.constant 18 : i32
    %c5 = arith.constant 5 : index
    %c0_157 = arith.constant 0 : index
    %c0_158 = arith.constant 0 : index
    %c0_159 = arith.constant 0 : index
    %158 = vector.load %arg2[%c5, %c0_157, %c0_158, %c0_159] : memref<6x4x8x8xf32, #tpu.memory_space<vmem>>, vector<1x1x8x8xf32>
    %159 = vector.shape_cast %158 : vector<1x1x8x8xf32> to vector<8x8xf32>
    %c5_160 = arith.constant 5 : index
    %c1_161 = arith.constant 1 : index
    %c0_162 = arith.constant 0 : index
    %c0_163 = arith.constant 0 : index
    %160 = vector.load %arg2[%c5_160, %c1_161, %c0_162, %c0_163] : memref<6x4x8x8xf32, #tpu.memory_space<vmem>>, vector<1x1x8x8xf32>
    %161 = vector.shape_cast %160 : vector<1x1x8x8xf32> to vector<8x8xf32>
    %c5_164 = arith.constant 5 : index
    %c2_165 = arith.constant 2 : index
    %c0_166 = arith.constant 0 : index
    %c0_167 = arith.constant 0 : index
    %162 = vector.load %arg2[%c5_164, %c2_165, %c0_166, %c0_167] : memref<6x4x8x8xf32, #tpu.memory_space<vmem>>, vector<1x1x8x8xf32>
    %163 = vector.shape_cast %162 : vector<1x1x8x8xf32> to vector<8x8xf32>
    %c5_168 = arith.constant 5 : index
    %c3_169 = arith.constant 3 : index
    %c0_170 = arith.constant 0 : index
    %c0_171 = arith.constant 0 : index
    %164 = vector.load %arg2[%c5_168, %c3_169, %c0_170, %c0_171] : memref<6x4x8x8xf32, #tpu.memory_space<vmem>>, vector<1x1x8x8xf32>
    %165 = vector.shape_cast %164 : vector<1x1x8x8xf32> to vector<8x8xf32>
    %c5_172 = arith.constant 5 : index
    %c0_173 = arith.constant 0 : index
    %c0_174 = arith.constant 0 : index
    %166 = vector.load %arg3[%c5_172, %c0_173, %c0_174] : memref<6x8x128xf32, #tpu.memory_space<vmem>>, vector<1x8x128xf32>
    %167 = vector.shape_cast %166 : vector<1x8x128xf32> to vector<8x128xf32>
    %c1_i32_175 = arith.constant 1 : i32
    %168 = vector.broadcast %c1_i32_175 : i32 to vector<128x128xi32>
    %169 = arith.subi %1, %168 : vector<128x128xi32>
    %c2_i32_176 = arith.constant 2 : i32
    %170 = vector.broadcast %c2_i32_176 : i32 to vector<128x128xi32>
    %171 = arith.muli %170, %169 : vector<128x128xi32>
    %172 = arith.cmpi eq, %0, %171 : vector<128x128xi32>
    %c1_i32_177 = arith.constant 1 : i32
    %173 = vector.broadcast %c1_i32_177 : i32 to vector<128x128xi32>
    %174 = arith.cmpi sge, %1, %173 : vector<128x128xi32>
    %175 = arith.andi %172, %174 : vector<128x128xi1>
    %c9_i32 = arith.constant 9 : i32
    %176 = vector.broadcast %c9_i32 : i32 to vector<128x128xi32>
    %177 = arith.cmpi sle, %1, %176 : vector<128x128xi32>
    %178 = arith.andi %175, %177 : vector<128x128xi1>
    %cst_178 = arith.constant 1.000000e+00 : f32
    %cst_179 = arith.constant 0.000000e+00 : f32
    %179 = vector.broadcast %cst_178 : f32 to vector<128x128xf32>
    %180 = vector.broadcast %cst_179 : f32 to vector<128x128xf32>
    %181 = arith.select %178, %179, %180 : vector<128x128xi1>, vector<128x128xf32>
    %c0_180 = arith.constant 0 : index
    %c0_181 = arith.constant 0 : index
    %c0_182 = arith.constant 0 : index
    %182 = vector.load %arg10[%c0_180, %c0_181, %c0_182] : memref<68x8x128xf32, #tpu.memory_space<vmem>>, vector<1x8x128xf32>
    %183 = vector.shape_cast %182 : vector<1x8x128xf32> to vector<8x128xf32>
    %184 = vector.shape_cast %8 : vector<8x128xf32> to vector<1x8x128xf32>
    tpu.vector_store %arg10[%c0_180, %c0_181, %c0_182], %184 {strides = array<i32>} : memref<68x8x128xf32, #tpu.memory_space<vmem>>, vector<1x8x128xf32>,
    %c10 = arith.constant 10 : index
    %c0_183 = arith.constant 0 : index
    %c0_184 = arith.constant 0 : index
    %185 = vector.load %arg10[%c10, %c0_183, %c0_184] : memref<68x8x128xf32, #tpu.memory_space<vmem>>, vector<1x8x128xf32>
    %186 = vector.shape_cast %185 : vector<1x8x128xf32> to vector<8x128xf32>
    %187 = vector.shape_cast %8 : vector<8x128xf32> to vector<1x8x128xf32>
    tpu.vector_store %arg10[%c10, %c0_183, %c0_184], %187 {strides = array<i32>} : memref<68x8x128xf32, #tpu.memory_space<vmem>>, vector<1x8x128xf32>,
    %c0_i32_185 = arith.constant 0 : i32
    %c9_i32_186 = arith.constant 9 : i32
    %188 = arith.addi %c0_i32_185, %c9_i32_186 : i32
    %c1_i32_187 = arith.constant 1 : i32
    scf.for %arg11 = %c0_i32_185 to %188 step %c1_i32_187  : i32 {
      %c2_i32_260 = arith.constant 2 : i32
      %255 = arith.muli %c2_i32_260, %arg11 : i32
      %256 = arith.index_cast %255 : i32 to index
      %c0_261 = arith.constant 0 : index
      %c0_262 = arith.constant 0 : index
      %257 = vector.load %arg9[%256, %c0_261, %c0_262] : memref<68x8x128xf32, #tpu.memory_space<vmem>>, vector<1x8x128xf32>
      %258 = vector.shape_cast %257 : vector<1x8x128xf32> to vector<8x128xf32>
      %c2_i32_263 = arith.constant 2 : i32
      %259 = arith.muli %c2_i32_263, %arg11 : i32
      %c1_i32_264 = arith.constant 1 : i32
      %260 = arith.addi %259, %c1_i32_264 : i32
      %261 = arith.index_cast %260 : i32 to index
      %c0_265 = arith.constant 0 : index
      %c0_266 = arith.constant 0 : index
      %262 = vector.load %arg9[%261, %c0_265, %c0_266] : memref<68x8x128xf32, #tpu.memory_space<vmem>>, vector<1x8x128xf32>
      %263 = vector.shape_cast %262 : vector<1x8x128xf32> to vector<8x128xf32>
      %c2_i32_267 = arith.constant 2 : i32
      %264 = arith.muli %c2_i32_267, %arg11 : i32
      %c2_i32_268 = arith.constant 2 : i32
      %265 = arith.addi %264, %c2_i32_268 : i32
      %266 = arith.index_cast %265 : i32 to index
      %c0_269 = arith.constant 0 : index
      %c0_270 = arith.constant 0 : index
      %267 = vector.load %arg9[%266, %c0_269, %c0_270] : memref<68x8x128xf32, #tpu.memory_space<vmem>>, vector<1x8x128xf32>
      %268 = vector.shape_cast %267 : vector<1x8x128xf32> to vector<8x128xf32>
      %cst_271 = arith.constant dense<0.000000e+00> : vector<8x128xf32>
      %269 = tpu.matmul %159, %258, %cst_271 {dimension_numbers = #tpu.dot_dimension_numbers<[1], [0], [0], [1], [0, 0, 1, 1], [], []>} : vector<8x8xf32>, vector<8x128xf32>, vector<8x128xf32> -> vector<8x128xf32>
      %cst_272 = arith.constant dense<0.000000e+00> : vector<8x128xf32>
      %270 = tpu.matmul %163, %263, %cst_272 {dimension_numbers = #tpu.dot_dimension_numbers<[1], [0], [0], [1], [0, 0, 1, 1], [], []>} : vector<8x8xf32>, vector<8x128xf32>, vector<8x128xf32> -> vector<8x128xf32>
      %271 = arith.addf %269, %270 : vector<8x128xf32>
      %cst_273 = arith.constant dense<0.000000e+00> : vector<8x128xf32>
      %272 = tpu.matmul %161, %258, %cst_273 {dimension_numbers = #tpu.dot_dimension_numbers<[1], [0], [0], [1], [0, 0, 1, 1], [], []>} : vector<8x8xf32>, vector<8x128xf32>, vector<8x128xf32> -> vector<8x128xf32>
      %cst_274 = arith.constant dense<0.000000e+00> : vector<8x128xf32>
      %273 = tpu.matmul %165, %263, %cst_274 {dimension_numbers = #tpu.dot_dimension_numbers<[1], [0], [0], [1], [0, 0, 1, 1], [], []>} : vector<8x8xf32>, vector<8x128xf32>, vector<8x128xf32> -> vector<8x128xf32>
      %274 = arith.addf %272, %273 : vector<8x128xf32>
      %cst_275 = arith.constant dense<0.000000e+00> : vector<8x128xf32>
      %275 = tpu.matmul %274, %7, %cst_275 {dimension_numbers = #tpu.dot_dimension_numbers<[1], [0], [0], [1], [0, 0, 1, 1], [], []>} : vector<8x128xf32>, vector<128x128xf32>, vector<8x128xf32> -> vector<8x128xf32>
      %276 = arith.addf %271, %275 : vector<8x128xf32>
      %277 = arith.addf %276, %167 : vector<8x128xf32>
      %cst_276 = arith.constant 0.000000e+00 : f32
      %278 = vector.broadcast %cst_276 : f32 to vector<8x128xf32>
      %279 = arith.maximumf %277, %278 : vector<8x128xf32>
      %cst_277 = arith.constant dense<0.000000e+00> : vector<8x128xf32>
      %280 = tpu.matmul %159, %263, %cst_277 {dimension_numbers = #tpu.dot_dimension_numbers<[1], [0], [0], [1], [0, 0, 1, 1], [], []>} : vector<8x8xf32>, vector<8x128xf32>, vector<8x128xf32> -> vector<8x128xf32>
      %cst_278 = arith.constant dense<0.000000e+00> : vector<8x128xf32>
      %281 = tpu.matmul %163, %268, %cst_278 {dimension_numbers = #tpu.dot_dimension_numbers<[1], [0], [0], [1], [0, 0, 1, 1], [], []>} : vector<8x8xf32>, vector<8x128xf32>, vector<8x128xf32> -> vector<8x128xf32>
      %282 = arith.addf %280, %281 : vector<8x128xf32>
      %cst_279 = arith.constant dense<0.000000e+00> : vector<8x128xf32>
      %283 = tpu.matmul %161, %263, %cst_279 {dimension_numbers = #tpu.dot_dimension_numbers<[1], [0], [0], [1], [0, 0, 1, 1], [], []>} : vector<8x8xf32>, vector<8x128xf32>, vector<8x128xf32> -> vector<8x128xf32>
      %cst_280 = arith.constant dense<0.000000e+00> : vector<8x128xf32>
      %284 = tpu.matmul %165, %268, %cst_280 {dimension_numbers = #tpu.dot_dimension_numbers<[1], [0], [0], [1], [0, 0, 1, 1], [], []>} : vector<8x8xf32>, vector<8x128xf32>, vector<8x128xf32> -> vector<8x128xf32>
      %285 = arith.addf %283, %284 : vector<8x128xf32>
      %cst_281 = arith.constant dense<0.000000e+00> : vector<8x128xf32>
      %286 = tpu.matmul %285, %7, %cst_281 {dimension_numbers = #tpu.dot_dimension_numbers<[1], [0], [0], [1], [0, 0, 1, 1], [], []>} : vector<8x128xf32>, vector<128x128xf32>, vector<8x128xf32> -> vector<8x128xf32>
      %287 = arith.addf %282, %286 : vector<8x128xf32>
      %288 = arith.addf %287, %167 : vector<8x128xf32>
      %cst_282 = arith.constant 0.000000e+00 : f32
      %289 = vector.broadcast %cst_282 : f32 to vector<8x128xf32>
      %290 = arith.maximumf %288, %289 : vector<8x128xf32>
      %291 = arith.maximumf %279, %290 : vector<8x128xf32>
      %cst_283 = arith.constant dense<0.000000e+00> : vector<8x128xf32>
      %292 = tpu.matmul %291, %7, %cst_283 {dimension_numbers = #tpu.dot_dimension_numbers<[1], [0], [0], [1], [0, 0, 1, 1], [], []>} : vector<8x128xf32>, vector<128x128xf32>, vector<8x128xf32> -> vector<8x128xf32>
      %293 = arith.maximumf %291, %292 : vector<8x128xf32>
      %cst_284 = arith.constant dense<0.000000e+00> : vector<8x128xf32>
      %294 = tpu.matmul %293, %181, %cst_284 {dimension_numbers = #tpu.dot_dimension_numbers<[1], [0], [0], [1], [0, 0, 1, 1], [], []>} : vector<8x128xf32>, vector<128x128xf32>, vector<8x128xf32> -> vector<8x128xf32>
      %c1_i32_285 = arith.constant 1 : i32
      %295 = arith.addi %arg11, %c1_i32_285 : i32
      %296 = arith.index_cast %295 : i32 to index
      %c0_286 = arith.constant 0 : index
      %c0_287 = arith.constant 0 : index
      %297 = vector.load %arg10[%296, %c0_286, %c0_287] : memref<68x8x128xf32, #tpu.memory_space<vmem>>, vector<1x8x128xf32>
      %298 = vector.shape_cast %297 : vector<1x8x128xf32> to vector<8x128xf32>
      %299 = vector.shape_cast %294 : vector<8x128xf32> to vector<1x8x128xf32>
      tpu.vector_store %arg10[%296, %c0_286, %c0_287], %299 {strides = array<i32>} : memref<68x8x128xf32, #tpu.memory_space<vmem>>, vector<1x8x128xf32>,
    }
    %c9_i32_188 = arith.constant 9 : i32
    %cst_189 = arith.constant 0.000000e+00 : f32
    %189 = vector.broadcast %cst_189 : f32 to vector<8x24xf32>
    %c1_190 = arith.constant 1 : index
    %c0_191 = arith.constant 0 : index
    %c0_192 = arith.constant 0 : index
    %190 = vector.load %arg10[%c1_190, %c0_191, %c0_192] : memref<68x8x128xf32, #tpu.memory_space<vmem>>, vector<1x8x128xf32>
    %191 = vector.shape_cast %190 : vector<1x8x128xf32> to vector<8x128xf32>
    %c0_193 = arith.constant 0 : index
    %c0_194 = arith.constant 0 : index
    %c0_195 = arith.constant 0 : index
    %192 = vector.load %arg4[%c0_193, %c0_194, %c0_195] : memref<9x128x24xf32, #tpu.memory_space<vmem>>, vector<1x128x24xf32>
    %193 = vector.shape_cast %192 : vector<1x128x24xf32> to vector<128x24xf32>
    %cst_196 = arith.constant dense<0.000000e+00> : vector<8x24xf32>
    %194 = tpu.matmul %191, %193, %cst_196 {dimension_numbers = #tpu.dot_dimension_numbers<[1], [0], [0], [1], [0, 0, 1, 1], [], []>} : vector<8x128xf32>, vector<128x24xf32>, vector<8x24xf32> -> vector<8x24xf32>
    %195 = arith.addf %189, %194 : vector<8x24xf32>
    %c2_197 = arith.constant 2 : index
    %c0_198 = arith.constant 0 : index
    %c0_199 = arith.constant 0 : index
    %196 = vector.load %arg10[%c2_197, %c0_198, %c0_199] : memref<68x8x128xf32, #tpu.memory_space<vmem>>, vector<1x8x128xf32>
    %197 = vector.shape_cast %196 : vector<1x8x128xf32> to vector<8x128xf32>
    %c1_200 = arith.constant 1 : index
    %c0_201 = arith.constant 0 : index
    %c0_202 = arith.constant 0 : index
    %198 = vector.load %arg4[%c1_200, %c0_201, %c0_202] : memref<9x128x24xf32, #tpu.memory_space<vmem>>, vector<1x128x24xf32>
    %199 = vector.shape_cast %198 : vector<1x128x24xf32> to vector<128x24xf32>
    %cst_203 = arith.constant dense<0.000000e+00> : vector<8x24xf32>
    %200 = tpu.matmul %197, %199, %cst_203 {dimension_numbers = #tpu.dot_dimension_numbers<[1], [0], [0], [1], [0, 0, 1, 1], [], []>} : vector<8x128xf32>, vector<128x24xf32>, vector<8x24xf32> -> vector<8x24xf32>
    %201 = arith.addf %195, %200 : vector<8x24xf32>
    %c3_204 = arith.constant 3 : index
    %c0_205 = arith.constant 0 : index
    %c0_206 = arith.constant 0 : index
    %202 = vector.load %arg10[%c3_204, %c0_205, %c0_206] : memref<68x8x128xf32, #tpu.memory_space<vmem>>, vector<1x8x128xf32>
    %203 = vector.shape_cast %202 : vector<1x8x128xf32> to vector<8x128xf32>
    %c2_207 = arith.constant 2 : index
    %c0_208 = arith.constant 0 : index
    %c0_209 = arith.constant 0 : index
    %204 = vector.load %arg4[%c2_207, %c0_208, %c0_209] : memref<9x128x24xf32, #tpu.memory_space<vmem>>, vector<1x128x24xf32>
    %205 = vector.shape_cast %204 : vector<1x128x24xf32> to vector<128x24xf32>
    %cst_210 = arith.constant dense<0.000000e+00> : vector<8x24xf32>
    %206 = tpu.matmul %203, %205, %cst_210 {dimension_numbers = #tpu.dot_dimension_numbers<[1], [0], [0], [1], [0, 0, 1, 1], [], []>} : vector<8x128xf32>, vector<128x24xf32>, vector<8x24xf32> -> vector<8x24xf32>
    %207 = arith.addf %201, %206 : vector<8x24xf32>
    %c4_211 = arith.constant 4 : index
    %c0_212 = arith.constant 0 : index
    %c0_213 = arith.constant 0 : index
    %208 = vector.load %arg10[%c4_211, %c0_212, %c0_213] : memref<68x8x128xf32, #tpu.memory_space<vmem>>, vector<1x8x128xf32>
    %209 = vector.shape_cast %208 : vector<1x8x128xf32> to vector<8x128xf32>
    %c3_214 = arith.constant 3 : index
    %c0_215 = arith.constant 0 : index
    %c0_216 = arith.constant 0 : index
    %210 = vector.load %arg4[%c3_214, %c0_215, %c0_216] : memref<9x128x24xf32, #tpu.memory_space<vmem>>, vector<1x128x24xf32>
    %211 = vector.shape_cast %210 : vector<1x128x24xf32> to vector<128x24xf32>
    %cst_217 = arith.constant dense<0.000000e+00> : vector<8x24xf32>
    %212 = tpu.matmul %209, %211, %cst_217 {dimension_numbers = #tpu.dot_dimension_numbers<[1], [0], [0], [1], [0, 0, 1, 1], [], []>} : vector<8x128xf32>, vector<128x24xf32>, vector<8x24xf32> -> vector<8x24xf32>
    %213 = arith.addf %207, %212 : vector<8x24xf32>
    %c5_218 = arith.constant 5 : index
    %c0_219 = arith.constant 0 : index
    %c0_220 = arith.constant 0 : index
    %214 = vector.load %arg10[%c5_218, %c0_219, %c0_220] : memref<68x8x128xf32, #tpu.memory_space<vmem>>, vector<1x8x128xf32>
    %215 = vector.shape_cast %214 : vector<1x8x128xf32> to vector<8x128xf32>
    %c4_221 = arith.constant 4 : index
    %c0_222 = arith.constant 0 : index
    %c0_223 = arith.constant 0 : index
    %216 = vector.load %arg4[%c4_221, %c0_222, %c0_223] : memref<9x128x24xf32, #tpu.memory_space<vmem>>, vector<1x128x24xf32>
    %217 = vector.shape_cast %216 : vector<1x128x24xf32> to vector<128x24xf32>
    %cst_224 = arith.constant dense<0.000000e+00> : vector<8x24xf32>
    %218 = tpu.matmul %215, %217, %cst_224 {dimension_numbers = #tpu.dot_dimension_numbers<[1], [0], [0], [1], [0, 0, 1, 1], [], []>} : vector<8x128xf32>, vector<128x24xf32>, vector<8x24xf32> -> vector<8x24xf32>
    %219 = arith.addf %213, %218 : vector<8x24xf32>
    %c6 = arith.constant 6 : index
    %c0_225 = arith.constant 0 : index
    %c0_226 = arith.constant 0 : index
    %220 = vector.load %arg10[%c6, %c0_225, %c0_226] : memref<68x8x128xf32, #tpu.memory_space<vmem>>, vector<1x8x128xf32>
    %221 = vector.shape_cast %220 : vector<1x8x128xf32> to vector<8x128xf32>
    %c5_227 = arith.constant 5 : index
    %c0_228 = arith.constant 0 : index
    %c0_229 = arith.constant 0 : index
    %222 = vector.load %arg4[%c5_227, %c0_228, %c0_229] : memref<9x128x24xf32, #tpu.memory_space<vmem>>, vector<1x128x24xf32>
    %223 = vector.shape_cast %222 : vector<1x128x24xf32> to vector<128x24xf32>
    %cst_230 = arith.constant dense<0.000000e+00> : vector<8x24xf32>
    %224 = tpu.matmul %221, %223, %cst_230 {dimension_numbers = #tpu.dot_dimension_numbers<[1], [0], [0], [1], [0, 0, 1, 1], [], []>} : vector<8x128xf32>, vector<128x24xf32>, vector<8x24xf32> -> vector<8x24xf32>
    %225 = arith.addf %219, %224 : vector<8x24xf32>
    %c7 = arith.constant 7 : index
    %c0_231 = arith.constant 0 : index
    %c0_232 = arith.constant 0 : index
    %226 = vector.load %arg10[%c7, %c0_231, %c0_232] : memref<68x8x128xf32, #tpu.memory_space<vmem>>, vector<1x8x128xf32>
    %227 = vector.shape_cast %226 : vector<1x8x128xf32> to vector<8x128xf32>
    %c6_233 = arith.constant 6 : index
    %c0_234 = arith.constant 0 : index
    %c0_235 = arith.constant 0 : index
    %228 = vector.load %arg4[%c6_233, %c0_234, %c0_235] : memref<9x128x24xf32, #tpu.memory_space<vmem>>, vector<1x128x24xf32>
    %229 = vector.shape_cast %228 : vector<1x128x24xf32> to vector<128x24xf32>
    %cst_236 = arith.constant dense<0.000000e+00> : vector<8x24xf32>
    %230 = tpu.matmul %227, %229, %cst_236 {dimension_numbers = #tpu.dot_dimension_numbers<[1], [0], [0], [1], [0, 0, 1, 1], [], []>} : vector<8x128xf32>, vector<128x24xf32>, vector<8x24xf32> -> vector<8x24xf32>
    %231 = arith.addf %225, %230 : vector<8x24xf32>
    %c8 = arith.constant 8 : index
    %c0_237 = arith.constant 0 : index
    %c0_238 = arith.constant 0 : index
    %232 = vector.load %arg10[%c8, %c0_237, %c0_238] : memref<68x8x128xf32, #tpu.memory_space<vmem>>, vector<1x8x128xf32>
    %233 = vector.shape_cast %232 : vector<1x8x128xf32> to vector<8x128xf32>
    %c7_239 = arith.constant 7 : index
    %c0_240 = arith.constant 0 : index
    %c0_241 = arith.constant 0 : index
    %234 = vector.load %arg4[%c7_239, %c0_240, %c0_241] : memref<9x128x24xf32, #tpu.memory_space<vmem>>, vector<1x128x24xf32>
    %235 = vector.shape_cast %234 : vector<1x128x24xf32> to vector<128x24xf32>
    %cst_242 = arith.constant dense<0.000000e+00> : vector<8x24xf32>
    %236 = tpu.matmul %233, %235, %cst_242 {dimension_numbers = #tpu.dot_dimension_numbers<[1], [0], [0], [1], [0, 0, 1, 1], [], []>} : vector<8x128xf32>, vector<128x24xf32>, vector<8x24xf32> -> vector<8x24xf32>
    %237 = arith.addf %231, %236 : vector<8x24xf32>
    %c9 = arith.constant 9 : index
    %c0_243 = arith.constant 0 : index
    %c0_244 = arith.constant 0 : index
    %238 = vector.load %arg10[%c9, %c0_243, %c0_244] : memref<68x8x128xf32, #tpu.memory_space<vmem>>, vector<1x8x128xf32>
    %239 = vector.shape_cast %238 : vector<1x8x128xf32> to vector<8x128xf32>
    %c8_245 = arith.constant 8 : index
    %c0_246 = arith.constant 0 : index
    %c0_247 = arith.constant 0 : index
    %240 = vector.load %arg4[%c8_245, %c0_246, %c0_247] : memref<9x128x24xf32, #tpu.memory_space<vmem>>, vector<1x128x24xf32>
    %241 = vector.shape_cast %240 : vector<1x128x24xf32> to vector<128x24xf32>
    %cst_248 = arith.constant dense<0.000000e+00> : vector<8x24xf32>
    %242 = tpu.matmul %239, %241, %cst_248 {dimension_numbers = #tpu.dot_dimension_numbers<[1], [0], [0], [1], [0, 0, 1, 1], [], []>} : vector<8x128xf32>, vector<128x24xf32>, vector<8x24xf32> -> vector<8x24xf32>
    %243 = arith.addf %237, %242 : vector<8x24xf32>
    %c0_249 = arith.constant 0 : index
    %c0_250 = arith.constant 0 : index
    %244 = vector.load %arg5[%c0_249, %c0_250] : memref<8x24xf32, #tpu.memory_space<vmem>>, vector<8x24xf32>
    %245 = arith.mulf %243, %244 : vector<8x24xf32>
    %c0_251 = arith.constant 0 : index
    %c0_252 = arith.constant 0 : index
    %246 = vector.load %arg6[%c0_251, %c0_252] : memref<24x3xf32, #tpu.memory_space<vmem>>, vector<24x3xf32>
    %cst_253 = arith.constant dense<0.000000e+00> : vector<8x3xf32>
    %247 = tpu.matmul %245, %246, %cst_253 {dimension_numbers = #tpu.dot_dimension_numbers<[1], [0], [0], [1], [0, 0, 1, 1], [], []>} : vector<8x24xf32>, vector<24x3xf32>, vector<8x3xf32> -> vector<8x3xf32>
    %cst_254 = arith.constant dense<0.000000e+00> : vector<3xf32>
    %248 = vector.multi_reduction <add>, %247, %cst_254 [0] : vector<8x3xf32> to vector<3xf32>
    %249 = vector.shape_cast %248 : vector<3xf32> to vector<1x3xf32>
    %c0_255 = arith.constant 0 : index
    %c0_256 = arith.constant 0 : index
    %250 = vector.load %arg7[%c0_255, %c0_256] : memref<1x3xf32, #tpu.memory_space<vmem>>, vector<1x3xf32>
    %251 = arith.addf %249, %250 : vector<1x3xf32>
    %c0_257 = arith.constant 0 : index
    %c0_258 = arith.constant 0 : index
    %c0_259 = arith.constant 0 : index
    %252 = vector.load %arg8[%c0_257, %c0_258, %c0_259] : memref<1x1x3xf32, #tpu.memory_space<vmem>>, vector<1x1x3xf32>
    %253 = vector.shape_cast %252 : vector<1x1x3xf32> to vector<1x3xf32>
    %254 = vector.shape_cast %251 : vector<1x3xf32> to vector<1x1x3xf32>
    tpu.vector_store %arg8[%c0_257, %c0_258, %c0_259], %254 {strides = array<i32>} : memref<1x1x3xf32, #tpu.memory_space<vmem>>, vector<1x1x3xf32>,
    return
  }
  func.func @transform_0(%arg0: i32) -> (i32, i32, i32, i32) {
    %c0_i32 = arith.constant 0 : i32
    %c0_i32_0 = arith.constant 0 : i32
    %c0_i32_1 = arith.constant 0 : i32
    %c0_i32_2 = arith.constant 0 : i32
    return %arg0, %c0_i32, %c0_i32_0, %c0_i32_1 : i32, i32, i32, i32
  }
  func.func @transform_1(%arg0: i32) -> (i32, i32, i32, i32) {
    %c0_i32 = arith.constant 0 : i32
    %c0_i32_0 = arith.constant 0 : i32
    %c0_i32_1 = arith.constant 0 : i32
    %c0_i32_2 = arith.constant 0 : i32
    %c0_i32_3 = arith.constant 0 : i32
    return %c0_i32, %c0_i32_0, %c0_i32_1, %c0_i32_2 : i32, i32, i32, i32
  }
  func.func @transform_2(%arg0: i32) -> (i32, i32, i32) {
    %c0_i32 = arith.constant 0 : i32
    %c0_i32_0 = arith.constant 0 : i32
    %c0_i32_1 = arith.constant 0 : i32
    %c0_i32_2 = arith.constant 0 : i32
    return %c0_i32, %c0_i32_0, %c0_i32_1 : i32, i32, i32
  }
  func.func @transform_3(%arg0: i32) -> (i32, i32, i32) {
    %c0_i32 = arith.constant 0 : i32
    %c0_i32_0 = arith.constant 0 : i32
    %c0_i32_1 = arith.constant 0 : i32
    %c0_i32_2 = arith.constant 0 : i32
    return %c0_i32, %c0_i32_0, %c0_i32_1 : i32, i32, i32
  }
  func.func @transform_4(%arg0: i32) -> (i32, i32) {
    %c0_i32 = arith.constant 0 : i32
    %c0_i32_0 = arith.constant 0 : i32
    %c0_i32_1 = arith.constant 0 : i32
    return %c0_i32, %c0_i32_0 : i32, i32
  }
  func.func @transform_5(%arg0: i32) -> (i32, i32) {
    %c0_i32 = arith.constant 0 : i32
    %c0_i32_0 = arith.constant 0 : i32
    %c0_i32_1 = arith.constant 0 : i32
    return %c0_i32, %c0_i32_0 : i32, i32
  }
  func.func @transform_6(%arg0: i32) -> (i32, i32) {
    %c0_i32 = arith.constant 0 : i32
    %c0_i32_0 = arith.constant 0 : i32
    %c0_i32_1 = arith.constant 0 : i32
    return %c0_i32, %c0_i32_0 : i32, i32
  }
  func.func @transform_7(%arg0: i32) -> (i32, i32, i32) {
    %c0_i32 = arith.constant 0 : i32
    %c0_i32_0 = arith.constant 0 : i32
    %c0_i32_1 = arith.constant 0 : i32
    return %arg0, %c0_i32, %c0_i32_0 : i32, i32, i32
  }
}

</mosaic_0001>

<llo_original>
// kernel: tiny_vgg_forward.1
$region0: #{tiny_vgg_forward.1}
  #allocation0 [shape = 'u32[]', space=smem, size = 0x4, offset = 0x4, fixed_abs, tag = 'smem constant byte address 0x4 - core index']
  #allocation1 [shape = 'u32[144,128]{1,0:T(1,128)}', space=vmem, size = 0x12000, scoped, tag = 'internal scratch']
  #allocation2 [shape = 'f32[68,8,128]{2,1,0:T(8,128)}', space=vmem, size = 0x44000, scoped, tag = 'scratch operand']
  #allocation3 [shape = 'f32[68,8,128]{2,1,0:T(8,128)}', space=vmem, size = 0x44000, scoped, tag = 'scratch operand']
  %s0 = inlined_call_operand.vmem [shape: f32[2,68,8,128], index: 0, kind: input, shape index: {}]
  %s1 = inlined_call_operand.vmem [shape: f32[6,4,8,8], index: 1, kind: input, shape index: {}]
  %s2 = inlined_call_operand.vmem [shape: f32[6,8,128], index: 2, kind: input, shape index: {}]
  %s3 = inlined_call_operand.vmem [shape: f32[9,128,24], index: 3, kind: input, shape index: {}]
  %s4 = inlined_call_operand.vmem [shape: f32[8,24], index: 4, kind: input, shape index: {}]
  %s5 = inlined_call_operand.vmem [shape: f32[24,3], index: 5, kind: input, shape index: {}]
  %s6 = inlined_call_operand.vmem [shape: f32[1,3], index: 6, kind: input, shape index: {}]
  %s7 = inlined_call_operand.hbm [shape: f32[2,1,3], index: 7, kind: output, shape index: {}]
  %s8 = sld [smem:[#allocation0]]
  $region103: #{tiny_vgg_forward.1} parent=0
    _
  %s10 = ssub.s32 1, %s8
  %s11 = scalar_select 0, %s10, %s8
  $region1: #{tiny_vgg_forward.1} parent=0
    #allocation4 [shape = 'u8[1024]{0}', space=vmem, size = 0x400, scoped, tag = 'output window, operand 0']
    #allocation5 [shape = 's32[2]{0}', space=sflag, size = 0x8, scoped, tag = 'scoped memory for tiny_vgg_forward.1']
    %12 = vsyncpa [#allocation5], 0
    %s13 = scalar_lea.sflag [#allocation5], 1
    %14 = vsyncpa %s13, 0
    loop: start=0, step=1, limit=4
    $region2: #{tiny_vgg_forward.1} parent=1 // loop_pre_header
      _
    $region3: #{tiny_vgg_forward.1} parent=1 // loop_header
      %s16 = sphi 0, %s20
      %p17 = scmp.ge.s32.totalorder %s16, 4
      %s26 = sphi 0, %s28
      %s29 = sphi 0, %s26
      %s30 = sphi 0, %s29
      %s46 = sphi 0, %s30
      %s50 = sphi 0, %s50
      %s52 = sphi 0, %s50
      %s53 = sphi 0, %s52
      %s67 = sphi 0, %s53
      %s71 = sphi 0, %s71
      %s73 = sphi 0, %s71
      %s74 = sphi 0, %s73
      %s88 = sphi 0, %s74
      %s92 = sphi 0, %s92
      %s94 = sphi 0, %s92
      %s95 = sphi 0, %s94
      %s109 = sphi 0, %s95
      %s113 = sphi 0, %s113
      %s115 = sphi 0, %s113
      %s116 = sphi 0, %s115
      %s130 = sphi 0, %s116
      %s134 = sphi 0, %s134
      %s136 = sphi 0, %s134
      %s137 = sphi 0, %s136
      %s151 = sphi 0, %s137
      %s155 = sphi 0, %s155
      %s157 = sphi 0, %s155
      %s158 = sphi 0, %s157
      %s172 = sphi 0, %s158
      %s178 = sphi 0, %s180
      %s181 = sphi 0, %s178
      %s182 = sphi 0, %s181
      %s198 = sphi 0, %s182
    $region4: #{tiny_vgg_forward.1} parent=1 // loop_header_branch
      %19 = sbr.rel (%p17) target = $region8
    $region5: #{tiny_vgg_forward.1} parent=1 // loop_body
      %s21 = ssub.s32 %s16, 1
      %s22 = ssub.s32 %s16, 2
      %s23 = sadd.s32 %s16, 1
      %s24 = ssub.s32 %s16, %s23
      %p25 = scmp.eq.s32.totalorder %s24, 0
      %s27 = sadd.s32 %s26, 1
      %s28 = scalar_select %p25, %s26, %s27
      %p31 = pneg %p25
      %p32 = scmp.eq.s32.totalorder %s16, 1
      %p33 = por %p31, %p32
      %p34 = scmp.ne.s32.totalorder %s26, %s29
      %p35 = scmp.eq.s32.totalorder %s16, 0
      %p36 = por %p34, %p35
      %p37 = scmp.ne.s32.totalorder %s26, %s29
      %p38 = scmp.eq.s32.totalorder %s21, 1
      %p39 = por %p37, %p38
      %p40 = scmp.ne.s32.totalorder %s29, %s30
      %p41 = scmp.eq.s32.totalorder %s21, 0
      %p42 = por %p40, %p41
      %p43 = scmp.ne.s32.totalorder %s29, %s30
      %p44 = scmp.eq.s32.totalorder %s22, 1
      %p45 = por %p43, %p44
      %p47 = scmp.ne.s32.totalorder %s30, %s46
      %p48 = scmp.eq.s32.totalorder %s22, 0
      %p49 = por %p47, %p48
      %s51 = sadd.s32 %s50, 1
      %p54 = scmp.eq.s32.totalorder %s16, 1
      %p55 = scmp.ne.s32.totalorder %s50, %s52
      %p56 = scmp.eq.s32.totalorder %s16, 0
      %p57 = por %p55, %p56
      %p58 = scmp.ne.s32.totalorder %s50, %s52
      %p59 = scmp.eq.s32.totalorder %s21, 1
      %p60 = por %p58, %p59
      %p61 = scmp.ne.s32.totalorder %s52, %s53
      %p62 = scmp.eq.s32.totalorder %s21, 0
      %p63 = por %p61, %p62
      %p64 = scmp.ne.s32.totalorder %s52, %s53
      %p65 = scmp.eq.s32.totalorder %s22, 1
      %p66 = por %p64, %p65
      %p68 = scmp.ne.s32.totalorder %s53, %s67
      %p69 = scmp.eq.s32.totalorder %s22, 0
      %p70 = por %p68, %p69
      %s72 = sadd.s32 %s71, 1
      %p75 = scmp.eq.s32.totalorder %s16, 1
      %p76 = scmp.ne.s32.totalorder %s71, %s73
      %p77 = scmp.eq.s32.totalorder %s16, 0
      %p78 = por %p76, %p77
      %p79 = scmp.ne.s32.totalorder %s71, %s73
      %p80 = scmp.eq.s32.totalorder %s21, 1
      %p81 = por %p79, %p80
      %p82 = scmp.ne.s32.totalorder %s73, %s74
      %p83 = scmp.eq.s32.totalorder %s21, 0
      %p84 = por %p82, %p83
      %p85 = scmp.ne.s32.totalorder %s73, %s74
      %p86 = scmp.eq.s32.totalorder %s22, 1
      %p87 = por %p85, %p86
      %p89 = scmp.ne.s32.totalorder %s74, %s88
      %p90 = scmp.eq.s32.totalorder %s22, 0
      %p91 = por %p89, %p90
      %s93 = sadd.s32 %s92, 1
      %p96 = scmp.eq.s32.totalorder %s16, 1
      %p97 = scmp.ne.s32.totalorder %s92, %s94
      %p98 = scmp.eq.s32.totalorder %s16, 0
      %p99 = por %p97, %p98
      %p100 = scmp.ne.s32.totalorder %s92, %s94
      %p101 = scmp.eq.s32.totalorder %s21, 1
      %p102 = por %p100, %p101
      %p103 = scmp.ne.s32.totalorder %s94, %s95
      %p104 = scmp.eq.s32.totalorder %s21, 0
      %p105 = por %p103, %p104
      %p106 = scmp.ne.s32.totalorder %s94, %s95
      %p107 = scmp.eq.s32.totalorder %s22, 1
      %p108 = por %p106, %p107
      %p110 = scmp.ne.s32.totalorder %s95, %s109
      %p111 = scmp.eq.s32.totalorder %s22, 0
      %p112 = por %p110, %p111
      %s114 = sadd.s32 %s113, 1
      %p117 = scmp.eq.s32.totalorder %s16, 1
      %p118 = scmp.ne.s32.totalorder %s113, %s115
      %p119 = scmp.eq.s32.totalorder %s16, 0
      %p120 = por %p118, %p119
      %p121 = scmp.ne.s32.totalorder %s113, %s115
      %p122 = scmp.eq.s32.totalorder %s21, 1
      %p123 = por %p121, %p122
      %p124 = scmp.ne.s32.totalorder %s115, %s116
      %p125 = scmp.eq.s32.totalorder %s21, 0
      %p126 = por %p124, %p125
      %p127 = scmp.ne.s32.totalorder %s115, %s116
      %p128 = scmp.eq.s32.totalorder %s22, 1
      %p129 = por %p127, %p128
      %p131 = scmp.ne.s32.totalorder %s116, %s130
      %p132 = scmp.eq.s32.totalorder %s22, 0
      %p133 = por %p131, %p132
      %s135 = sadd.s32 %s134, 1
      %p138 = scmp.eq.s32.totalorder %s16, 1
      %p139 = scmp.ne.s32.totalorder %s134, %s136
      %p140 = scmp.eq.s32.totalorder %s16, 0
      %p141 = por %p139, %p140
      %p142 = scmp.ne.s32.totalorder %s134, %s136
      %p143 = scmp.eq.s32.totalorder %s21, 1
      %p144 = por %p142, %p143
      %p145 = scmp.ne.s32.totalorder %s136, %s137
      %p146 = scmp.eq.s32.totalorder %s21, 0
      %p147 = por %p145, %p146
      %p148 = scmp.ne.s32.totalorder %s136, %s137
      %p149 = scmp.eq.s32.totalorder %s22, 1
      %p150 = por %p148, %p149
      %p152 = scmp.ne.s32.totalorder %s137, %s151
      %p153 = scmp.eq.s32.totalorder %s22, 0
      %p154 = por %p152, %p153
      %s156 = sadd.s32 %s155, 1
      %p159 = scmp.eq.s32.totalorder %s16, 1
      %p160 = scmp.ne.s32.totalorder %s155, %s157
      %p161 = scmp.eq.s32.totalorder %s16, 0
      %p162 = por %p160, %p161
      %p163 = scmp.ne.s32.totalorder %s155, %s157
      %p164 = scmp.eq.s32.totalorder %s21, 1
      %p165 = por %p163, %p164
      %p166 = scmp.ne.s32.totalorder %s157, %s158
      %p167 = scmp.eq.s32.totalorder %s21, 0
      %p168 = por %p166, %p167
      %p169 = scmp.ne.s32.totalorder %s157, %s158
      %p170 = scmp.eq.s32.totalorder %s22, 1
      %p171 = por %p169, %p170
      %p173 = scmp.ne.s32.totalorder %s158, %s172
      %p174 = scmp.eq.s32.totalorder %s22, 0
      %p175 = por %p173, %p174
      %s176 = ssub.s32 %s16, %s23
      %p177 = scmp.eq.s32.totalorder %s176, 0
      %s179 = sadd.s32 %s178, 1
      %s180 = scalar_select %p177, %s178, %s179
      %p183 = pneg %p177
      %p184 = scmp.eq.s32.totalorder %s16, 1
      %p185 = por %p183, %p184
      %p186 = scmp.ne.s32.totalorder %s178, %s181
      %p187 = scmp.eq.s32.totalorder %s16, 0
      %p188 = por %p186, %p187
      %p189 = scmp.ne.s32.totalorder %s178, %s181
      %p190 = scmp.eq.s32.totalorder %s21, 1
      %p191 = por %p189, %p190
      %p192 = scmp.ne.s32.totalorder %s181, %s182
      %p193 = scmp.eq.s32.totalorder %s21, 0
      %p194 = por %p192, %p193
      %p195 = scmp.ne.s32.totalorder %s181, %s182
      %p196 = scmp.eq.s32.totalorder %s22, 1
      %p197 = por %p195, %p196
      %p199 = scmp.ne.s32.totalorder %s182, %s198
      %p200 = scmp.eq.s32.totalorder %s22, 0
      %p201 = por %p199, %p200
      %p202 = scmp.le.s32.totalorder 1, %s16
      %p203 = scmp.lt.s32.totalorder %s16, 3
      %p204 = pnand %p202, %p203
      %p205 = pneg %p204
      // Predicated region
      $region9: #{tiny_vgg_forward.1} parent=5 // pred_check
        _
      $region10: #{tiny_vgg_forward.1} parent=5 // pred_check_branch
        %207 = sbr.rel (%p204) target = $region12
      $region11: #{tiny_vgg_forward.1} parent=5 // pred_region
        %s208 = ssub.s32 %s16, 1
        // Predicated region
        $region13: #{tiny_vgg_forward.1} parent=11 // pred_check
          %p209 = pneg %p63
        $region14: #{tiny_vgg_forward.1} parent=11 // pred_check_branch
          %211 = sbr.rel (%p209) target = $region16
        $region15: #{tiny_vgg_forward.1} parent=11 // pred_region
          _
        $region16: #{tiny_vgg_forward.1} parent=11 // pred_fallthru
          _
        // Predicated region
        $region17: #{tiny_vgg_forward.1} parent=11 // pred_check
          %p212 = pneg %p84
        $region18: #{tiny_vgg_forward.1} parent=11 // pred_check_branch
          %214 = sbr.rel (%p212) target = $region20
        $region19: #{tiny_vgg_forward.1} parent=11 // pred_region
          _
        $region20: #{tiny_vgg_forward.1} parent=11 // pred_fallthru
          _
        // Predicated region
        $region21: #{tiny_vgg_forward.1} parent=11 // pred_check
          %p215 = pneg %p105
        $region22: #{tiny_vgg_forward.1} parent=11 // pred_check_branch
          %217 = sbr.rel (%p215) target = $region24
        $region23: #{tiny_vgg_forward.1} parent=11 // pred_region
          _
        $region24: #{tiny_vgg_forward.1} parent=11 // pred_fallthru
          _
        // Predicated region
        $region25: #{tiny_vgg_forward.1} parent=11 // pred_check
          %p218 = pneg %p126
        $region26: #{tiny_vgg_forward.1} parent=11 // pred_check_branch
          %220 = sbr.rel (%p218) target = $region28
        $region27: #{tiny_vgg_forward.1} parent=11 // pred_region
          _
        $region28: #{tiny_vgg_forward.1} parent=11 // pred_fallthru
          _
        // Predicated region
        $region29: #{tiny_vgg_forward.1} parent=11 // pred_check
          %p221 = pneg %p147
        $region30: #{tiny_vgg_forward.1} parent=11 // pred_check_branch
          %223 = sbr.rel (%p221) target = $region32
        $region31: #{tiny_vgg_forward.1} parent=11 // pred_region
          _
        $region32: #{tiny_vgg_forward.1} parent=11 // pred_fallthru
          _
        // Predicated region
        $region33: #{tiny_vgg_forward.1} parent=11 // pred_check
          %p224 = pneg %p168
        $region34: #{tiny_vgg_forward.1} parent=11 // pred_check_branch
          %226 = sbr.rel (%p224) target = $region36
        $region35: #{tiny_vgg_forward.1} parent=11 // pred_region
          _
        $region36: #{tiny_vgg_forward.1} parent=11 // pred_fallthru
          _
      $region12: #{tiny_vgg_forward.1} parent=5 // pred_fallthru
        _
      %p227 = scmp.lt.s32.totalorder %s16, 2
      // Predicated region
      $region37: #{tiny_vgg_forward.1} parent=5 // pred_check
        %p228 = pneg %p227
      $region38: #{tiny_vgg_forward.1} parent=5 // pred_check_branch
        %230 = sbr.rel (%p228) target = $region40
      $region39: #{tiny_vgg_forward.1} parent=5 // pred_region
        // Predicated region
        $region41: #{tiny_vgg_forward.1} parent=39 // pred_check
          %p231 = pneg %p36
        $region42: #{tiny_vgg_forward.1} parent=39 // pred_check_branch
          %233 = sbr.rel (%p231) target = $region44
        $region43: #{tiny_vgg_forward.1} parent=39 // pred_region
          %p234 = scmp.lt.s32.totalorder %s16, 1
          %s235 = scalar_select %p234, %s16, 1
          %s236 = smul.addr %s235, 68
          %s237 = smul.addr %s236, 8
          %s238 = scalar_lea.vmem %s0, %s237
        $region44: #{tiny_vgg_forward.1} parent=39 // pred_fallthru
          _
      $region40: #{tiny_vgg_forward.1} parent=5 // pred_fallthru
        _
      %p239 = scmp.le.s32.totalorder 1, %s16
      %p240 = scmp.lt.s32.totalorder %s16, 3
      %p241 = pnand %p239, %p240
      %p242 = pneg %p241
      // Predicated region
      $region45: #{tiny_vgg_forward.1} parent=5 // pred_check
        _
      $region46: #{tiny_vgg_forward.1} parent=5 // pred_check_branch
        %244 = sbr.rel (%p241) target = $region48
      $region47: #{tiny_vgg_forward.1} parent=5 // pred_region
        %s245 = ssub.s32 %s16, 1
        %p246 = scmp.lt.s32.totalorder %s21, 1
        %s247 = scalar_select %p246, %s21, 1
        %s248 = smul.addr %s247, 68
        %s249 = smul.addr %s248, 8
        %s250 = scalar_lea.vmem %s0, %s249
        %p251 = pneg %p42
        %p252 = pneg %p39
        %p253 = pneg %p63
        %p254 = pneg %p60
        %p255 = pneg %p84
        %p256 = pneg %p81
        %p257 = pneg %p105
        %p258 = pneg %p102
        %p259 = pneg %p126
        %p260 = pneg %p123
        %p261 = pneg %p147
        %p262 = pneg %p144
        %p263 = pneg %p168
        %p264 = pneg %p165
        %p265 = pneg %p194
        %p266 = pneg %p191
        %s267 = sand.u32 %s181, 1
        %s268 = scalar_lea.sflag [#allocation5], %s267
        %s269 = sand.u32 %s181, 1
        %s270 = scalar_lea.vmem [#allocation4], %s269
        %p271 = scmp.lt.s32.totalorder %s21, 1
        %s272 = scalar_select %p271, %s21, 1
        %s273 = smul.addr %s272, 68
        %s274 = smul.addr %s273, 8
        %s275 = scalar_lea.vmem %s0, %s274
        %v276 = vlaneseq
        %v277 = vshrl.u32 %v276, 7
        %v278 = vadd.s32 %v277, 8
        %v279 = vadd.s32 %v277, 16
        %v280 = vadd.s32 %v277, 24
        %v281 = vadd.s32 %v277, 32
        %v282 = vadd.s32 %v277, 40
        %v283 = vadd.s32 %v277, 48
        %v284 = vadd.s32 %v277, 56
        %v285 = vadd.s32 %v277, 64
        %v286 = vadd.s32 %v277, 72
        %v287 = vadd.s32 %v277, 80
        %v288 = vadd.s32 %v277, 88
        %v289 = vadd.s32 %v277, 96
        %v290 = vadd.s32 %v277, 104
        %v291 = vadd.s32 %v277, 112
        %v292 = vadd.s32 %v277, 120
        %v293 = vlaneseq
        %v294 = vand.u32 %v293, 127
        %v295 = vadd.s32 %v294, 1
        %vm296 = vcmp.eq.s32.totalorder %v277, %v295
        %vm297 = vcmp.eq.s32.totalorder %v278, %v295
        %vm298 = vcmp.eq.s32.totalorder %v279, %v295
        %vm299 = vcmp.eq.s32.totalorder %v280, %v295
        %vm300 = vcmp.eq.s32.totalorder %v281, %v295
        %vm301 = vcmp.eq.s32.totalorder %v282, %v295
        %vm302 = vcmp.eq.s32.totalorder %v283, %v295
        %vm303 = vcmp.eq.s32.totalorder %v284, %v295
        %vm304 = vcmp.eq.s32.totalorder %v285, %v295
        %vm305 = vcmp.eq.s32.totalorder %v286, %v295
        %vm306 = vcmp.eq.s32.totalorder %v287, %v295
        %vm307 = vcmp.eq.s32.totalorder %v288, %v295
        %vm308 = vcmp.eq.s32.totalorder %v289, %v295
        %vm309 = vcmp.eq.s32.totalorder %v290, %v295
        %vm310 = vcmp.eq.s32.totalorder %v291, %v295
        %vm311 = vcmp.eq.s32.totalorder %v292, %v295
        %v312 = vsel %vm296, 1.0, 0.0
        %v313 = vsel %vm297, 1.0, 0.0
        %v314 = vsel %vm298, 1.0, 0.0
        %v315 = vsel %vm299, 1.0, 0.0
        %v316 = vsel %vm300, 1.0, 0.0
        %v317 = vsel %vm301, 1.0, 0.0
        %v318 = vsel %vm302, 1.0, 0.0
        %v319 = vsel %vm303, 1.0, 0.0
        %v320 = vsel %vm304, 1.0, 0.0
        %v321 = vsel %vm305, 1.0, 0.0
        %v322 = vsel %vm306, 1.0, 0.0
        %v323 = vsel %vm307, 1.0, 0.0
        %v324 = vsel %vm308, 1.0, 0.0
        %v325 = vsel %vm309, 1.0, 0.0
        %v326 = vsel %vm310, 1.0, 0.0
        %v327 = vsel %vm311, 1.0, 0.0
        %v328 = vld [vmem:[%s1] sm:$0xff]
        %s329 = scalar_lea.vmem %s1, 8
        %v330 = vld [vmem:[%s329] sm:$0xff]
        %s331 = scalar_lea.vmem %s1, 16
        %v332 = vld [vmem:[%s331] sm:$0xff]
        %s333 = scalar_lea.vmem %s1, 24
        %v334 = vld [vmem:[%s333] sm:$0xff]
        %v335 = vld [vmem:[%s2] sm:$0xff]
        %v336 = vadd.s32 %v277, 1
        %v337 = vadd.s32 %v278, 1
        %v338 = vadd.s32 %v279, 1
        %v339 = vadd.s32 %v280, 1
        %v340 = vadd.s32 %v281, 1
        %v341 = vadd.s32 %v282, 1
        %v342 = vadd.s32 %v283, 1
        %v343 = vadd.s32 %v284, 1
        %v344 = vadd.s32 %v285, 1
        %v345 = vadd.s32 %v286, 1
        %v346 = vadd.s32 %v287, 1
        %v347 = vadd.s32 %v288, 1
        %v348 = vadd.s32 %v289, 1
        %v349 = vadd.s32 %v290, 1
        %v350 = vadd.s32 %v291, 1
        %v351 = vadd.s32 %v292, 1
        %vm352 = vcmp.eq.s32.totalorder %v294, %v336
        %vm353 = vcmp.eq.s32.totalorder %v294, %v337
        %vm354 = vcmp.eq.s32.totalorder %v294, %v338
        %vm355 = vcmp.eq.s32.totalorder %v294, %v339
        %vm356 = vcmp.eq.s32.totalorder %v294, %v340
        %vm357 = vcmp.eq.s32.totalorder %v294, %v341
        %vm358 = vcmp.eq.s32.totalorder %v294, %v342
        %vm359 = vcmp.eq.s32.totalorder %v294, %v343
        %vm360 = vcmp.eq.s32.totalorder %v294, %v344
        %vm361 = vcmp.eq.s32.totalorder %v294, %v345
        %vm362 = vcmp.eq.s32.totalorder %v294, %v346
        %vm363 = vcmp.eq.s32.totalorder %v294, %v347
        %vm364 = vcmp.eq.s32.totalorder %v294, %v348
        %vm365 = vcmp.eq.s32.totalorder %v294, %v349
        %vm366 = vcmp.eq.s32.totalorder %v294, %v350
        %vm367 = vcmp.eq.s32.totalorder %v294, %v351
        %vm368 = vcmp.ge.s32.totalorder %v294, 1
        %vm369 = vmand %vm352, %vm368
        %vm370 = vmand %vm353, %vm368
        %vm371 = vmand %vm354, %vm368
        %vm372 = vmand %vm355, %vm368
        %vm373 = vmand %vm356, %vm368
        %vm374 = vmand %vm357, %vm368
        %vm375 = vmand %vm358, %vm368
        %vm376 = vmand %vm359, %vm368
        %vm377 = vmand %vm360, %vm368
        %vm378 = vmand %vm361, %vm368
        %vm379 = vmand %vm362, %vm368
        %vm380 = vmand %vm363, %vm368
        %vm381 = vmand %vm364, %vm368
        %vm382 = vmand %vm365, %vm368
        %vm383 = vmand %vm366, %vm368
        %vm384 = vmand %vm367, %vm368
        %vm385 = vcmp.le.s32.totalorder %v294, 65
        %vm386 = vmand %vm369, %vm385
        %vm387 = vmand %vm370, %vm385
        %vm388 = vmand %vm371, %vm385
        %vm389 = vmand %vm372, %vm385
        %vm390 = vmand %vm373, %vm385
        %vm391 = vmand %vm374, %vm385
        %vm392 = vmand %vm375, %vm385
        %vm393 = vmand %vm376, %vm385
        %vm394 = vmand %vm377, %vm385
        %vm395 = vmand %vm378, %vm385
        %vm396 = vmand %vm379, %vm385
        %vm397 = vmand %vm380, %vm385
        %vm398 = vmand %vm381, %vm385
        %vm399 = vmand %vm382, %vm385
        %vm400 = vmand %vm383, %vm385
        %vm401 = vmand %vm384, %vm385
        %v402 = vsel %vm386, 1.0, 0.0
        %v403 = vsel %vm387, 1.0, 0.0
        %v404 = vsel %vm388, 1.0, 0.0
        %v405 = vsel %vm389, 1.0, 0.0
        %v406 = vsel %vm390, 1.0, 0.0
        %v407 = vsel %vm391, 1.0, 0.0
        %v408 = vsel %vm392, 1.0, 0.0
        %v409 = vsel %vm393, 1.0, 0.0
        %v410 = vsel %vm394, 1.0, 0.0
        %v411 = vsel %vm395, 1.0, 0.0
        %v412 = vsel %vm396, 1.0, 0.0
        %v413 = vsel %vm397, 1.0, 0.0
        %v414 = vsel %vm398, 1.0, 0.0
        %v415 = vsel %vm399, 1.0, 0.0
        %v416 = vsel %vm400, 1.0, 0.0
        %v417 = vsel %vm401, 1.0, 0.0
        %418 = vst [vmem:[#allocation2] sm:$0xff] 0.0
        %s419 = scalar_lea.vmem [#allocation2], 528
        %420 = vst [vmem:[%s419] sm:$0xff] 0.0
        loop: start=0, step=1, limit=65
        $region49: #{tiny_vgg_forward.1} parent=47 // loop_pre_header
          _
        $region50: #{tiny_vgg_forward.1} parent=47 // loop_header
          %s422 = sphi 0, %s426
          %p423 = scmp.ge.s32.totalorder %s422, 65
        $region51: #{tiny_vgg_forward.1} parent=47 // loop_header_branch
          %425 = sbr.rel (%p423) target = $region55
        $region52: #{tiny_vgg_forward.1} parent=47 // loop_body
          %s427 = smul.u32 %s422, 8
          %s428 = scalar_lea.vmem %s275, %s427
          %v429 = vld [vmem:[%s428] sm:$0xff]
          %s430 = sadd.s32 %s422, 1
          %s431 = smul.u32 %s430, 8
          %s432 = scalar_lea.vmem %s275, %s431
          %v433 = vld [vmem:[%s432] sm:$0xff]
          %vm434 = vcmask 64512
          %v436 = vsel %vm434, %v332, 0
          %438 = vmatprep.subr.mxu0 0.0
          %439 = vmatpush1.msra.mxu0 %v433
          %440 = vmatprep.subr.mxu0 0.0
          %441 = vmatpush1.msra.mxu0 0.0
          %442 = vmatprep.subr.mxu0 0.0
          %443 = vmatpush1.msra.mxu0 0.0
          %444 = vmatprep.subr.mxu0 0.0
          %445 = vmatpush1.msra.mxu0 0.0
          %446 = vmatprep.subr.mxu0 0.0
          %447 = vmatpush1.msra.mxu0 0.0
          %448 = vmatprep.subr.mxu0 0.0
          %449 = vmatpush1.msra.mxu0 0.0
          %450 = vmatprep.subr.mxu0 0.0
          %451 = vmatpush1.msra.mxu0 0.0
          %452 = vmatprep.subr.mxu0 0.0
          %453 = vmatpush1.msra.mxu0 0.0
          %454 = vmatprep.subr.mxu0 0.0
          %455 = vmatpush1.msra.mxu0 0.0
          %456 = vmatprep.subr.mxu0 0.0
          %457 = vmatpush1.msra.mxu0 0.0
          %458 = vmatprep.subr.mxu0 0.0
          %459 = vmatpush1.msra.mxu0 0.0
          %460 = vmatprep.subr.mxu0 0.0
          %461 = vmatpush1.msra.mxu0 0.0
          %462 = vmatprep.subr.mxu0 0.0
          %463 = vmatpush1.msra.mxu0 0.0
          %464 = vmatprep.subr.mxu0 0.0
          %465 = vmatpush1.msra.mxu0 0.0
          %466 = vmatprep.subr.mxu0 0.0
          %467 = vmatpush1.msra.mxu0 0.0
          %468 = vmatprep.subr.mxu0 0.0
          %469 = vmatpush1.msra.mxu0 0.0
          %470 = vmatprep.subr.mxu0 0.0
          %471 = vmatpush1.msra.mxu0 0.0
          %472 = vmatprep.subr.mxu0 0.0
          %473 = vmatpush1.msra.mxu0 0.0
          %474 = vmatprep.subr.mxu0 0.0
          %475 = vmatpush1.msra.mxu0 0.0
          %476 = vmatprep.subr.mxu0 0.0
          %477 = vmatpush1.msra.mxu0 0.0
          %478 = vmatprep.subr.mxu0 0.0
          %479 = vmatpush1.msra.mxu0 0.0
          %480 = vmatprep.subr.mxu0 0.0
          %481 = vmatpush1.msra.mxu0 0.0
          %482 = vmatprep.subr.mxu0 0.0
          %483 = vmatpush1.msra.mxu0 0.0
          %484 = vmatprep.subr.mxu0 0.0
          %485 = vmatpush1.msra.mxu0 0.0
          %486 = vmatprep.subr.mxu0 0.0
          %487 = vmatpush1.msra.mxu0 0.0
          %488 = vmatprep.subr.mxu0 0.0
          %489 = vmatpush1.msra.mxu0 0.0
          %490 = vmatprep.subr.mxu0 0.0
          %491 = vmatpush1.msra.mxu0 0.0
          %492 = vmatprep.subr.mxu0 0.0
          %493 = vmatpush1.msra.mxu0 0.0
          %494 = vmatprep.subr.mxu0 0.0
          %495 = vmatpush1.msra.mxu0 0.0
          %496 = vmatprep.subr.mxu0 0.0
          %497 = vmatpush1.msra.mxu0 0.0
          %498 = vmatprep.subr.mxu0 0.0
          %499 = vmatpush1.msra.mxu0 0.0
          %500 = vmatprep.subr.mxu0 0.0
          %501 = vmatpush1.msra.mxu0 0.0
          %502 = vmatprep.mubr.f32.mxu0 0.0
          %503 = vmatmul.mubr.f32.gmra.mrb[0].mxu0 %v436
          %v504 = vpop.f32.mrb[0].mxu0
          %v505 = vadd.f32 0.0, %v504
          %v506 = vpop.f32.mrb[0].mxu0
          %507 = vdwg.mxu0
          %v509 = vsel %vm434, %v328, 0
          %511 = vmatprep.subr.mxu0 0.0
          %512 = vmatpush1.msra.mxu0 %v429
          %513 = vmatprep.subr.mxu0 0.0
          %514 = vmatpush1.msra.mxu0 0.0
          %515 = vmatprep.subr.mxu0 0.0
          %516 = vmatpush1.msra.mxu0 0.0
          %517 = vmatprep.subr.mxu0 0.0
          %518 = vmatpush1.msra.mxu0 0.0
          %519 = vmatprep.subr.mxu0 0.0
          %520 = vmatpush1.msra.mxu0 0.0
          %521 = vmatprep.subr.mxu0 0.0
          %522 = vmatpush1.msra.mxu0 0.0
          %523 = vmatprep.subr.mxu0 0.0
          %524 = vmatpush1.msra.mxu0 0.0
          %525 = vmatprep.subr.mxu0 0.0
          %526 = vmatpush1.msra.mxu0 0.0
          %527 = vmatprep.subr.mxu0 0.0
          %528 = vmatpush1.msra.mxu0 0.0
          %529 = vmatprep.subr.mxu0 0.0
          %530 = vmatpush1.msra.mxu0 0.0
          %531 = vmatprep.subr.mxu0 0.0
          %532 = vmatpush1.msra.mxu0 0.0
          %533 = vmatprep.subr.mxu0 0.0
          %534 = vmatpush1.msra.mxu0 0.0
          %535 = vmatprep.subr.mxu0 0.0
          %536 = vmatpush1.msra.mxu0 0.0
          %537 = vmatprep.subr.mxu0 0.0
          %538 = vmatpush1.msra.mxu0 0.0
          %539 = vmatprep.subr.mxu0 0.0
          %540 = vmatpush1.msra.mxu0 0.0
          %541 = vmatprep.subr.mxu0 0.0
          %542 = vmatpush1.msra.mxu0 0.0
          %543 = vmatprep.subr.mxu0 0.0
          %544 = vmatpush1.msra.mxu0 0.0
          %545 = vmatprep.subr.mxu0 0.0
          %546 = vmatpush1.msra.mxu0 0.0
          %547 = vmatprep.subr.mxu0 0.0
          %548 = vmatpush1.msra.mxu0 0.0
          %549 = vmatprep.subr.mxu0 0.0
          %550 = vmatpush1.msra.mxu0 0.0
          %551 = vmatprep.subr.mxu0 0.0
          %552 = vmatpush1.msra.mxu0 0.0
          %553 = vmatprep.subr.mxu0 0.0
          %554 = vmatpush1.msra.mxu0 0.0
          %555 = vmatprep.subr.mxu0 0.0
          %556 = vmatpush1.msra.mxu0 0.0
          %557 = vmatprep.subr.mxu0 0.0
          %558 = vmatpush1.msra.mxu0 0.0
          %559 = vmatprep.subr.mxu0 0.0
          %560 = vmatpush1.msra.mxu0 0.0
          %561 = vmatprep.subr.mxu0 0.0
          %562 = vmatpush1.msra.mxu0 0.0
          %563 = vmatprep.subr.mxu0 0.0
          %564 = vmatpush1.msra.mxu0 0.0
          %565 = vmatprep.subr.mxu0 0.0
          %566 = vmatpush1.msra.mxu0 0.0
          %567 = vmatprep.subr.mxu0 0.0
          %568 = vmatpush1.msra.mxu0 0.0
          %569 = vmatprep.subr.mxu0 0.0
          %570 = vmatpush1.msra.mxu0 0.0
          %571 = vmatprep.subr.mxu0 0.0
          %572 = vmatpush1.msra.mxu0 0.0
          %573 = vmatprep.subr.mxu0 0.0
          %574 = vmatpush1.msra.mxu0 0.0
          %575 = vmatprep.mubr.f32.mxu0 0.0
          %576 = vmatmul.mubr.f32.gmra.mrb[0].mxu0 %v509
          %v577 = vpop.f32.mrb[0].mxu0
          %v578 = vadd.f32 %v505, %v577
          %v579 = vpop.f32.mrb[0].mxu0
          %580 = vdwg.mxu0
          %v582 = vsel %vm434, %v334, 0
          %584 = vmatprep.subr.mxu0 0.0
          %585 = vmatpush1.msra.mxu0 %v433
          %586 = vmatprep.subr.mxu0 0.0
          %587 = vmatpush1.msra.mxu0 0.0
          %588 = vmatprep.subr.mxu0 0.0
          %589 = vmatpush1.msra.mxu0 0.0
          %590 = vmatprep.subr.mxu0 0.0
          %591 = vmatpush1.msra.mxu0 0.0
          %592 = vmatprep.subr.mxu0 0.0
          %593 = vmatpush1.msra.mxu0 0.0
          %594 = vmatprep.subr.mxu0 0.0
          %595 = vmatpush1.msra.mxu0 0.0
          %596 = vmatprep.subr.mxu0 0.0
          %597 = vmatpush1.msra.mxu0 0.0
          %598 = vmatprep.subr.mxu0 0.0
          %599 = vmatpush1.msra.mxu0 0.0
          %600 = vmatprep.subr.mxu0 0.0
          %601 = vmatpush1.msra.mxu0 0.0
          %602 = vmatprep.subr.mxu0 0.0
          %603 = vmatpush1.msra.mxu0 0.0
          %604 = vmatprep.subr.mxu0 0.0
          %605 = vmatpush1.msra.mxu0 0.0
          %606 = vmatprep.subr.mxu0 0.0
          %607 = vmatpush1.msra.mxu0 0.0
          %608 = vmatprep.subr.mxu0 0.0
          %609 = vmatpush1.msra.mxu0 0.0
          %610 = vmatprep.subr.mxu0 0.0
          %611 = vmatpush1.msra.mxu0 0.0
          %612 = vmatprep.subr.mxu0 0.0
          %613 = vmatpush1.msra.mxu0 0.0
          %614 = vmatprep.subr.mxu0 0.0
          %615 = vmatpush1.msra.mxu0 0.0
          %616 = vmatprep.subr.mxu0 0.0
          %617 = vmatpush1.msra.mxu0 0.0
          %618 = vmatprep.subr.mxu0 0.0
          %619 = vmatpush1.msra.mxu0 0.0
          %620 = vmatprep.subr.mxu0 0.0
          %621 = vmatpush1.msra.mxu0 0.0
          %622 = vmatprep.subr.mxu0 0.0
          %623 = vmatpush1.msra.mxu0 0.0
          %624 = vmatprep.subr.mxu0 0.0
          %625 = vmatpush1.msra.mxu0 0.0
          %626 = vmatprep.subr.mxu0 0.0
          %627 = vmatpush1.msra.mxu0 0.0
          %628 = vmatprep.subr.mxu0 0.0
          %629 = vmatpush1.msra.mxu0 0.0
          %630 = vmatprep.subr.mxu0 0.0
          %631 = vmatpush1.msra.mxu0 0.0
          %632 = vmatprep.subr.mxu0 0.0
          %633 = vmatpush1.msra.mxu0 0.0
          %634 = vmatprep.subr.mxu0 0.0
          %635 = vmatpush1.msra.mxu0 0.0
          %636 = vmatprep.subr.mxu0 0.0
          %637 = vmatpush1.msra.mxu0 0.0
          %638 = vmatprep.subr.mxu0 0.0
          %639 = vmatpush1.msra.mxu0 0.0
          %640 = vmatprep.subr.mxu0 0.0
          %641 = vmatpush1.msra.mxu0 0.0
          %642 = vmatprep.subr.mxu0 0.0
          %643 = vmatpush1.msra.mxu0 0.0
          %644 = vmatprep.subr.mxu0 0.0
          %645 = vmatpush1.msra.mxu0 0.0
          %646 = vmatprep.subr.mxu0 0.0
          %647 = vmatpush1.msra.mxu0 0.0
          %648 = vmatprep.mubr.f32.mxu0 0.0
          %649 = vmatmul.mubr.f32.gmra.mrb[0].mxu0 %v582
          %v650 = vpop.f32.mrb[0].mxu0
          %v651 = vadd.f32 0.0, %v650
          %v652 = vpop.f32.mrb[0].mxu0
          %653 = vdwg.mxu0
          %v655 = vsel %vm434, %v330, 0
          %657 = vmatprep.subr.mxu0 0.0
          %658 = vmatpush1.msra.mxu0 %v429
          %659 = vmatprep.subr.mxu0 0.0
          %660 = vmatpush1.msra.mxu0 0.0
          %661 = vmatprep.subr.mxu0 0.0
          %662 = vmatpush1.msra.mxu0 0.0
          %663 = vmatprep.subr.mxu0 0.0
          %664 = vmatpush1.msra.mxu0 0.0
          %665 = vmatprep.subr.mxu0 0.0
          %666 = vmatpush1.msra.mxu0 0.0
          %667 = vmatprep.subr.mxu0 0.0
          %668 = vmatpush1.msra.mxu0 0.0
          %669 = vmatprep.subr.mxu0 0.0
          %670 = vmatpush1.msra.mxu0 0.0
          %671 = vmatprep.subr.mxu0 0.0
          %672 = vmatpush1.msra.mxu0 0.0
          %673 = vmatprep.subr.mxu0 0.0
          %674 = vmatpush1.msra.mxu0 0.0
          %675 = vmatprep.subr.mxu0 0.0
          %676 = vmatpush1.msra.mxu0 0.0
          %677 = vmatprep.subr.mxu0 0.0
          %678 = vmatpush1.msra.mxu0 0.0
          %679 = vmatprep.subr.mxu0 0.0
          %680 = vmatpush1.msra.mxu0 0.0
          %681 = vmatprep.subr.mxu0 0.0
          %682 = vmatpush1.msra.mxu0 0.0
          %683 = vmatprep.subr.mxu0 0.0
          %684 = vmatpush1.msra.mxu0 0.0
          %685 = vmatprep.subr.mxu0 0.0
          %686 = vmatpush1.msra.mxu0 0.0
          %687 = vmatprep.subr.mxu0 0.0
          %688 = vmatpush1.msra.mxu0 0.0
          %689 = vmatprep.subr.mxu0 0.0
          %690 = vmatpush1.msra.mxu0 0.0
          %691 = vmatprep.subr.mxu0 0.0
          %692 = vmatpush1.msra.mxu0 0.0
          %693 = vmatprep.subr.mxu0 0.0
          %694 = vmatpush1.msra.mxu0 0.0
          %695 = vmatprep.subr.mxu0 0.0
          %696 = vmatpush1.msra.mxu0 0.0
          %697 = vmatprep.subr.mxu0 0.0
          %698 = vmatpush1.msra.mxu0 0.0
          %699 = vmatprep.subr.mxu0 0.0
          %700 = vmatpush1.msra.mxu0 0.0
          %701 = vmatprep.subr.mxu0 0.0
          %702 = vmatpush1.msra.mxu0 0.0
          %703 = vmatprep.subr.mxu0 0.0
          %704 = vmatpush1.msra.mxu0 0.0
          %705 = vmatprep.subr.mxu0 0.0
          %706 = vmatpush1.msra.mxu0 0.0
          %707 = vmatprep.subr.mxu0 0.0
          %708 = vmatpush1.msra.mxu0 0.0
          %709 = vmatprep.subr.mxu0 0.0
          %710 = vmatpush1.msra.mxu0 0.0
          %711 = vmatprep.subr.mxu0 0.0
          %712 = vmatpush1.msra.mxu0 0.0
          %713 = vmatprep.subr.mxu0 0.0
          %714 = vmatpush1.msra.mxu0 0.0
          %715 = vmatprep.subr.mxu0 0.0
          %716 = vmatpush1.msra.mxu0 0.0
          %717 = vmatprep.subr.mxu0 0.0
          %718 = vmatpush1.msra.mxu0 0.0
          %719 = vmatprep.subr.mxu0 0.0
          %720 = vmatpush1.msra.mxu0 0.0
          %721 = vmatprep.mubr.f32.mxu0 0.0
          %722 = vmatmul.mubr.f32.gmra.mrb[0].mxu0 %v655
          %v723 = vpop.f32.mrb[0].mxu0
          %v724 = vadd.f32 %v651, %v723
          %v725 = vpop.f32.mrb[0].mxu0
          %726 = vdwg.mxu0
          %727 = vmatprep.subr.mxu0 0.0
          %728 = vmatpush1.msra.mxu0 %v312
          %729 = vmatprep.subr.mxu0 0.0
          %730 = vmatpush1.msra.mxu0 %v313
          %731 = vmatprep.subr.mxu0 0.0
          %732 = vmatpush1.msra.mxu0 %v314
          %733 = vmatprep.subr.mxu0 0.0
          %734 = vmatpush1.msra.mxu0 %v315
          %735 = vmatprep.subr.mxu0 0.0
          %736 = vmatpush1.msra.mxu0 %v316
          %737 = vmatprep.subr.mxu0 0.0
          %738 = vmatpush1.msra.mxu0 %v317
          %739 = vmatprep.subr.mxu0 0.0
          %740 = vmatpush1.msra.mxu0 %v318
          %741 = vmatprep.subr.mxu0 0.0
          %742 = vmatpush1.msra.mxu0 %v319
          %743 = vmatprep.subr.mxu0 0.0
          %744 = vmatpush1.msra.mxu0 %v320
          %745 = vmatprep.subr.mxu0 0.0
          %746 = vmatpush1.msra.mxu0 %v321
          %747 = vmatprep.subr.mxu0 0.0
          %748 = vmatpush1.msra.mxu0 %v322
          %749 = vmatprep.subr.mxu0 0.0
          %750 = vmatpush1.msra.mxu0 %v323
          %751 = vmatprep.subr.mxu0 0.0
          %752 = vmatpush1.msra.mxu0 %v324
          %753 = vmatprep.subr.mxu0 0.0
          %754 = vmatpush1.msra.mxu0 %v325
          %755 = vmatprep.subr.mxu0 0.0
          %756 = vmatpush1.msra.mxu0 %v326
          %757 = vmatprep.subr.mxu0 0.0
          %758 = vmatpush1.msra.mxu0 %v327
          %759 = vmatprep.subr.mxu0 0.0
          %760 = vmatpush1.msra.mxu0 0.0
          %761 = vmatprep.subr.mxu0 0.0
          %762 = vmatpush1.msra.mxu0 0.0
          %763 = vmatprep.subr.mxu0 0.0
          %764 = vmatpush1.msra.mxu0 0.0
          %765 = vmatprep.subr.mxu0 0.0
          %766 = vmatpush1.msra.mxu0 0.0
          %767 = vmatprep.subr.mxu0 0.0
          %768 = vmatpush1.msra.mxu0 0.0
          %769 = vmatprep.subr.mxu0 0.0
          %770 = vmatpush1.msra.mxu0 0.0
          %771 = vmatprep.subr.mxu0 0.0
          %772 = vmatpush1.msra.mxu0 0.0
          %773 = vmatprep.subr.mxu0 0.0
          %774 = vmatpush1.msra.mxu0 0.0
          %775 = vmatprep.subr.mxu0 0.0
          %776 = vmatpush1.msra.mxu0 0.0
          %777 = vmatprep.subr.mxu0 0.0
          %778 = vmatpush1.msra.mxu0 0.0
          %779 = vmatprep.subr.mxu0 0.0
          %780 = vmatpush1.msra.mxu0 0.0
          %781 = vmatprep.subr.mxu0 0.0
          %782 = vmatpush1.msra.mxu0 0.0
          %783 = vmatprep.subr.mxu0 0.0
          %784 = vmatpush1.msra.mxu0 0.0
          %785 = vmatprep.subr.mxu0 0.0
          %786 = vmatpush1.msra.mxu0 0.0
          %787 = vmatprep.subr.mxu0 0.0
          %788 = vmatpush1.msra.mxu0 0.0
          %789 = vmatprep.subr.mxu0 0.0
          %790 = vmatpush1.msra.mxu0 0.0
          %791 = vmatprep.mubr.f32.mxu0 0.0
          %792 = vmatmul.mubr.f32.gmra.mrb[0].mxu0 %v724
          %v793 = vpop.f32.mrb[0].mxu0
          %v794 = vadd.f32 0.0, %v793
          %v795 = vpop.f32.mrb[0].mxu0
          %796 = vdwg.mxu0
          %v797 = vadd.f32 %v578, %v794
          %v798 = vadd.f32 %v797, %v335
          %v799 = vmax.f32 %v798, 0.0
          %800 = vmatprep.subr.mxu0 0.0
          %801 = vmatpush1.msra.mxu0 %v402
          %802 = vmatprep.subr.mxu0 0.0
          %803 = vmatpush1.msra.mxu0 %v403
          %804 = vmatprep.subr.mxu0 0.0
          %805 = vmatpush1.msra.mxu0 %v404
          %806 = vmatprep.subr.mxu0 0.0
          %807 = vmatpush1.msra.mxu0 %v405
          %808 = vmatprep.subr.mxu0 0.0
          %809 = vmatpush1.msra.mxu0 %v406
          %810 = vmatprep.subr.mxu0 0.0
          %811 = vmatpush1.msra.mxu0 %v407
          %812 = vmatprep.subr.mxu0 0.0
          %813 = vmatpush1.msra.mxu0 %v408
          %814 = vmatprep.subr.mxu0 0.0
          %815 = vmatpush1.msra.mxu0 %v409
          %816 = vmatprep.subr.mxu0 0.0
          %817 = vmatpush1.msra.mxu0 %v410
          %818 = vmatprep.subr.mxu0 0.0
          %819 = vmatpush1.msra.mxu0 %v411
          %820 = vmatprep.subr.mxu0 0.0
          %821 = vmatpush1.msra.mxu0 %v412
          %822 = vmatprep.subr.mxu0 0.0
          %823 = vmatpush1.msra.mxu0 %v413
          %824 = vmatprep.subr.mxu0 0.0
          %825 = vmatpush1.msra.mxu0 %v414
          %826 = vmatprep.subr.mxu0 0.0
          %827 = vmatpush1.msra.mxu0 %v415
          %828 = vmatprep.subr.mxu0 0.0
          %829 = vmatpush1.msra.mxu0 %v416
          %830 = vmatprep.subr.mxu0 0.0
          %831 = vmatpush1.msra.mxu0 %v417
          %832 = vmatprep.subr.mxu0 0.0
          %833 = vmatpush1.msra.mxu0 0.0
          %834 = vmatprep.subr.mxu0 0.0
          %835 = vmatpush1.msra.mxu0 0.0
          %836 = vmatprep.subr.mxu0 0.0
          %837 = vmatpush1.msra.mxu0 0.0
          %838 = vmatprep.subr.mxu0 0.0
          %839 = vmatpush1.msra.mxu0 0.0
          %840 = vmatprep.subr.mxu0 0.0
          %841 = vmatpush1.msra.mxu0 0.0
          %842 = vmatprep.subr.mxu0 0.0
          %843 = vmatpush1.msra.mxu0 0.0
          %844 = vmatprep.subr.mxu0 0.0
          %845 = vmatpush1.msra.mxu0 0.0
          %846 = vmatprep.subr.mxu0 0.0
          %847 = vmatpush1.msra.mxu0 0.0
          %848 = vmatprep.subr.mxu0 0.0
          %849 = vmatpush1.msra.mxu0 0.0
          %850 = vmatprep.subr.mxu0 0.0
          %851 = vmatpush1.msra.mxu0 0.0
          %852 = vmatprep.subr.mxu0 0.0
          %853 = vmatpush1.msra.mxu0 0.0
          %854 = vmatprep.subr.mxu0 0.0
          %855 = vmatpush1.msra.mxu0 0.0
          %856 = vmatprep.subr.mxu0 0.0
          %857 = vmatpush1.msra.mxu0 0.0
          %858 = vmatprep.subr.mxu0 0.0
          %859 = vmatpush1.msra.mxu0 0.0
          %860 = vmatprep.subr.mxu0 0.0
          %861 = vmatpush1.msra.mxu0 0.0
          %862 = vmatprep.subr.mxu0 0.0
          %863 = vmatpush1.msra.mxu0 0.0
          %864 = vmatprep.mubr.f32.mxu0 0.0
          %865 = vmatmul.mubr.f32.gmra.mrb[0].mxu0 %v799
          %v866 = vpop.f32.mrb[0].mxu0
          %v867 = vadd.f32 0.0, %v866
          %v868 = vpop.f32.mrb[0].mxu0
          %869 = vdwg.mxu0
          %s870 = scalar_lea.vmem [#allocation2], %s431
          %871 = vst [vmem:[%s870] sm:$0xff] %v867
        $region53: #{tiny_vgg_forward.1} parent=47 // loop_footer
          %s426 = sadd.s32 1, %s422
        $region54: #{tiny_vgg_forward.1} parent=47 // loop_footer_branch
          %421 = sbr.rel target = $region50
        $region55: #{tiny_vgg_forward.1} parent=47 // loop_exit
          _
        %s872 = scalar_lea.vmem %s1, 32
        %v873 = vld [vmem:[%s872] sm:$0xff]
        %s874 = scalar_lea.vmem %s1, 40
        %v875 = vld [vmem:[%s874] sm:$0xff]
        %s876 = scalar_lea.vmem %s1, 48
        %v877 = vld [vmem:[%s876] sm:$0xff]
        %s878 = scalar_lea.vmem %s1, 56
        %v879 = vld [vmem:[%s878] sm:$0xff]
        %s880 = scalar_lea.vmem %s2, 8
        %v881 = vld [vmem:[%s880] sm:$0xff]
        %v882 = vsub.s32 %v294, 1
        %v883 = vmul.u32 %v882, 2
        %vm884 = vcmp.eq.s32.totalorder %v277, %v883
        %vm885 = vcmp.eq.s32.totalorder %v278, %v883
        %vm886 = vcmp.eq.s32.totalorder %v279, %v883
        %vm887 = vcmp.eq.s32.totalorder %v280, %v883
        %vm888 = vcmp.eq.s32.totalorder %v281, %v883
        %vm889 = vcmp.eq.s32.totalorder %v282, %v883
        %vm890 = vcmp.eq.s32.totalorder %v283, %v883
        %vm891 = vcmp.eq.s32.totalorder %v284, %v883
        %vm892 = vcmp.eq.s32.totalorder %v285, %v883
        %vm893 = vcmp.eq.s32.totalorder %v286, %v883
        %vm894 = vcmp.eq.s32.totalorder %v287, %v883
        %vm895 = vcmp.eq.s32.totalorder %v288, %v883
        %vm896 = vcmp.eq.s32.totalorder %v289, %v883
        %vm897 = vcmp.eq.s32.totalorder %v290, %v883
        %vm898 = vcmp.eq.s32.totalorder %v291, %v883
        %vm899 = vcmp.eq.s32.totalorder %v292, %v883
        %vm900 = vmand %vm884, %vm368
        %vm901 = vmand %vm885, %vm368
        %vm902 = vmand %vm886, %vm368
        %vm903 = vmand %vm887, %vm368
        %vm904 = vmand %vm888, %vm368
        %vm905 = vmand %vm889, %vm368
        %vm906 = vmand %vm890, %vm368
        %vm907 = vmand %vm891, %vm368
        %vm908 = vmand %vm892, %vm368
        %vm909 = vmand %vm893, %vm368
        %vm910 = vmand %vm894, %vm368
        %vm911 = vmand %vm895, %vm368
        %vm912 = vmand %vm896, %vm368
        %vm913 = vmand %vm897, %vm368
        %vm914 = vmand %vm898, %vm368
        %vm915 = vmand %vm899, %vm368
        %vm916 = vcmp.le.s32.totalorder %v294, 33
        %vm917 = vmand %vm900, %vm916
        %vm918 = vmand %vm901, %vm916
        %vm919 = vmand %vm902, %vm916
        %vm920 = vmand %vm903, %vm916
        %vm921 = vmand %vm904, %vm916
        %vm922 = vmand %vm905, %vm916
        %vm923 = vmand %vm906, %vm916
        %vm924 = vmand %vm907, %vm916
        %vm925 = vmand %vm908, %vm916
        %vm926 = vmand %vm909, %vm916
        %vm927 = vmand %vm910, %vm916
        %vm928 = vmand %vm911, %vm916
        %vm929 = vmand %vm912, %vm916
        %vm930 = vmand %vm913, %vm916
        %vm931 = vmand %vm914, %vm916
        %vm932 = vmand %vm915, %vm916
        %v933 = vsel %vm917, 1.0, 0.0
        %v934 = vsel %vm918, 1.0, 0.0
        %v935 = vsel %vm919, 1.0, 0.0
        %v936 = vsel %vm920, 1.0, 0.0
        %v937 = vsel %vm921, 1.0, 0.0
        %v938 = vsel %vm922, 1.0, 0.0
        %v939 = vsel %vm923, 1.0, 0.0
        %v940 = vsel %vm924, 1.0, 0.0
        %v941 = vsel %vm925, 1.0, 0.0
        %v942 = vsel %vm926, 1.0, 0.0
        %v943 = vsel %vm927, 1.0, 0.0
        %v944 = vsel %vm928, 1.0, 0.0
        %v945 = vsel %vm929, 1.0, 0.0
        %v946 = vsel %vm930, 1.0, 0.0
        %v947 = vsel %vm931, 1.0, 0.0
        %v948 = vsel %vm932, 1.0, 0.0
        %949 = vst [vmem:[#allocation3] sm:$0xff] 0.0
        %s950 = scalar_lea.vmem [#allocation3], 272
        %951 = vst [vmem:[%s950] sm:$0xff] 0.0
        loop: start=0, step=1, limit=33
        $region56: #{tiny_vgg_forward.1} parent=47 // loop_pre_header
          _
        $region57: #{tiny_vgg_forward.1} parent=47 // loop_header
          %s953 = sphi 0, %s957
          %p954 = scmp.ge.s32.totalorder %s953, 33
        $region58: #{tiny_vgg_forward.1} parent=47 // loop_header_branch
          %956 = sbr.rel (%p954) target = $region62
        $region59: #{tiny_vgg_forward.1} parent=47 // loop_body
          %s958 = smul.u32 %s953, 2
          %s959 = smul.u32 %s958, 8
          %s960 = scalar_lea.vmem [#allocation2], %s959
          %v961 = vld [vmem:[%s960] sm:$0xff]
          %s962 = sadd.s32 %s958, 1
          %s963 = smul.u32 %s962, 8
          %s964 = scalar_lea.vmem [#allocation2], %s963
          %v965 = vld [vmem:[%s964] sm:$0xff]
          %s966 = sadd.s32 %s958, 2
          %s967 = smul.u32 %s966, 8
          %s968 = scalar_lea.vmem [#allocation2], %s967
          %v969 = vld [vmem:[%s968] sm:$0xff]
          %vm970 = vcmask 64512
          %v972 = vsel %vm970, %v877, 0
          %974 = vmatprep.subr.mxu0 0.0
          %975 = vmatpush1.msra.mxu0 %v965
          %976 = vmatprep.subr.mxu0 0.0
          %977 = vmatpush1.msra.mxu0 0.0
          %978 = vmatprep.subr.mxu0 0.0
          %979 = vmatpush1.msra.mxu0 0.0
          %980 = vmatprep.subr.mxu0 0.0
          %981 = vmatpush1.msra.mxu0 0.0
          %982 = vmatprep.subr.mxu0 0.0
          %983 = vmatpush1.msra.mxu0 0.0
          %984 = vmatprep.subr.mxu0 0.0
          %985 = vmatpush1.msra.mxu0 0.0
          %986 = vmatprep.subr.mxu0 0.0
          %987 = vmatpush1.msra.mxu0 0.0
          %988 = vmatprep.subr.mxu0 0.0
          %989 = vmatpush1.msra.mxu0 0.0
          %990 = vmatprep.subr.mxu0 0.0
          %991 = vmatpush1.msra.mxu0 0.0
          %992 = vmatprep.subr.mxu0 0.0
          %993 = vmatpush1.msra.mxu0 0.0
          %994 = vmatprep.subr.mxu0 0.0
          %995 = vmatpush1.msra.mxu0 0.0
          %996 = vmatprep.subr.mxu0 0.0
          %997 = vmatpush1.msra.mxu0 0.0
          %998 = vmatprep.subr.mxu0 0.0
          %999 = vmatpush1.msra.mxu0 0.0
          %1000 = vmatprep.subr.mxu0 0.0
          %1001 = vmatpush1.msra.mxu0 0.0
          %1002 = vmatprep.subr.mxu0 0.0
          %1003 = vmatpush1.msra.mxu0 0.0
          %1004 = vmatprep.subr.mxu0 0.0
          %1005 = vmatpush1.msra.mxu0 0.0
          %1006 = vmatprep.subr.mxu0 0.0
          %1007 = vmatpush1.msra.mxu0 0.0
          %1008 = vmatprep.subr.mxu0 0.0
          %1009 = vmatpush1.msra.mxu0 0.0
          %1010 = vmatprep.subr.mxu0 0.0
          %1011 = vmatpush1.msra.mxu0 0.0
          %1012 = vmatprep.subr.mxu0 0.0
          %1013 = vmatpush1.msra.mxu0 0.0
          %1014 = vmatprep.subr.mxu0 0.0
          %1015 = vmatpush1.msra.mxu0 0.0
          %1016 = vmatprep.subr.mxu0 0.0
          %1017 = vmatpush1.msra.mxu0 0.0
          %1018 = vmatprep.subr.mxu0 0.0
          %1019 = vmatpush1.msra.mxu0 0.0
          %1020 = vmatprep.subr.mxu0 0.0
          %1021 = vmatpush1.msra.mxu0 0.0
          %1022 = vmatprep.subr.mxu0 0.0
          %1023 = vmatpush1.msra.mxu0 0.0
          %1024 = vmatprep.subr.mxu0 0.0
          %1025 = vmatpush1.msra.mxu0 0.0
          %1026 = vmatprep.subr.mxu0 0.0
          %1027 = vmatpush1.msra.mxu0 0.0
          %1028 = vmatprep.subr.mxu0 0.0
          %1029 = vmatpush1.msra.mxu0 0.0
          %1030 = vmatprep.subr.mxu0 0.0
          %1031 = vmatpush1.msra.mxu0 0.0
          %1032 = vmatprep.subr.mxu0 0.0
          %1033 = vmatpush1.msra.mxu0 0.0
          %1034 = vmatprep.subr.mxu0 0.0
          %1035 = vmatpush1.msra.mxu0 0.0
          %1036 = vmatprep.subr.mxu0 0.0
          %1037 = vmatpush1.msra.mxu0 0.0
          %1038 = vmatprep.mubr.f32.mxu0 0.0
          %1039 = vmatmul.mubr.f32.gmra.mrb[0].mxu0 %v972
          %v1040 = vpop.f32.mrb[0].mxu0
          %v1041 = vadd.f32 0.0, %v1040
          %v1042 = vpop.f32.mrb[0].mxu0
          %1043 = vdwg.mxu0
          %v1045 = vsel %vm970, %v873, 0
          %1047 = vmatprep.subr.mxu0 0.0
          %1048 = vmatpush1.msra.mxu0 %v961
          %1049 = vmatprep.subr.mxu0 0.0
          %1050 = vmatpush1.msra.mxu0 0.0
          %1051 = vmatprep.subr.mxu0 0.0
          %1052 = vmatpush1.msra.mxu0 0.0
          %1053 = vmatprep.subr.mxu0 0.0
          %1054 = vmatpush1.msra.mxu0 0.0
          %1055 = vmatprep.subr.mxu0 0.0
          %1056 = vmatpush1.msra.mxu0 0.0
          %1057 = vmatprep.subr.mxu0 0.0
          %1058 = vmatpush1.msra.mxu0 0.0
          %1059 = vmatprep.subr.mxu0 0.0
          %1060 = vmatpush1.msra.mxu0 0.0
          %1061 = vmatprep.subr.mxu0 0.0
          %1062 = vmatpush1.msra.mxu0 0.0
          %1063 = vmatprep.subr.mxu0 0.0
          %1064 = vmatpush1.msra.mxu0 0.0
          %1065 = vmatprep.subr.mxu0 0.0
          %1066 = vmatpush1.msra.mxu0 0.0
          %1067 = vmatprep.subr.mxu0 0.0
          %1068 = vmatpush1.msra.mxu0 0.0
          %1069 = vmatprep.subr.mxu0 0.0
          %1070 = vmatpush1.msra.mxu0 0.0
          %1071 = vmatprep.subr.mxu0 0.0
          %1072 = vmatpush1.msra.mxu0 0.0
          %1073 = vmatprep.subr.mxu0 0.0
          %1074 = vmatpush1.msra.mxu0 0.0
          %1075 = vmatprep.subr.mxu0 0.0
          %1076 = vmatpush1.msra.mxu0 0.0
          %1077 = vmatprep.subr.mxu0 0.0
          %1078 = vmatpush1.msra.mxu0 0.0
          %1079 = vmatprep.subr.mxu0 0.0
          %1080 = vmatpush1.msra.mxu0 0.0
          %1081 = vmatprep.subr.mxu0 0.0
          %1082 = vmatpush1.msra.mxu0 0.0
          %1083 = vmatprep.subr.mxu0 0.0
          %1084 = vmatpush1.msra.mxu0 0.0
          %1085 = vmatprep.subr.mxu0 0.0
          %1086 = vmatpush1.msra.mxu0 0.0
          %1087 = vmatprep.subr.mxu0 0.0
          %1088 = vmatpush1.msra.mxu0 0.0
          %1089 = vmatprep.subr.mxu0 0.0
          %1090 = vmatpush1.msra.mxu0 0.0
          %1091 = vmatprep.subr.mxu0 0.0
          %1092 = vmatpush1.msra.mxu0 0.0
          %1093 = vmatprep.subr.mxu0 0.0
          %1094 = vmatpush1.msra.mxu0 0.0
          %1095 = vmatprep.subr.mxu0 0.0
          %1096 = vmatpush1.msra.mxu0 0.0
          %1097 = vmatprep.subr.mxu0 0.0
          %1098 = vmatpush1.msra.mxu0 0.0
          %1099 = vmatprep.subr.mxu0 0.0
          %1100 = vmatpush1.msra.mxu0 0.0
          %1101 = vmatprep.subr.mxu0 0.0
          %1102 = vmatpush1.msra.mxu0 0.0
          %1103 = vmatprep.subr.mxu0 0.0
          %1104 = vmatpush1.msra.mxu0 0.0
          %1105 = vmatprep.subr.mxu0 0.0
          %1106 = vmatpush1.msra.mxu0 0.0
          %1107 = vmatprep.subr.mxu0 0.0
          %1108 = vmatpush1.msra.mxu0 0.0
          %1109 = vmatprep.subr.mxu0 0.0
          %1110 = vmatpush1.msra.mxu0 0.0
          %1111 = vmatprep.mubr.f32.mxu0 0.0
          %1112 = vmatmul.mubr.f32.gmra.mrb[0].mxu0 %v1045
          %v1113 = vpop.f32.mrb[0].mxu0
          %v1114 = vadd.f32 %v1041, %v1113
          %v1115 = vpop.f32.mrb[0].mxu0
          %1116 = vdwg.mxu0
          %v1118 = vsel %vm970, %v879, 0
          %1120 = vmatprep.subr.mxu0 0.0
          %1121 = vmatpush1.msra.mxu0 %v965
          %1122 = vmatprep.subr.mxu0 0.0
          %1123 = vmatpush1.msra.mxu0 0.0
          %1124 = vmatprep.subr.mxu0 0.0
          %1125 = vmatpush1.msra.mxu0 0.0
          %1126 = vmatprep.subr.mxu0 0.0
          %1127 = vmatpush1.msra.mxu0 0.0
          %1128 = vmatprep.subr.mxu0 0.0
          %1129 = vmatpush1.msra.mxu0 0.0
          %1130 = vmatprep.subr.mxu0 0.0
          %1131 = vmatpush1.msra.mxu0 0.0
          %1132 = vmatprep.subr.mxu0 0.0
          %1133 = vmatpush1.msra.mxu0 0.0
          %1134 = vmatprep.subr.mxu0 0.0
          %1135 = vmatpush1.msra.mxu0 0.0
          %1136 = vmatprep.subr.mxu0 0.0
          %1137 = vmatpush1.msra.mxu0 0.0
          %1138 = vmatprep.subr.mxu0 0.0
          %1139 = vmatpush1.msra.mxu0 0.0
          %1140 = vmatprep.subr.mxu0 0.0
          %1141 = vmatpush1.msra.mxu0 0.0
          %1142 = vmatprep.subr.mxu0 0.0
          %1143 = vmatpush1.msra.mxu0 0.0
          %1144 = vmatprep.subr.mxu0 0.0
          %1145 = vmatpush1.msra.mxu0 0.0
          %1146 = vmatprep.subr.mxu0 0.0
          %1147 = vmatpush1.msra.mxu0 0.0
          %1148 = vmatprep.subr.mxu0 0.0
          %1149 = vmatpush1.msra.mxu0 0.0
          %1150 = vmatprep.subr.mxu0 0.0
          %1151 = vmatpush1.msra.mxu0 0.0
          %1152 = vmatprep.subr.mxu0 0.0
          %1153 = vmatpush1.msra.mxu0 0.0
          %1154 = vmatprep.subr.mxu0 0.0
          %1155 = vmatpush1.msra.mxu0 0.0
          %1156 = vmatprep.subr.mxu0 0.0
          %1157 = vmatpush1.msra.mxu0 0.0
          %1158 = vmatprep.subr.mxu0 0.0
          %1159 = vmatpush1.msra.mxu0 0.0
          %1160 = vmatprep.subr.mxu0 0.0
          %1161 = vmatpush1.msra.mxu0 0.0
          %1162 = vmatprep.subr.mxu0 0.0
          %1163 = vmatpush1.msra.mxu0 0.0
          %1164 = vmatprep.subr.mxu0 0.0
          %1165 = vmatpush1.msra.mxu0 0.0
          %1166 = vmatprep.subr.mxu0 0.0
          %1167 = vmatpush1.msra.mxu0 0.0
          %1168 = vmatprep.subr.mxu0 0.0
          %1169 = vmatpush1.msra.mxu0 0.0
          %1170 = vmatprep.subr.mxu0 0.0
          %1171 = vmatpush1.msra.mxu0 0.0
          %1172 = vmatprep.subr.mxu0 0.0
          %1173 = vmatpush1.msra.mxu0 0.0
          %1174 = vmatprep.subr.mxu0 0.0
          %1175 = vmatpush1.msra.mxu0 0.0
          %1176 = vmatprep.subr.mxu0 0.0
          %1177 = vmatpush1.msra.mxu0 0.0
          %1178 = vmatprep.subr.mxu0 0.0
          %1179 = vmatpush1.msra.mxu0 0.0
          %1180 = vmatprep.subr.mxu0 0.0
          %1181 = vmatpush1.msra.mxu0 0.0
          %1182 = vmatprep.subr.mxu0 0.0
          %1183 = vmatpush1.msra.mxu0 0.0
          %1184 = vmatprep.mubr.f32.mxu0 0.0
          %1185 = vmatmul.mubr.f32.gmra.mrb[0].mxu0 %v1118
          %v1186 = vpop.f32.mrb[0].mxu0
          %v1187 = vadd.f32 0.0, %v1186
          %v1188 = vpop.f32.mrb[0].mxu0
          %1189 = vdwg.mxu0
          %v1191 = vsel %vm970, %v875, 0
          %1193 = vmatprep.subr.mxu0 0.0
          %1194 = vmatpush1.msra.mxu0 %v961
          %1195 = vmatprep.subr.mxu0 0.0
          %1196 = vmatpush1.msra.mxu0 0.0
          %1197 = vmatprep.subr.mxu0 0.0
          %1198 = vmatpush1.msra.mxu0 0.0
          %1199 = vmatprep.subr.mxu0 0.0
          %1200 = vmatpush1.msra.mxu0 0.0
          %1201 = vmatprep.subr.mxu0 0.0
          %1202 = vmatpush1.msra.mxu0 0.0
          %1203 = vmatprep.subr.mxu0 0.0
          %1204 = vmatpush1.msra.mxu0 0.0
          %1205 = vmatprep.subr.mxu0 0.0
          %1206 = vmatpush1.msra.mxu0 0.0
          %1207 = vmatprep.subr.mxu0 0.0
          %1208 = vmatpush1.msra.mxu0 0.0
          %1209 = vmatprep.subr.mxu0 0.0
          %1210 = vmatpush1.msra.mxu0 0.0
          %1211 = vmatprep.subr.mxu0 0.0
          %1212 = vmatpush1.msra.mxu0 0.0
          %1213 = vmatprep.subr.mxu0 0.0
          %1214 = vmatpush1.msra.mxu0 0.0
          %1215 = vmatprep.subr.mxu0 0.0
          %1216 = vmatpush1.msra.mxu0 0.0
          %1217 = vmatprep.subr.mxu0 0.0
          %1218 = vmatpush1.msra.mxu0 0.0
          %1219 = vmatprep.subr.mxu0 0.0
          %1220 = vmatpush1.msra.mxu0 0.0
          %1221 = vmatprep.subr.mxu0 0.0
          %1222 = vmatpush1.msra.mxu0 0.0
          %1223 = vmatprep.subr.mxu0 0.0
          %1224 = vmatpush1.msra.mxu0 0.0
          %1225 = vmatprep.subr.mxu0 0.0
          %1226 = vmatpush1.msra.mxu0 0.0
          %1227 = vmatprep.subr.mxu0 0.0
          %1228 = vmatpush1.msra.mxu0 0.0
          %1229 = vmatprep.subr.mxu0 0.0
          %1230 = vmatpush1.msra.mxu0 0.0
          %1231 = vmatprep.subr.mxu0 0.0
          %1232 = vmatpush1.msra.mxu0 0.0
          %1233 = vmatprep.subr.mxu0 0.0
          %1234 = vmatpush1.msra.mxu0 0.0
          %1235 = vmatprep.subr.mxu0 0.0
          %1236 = vmatpush1.msra.mxu0 0.0
          %1237 = vmatprep.subr.mxu0 0.0
          %1238 = vmatpush1.msra.mxu0 0.0
          %1239 = vmatprep.subr.mxu0 0.0
          %1240 = vmatpush1.msra.mxu0 0.0
          %1241 = vmatprep.subr.mxu0 0.0
          %1242 = vmatpush1.msra.mxu0 0.0
          %1243 = vmatprep.subr.mxu0 0.0
          %1244 = vmatpush1.msra.mxu0 0.0
          %1245 = vmatprep.subr.mxu0 0.0
          %1246 = vmatpush1.msra.mxu0 0.0
          %1247 = vmatprep.subr.mxu0 0.0
          %1248 = vmatpush1.msra.mxu0 0.0
          %1249 = vmatprep.subr.mxu0 0.0
          %1250 = vmatpush1.msra.mxu0 0.0
          %1251 = vmatprep.subr.mxu0 0.0
          %1252 = vmatpush1.msra.mxu0 0.0
          %1253 = vmatprep.subr.mxu0 0.0
          %1254 = vmatpush1.msra.mxu0 0.0
          %1255 = vmatprep.subr.mxu0 0.0
          %1256 = vmatpush1.msra.mxu0 0.0
          %1257 = vmatprep.mubr.f32.mxu0 0.0
          %1258 = vmatmul.mubr.f32.gmra.mrb[0].mxu0 %v1191
          %v1259 = vpop.f32.mrb[0].mxu0
          %v1260 = vadd.f32 %v1187, %v1259
          %v1261 = vpop.f32.mrb[0].mxu0
          %1262 = vdwg.mxu0
          %1263 = vmatprep.subr.mxu0 0.0
          %1264 = vmatpush1.msra.mxu0 %v312
          %1265 = vmatprep.subr.mxu0 0.0
          %1266 = vmatpush1.msra.mxu0 %v313
          %1267 = vmatprep.subr.mxu0 0.0
          %1268 = vmatpush1.msra.mxu0 %v314
          %1269 = vmatprep.subr.mxu0 0.0
          %1270 = vmatpush1.msra.mxu0 %v315
          %1271 = vmatprep.subr.mxu0 0.0
          %1272 = vmatpush1.msra.mxu0 %v316
          %1273 = vmatprep.subr.mxu0 0.0
          %1274 = vmatpush1.msra.mxu0 %v317
          %1275 = vmatprep.subr.mxu0 0.0
          %1276 = vmatpush1.msra.mxu0 %v318
          %1277 = vmatprep.subr.mxu0 0.0
          %1278 = vmatpush1.msra.mxu0 %v319
          %1279 = vmatprep.subr.mxu0 0.0
          %1280 = vmatpush1.msra.mxu0 %v320
          %1281 = vmatprep.subr.mxu0 0.0
          %1282 = vmatpush1.msra.mxu0 %v321
          %1283 = vmatprep.subr.mxu0 0.0
          %1284 = vmatpush1.msra.mxu0 %v322
          %1285 = vmatprep.subr.mxu0 0.0
          %1286 = vmatpush1.msra.mxu0 %v323
          %1287 = vmatprep.subr.mxu0 0.0
          %1288 = vmatpush1.msra.mxu0 %v324
          %1289 = vmatprep.subr.mxu0 0.0
          %1290 = vmatpush1.msra.mxu0 %v325
          %1291 = vmatprep.subr.mxu0 0.0
          %1292 = vmatpush1.msra.mxu0 %v326
          %1293 = vmatprep.subr.mxu0 0.0
          %1294 = vmatpush1.msra.mxu0 %v327
          %1295 = vmatprep.subr.mxu0 0.0
          %1296 = vmatpush1.msra.mxu0 0.0
          %1297 = vmatprep.subr.mxu0 0.0
          %1298 = vmatpush1.msra.mxu0 0.0
          %1299 = vmatprep.subr.mxu0 0.0
          %1300 = vmatpush1.msra.mxu0 0.0
          %1301 = vmatprep.subr.mxu0 0.0
          %1302 = vmatpush1.msra.mxu0 0.0
          %1303 = vmatprep.subr.mxu0 0.0
          %1304 = vmatpush1.msra.mxu0 0.0
          %1305 = vmatprep.subr.mxu0 0.0
          %1306 = vmatpush1.msra.mxu0 0.0
          %1307 = vmatprep.subr.mxu0 0.0
          %1308 = vmatpush1.msra.mxu0 0.0
          %1309 = vmatprep.subr.mxu0 0.0
          %1310 = vmatpush1.msra.mxu0 0.0
          %1311 = vmatprep.subr.mxu0 0.0
          %1312 = vmatpush1.msra.mxu0 0.0
          %1313 = vmatprep.subr.mxu0 0.0
          %1314 = vmatpush1.msra.mxu0 0.0
          %1315 = vmatprep.subr.mxu0 0.0
          %1316 = vmatpush1.msra.mxu0 0.0
          %1317 = vmatprep.subr.mxu0 0.0
          %1318 = vmatpush1.msra.mxu0 0.0
          %1319 = vmatprep.subr.mxu0 0.0
          %1320 = vmatpush1.msra.mxu0 0.0
          %1321 = vmatprep.subr.mxu0 0.0
          %1322 = vmatpush1.msra.mxu0 0.0
          %1323 = vmatprep.subr.mxu0 0.0
          %1324 = vmatpush1.msra.mxu0 0.0
          %1325 = vmatprep.subr.mxu0 0.0
          %1326 = vmatpush1.msra.mxu0 0.0
          %1327 = vmatprep.mubr.f32.mxu0 0.0
          %1328 = vmatmul.mubr.f32.gmra.mrb[0].mxu0 %v1260
          %v1329 = vpop.f32.mrb[0].mxu0
          %v1330 = vadd.f32 0.0, %v1329
          %v1331 = vpop.f32.mrb[0].mxu0
          %1332 = vdwg.mxu0
          %v1333 = vadd.f32 %v1114, %v1330
          %v1334 = vadd.f32 %v1333, %v881
          %v1335 = vmax.f32 %v1334, 0.0
          %1336 = vmatprep.subr.mxu0 0.0
          %1337 = vmatpush1.msra.mxu0 %v969
          %1338 = vmatprep.subr.mxu0 0.0
          %1339 = vmatpush1.msra.mxu0 0.0
          %1340 = vmatprep.subr.mxu0 0.0
          %1341 = vmatpush1.msra.mxu0 0.0
          %1342 = vmatprep.subr.mxu0 0.0
          %1343 = vmatpush1.msra.mxu0 0.0
          %1344 = vmatprep.subr.mxu0 0.0
          %1345 = vmatpush1.msra.mxu0 0.0
          %1346 = vmatprep.subr.mxu0 0.0
          %1347 = vmatpush1.msra.mxu0 0.0
          %1348 = vmatprep.subr.mxu0 0.0
          %1349 = vmatpush1.msra.mxu0 0.0
          %1350 = vmatprep.subr.mxu0 0.0
          %1351 = vmatpush1.msra.mxu0 0.0
          %1352 = vmatprep.subr.mxu0 0.0
          %1353 = vmatpush1.msra.mxu0 0.0
          %1354 = vmatprep.subr.mxu0 0.0
          %1355 = vmatpush1.msra.mxu0 0.0
          %1356 = vmatprep.subr.mxu0 0.0
          %1357 = vmatpush1.msra.mxu0 0.0
          %1358 = vmatprep.subr.mxu0 0.0
          %1359 = vmatpush1.msra.mxu0 0.0
          %1360 = vmatprep.subr.mxu0 0.0
          %1361 = vmatpush1.msra.mxu0 0.0
          %1362 = vmatprep.subr.mxu0 0.0
          %1363 = vmatpush1.msra.mxu0 0.0
          %1364 = vmatprep.subr.mxu0 0.0
          %1365 = vmatpush1.msra.mxu0 0.0
          %1366 = vmatprep.subr.mxu0 0.0
          %1367 = vmatpush1.msra.mxu0 0.0
          %1368 = vmatprep.subr.mxu0 0.0
          %1369 = vmatpush1.msra.mxu0 0.0
          %1370 = vmatprep.subr.mxu0 0.0
          %1371 = vmatpush1.msra.mxu0 0.0
          %1372 = vmatprep.subr.mxu0 0.0
          %1373 = vmatpush1.msra.mxu0 0.0
          %1374 = vmatprep.subr.mxu0 0.0
          %1375 = vmatpush1.msra.mxu0 0.0
          %1376 = vmatprep.subr.mxu0 0.0
          %1377 = vmatpush1.msra.mxu0 0.0
          %1378 = vmatprep.subr.mxu0 0.0
          %1379 = vmatpush1.msra.mxu0 0.0
          %1380 = vmatprep.subr.mxu0 0.0
          %1381 = vmatpush1.msra.mxu0 0.0
          %1382 = vmatprep.subr.mxu0 0.0
          %1383 = vmatpush1.msra.mxu0 0.0
          %1384 = vmatprep.subr.mxu0 0.0
          %1385 = vmatpush1.msra.mxu0 0.0
          %1386 = vmatprep.subr.mxu0 0.0
          %1387 = vmatpush1.msra.mxu0 0.0
          %1388 = vmatprep.subr.mxu0 0.0
          %1389 = vmatpush1.msra.mxu0 0.0
          %1390 = vmatprep.subr.mxu0 0.0
          %1391 = vmatpush1.msra.mxu0 0.0
          %1392 = vmatprep.subr.mxu0 0.0
          %1393 = vmatpush1.msra.mxu0 0.0
          %1394 = vmatprep.subr.mxu0 0.0
          %1395 = vmatpush1.msra.mxu0 0.0
          %1396 = vmatprep.subr.mxu0 0.0
          %1397 = vmatpush1.msra.mxu0 0.0
          %1398 = vmatprep.subr.mxu0 0.0
          %1399 = vmatpush1.msra.mxu0 0.0
          %1400 = vmatprep.mubr.f32.mxu0 0.0
          %1401 = vmatmul.mubr.f32.gmra.mrb[0].mxu0 %v972
          %v1402 = vpop.f32.mrb[0].mxu0
          %v1403 = vadd.f32 0.0, %v1402
          %v1404 = vpop.f32.mrb[0].mxu0
          %1405 = vdwg.mxu0
          %1406 = vmatprep.subr.mxu0 0.0
          %1407 = vmatpush1.msra.mxu0 %v965
          %1408 = vmatprep.subr.mxu0 0.0
          %1409 = vmatpush1.msra.mxu0 0.0
          %1410 = vmatprep.subr.mxu0 0.0
          %1411 = vmatpush1.msra.mxu0 0.0
          %1412 = vmatprep.subr.mxu0 0.0
          %1413 = vmatpush1.msra.mxu0 0.0
          %1414 = vmatprep.subr.mxu0 0.0
          %1415 = vmatpush1.msra.mxu0 0.0
          %1416 = vmatprep.subr.mxu0 0.0
          %1417 = vmatpush1.msra.mxu0 0.0
          %1418 = vmatprep.subr.mxu0 0.0
          %1419 = vmatpush1.msra.mxu0 0.0
          %1420 = vmatprep.subr.mxu0 0.0
          %1421 = vmatpush1.msra.mxu0 0.0
          %1422 = vmatprep.subr.mxu0 0.0
          %1423 = vmatpush1.msra.mxu0 0.0
          %1424 = vmatprep.subr.mxu0 0.0
          %1425 = vmatpush1.msra.mxu0 0.0
          %1426 = vmatprep.subr.mxu0 0.0
          %1427 = vmatpush1.msra.mxu0 0.0
          %1428 = vmatprep.subr.mxu0 0.0
          %1429 = vmatpush1.msra.mxu0 0.0
          %1430 = vmatprep.subr.mxu0 0.0
          %1431 = vmatpush1.msra.mxu0 0.0
          %1432 = vmatprep.subr.mxu0 0.0
          %1433 = vmatpush1.msra.mxu0 0.0
          %1434 = vmatprep.subr.mxu0 0.0
          %1435 = vmatpush1.msra.mxu0 0.0
          %1436 = vmatprep.subr.mxu0 0.0
          %1437 = vmatpush1.msra.mxu0 0.0
          %1438 = vmatprep.subr.mxu0 0.0
          %1439 = vmatpush1.msra.mxu0 0.0
          %1440 = vmatprep.subr.mxu0 0.0
          %1441 = vmatpush1.msra.mxu0 0.0
          %1442 = vmatprep.subr.mxu0 0.0
          %1443 = vmatpush1.msra.mxu0 0.0
          %1444 = vmatprep.subr.mxu0 0.0
          %1445 = vmatpush1.msra.mxu0 0.0
          %1446 = vmatprep.subr.mxu0 0.0
          %1447 = vmatpush1.msra.mxu0 0.0
          %1448 = vmatprep.subr.mxu0 0.0
          %1449 = vmatpush1.msra.mxu0 0.0
          %1450 = vmatprep.subr.mxu0 0.0
          %1451 = vmatpush1.msra.mxu0 0.0
          %1452 = vmatprep.subr.mxu0 0.0
          %1453 = vmatpush1.msra.mxu0 0.0
          %1454 = vmatprep.subr.mxu0 0.0
          %1455 = vmatpush1.msra.mxu0 0.0
          %1456 = vmatprep.subr.mxu0 0.0
          %1457 = vmatpush1.msra.mxu0 0.0
          %1458 = vmatprep.subr.mxu0 0.0
          %1459 = vmatpush1.msra.mxu0 0.0
          %1460 = vmatprep.subr.mxu0 0.0
          %1461 = vmatpush1.msra.mxu0 0.0
          %1462 = vmatprep.subr.mxu0 0.0
          %1463 = vmatpush1.msra.mxu0 0.0
          %1464 = vmatprep.subr.mxu0 0.0
          %1465 = vmatpush1.msra.mxu0 0.0
          %1466 = vmatprep.subr.mxu0 0.0
          %1467 = vmatpush1.msra.mxu0 0.0
          %1468 = vmatprep.subr.mxu0 0.0
          %1469 = vmatpush1.msra.mxu0 0.0
          %1470 = vmatprep.mubr.f32.mxu0 0.0
          %1471 = vmatmul.mubr.f32.gmra.mrb[0].mxu0 %v1045
          %v1472 = vpop.f32.mrb[0].mxu0
          %v1473 = vadd.f32 %v1403, %v1472
          %v1474 = vpop.f32.mrb[0].mxu0
          %1475 = vdwg.mxu0
          %1476 = vmatprep.subr.mxu0 0.0
          %1477 = vmatpush1.msra.mxu0 %v969
          %1478 = vmatprep.subr.mxu0 0.0
          %1479 = vmatpush1.msra.mxu0 0.0
          %1480 = vmatprep.subr.mxu0 0.0
          %1481 = vmatpush1.msra.mxu0 0.0
          %1482 = vmatprep.subr.mxu0 0.0
          %1483 = vmatpush1.msra.mxu0 0.0
          %1484 = vmatprep.subr.mxu0 0.0
          %1485 = vmatpush1.msra.mxu0 0.0
          %1486 = vmatprep.subr.mxu0 0.0
          %1487 = vmatpush1.msra.mxu0 0.0
          %1488 = vmatprep.subr.mxu0 0.0
          %1489 = vmatpush1.msra.mxu0 0.0
          %1490 = vmatprep.subr.mxu0 0.0
          %1491 = vmatpush1.msra.mxu0 0.0
          %1492 = vmatprep.subr.mxu0 0.0
          %1493 = vmatpush1.msra.mxu0 0.0
          %1494 = vmatprep.subr.mxu0 0.0
          %1495 = vmatpush1.msra.mxu0 0.0
          %1496 = vmatprep.subr.mxu0 0.0
          %1497 = vmatpush1.msra.mxu0 0.0
          %1498 = vmatprep.subr.mxu0 0.0
          %1499 = vmatpush1.msra.mxu0 0.0
          %1500 = vmatprep.subr.mxu0 0.0
          %1501 = vmatpush1.msra.mxu0 0.0
          %1502 = vmatprep.subr.mxu0 0.0
          %1503 = vmatpush1.msra.mxu0 0.0
          %1504 = vmatprep.subr.mxu0 0.0
          %1505 = vmatpush1.msra.mxu0 0.0
          %1506 = vmatprep.subr.mxu0 0.0
          %1507 = vmatpush1.msra.mxu0 0.0
          %1508 = vmatprep.subr.mxu0 0.0
          %1509 = vmatpush1.msra.mxu0 0.0
          %1510 = vmatprep.subr.mxu0 0.0
          %1511 = vmatpush1.msra.mxu0 0.0
          %1512 = vmatprep.subr.mxu0 0.0
          %1513 = vmatpush1.msra.mxu0 0.0
          %1514 = vmatprep.subr.mxu0 0.0
          %1515 = vmatpush1.msra.mxu0 0.0
          %1516 = vmatprep.subr.mxu0 0.0
          %1517 = vmatpush1.msra.mxu0 0.0
          %1518 = vmatprep.subr.mxu0 0.0
          %1519 = vmatpush1.msra.mxu0 0.0
          %1520 = vmatprep.subr.mxu0 0.0
          %1521 = vmatpush1.msra.mxu0 0.0
          %1522 = vmatprep.subr.mxu0 0.0
          %1523 = vmatpush1.msra.mxu0 0.0
          %1524 = vmatprep.subr.mxu0 0.0
          %1525 = vmatpush1.msra.mxu0 0.0
          %1526 = vmatprep.subr.mxu0 0.0
          %1527 = vmatpush1.msra.mxu0 0.0
          %1528 = vmatprep.subr.mxu0 0.0
          %1529 = vmatpush1.msra.mxu0 0.0
          %1530 = vmatprep.subr.mxu0 0.0
          %1531 = vmatpush1.msra.mxu0 0.0
          %1532 = vmatprep.subr.mxu0 0.0
          %1533 = vmatpush1.msra.mxu0 0.0
          %1534 = vmatprep.subr.mxu0 0.0
          %1535 = vmatpush1.msra.mxu0 0.0
          %1536 = vmatprep.subr.mxu0 0.0
          %1537 = vmatpush1.msra.mxu0 0.0
          %1538 = vmatprep.subr.mxu0 0.0
          %1539 = vmatpush1.msra.mxu0 0.0
          %1540 = vmatprep.mubr.f32.mxu0 0.0
          %1541 = vmatmul.mubr.f32.gmra.mrb[0].mxu0 %v1118
          %v1542 = vpop.f32.mrb[0].mxu0
          %v1543 = vadd.f32 0.0, %v1542
          %v1544 = vpop.f32.mrb[0].mxu0
          %1545 = vdwg.mxu0
          %1546 = vmatprep.subr.mxu0 0.0
          %1547 = vmatpush1.msra.mxu0 %v965
          %1548 = vmatprep.subr.mxu0 0.0
          %1549 = vmatpush1.msra.mxu0 0.0
          %1550 = vmatprep.subr.mxu0 0.0
          %1551 = vmatpush1.msra.mxu0 0.0
          %1552 = vmatprep.subr.mxu0 0.0
          %1553 = vmatpush1.msra.mxu0 0.0
          %1554 = vmatprep.subr.mxu0 0.0
          %1555 = vmatpush1.msra.mxu0 0.0
          %1556 = vmatprep.subr.mxu0 0.0
          %1557 = vmatpush1.msra.mxu0 0.0
          %1558 = vmatprep.subr.mxu0 0.0
          %1559 = vmatpush1.msra.mxu0 0.0
          %1560 = vmatprep.subr.mxu0 0.0
          %1561 = vmatpush1.msra.mxu0 0.0
          %1562 = vmatprep.subr.mxu0 0.0
          %1563 = vmatpush1.msra.mxu0 0.0
          %1564 = vmatprep.subr.mxu0 0.0
          %1565 = vmatpush1.msra.mxu0 0.0
          %1566 = vmatprep.subr.mxu0 0.0
          %1567 = vmatpush1.msra.mxu0 0.0
          %1568 = vmatprep.subr.mxu0 0.0
          %1569 = vmatpush1.msra.mxu0 0.0
          %1570 = vmatprep.subr.mxu0 0.0
          %1571 = vmatpush1.msra.mxu0 0.0
          %1572 = vmatprep.subr.mxu0 0.0
          %1573 = vmatpush1.msra.mxu0 0.0
          %1574 = vmatprep.subr.mxu0 0.0
          %1575 = vmatpush1.msra.mxu0 0.0
          %1576 = vmatprep.subr.mxu0 0.0
          %1577 = vmatpush1.msra.mxu0 0.0
          %1578 = vmatprep.subr.mxu0 0.0
          %1579 = vmatpush1.msra.mxu0 0.0
          %1580 = vmatprep.subr.mxu0 0.0
          %1581 = vmatpush1.msra.mxu0 0.0
          %1582 = vmatprep.subr.mxu0 0.0
          %1583 = vmatpush1.msra.mxu0 0.0
          %1584 = vmatprep.subr.mxu0 0.0
          %1585 = vmatpush1.msra.mxu0 0.0
          %1586 = vmatprep.subr.mxu0 0.0
          %1587 = vmatpush1.msra.mxu0 0.0
          %1588 = vmatprep.subr.mxu0 0.0
          %1589 = vmatpush1.msra.mxu0 0.0
          %1590 = vmatprep.subr.mxu0 0.0
          %1591 = vmatpush1.msra.mxu0 0.0
          %1592 = vmatprep.subr.mxu0 0.0
          %1593 = vmatpush1.msra.mxu0 0.0
          %1594 = vmatprep.subr.mxu0 0.0
          %1595 = vmatpush1.msra.mxu0 0.0
          %1596 = vmatprep.subr.mxu0 0.0
          %1597 = vmatpush1.msra.mxu0 0.0
          %1598 = vmatprep.subr.mxu0 0.0
          %1599 = vmatpush1.msra.mxu0 0.0
          %1600 = vmatprep.subr.mxu0 0.0
          %1601 = vmatpush1.msra.mxu0 0.0
          %1602 = vmatprep.subr.mxu0 0.0
          %1603 = vmatpush1.msra.mxu0 0.0
          %1604 = vmatprep.subr.mxu0 0.0
          %1605 = vmatpush1.msra.mxu0 0.0
          %1606 = vmatprep.subr.mxu0 0.0
          %1607 = vmatpush1.msra.mxu0 0.0
          %1608 = vmatprep.subr.mxu0 0.0
          %1609 = vmatpush1.msra.mxu0 0.0
          %1610 = vmatprep.mubr.f32.mxu0 0.0
          %1611 = vmatmul.mubr.f32.gmra.mrb[0].mxu0 %v1191
          %v1612 = vpop.f32.mrb[0].mxu0
          %v1613 = vadd.f32 %v1543, %v1612
          %v1614 = vpop.f32.mrb[0].mxu0
          %1615 = vdwg.mxu0
          %1616 = vmatprep.subr.mxu0 0.0
          %1617 = vmatpush1.msra.mxu0 %v312
          %1618 = vmatprep.subr.mxu0 0.0
          %1619 = vmatpush1.msra.mxu0 %v313
          %1620 = vmatprep.subr.mxu0 0.0
          %1621 = vmatpush1.msra.mxu0 %v314
          %1622 = vmatprep.subr.mxu0 0.0
          %1623 = vmatpush1.msra.mxu0 %v315
          %1624 = vmatprep.subr.mxu0 0.0
          %1625 = vmatpush1.msra.mxu0 %v316
          %1626 = vmatprep.subr.mxu0 0.0
          %1627 = vmatpush1.msra.mxu0 %v317
          %1628 = vmatprep.subr.mxu0 0.0
          %1629 = vmatpush1.msra.mxu0 %v318
          %1630 = vmatprep.subr.mxu0 0.0
          %1631 = vmatpush1.msra.mxu0 %v319
          %1632 = vmatprep.subr.mxu0 0.0
          %1633 = vmatpush1.msra.mxu0 %v320
          %1634 = vmatprep.subr.mxu0 0.0
          %1635 = vmatpush1.msra.mxu0 %v321
          %1636 = vmatprep.subr.mxu0 0.0
          %1637 = vmatpush1.msra.mxu0 %v322
          %1638 = vmatprep.subr.mxu0 0.0
          %1639 = vmatpush1.msra.mxu0 %v323
          %1640 = vmatprep.subr.mxu0 0.0
          %1641 = vmatpush1.msra.mxu0 %v324
          %1642 = vmatprep.subr.mxu0 0.0
          %1643 = vmatpush1.msra.mxu0 %v325
          %1644 = vmatprep.subr.mxu0 0.0
          %1645 = vmatpush1.msra.mxu0 %v326
          %1646 = vmatprep.subr.mxu0 0.0
          %1647 = vmatpush1.msra.mxu0 %v327
          %1648 = vmatprep.subr.mxu0 0.0
          %1649 = vmatpush1.msra.mxu0 0.0
          %1650 = vmatprep.subr.mxu0 0.0
          %1651 = vmatpush1.msra.mxu0 0.0
          %1652 = vmatprep.subr.mxu0 0.0
          %1653 = vmatpush1.msra.mxu0 0.0
          %1654 = vmatprep.subr.mxu0 0.0
          %1655 = vmatpush1.msra.mxu0 0.0
          %1656 = vmatprep.subr.mxu0 0.0
          %1657 = vmatpush1.msra.mxu0 0.0
          %1658 = vmatprep.subr.mxu0 0.0
          %1659 = vmatpush1.msra.mxu0 0.0
          %1660 = vmatprep.subr.mxu0 0.0
          %1661 = vmatpush1.msra.mxu0 0.0
          %1662 = vmatprep.subr.mxu0 0.0
          %1663 = vmatpush1.msra.mxu0 0.0
          %1664 = vmatprep.subr.mxu0 0.0
          %1665 = vmatpush1.msra.mxu0 0.0
          %1666 = vmatprep.subr.mxu0 0.0
          %1667 = vmatpush1.msra.mxu0 0.0
          %1668 = vmatprep.subr.mxu0 0.0
          %1669 = vmatpush1.msra.mxu0 0.0
          %1670 = vmatprep.subr.mxu0 0.0
          %1671 = vmatpush1.msra.mxu0 0.0
          %1672 = vmatprep.subr.mxu0 0.0
          %1673 = vmatpush1.msra.mxu0 0.0
          %1674 = vmatprep.subr.mxu0 0.0
          %1675 = vmatpush1.msra.mxu0 0.0
          %1676 = vmatprep.subr.mxu0 0.0
          %1677 = vmatpush1.msra.mxu0 0.0
          %1678 = vmatprep.subr.mxu0 0.0
          %1679 = vmatpush1.msra.mxu0 0.0
          %1680 = vmatprep.mubr.f32.mxu0 0.0
          %1681 = vmatmul.mubr.f32.gmra.mrb[0].mxu0 %v1613
          %v1682 = vpop.f32.mrb[0].mxu0
          %v1683 = vadd.f32 0.0, %v1682
          %v1684 = vpop.f32.mrb[0].mxu0
          %1685 = vdwg.mxu0
          %v1686 = vadd.f32 %v1473, %v1683
          %v1687 = vadd.f32 %v1686, %v881
          %v1688 = vmax.f32 %v1687, 0.0
          %v1689 = vmax.f32 %v1335, %v1688
          %1690 = vmatprep.subr.mxu0 0.0
          %1691 = vmatpush1.msra.mxu0 %v312
          %1692 = vmatprep.subr.mxu0 0.0
          %1693 = vmatpush1.msra.mxu0 %v313
          %1694 = vmatprep.subr.mxu0 0.0
          %1695 = vmatpush1.msra.mxu0 %v314
          %1696 = vmatprep.subr.mxu0 0.0
          %1697 = vmatpush1.msra.mxu0 %v315
          %1698 = vmatprep.subr.mxu0 0.0
          %1699 = vmatpush1.msra.mxu0 %v316
          %1700 = vmatprep.subr.mxu0 0.0
          %1701 = vmatpush1.msra.mxu0 %v317
          %1702 = vmatprep.subr.mxu0 0.0
          %1703 = vmatpush1.msra.mxu0 %v318
          %1704 = vmatprep.subr.mxu0 0.0
          %1705 = vmatpush1.msra.mxu0 %v319
          %1706 = vmatprep.subr.mxu0 0.0
          %1707 = vmatpush1.msra.mxu0 %v320
          %1708 = vmatprep.subr.mxu0 0.0
          %1709 = vmatpush1.msra.mxu0 %v321
          %1710 = vmatprep.subr.mxu0 0.0
          %1711 = vmatpush1.msra.mxu0 %v322
          %1712 = vmatprep.subr.mxu0 0.0
          %1713 = vmatpush1.msra.mxu0 %v323
          %1714 = vmatprep.subr.mxu0 0.0
          %1715 = vmatpush1.msra.mxu0 %v324
          %1716 = vmatprep.subr.mxu0 0.0
          %1717 = vmatpush1.msra.mxu0 %v325
          %1718 = vmatprep.subr.mxu0 0.0
          %1719 = vmatpush1.msra.mxu0 %v326
          %1720 = vmatprep.subr.mxu0 0.0
          %1721 = vmatpush1.msra.mxu0 %v327
          %1722 = vmatprep.subr.mxu0 0.0
          %1723 = vmatpush1.msra.mxu0 0.0
          %1724 = vmatprep.subr.mxu0 0.0
          %1725 = vmatpush1.msra.mxu0 0.0
          %1726 = vmatprep.subr.mxu0 0.0
          %1727 = vmatpush1.msra.mxu0 0.0
          %1728 = vmatprep.subr.mxu0 0.0
          %1729 = vmatpush1.msra.mxu0 0.0
          %1730 = vmatprep.subr.mxu0 0.0
          %1731 = vmatpush1.msra.mxu0 0.0
          %1732 = vmatprep.subr.mxu0 0.0
          %1733 = vmatpush1.msra.mxu0 0.0
          %1734 = vmatprep.subr.mxu0 0.0
          %1735 = vmatpush1.msra.mxu0 0.0
          %1736 = vmatprep.subr.mxu0 0.0
          %1737 = vmatpush1.msra.mxu0 0.0
          %1738 = vmatprep.subr.mxu0 0.0
          %1739 = vmatpush1.msra.mxu0 0.0
          %1740 = vmatprep.subr.mxu0 0.0
          %1741 = vmatpush1.msra.mxu0 0.0
          %1742 = vmatprep.subr.mxu0 0.0
          %1743 = vmatpush1.msra.mxu0 0.0
          %1744 = vmatprep.subr.mxu0 0.0
          %1745 = vmatpush1.msra.mxu0 0.0
          %1746 = vmatprep.subr.mxu0 0.0
          %1747 = vmatpush1.msra.mxu0 0.0
          %1748 = vmatprep.subr.mxu0 0.0
          %1749 = vmatpush1.msra.mxu0 0.0
          %1750 = vmatprep.subr.mxu0 0.0
          %1751 = vmatpush1.msra.mxu0 0.0
          %1752 = vmatprep.subr.mxu0 0.0
          %1753 = vmatpush1.msra.mxu0 0.0
          %1754 = vmatprep.mubr.f32.mxu0 0.0
          %1755 = vmatmul.mubr.f32.gmra.mrb[0].mxu0 %v1689
          %v1756 = vpop.f32.mrb[0].mxu0
          %v1757 = vadd.f32 0.0, %v1756
          %v1758 = vpop.f32.mrb[0].mxu0
          %1759 = vdwg.mxu0
          %v1760 = vmax.f32 %v1689, %v1757
          %1761 = vmatprep.subr.mxu0 0.0
          %1762 = vmatpush1.msra.mxu0 %v933
          %1763 = vmatprep.subr.mxu0 0.0
          %1764 = vmatpush1.msra.mxu0 %v934
          %1765 = vmatprep.subr.mxu0 0.0
          %1766 = vmatpush1.msra.mxu0 %v935
          %1767 = vmatprep.subr.mxu0 0.0
          %1768 = vmatpush1.msra.mxu0 %v936
          %1769 = vmatprep.subr.mxu0 0.0
          %1770 = vmatpush1.msra.mxu0 %v937
          %1771 = vmatprep.subr.mxu0 0.0
          %1772 = vmatpush1.msra.mxu0 %v938
          %1773 = vmatprep.subr.mxu0 0.0
          %1774 = vmatpush1.msra.mxu0 %v939
          %1775 = vmatprep.subr.mxu0 0.0
          %1776 = vmatpush1.msra.mxu0 %v940
          %1777 = vmatprep.subr.mxu0 0.0
          %1778 = vmatpush1.msra.mxu0 %v941
          %1779 = vmatprep.subr.mxu0 0.0
          %1780 = vmatpush1.msra.mxu0 %v942
          %1781 = vmatprep.subr.mxu0 0.0
          %1782 = vmatpush1.msra.mxu0 %v943
          %1783 = vmatprep.subr.mxu0 0.0
          %1784 = vmatpush1.msra.mxu0 %v944
          %1785 = vmatprep.subr.mxu0 0.0
          %1786 = vmatpush1.msra.mxu0 %v945
          %1787 = vmatprep.subr.mxu0 0.0
          %1788 = vmatpush1.msra.mxu0 %v946
          %1789 = vmatprep.subr.mxu0 0.0
          %1790 = vmatpush1.msra.mxu0 %v947
          %1791 = vmatprep.subr.mxu0 0.0
          %1792 = vmatpush1.msra.mxu0 %v948
          %1793 = vmatprep.subr.mxu0 0.0
          %1794 = vmatpush1.msra.mxu0 0.0
          %1795 = vmatprep.subr.mxu0 0.0
          %1796 = vmatpush1.msra.mxu0 0.0
          %1797 = vmatprep.subr.mxu0 0.0
          %1798 = vmatpush1.msra.mxu0 0.0
          %1799 = vmatprep.subr.mxu0 0.0
          %1800 = vmatpush1.msra.mxu0 0.0
          %1801 = vmatprep.subr.mxu0 0.0
          %1802 = vmatpush1.msra.mxu0 0.0
          %1803 = vmatprep.subr.mxu0 0.0
          %1804 = vmatpush1.msra.mxu0 0.0
          %1805 = vmatprep.subr.mxu0 0.0
          %1806 = vmatpush1.msra.mxu0 0.0
          %1807 = vmatprep.subr.mxu0 0.0
          %1808 = vmatpush1.msra.mxu0 0.0
          %1809 = vmatprep.subr.mxu0 0.0
          %1810 = vmatpush1.msra.mxu0 0.0
          %1811 = vmatprep.subr.mxu0 0.0
          %1812 = vmatpush1.msra.mxu0 0.0
          %1813 = vmatprep.subr.mxu0 0.0
          %1814 = vmatpush1.msra.mxu0 0.0
          %1815 = vmatprep.subr.mxu0 0.0
          %1816 = vmatpush1.msra.mxu0 0.0
          %1817 = vmatprep.subr.mxu0 0.0
          %1818 = vmatpush1.msra.mxu0 0.0
          %1819 = vmatprep.subr.mxu0 0.0
          %1820 = vmatpush1.msra.mxu0 0.0
          %1821 = vmatprep.subr.mxu0 0.0
          %1822 = vmatpush1.msra.mxu0 0.0
          %1823 = vmatprep.subr.mxu0 0.0
          %1824 = vmatpush1.msra.mxu0 0.0
          %1825 = vmatprep.mubr.f32.mxu0 0.0
          %1826 = vmatmul.mubr.f32.gmra.mrb[0].mxu0 %v1760
          %v1827 = vpop.f32.mrb[0].mxu0
          %v1828 = vadd.f32 0.0, %v1827
          %v1829 = vpop.f32.mrb[0].mxu0
          %1830 = vdwg.mxu0
          %s1831 = sadd.s32 %s953, 1
          %s1832 = smul.u32 %s1831, 8
          %s1833 = scalar_lea.vmem [#allocation3], %s1832
          %1834 = vst [vmem:[%s1833] sm:$0xff] %v1828
        $region60: #{tiny_vgg_forward.1} parent=47 // loop_footer
          %s957 = sadd.s32 1, %s953
        $region61: #{tiny_vgg_forward.1} parent=47 // loop_footer_branch
          %952 = sbr.rel target = $region57
        $region62: #{tiny_vgg_forward.1} parent=47 // loop_exit
          _
        %s1835 = scalar_lea.vmem %s1, 64
        %v1836 = vld [vmem:[%s1835] sm:$0xff]
        %s1837 = scalar_lea.vmem %s1, 72
        %v1838 = vld [vmem:[%s1837] sm:$0xff]
        %s1839 = scalar_lea.vmem %s1, 80
        %v1840 = vld [vmem:[%s1839] sm:$0xff]
        %s1841 = scalar_lea.vmem %s1, 88
        %v1842 = vld [vmem:[%s1841] sm:$0xff]
        %s1843 = scalar_lea.vmem %s2, 16
        %v1844 = vld [vmem:[%s1843] sm:$0xff]
        %vm1845 = vcmp.le.s32.totalorder %v294, 34
        %vm1846 = vmand %vm369, %vm1845
        %vm1847 = vmand %vm370, %vm1845
        %vm1848 = vmand %vm371, %vm1845
        %vm1849 = vmand %vm372, %vm1845
        %vm1850 = vmand %vm373, %vm1845
        %vm1851 = vmand %vm374, %vm1845
        %vm1852 = vmand %vm375, %vm1845
        %vm1853 = vmand %vm376, %vm1845
        %vm1854 = vmand %vm377, %vm1845
        %vm1855 = vmand %vm378, %vm1845
        %vm1856 = vmand %vm379, %vm1845
        %vm1857 = vmand %vm380, %vm1845
        %vm1858 = vmand %vm381, %vm1845
        %vm1859 = vmand %vm382, %vm1845
        %vm1860 = vmand %vm383, %vm1845
        %vm1861 = vmand %vm384, %vm1845
        %v1862 = vsel %vm1846, 1.0, 0.0
        %v1863 = vsel %vm1847, 1.0, 0.0
        %v1864 = vsel %vm1848, 1.0, 0.0
        %v1865 = vsel %vm1849, 1.0, 0.0
        %v1866 = vsel %vm1850, 1.0, 0.0
        %v1867 = vsel %vm1851, 1.0, 0.0
        %v1868 = vsel %vm1852, 1.0, 0.0
        %v1869 = vsel %vm1853, 1.0, 0.0
        %v1870 = vsel %vm1854, 1.0, 0.0
        %v1871 = vsel %vm1855, 1.0, 0.0
        %v1872 = vsel %vm1856, 1.0, 0.0
        %v1873 = vsel %vm1857, 1.0, 0.0
        %v1874 = vsel %vm1858, 1.0, 0.0
        %v1875 = vsel %vm1859, 1.0, 0.0
        %v1876 = vsel %vm1860, 1.0, 0.0
        %v1877 = vsel %vm1861, 1.0, 0.0
        %1878 = vst [vmem:[#allocation2] sm:$0xff] 0.0
        %s1879 = scalar_lea.vmem [#allocation2], 280
        %1880 = vst [vmem:[%s1879] sm:$0xff] 0.0
        loop: start=0, step=1, limit=34
        $region63: #{tiny_vgg_forward.1} parent=47 // loop_pre_header
          _
        $region64: #{tiny_vgg_forward.1} parent=47 // loop_header
          %s1882 = sphi 0, %s1886
          %p1883 = scmp.ge.s32.totalorder %s1882, 34
        $region65: #{tiny_vgg_forward.1} parent=47 // loop_header_branch
          %1885 = sbr.rel (%p1883) target = $region69
        $region66: #{tiny_vgg_forward.1} parent=47 // loop_body
          %s1887 = smul.u32 %s1882, 8
          %s1888 = scalar_lea.vmem [#allocation3], %s1887
          %v1889 = vld [vmem:[%s1888] sm:$0xff]
          %s1890 = sadd.s32 %s1882, 1
          %s1891 = smul.u32 %s1890, 8
          %s1892 = scalar_lea.vmem [#allocation3], %s1891
          %v1893 = vld [vmem:[%s1892] sm:$0xff]
          %vm1894 = vcmask 64512
          %v1896 = vsel %vm1894, %v1840, 0
          %1898 = vmatprep.subr.mxu0 0.0
          %1899 = vmatpush1.msra.mxu0 %v1893
          %1900 = vmatprep.subr.mxu0 0.0
          %1901 = vmatpush1.msra.mxu0 0.0
          %1902 = vmatprep.subr.mxu0 0.0
          %1903 = vmatpush1.msra.mxu0 0.0
          %1904 = vmatprep.subr.mxu0 0.0
          %1905 = vmatpush1.msra.mxu0 0.0
          %1906 = vmatprep.subr.mxu0 0.0
          %1907 = vmatpush1.msra.mxu0 0.0
          %1908 = vmatprep.subr.mxu0 0.0
          %1909 = vmatpush1.msra.mxu0 0.0
          %1910 = vmatprep.subr.mxu0 0.0
          %1911 = vmatpush1.msra.mxu0 0.0
          %1912 = vmatprep.subr.mxu0 0.0
          %1913 = vmatpush1.msra.mxu0 0.0
          %1914 = vmatprep.subr.mxu0 0.0
          %1915 = vmatpush1.msra.mxu0 0.0
          %1916 = vmatprep.subr.mxu0 0.0
          %1917 = vmatpush1.msra.mxu0 0.0
          %1918 = vmatprep.subr.mxu0 0.0
          %1919 = vmatpush1.msra.mxu0 0.0
          %1920 = vmatprep.subr.mxu0 0.0
          %1921 = vmatpush1.msra.mxu0 0.0
          %1922 = vmatprep.subr.mxu0 0.0
          %1923 = vmatpush1.msra.mxu0 0.0
          %1924 = vmatprep.subr.mxu0 0.0
          %1925 = vmatpush1.msra.mxu0 0.0
          %1926 = vmatprep.subr.mxu0 0.0
          %1927 = vmatpush1.msra.mxu0 0.0
          %1928 = vmatprep.subr.mxu0 0.0
          %1929 = vmatpush1.msra.mxu0 0.0
          %1930 = vmatprep.subr.mxu0 0.0
          %1931 = vmatpush1.msra.mxu0 0.0
          %1932 = vmatprep.subr.mxu0 0.0
          %1933 = vmatpush1.msra.mxu0 0.0
          %1934 = vmatprep.subr.mxu0 0.0
          %1935 = vmatpush1.msra.mxu0 0.0
          %1936 = vmatprep.subr.mxu0 0.0
          %1937 = vmatpush1.msra.mxu0 0.0
          %1938 = vmatprep.subr.mxu0 0.0
          %1939 = vmatpush1.msra.mxu0 0.0
          %1940 = vmatprep.subr.mxu0 0.0
          %1941 = vmatpush1.msra.mxu0 0.0
          %1942 = vmatprep.subr.mxu0 0.0
          %1943 = vmatpush1.msra.mxu0 0.0
          %1944 = vmatprep.subr.mxu0 0.0
          %1945 = vmatpush1.msra.mxu0 0.0
          %1946 = vmatprep.subr.mxu0 0.0
          %1947 = vmatpush1.msra.mxu0 0.0
          %1948 = vmatprep.subr.mxu0 0.0
          %1949 = vmatpush1.msra.mxu0 0.0
          %1950 = vmatprep.subr.mxu0 0.0
          %1951 = vmatpush1.msra.mxu0 0.0
          %1952 = vmatprep.subr.mxu0 0.0
          %1953 = vmatpush1.msra.mxu0 0.0
          %1954 = vmatprep.subr.mxu0 0.0
          %1955 = vmatpush1.msra.mxu0 0.0
          %1956 = vmatprep.subr.mxu0 0.0
          %1957 = vmatpush1.msra.mxu0 0.0
          %1958 = vmatprep.subr.mxu0 0.0
          %1959 = vmatpush1.msra.mxu0 0.0
          %1960 = vmatprep.subr.mxu0 0.0
          %1961 = vmatpush1.msra.mxu0 0.0
          %1962 = vmatprep.mubr.f32.mxu0 0.0
          %1963 = vmatmul.mubr.f32.gmra.mrb[0].mxu0 %v1896
          %v1964 = vpop.f32.mrb[0].mxu0
          %v1965 = vadd.f32 0.0, %v1964
          %v1966 = vpop.f32.mrb[0].mxu0
          %1967 = vdwg.mxu0
          %v1969 = vsel %vm1894, %v1836, 0
          %1971 = vmatprep.subr.mxu0 0.0
          %1972 = vmatpush1.msra.mxu0 %v1889
          %1973 = vmatprep.subr.mxu0 0.0
          %1974 = vmatpush1.msra.mxu0 0.0
          %1975 = vmatprep.subr.mxu0 0.0
          %1976 = vmatpush1.msra.mxu0 0.0
          %1977 = vmatprep.subr.mxu0 0.0
          %1978 = vmatpush1.msra.mxu0 0.0
          %1979 = vmatprep.subr.mxu0 0.0
          %1980 = vmatpush1.msra.mxu0 0.0
          %1981 = vmatprep.subr.mxu0 0.0
          %1982 = vmatpush1.msra.mxu0 0.0
          %1983 = vmatprep.subr.mxu0 0.0
          %1984 = vmatpush1.msra.mxu0 0.0
          %1985 = vmatprep.subr.mxu0 0.0
          %1986 = vmatpush1.msra.mxu0 0.0
          %1987 = vmatprep.subr.mxu0 0.0
          %1988 = vmatpush1.msra.mxu0 0.0
          %1989 = vmatprep.subr.mxu0 0.0
          %1990 = vmatpush1.msra.mxu0 0.0
          %1991 = vmatprep.subr.mxu0 0.0
          %1992 = vmatpush1.msra.mxu0 0.0
          %1993 = vmatprep.subr.mxu0 0.0
          %1994 = vmatpush1.msra.mxu0 0.0
          %1995 = vmatprep.subr.mxu0 0.0
          %1996 = vmatpush1.msra.mxu0 0.0
          %1997 = vmatprep.subr.mxu0 0.0
          %1998 = vmatpush1.msra.mxu0 0.0
          %1999 = vmatprep.subr.mxu0 0.0
          %2000 = vmatpush1.msra.mxu0 0.0
          %2001 = vmatprep.subr.mxu0 0.0
          %2002 = vmatpush1.msra.mxu0 0.0
          %2003 = vmatprep.subr.mxu0 0.0
          %2004 = vmatpush1.msra.mxu0 0.0
          %2005 = vmatprep.subr.mxu0 0.0
          %2006 = vmatpush1.msra.mxu0 0.0
          %2007 = vmatprep.subr.mxu0 0.0
          %2008 = vmatpush1.msra.mxu0 0.0
          %2009 = vmatprep.subr.mxu0 0.0
          %2010 = vmatpush1.msra.mxu0 0.0
          %2011 = vmatprep.subr.mxu0 0.0
          %2012 = vmatpush1.msra.mxu0 0.0
          %2013 = vmatprep.subr.mxu0 0.0
          %2014 = vmatpush1.msra.mxu0 0.0
          %2015 = vmatprep.subr.mxu0 0.0
          %2016 = vmatpush1.msra.mxu0 0.0
          %2017 = vmatprep.subr.mxu0 0.0
          %2018 = vmatpush1.msra.mxu0 0.0
          %2019 = vmatprep.subr.mxu0 0.0
          %2020 = vmatpush1.msra.mxu0 0.0
          %2021 = vmatprep.subr.mxu0 0.0
          %2022 = vmatpush1.msra.mxu0 0.0
          %2023 = vmatprep.subr.mxu0 0.0
          %2024 = vmatpush1.msra.mxu0 0.0
          %2025 = vmatprep.subr.mxu0 0.0
          %2026 = vmatpush1.msra.mxu0 0.0
          %2027 = vmatprep.subr.mxu0 0.0
          %2028 = vmatpush1.msra.mxu0 0.0
          %2029 = vmatprep.subr.mxu0 0.0
          %2030 = vmatpush1.msra.mxu0 0.0
          %2031 = vmatprep.subr.mxu0 0.0
          %2032 = vmatpush1.msra.mxu0 0.0
          %2033 = vmatprep.subr.mxu0 0.0
          %2034 = vmatpush1.msra.mxu0 0.0
          %2035 = vmatprep.mubr.f32.mxu0 0.0
          %2036 = vmatmul.mubr.f32.gmra.mrb[0].mxu0 %v1969
          %v2037 = vpop.f32.mrb[0].mxu0
          %v2038 = vadd.f32 %v1965, %v2037
          %v2039 = vpop.f32.mrb[0].mxu0
          %2040 = vdwg.mxu0
          %v2042 = vsel %vm1894, %v1842, 0
          %2044 = vmatprep.subr.mxu0 0.0
          %2045 = vmatpush1.msra.mxu0 %v1893
          %2046 = vmatprep.subr.mxu0 0.0
          %2047 = vmatpush1.msra.mxu0 0.0
          %2048 = vmatprep.subr.mxu0 0.0
          %2049 = vmatpush1.msra.mxu0 0.0
          %2050 = vmatprep.subr.mxu0 0.0
          %2051 = vmatpush1.msra.mxu0 0.0
          %2052 = vmatprep.subr.mxu0 0.0
          %2053 = vmatpush1.msra.mxu0 0.0
          %2054 = vmatprep.subr.mxu0 0.0
          %2055 = vmatpush1.msra.mxu0 0.0
          %2056 = vmatprep.subr.mxu0 0.0
          %2057 = vmatpush1.msra.mxu0 0.0
          %2058 = vmatprep.subr.mxu0 0.0
          %2059 = vmatpush1.msra.mxu0 0.0
          %2060 = vmatprep.subr.mxu0 0.0
          %2061 = vmatpush1.msra.mxu0 0.0
          %2062 = vmatprep.subr.mxu0 0.0
          %2063 = vmatpush1.msra.mxu0 0.0
          %2064 = vmatprep.subr.mxu0 0.0
          %2065 = vmatpush1.msra.mxu0 0.0
          %2066 = vmatprep.subr.mxu0 0.0
          %2067 = vmatpush1.msra.mxu0 0.0
          %2068 = vmatprep.subr.mxu0 0.0
          %2069 = vmatpush1.msra.mxu0 0.0
          %2070 = vmatprep.subr.mxu0 0.0
          %2071 = vmatpush1.msra.mxu0 0.0
          %2072 = vmatprep.subr.mxu0 0.0
          %2073 = vmatpush1.msra.mxu0 0.0
          %2074 = vmatprep.subr.mxu0 0.0
          %2075 = vmatpush1.msra.mxu0 0.0
          %2076 = vmatprep.subr.mxu0 0.0
          %2077 = vmatpush1.msra.mxu0 0.0
          %2078 = vmatprep.subr.mxu0 0.0
          %2079 = vmatpush1.msra.mxu0 0.0
          %2080 = vmatprep.subr.mxu0 0.0
          %2081 = vmatpush1.msra.mxu0 0.0
          %2082 = vmatprep.subr.mxu0 0.0
          %2083 = vmatpush1.msra.mxu0 0.0
          %2084 = vmatprep.subr.mxu0 0.0
          %2085 = vmatpush1.msra.mxu0 0.0
          %2086 = vmatprep.subr.mxu0 0.0
          %2087 = vmatpush1.msra.mxu0 0.0
          %2088 = vmatprep.subr.mxu0 0.0
          %2089 = vmatpush1.msra.mxu0 0.0
          %2090 = vmatprep.subr.mxu0 0.0
          %2091 = vmatpush1.msra.mxu0 0.0
          %2092 = vmatprep.subr.mxu0 0.0
          %2093 = vmatpush1.msra.mxu0 0.0
          %2094 = vmatprep.subr.mxu0 0.0
          %2095 = vmatpush1.msra.mxu0 0.0
          %2096 = vmatprep.subr.mxu0 0.0
          %2097 = vmatpush1.msra.mxu0 0.0
          %2098 = vmatprep.subr.mxu0 0.0
          %2099 = vmatpush1.msra.mxu0 0.0
          %2100 = vmatprep.subr.mxu0 0.0
          %2101 = vmatpush1.msra.mxu0 0.0
          %2102 = vmatprep.subr.mxu0 0.0
          %2103 = vmatpush1.msra.mxu0 0.0
          %2104 = vmatprep.subr.mxu0 0.0
          %2105 = vmatpush1.msra.mxu0 0.0
          %2106 = vmatprep.subr.mxu0 0.0
          %2107 = vmatpush1.msra.mxu0 0.0
          %2108 = vmatprep.mubr.f32.mxu0 0.0
          %2109 = vmatmul.mubr.f32.gmra.mrb[0].mxu0 %v2042
          %v2110 = vpop.f32.mrb[0].mxu0
          %v2111 = vadd.f32 0.0, %v2110
          %v2112 = vpop.f32.mrb[0].mxu0
          %2113 = vdwg.mxu0
          %v2115 = vsel %vm1894, %v1838, 0
          %2117 = vmatprep.subr.mxu0 0.0
          %2118 = vmatpush1.msra.mxu0 %v1889
          %2119 = vmatprep.subr.mxu0 0.0
          %2120 = vmatpush1.msra.mxu0 0.0
          %2121 = vmatprep.subr.mxu0 0.0
          %2122 = vmatpush1.msra.mxu0 0.0
          %2123 = vmatprep.subr.mxu0 0.0
          %2124 = vmatpush1.msra.mxu0 0.0
          %2125 = vmatprep.subr.mxu0 0.0
          %2126 = vmatpush1.msra.mxu0 0.0
          %2127 = vmatprep.subr.mxu0 0.0
          %2128 = vmatpush1.msra.mxu0 0.0
          %2129 = vmatprep.subr.mxu0 0.0
          %2130 = vmatpush1.msra.mxu0 0.0
          %2131 = vmatprep.subr.mxu0 0.0
          %2132 = vmatpush1.msra.mxu0 0.0
          %2133 = vmatprep.subr.mxu0 0.0
          %2134 = vmatpush1.msra.mxu0 0.0
          %2135 = vmatprep.subr.mxu0 0.0
          %2136 = vmatpush1.msra.mxu0 0.0
          %2137 = vmatprep.subr.mxu0 0.0
          %2138 = vmatpush1.msra.mxu0 0.0
          %2139 = vmatprep.subr.mxu0 0.0
          %2140 = vmatpush1.msra.mxu0 0.0
          %2141 = vmatprep.subr.mxu0 0.0
          %2142 = vmatpush1.msra.mxu0 0.0
          %2143 = vmatprep.subr.mxu0 0.0
          %2144 = vmatpush1.msra.mxu0 0.0
          %2145 = vmatprep.subr.mxu0 0.0
          %2146 = vmatpush1.msra.mxu0 0.0
          %2147 = vmatprep.subr.mxu0 0.0
          %2148 = vmatpush1.msra.mxu0 0.0
          %2149 = vmatprep.subr.mxu0 0.0
          %2150 = vmatpush1.msra.mxu0 0.0
          %2151 = vmatprep.subr.mxu0 0.0
          %2152 = vmatpush1.msra.mxu0 0.0
          %2153 = vmatprep.subr.mxu0 0.0
          %2154 = vmatpush1.msra.mxu0 0.0
          %2155 = vmatprep.subr.mxu0 0.0
          %2156 = vmatpush1.msra.mxu0 0.0
          %2157 = vmatprep.subr.mxu0 0.0
          %2158 = vmatpush1.msra.mxu0 0.0
          %2159 = vmatprep.subr.mxu0 0.0
          %2160 = vmatpush1.msra.mxu0 0.0
          %2161 = vmatprep.subr.mxu0 0.0
          %2162 = vmatpush1.msra.mxu0 0.0
          %2163 = vmatprep.subr.mxu0 0.0
          %2164 = vmatpush1.msra.mxu0 0.0
          %2165 = vmatprep.subr.mxu0 0.0
          %2166 = vmatpush1.msra.mxu0 0.0
          %2167 = vmatprep.subr.mxu0 0.0
          %2168 = vmatpush1.msra.mxu0 0.0
          %2169 = vmatprep.subr.mxu0 0.0
          %2170 = vmatpush1.msra.mxu0 0.0
          %2171 = vmatprep.subr.mxu0 0.0
          %2172 = vmatpush1.msra.mxu0 0.0
          %2173 = vmatprep.subr.mxu0 0.0
          %2174 = vmatpush1.msra.mxu0 0.0
          %2175 = vmatprep.subr.mxu0 0.0
          %2176 = vmatpush1.msra.mxu0 0.0
          %2177 = vmatprep.subr.mxu0 0.0
          %2178 = vmatpush1.msra.mxu0 0.0
          %2179 = vmatprep.subr.mxu0 0.0
          %2180 = vmatpush1.msra.mxu0 0.0
          %2181 = vmatprep.mubr.f32.mxu0 0.0
          %2182 = vmatmul.mubr.f32.gmra.mrb[0].mxu0 %v2115
          %v2183 = vpop.f32.mrb[0].mxu0
          %v2184 = vadd.f32 %v2111, %v2183
          %v2185 = vpop.f32.mrb[0].mxu0
          %2186 = vdwg.mxu0
          %2187 = vmatprep.subr.mxu0 0.0
          %2188 = vmatpush1.msra.mxu0 %v312
          %2189 = vmatprep.subr.mxu0 0.0
          %2190 = vmatpush1.msra.mxu0 %v313
          %2191 = vmatprep.subr.mxu0 0.0
          %2192 = vmatpush1.msra.mxu0 %v314
          %2193 = vmatprep.subr.mxu0 0.0
          %2194 = vmatpush1.msra.mxu0 %v315
          %2195 = vmatprep.subr.mxu0 0.0
          %2196 = vmatpush1.msra.mxu0 %v316
          %2197 = vmatprep.subr.mxu0 0.0
          %2198 = vmatpush1.msra.mxu0 %v317
          %2199 = vmatprep.subr.mxu0 0.0
          %2200 = vmatpush1.msra.mxu0 %v318
          %2201 = vmatprep.subr.mxu0 0.0
          %2202 = vmatpush1.msra.mxu0 %v319
          %2203 = vmatprep.subr.mxu0 0.0
          %2204 = vmatpush1.msra.mxu0 %v320
          %2205 = vmatprep.subr.mxu0 0.0
          %2206 = vmatpush1.msra.mxu0 %v321
          %2207 = vmatprep.subr.mxu0 0.0
          %2208 = vmatpush1.msra.mxu0 %v322
          %2209 = vmatprep.subr.mxu0 0.0
          %2210 = vmatpush1.msra.mxu0 %v323
          %2211 = vmatprep.subr.mxu0 0.0
          %2212 = vmatpush1.msra.mxu0 %v324
          %2213 = vmatprep.subr.mxu0 0.0
          %2214 = vmatpush1.msra.mxu0 %v325
          %2215 = vmatprep.subr.mxu0 0.0
          %2216 = vmatpush1.msra.mxu0 %v326
          %2217 = vmatprep.subr.mxu0 0.0
          %2218 = vmatpush1.msra.mxu0 %v327
          %2219 = vmatprep.subr.mxu0 0.0
          %2220 = vmatpush1.msra.mxu0 0.0
          %2221 = vmatprep.subr.mxu0 0.0
          %2222 = vmatpush1.msra.mxu0 0.0
          %2223 = vmatprep.subr.mxu0 0.0
          %2224 = vmatpush1.msra.mxu0 0.0
          %2225 = vmatprep.subr.mxu0 0.0
          %2226 = vmatpush1.msra.mxu0 0.0
          %2227 = vmatprep.subr.mxu0 0.0
          %2228 = vmatpush1.msra.mxu0 0.0
          %2229 = vmatprep.subr.mxu0 0.0
          %2230 = vmatpush1.msra.mxu0 0.0
          %2231 = vmatprep.subr.mxu0 0.0
          %2232 = vmatpush1.msra.mxu0 0.0
          %2233 = vmatprep.subr.mxu0 0.0
          %2234 = vmatpush1.msra.mxu0 0.0
          %2235 = vmatprep.subr.mxu0 0.0
          %2236 = vmatpush1.msra.mxu0 0.0
          %2237 = vmatprep.subr.mxu0 0.0
          %2238 = vmatpush1.msra.mxu0 0.0
          %2239 = vmatprep.subr.mxu0 0.0
          %2240 = vmatpush1.msra.mxu0 0.0
          %2241 = vmatprep.subr.mxu0 0.0
          %2242 = vmatpush1.msra.mxu0 0.0
          %2243 = vmatprep.subr.mxu0 0.0
          %2244 = vmatpush1.msra.mxu0 0.0
          %2245 = vmatprep.subr.mxu0 0.0
          %2246 = vmatpush1.msra.mxu0 0.0
          %2247 = vmatprep.subr.mxu0 0.0
          %2248 = vmatpush1.msra.mxu0 0.0
          %2249 = vmatprep.subr.mxu0 0.0
          %2250 = vmatpush1.msra.mxu0 0.0
          %2251 = vmatprep.mubr.f32.mxu0 0.0
          %2252 = vmatmul.mubr.f32.gmra.mrb[0].mxu0 %v2184
          %v2253 = vpop.f32.mrb[0].mxu0
          %v2254 = vadd.f32 0.0, %v2253
          %v2255 = vpop.f32.mrb[0].mxu0
          %2256 = vdwg.mxu0
          %v2257 = vadd.f32 %v2038, %v2254
          %v2258 = vadd.f32 %v2257, %v1844
          %v2259 = vmax.f32 %v2258, 0.0
          %2260 = vmatprep.subr.mxu0 0.0
          %2261 = vmatpush1.msra.mxu0 %v1862
          %2262 = vmatprep.subr.mxu0 0.0
          %2263 = vmatpush1.msra.mxu0 %v1863
          %2264 = vmatprep.subr.mxu0 0.0
          %2265 = vmatpush1.msra.mxu0 %v1864
          %2266 = vmatprep.subr.mxu0 0.0
          %2267 = vmatpush1.msra.mxu0 %v1865
          %2268 = vmatprep.subr.mxu0 0.0
          %2269 = vmatpush1.msra.mxu0 %v1866
          %2270 = vmatprep.subr.mxu0 0.0
          %2271 = vmatpush1.msra.mxu0 %v1867
          %2272 = vmatprep.subr.mxu0 0.0
          %2273 = vmatpush1.msra.mxu0 %v1868
          %2274 = vmatprep.subr.mxu0 0.0
          %2275 = vmatpush1.msra.mxu0 %v1869
          %2276 = vmatprep.subr.mxu0 0.0
          %2277 = vmatpush1.msra.mxu0 %v1870
          %2278 = vmatprep.subr.mxu0 0.0
          %2279 = vmatpush1.msra.mxu0 %v1871
          %2280 = vmatprep.subr.mxu0 0.0
          %2281 = vmatpush1.msra.mxu0 %v1872
          %2282 = vmatprep.subr.mxu0 0.0
          %2283 = vmatpush1.msra.mxu0 %v1873
          %2284 = vmatprep.subr.mxu0 0.0
          %2285 = vmatpush1.msra.mxu0 %v1874
          %2286 = vmatprep.subr.mxu0 0.0
          %2287 = vmatpush1.msra.mxu0 %v1875
          %2288 = vmatprep.subr.mxu0 0.0
          %2289 = vmatpush1.msra.mxu0 %v1876
          %2290 = vmatprep.subr.mxu0 0.0
          %2291 = vmatpush1.msra.mxu0 %v1877
          %2292 = vmatprep.subr.mxu0 0.0
          %2293 = vmatpush1.msra.mxu0 0.0
          %2294 = vmatprep.subr.mxu0 0.0
          %2295 = vmatpush1.msra.mxu0 0.0
          %2296 = vmatprep.subr.mxu0 0.0
          %2297 = vmatpush1.msra.mxu0 0.0
          %2298 = vmatprep.subr.mxu0 0.0
          %2299 = vmatpush1.msra.mxu0 0.0
          %2300 = vmatprep.subr.mxu0 0.0
          %2301 = vmatpush1.msra.mxu0 0.0
          %2302 = vmatprep.subr.mxu0 0.0
          %2303 = vmatpush1.msra.mxu0 0.0
          %2304 = vmatprep.subr.mxu0 0.0
          %2305 = vmatpush1.msra.mxu0 0.0
          %2306 = vmatprep.subr.mxu0 0.0
          %2307 = vmatpush1.msra.mxu0 0.0
          %2308 = vmatprep.subr.mxu0 0.0
          %2309 = vmatpush1.msra.mxu0 0.0
          %2310 = vmatprep.subr.mxu0 0.0
          %2311 = vmatpush1.msra.mxu0 0.0
          %2312 = vmatprep.subr.mxu0 0.0
          %2313 = vmatpush1.msra.mxu0 0.0
          %2314 = vmatprep.subr.mxu0 0.0
          %2315 = vmatpush1.msra.mxu0 0.0
          %2316 = vmatprep.subr.mxu0 0.0
          %2317 = vmatpush1.msra.mxu0 0.0
          %2318 = vmatprep.subr.mxu0 0.0
          %2319 = vmatpush1.msra.mxu0 0.0
          %2320 = vmatprep.subr.mxu0 0.0
          %2321 = vmatpush1.msra.mxu0 0.0
          %2322 = vmatprep.subr.mxu0 0.0
          %2323 = vmatpush1.msra.mxu0 0.0
          %2324 = vmatprep.mubr.f32.mxu0 0.0
          %2325 = vmatmul.mubr.f32.gmra.mrb[0].mxu0 %v2259
          %v2326 = vpop.f32.mrb[0].mxu0
          %v2327 = vadd.f32 0.0, %v2326
          %v2328 = vpop.f32.mrb[0].mxu0
          %2329 = vdwg.mxu0
          %s2330 = scalar_lea.vmem [#allocation2], %s1891
          %2331 = vst [vmem:[%s2330] sm:$0xff] %v2327
        $region67: #{tiny_vgg_forward.1} parent=47 // loop_footer
          %s1886 = sadd.s32 1, %s1882
        $region68: #{tiny_vgg_forward.1} parent=47 // loop_footer_branch
          %1881 = sbr.rel target = $region64
        $region69: #{tiny_vgg_forward.1} parent=47 // loop_exit
          _
        %s2332 = scalar_lea.vmem %s1, 96
        %v2333 = vld [vmem:[%s2332] sm:$0xff]
        %s2334 = scalar_lea.vmem %s1, 104
        %v2335 = vld [vmem:[%s2334] sm:$0xff]
        %s2336 = scalar_lea.vmem %s1, 112
        %v2337 = vld [vmem:[%s2336] sm:$0xff]
        %s2338 = scalar_lea.vmem %s1, 120
        %v2339 = vld [vmem:[%s2338] sm:$0xff]
        %s2340 = scalar_lea.vmem %s2, 24
        %v2341 = vld [vmem:[%s2340] sm:$0xff]
        %vm2342 = vcmp.le.s32.totalorder %v294, 17
        %vm2343 = vmand %vm900, %vm2342
        %vm2344 = vmand %vm901, %vm2342
        %vm2345 = vmand %vm902, %vm2342
        %vm2346 = vmand %vm903, %vm2342
        %vm2347 = vmand %vm904, %vm2342
        %vm2348 = vmand %vm905, %vm2342
        %vm2349 = vmand %vm906, %vm2342
        %vm2350 = vmand %vm907, %vm2342
        %vm2351 = vmand %vm908, %vm2342
        %vm2352 = vmand %vm909, %vm2342
        %vm2353 = vmand %vm910, %vm2342
        %vm2354 = vmand %vm911, %vm2342
        %vm2355 = vmand %vm912, %vm2342
        %vm2356 = vmand %vm913, %vm2342
        %vm2357 = vmand %vm914, %vm2342
        %vm2358 = vmand %vm915, %vm2342
        %v2359 = vsel %vm2343, 1.0, 0.0
        %v2360 = vsel %vm2344, 1.0, 0.0
        %v2361 = vsel %vm2345, 1.0, 0.0
        %v2362 = vsel %vm2346, 1.0, 0.0
        %v2363 = vsel %vm2347, 1.0, 0.0
        %v2364 = vsel %vm2348, 1.0, 0.0
        %v2365 = vsel %vm2349, 1.0, 0.0
        %v2366 = vsel %vm2350, 1.0, 0.0
        %v2367 = vsel %vm2351, 1.0, 0.0
        %v2368 = vsel %vm2352, 1.0, 0.0
        %v2369 = vsel %vm2353, 1.0, 0.0
        %v2370 = vsel %vm2354, 1.0, 0.0
        %v2371 = vsel %vm2355, 1.0, 0.0
        %v2372 = vsel %vm2356, 1.0, 0.0
        %v2373 = vsel %vm2357, 1.0, 0.0
        %v2374 = vsel %vm2358, 1.0, 0.0
        %2375 = vst [vmem:[#allocation3] sm:$0xff] 0.0
        %s2376 = scalar_lea.vmem [#allocation3], 144
        %2377 = vst [vmem:[%s2376] sm:$0xff] 0.0
        loop: start=0, step=1, limit=17
        $region70: #{tiny_vgg_forward.1} parent=47 // loop_pre_header
          _
        $region71: #{tiny_vgg_forward.1} parent=47 // loop_header
          %s2379 = sphi 0, %s2383
          %p2380 = scmp.ge.s32.totalorder %s2379, 17
        $region72: #{tiny_vgg_forward.1} parent=47 // loop_header_branch
          %2382 = sbr.rel (%p2380) target = $region76
        $region73: #{tiny_vgg_forward.1} parent=47 // loop_body
          %s2384 = smul.u32 %s2379, 2
          %s2385 = smul.u32 %s2384, 8
          %s2386 = scalar_lea.vmem [#allocation2], %s2385
          %v2387 = vld [vmem:[%s2386] sm:$0xff]
          %s2388 = sadd.s32 %s2384, 1
          %s2389 = smul.u32 %s2388, 8
          %s2390 = scalar_lea.vmem [#allocation2], %s2389
          %v2391 = vld [vmem:[%s2390] sm:$0xff]
          %s2392 = sadd.s32 %s2384, 2
          %s2393 = smul.u32 %s2392, 8
          %s2394 = scalar_lea.vmem [#allocation2], %s2393
          %v2395 = vld [vmem:[%s2394] sm:$0xff]
          %vm2396 = vcmask 64512
          %v2398 = vsel %vm2396, %v2337, 0
          %2400 = vmatprep.subr.mxu0 0.0
          %2401 = vmatpush1.msra.mxu0 %v2391
          %2402 = vmatprep.subr.mxu0 0.0
          %2403 = vmatpush1.msra.mxu0 0.0
          %2404 = vmatprep.subr.mxu0 0.0
          %2405 = vmatpush1.msra.mxu0 0.0
          %2406 = vmatprep.subr.mxu0 0.0
          %2407 = vmatpush1.msra.mxu0 0.0
          %2408 = vmatprep.subr.mxu0 0.0
          %2409 = vmatpush1.msra.mxu0 0.0
          %2410 = vmatprep.subr.mxu0 0.0
          %2411 = vmatpush1.msra.mxu0 0.0
          %2412 = vmatprep.subr.mxu0 0.0
          %2413 = vmatpush1.msra.mxu0 0.0
          %2414 = vmatprep.subr.mxu0 0.0
          %2415 = vmatpush1.msra.mxu0 0.0
          %2416 = vmatprep.subr.mxu0 0.0
          %2417 = vmatpush1.msra.mxu0 0.0
          %2418 = vmatprep.subr.mxu0 0.0
          %2419 = vmatpush1.msra.mxu0 0.0
          %2420 = vmatprep.subr.mxu0 0.0
          %2421 = vmatpush1.msra.mxu0 0.0
          %2422 = vmatprep.subr.mxu0 0.0
          %2423 = vmatpush1.msra.mxu0 0.0
          %2424 = vmatprep.subr.mxu0 0.0
          %2425 = vmatpush1.msra.mxu0 0.0
          %2426 = vmatprep.subr.mxu0 0.0
          %2427 = vmatpush1.msra.mxu0 0.0
          %2428 = vmatprep.subr.mxu0 0.0
          %2429 = vmatpush1.msra.mxu0 0.0
          %2430 = vmatprep.subr.mxu0 0.0
          %2431 = vmatpush1.msra.mxu0 0.0
          %2432 = vmatprep.subr.mxu0 0.0
          %2433 = vmatpush1.msra.mxu0 0.0
          %2434 = vmatprep.subr.mxu0 0.0
          %2435 = vmatpush1.msra.mxu0 0.0
          %2436 = vmatprep.subr.mxu0 0.0
          %2437 = vmatpush1.msra.mxu0 0.0
          %2438 = vmatprep.subr.mxu0 0.0
          %2439 = vmatpush1.msra.mxu0 0.0
          %2440 = vmatprep.subr.mxu0 0.0
          %2441 = vmatpush1.msra.mxu0 0.0
          %2442 = vmatprep.subr.mxu0 0.0
          %2443 = vmatpush1.msra.mxu0 0.0
          %2444 = vmatprep.subr.mxu0 0.0
          %2445 = vmatpush1.msra.mxu0 0.0
          %2446 = vmatprep.subr.mxu0 0.0
          %2447 = vmatpush1.msra.mxu0 0.0
          %2448 = vmatprep.subr.mxu0 0.0
          %2449 = vmatpush1.msra.mxu0 0.0
          %2450 = vmatprep.subr.mxu0 0.0
          %2451 = vmatpush1.msra.mxu0 0.0
          %2452 = vmatprep.subr.mxu0 0.0
          %2453 = vmatpush1.msra.mxu0 0.0
          %2454 = vmatprep.subr.mxu0 0.0
          %2455 = vmatpush1.msra.mxu0 0.0
          %2456 = vmatprep.subr.mxu0 0.0
          %2457 = vmatpush1.msra.mxu0 0.0
          %2458 = vmatprep.subr.mxu0 0.0
          %2459 = vmatpush1.msra.mxu0 0.0
          %2460 = vmatprep.subr.mxu0 0.0
          %2461 = vmatpush1.msra.mxu0 0.0
          %2462 = vmatprep.subr.mxu0 0.0
          %2463 = vmatpush1.msra.mxu0 0.0
          %2464 = vmatprep.mubr.f32.mxu0 0.0
          %2465 = vmatmul.mubr.f32.gmra.mrb[0].mxu0 %v2398
          %v2466 = vpop.f32.mrb[0].mxu0
          %v2467 = vadd.f32 0.0, %v2466
          %v2468 = vpop.f32.mrb[0].mxu0
          %2469 = vdwg.mxu0
          %v2471 = vsel %vm2396, %v2333, 0
          %2473 = vmatprep.subr.mxu0 0.0
          %2474 = vmatpush1.msra.mxu0 %v2387
          %2475 = vmatprep.subr.mxu0 0.0
          %2476 = vmatpush1.msra.mxu0 0.0
          %2477 = vmatprep.subr.mxu0 0.0
          %2478 = vmatpush1.msra.mxu0 0.0
          %2479 = vmatprep.subr.mxu0 0.0
          %2480 = vmatpush1.msra.mxu0 0.0
          %2481 = vmatprep.subr.mxu0 0.0
          %2482 = vmatpush1.msra.mxu0 0.0
          %2483 = vmatprep.subr.mxu0 0.0
          %2484 = vmatpush1.msra.mxu0 0.0
          %2485 = vmatprep.subr.mxu0 0.0
          %2486 = vmatpush1.msra.mxu0 0.0
          %2487 = vmatprep.subr.mxu0 0.0
          %2488 = vmatpush1.msra.mxu0 0.0
          %2489 = vmatprep.subr.mxu0 0.0
          %2490 = vmatpush1.msra.mxu0 0.0
          %2491 = vmatprep.subr.mxu0 0.0
          %2492 = vmatpush1.msra.mxu0 0.0
          %2493 = vmatprep.subr.mxu0 0.0
          %2494 = vmatpush1.msra.mxu0 0.0
          %2495 = vmatprep.subr.mxu0 0.0
          %2496 = vmatpush1.msra.mxu0 0.0
          %2497 = vmatprep.subr.mxu0 0.0
          %2498 = vmatpush1.msra.mxu0 0.0
          %2499 = vmatprep.subr.mxu0 0.0
          %2500 = vmatpush1.msra.mxu0 0.0
          %2501 = vmatprep.subr.mxu0 0.0
          %2502 = vmatpush1.msra.mxu0 0.0
          %2503 = vmatprep.subr.mxu0 0.0
          %2504 = vmatpush1.msra.mxu0 0.0
          %2505 = vmatprep.subr.mxu0 0.0
          %2506 = vmatpush1.msra.mxu0 0.0
          %2507 = vmatprep.subr.mxu0 0.0
          %2508 = vmatpush1.msra.mxu0 0.0
          %2509 = vmatprep.subr.mxu0 0.0
          %2510 = vmatpush1.msra.mxu0 0.0
          %2511 = vmatprep.subr.mxu0 0.0
          %2512 = vmatpush1.msra.mxu0 0.0
          %2513 = vmatprep.subr.mxu0 0.0
          %2514 = vmatpush1.msra.mxu0 0.0
          %2515 = vmatprep.subr.mxu0 0.0
          %2516 = vmatpush1.msra.mxu0 0.0
          %2517 = vmatprep.subr.mxu0 0.0
          %2518 = vmatpush1.msra.mxu0 0.0
          %2519 = vmatprep.subr.mxu0 0.0
          %2520 = vmatpush1.msra.mxu0 0.0
          %2521 = vmatprep.subr.mxu0 0.0
          %2522 = vmatpush1.msra.mxu0 0.0
          %2523 = vmatprep.subr.mxu0 0.0
          %2524 = vmatpush1.msra.mxu0 0.0
          %2525 = vmatprep.subr.mxu0 0.0
          %2526 = vmatpush1.msra.mxu0 0.0
          %2527 = vmatprep.subr.mxu0 0.0
          %2528 = vmatpush1.msra.mxu0 0.0
          %2529 = vmatprep.subr.mxu0 0.0
          %2530 = vmatpush1.msra.mxu0 0.0
          %2531 = vmatprep.subr.mxu0 0.0
          %2532 = vmatpush1.msra.mxu0 0.0
          %2533 = vmatprep.subr.mxu0 0.0
          %2534 = vmatpush1.msra.mxu0 0.0
          %2535 = vmatprep.subr.mxu0 0.0
          %2536 = vmatpush1.msra.mxu0 0.0
          %2537 = vmatprep.mubr.f32.mxu0 0.0
          %2538 = vmatmul.mubr.f32.gmra.mrb[0].mxu0 %v2471
          %v2539 = vpop.f32.mrb[0].mxu0
          %v2540 = vadd.f32 %v2467, %v2539
          %v2541 = vpop.f32.mrb[0].mxu0
          %2542 = vdwg.mxu0
          %v2544 = vsel %vm2396, %v2339, 0
          %2546 = vmatprep.subr.mxu0 0.0
          %2547 = vmatpush1.msra.mxu0 %v2391
          %2548 = vmatprep.subr.mxu0 0.0
          %2549 = vmatpush1.msra.mxu0 0.0
          %2550 = vmatprep.subr.mxu0 0.0
          %2551 = vmatpush1.msra.mxu0 0.0
          %2552 = vmatprep.subr.mxu0 0.0
          %2553 = vmatpush1.msra.mxu0 0.0
          %2554 = vmatprep.subr.mxu0 0.0
          %2555 = vmatpush1.msra.mxu0 0.0
          %2556 = vmatprep.subr.mxu0 0.0
          %2557 = vmatpush1.msra.mxu0 0.0
          %2558 = vmatprep.subr.mxu0 0.0
          %2559 = vmatpush1.msra.mxu0 0.0
          %2560 = vmatprep.subr.mxu0 0.0
          %2561 = vmatpush1.msra.mxu0 0.0
          %2562 = vmatprep.subr.mxu0 0.0
          %2563 = vmatpush1.msra.mxu0 0.0
          %2564 = vmatprep.subr.mxu0 0.0
          %2565 = vmatpush1.msra.mxu0 0.0
          %2566 = vmatprep.subr.mxu0 0.0
          %2567 = vmatpush1.msra.mxu0 0.0
          %2568 = vmatprep.subr.mxu0 0.0
          %2569 = vmatpush1.msra.mxu0 0.0
          %2570 = vmatprep.subr.mxu0 0.0
          %2571 = vmatpush1.msra.mxu0 0.0
          %2572 = vmatprep.subr.mxu0 0.0
          %2573 = vmatpush1.msra.mxu0 0.0
          %2574 = vmatprep.subr.mxu0 0.0
          %2575 = vmatpush1.msra.mxu0 0.0
          %2576 = vmatprep.subr.mxu0 0.0
          %2577 = vmatpush1.msra.mxu0 0.0
          %2578 = vmatprep.subr.mxu0 0.0
          %2579 = vmatpush1.msra.mxu0 0.0
          %2580 = vmatprep.subr.mxu0 0.0
          %2581 = vmatpush1.msra.mxu0 0.0
          %2582 = vmatprep.subr.mxu0 0.0
          %2583 = vmatpush1.msra.mxu0 0.0
          %2584 = vmatprep.subr.mxu0 0.0
          %2585 = vmatpush1.msra.mxu0 0.0
          %2586 = vmatprep.subr.mxu0 0.0
          %2587 = vmatpush1.msra.mxu0 0.0
          %2588 = vmatprep.subr.mxu0 0.0
          %2589 = vmatpush1.msra.mxu0 0.0
          %2590 = vmatprep.subr.mxu0 0.0
          %2591 = vmatpush1.msra.mxu0 0.0
          %2592 = vmatprep.subr.mxu0 0.0
          %2593 = vmatpush1.msra.mxu0 0.0
          %2594 = vmatprep.subr.mxu0 0.0
          %2595 = vmatpush1.msra.mxu0 0.0
          %2596 = vmatprep.subr.mxu0 0.0
          %2597 = vmatpush1.msra.mxu0 0.0
          %2598 = vmatprep.subr.mxu0 0.0
          %2599 = vmatpush1.msra.mxu0 0.0
          %2600 = vmatprep.subr.mxu0 0.0
          %2601 = vmatpush1.msra.mxu0 0.0
          %2602 = vmatprep.subr.mxu0 0.0
          %2603 = vmatpush1.msra.mxu0 0.0
          %2604 = vmatprep.subr.mxu0 0.0
          %2605 = vmatpush1.msra.mxu0 0.0
          %2606 = vmatprep.subr.mxu0 0.0
          %2607 = vmatpush1.msra.mxu0 0.0
          %2608 = vmatprep.subr.mxu0 0.0
          %2609 = vmatpush1.msra.mxu0 0.0
          %2610 = vmatprep.mubr.f32.mxu0 0.0
          %2611 = vmatmul.mubr.f32.gmra.mrb[0].mxu0 %v2544
          %v2612 = vpop.f32.mrb[0].mxu0
          %v2613 = vadd.f32 0.0, %v2612
          %v2614 = vpop.f32.mrb[0].mxu0
          %2615 = vdwg.mxu0
          %v2617 = vsel %vm2396, %v2335, 0
          %2619 = vmatprep.subr.mxu0 0.0
          %2620 = vmatpush1.msra.mxu0 %v2387
          %2621 = vmatprep.subr.mxu0 0.0
          %2622 = vmatpush1.msra.mxu0 0.0
          %2623 = vmatprep.subr.mxu0 0.0
          %2624 = vmatpush1.msra.mxu0 0.0
          %2625 = vmatprep.subr.mxu0 0.0
          %2626 = vmatpush1.msra.mxu0 0.0
          %2627 = vmatprep.subr.mxu0 0.0
          %2628 = vmatpush1.msra.mxu0 0.0
          %2629 = vmatprep.subr.mxu0 0.0
          %2630 = vmatpush1.msra.mxu0 0.0
          %2631 = vmatprep.subr.mxu0 0.0
          %2632 = vmatpush1.msra.mxu0 0.0
          %2633 = vmatprep.subr.mxu0 0.0
          %2634 = vmatpush1.msra.mxu0 0.0
          %2635 = vmatprep.subr.mxu0 0.0
          %2636 = vmatpush1.msra.mxu0 0.0
          %2637 = vmatprep.subr.mxu0 0.0
          %2638 = vmatpush1.msra.mxu0 0.0
          %2639 = vmatprep.subr.mxu0 0.0
          %2640 = vmatpush1.msra.mxu0 0.0
          %2641 = vmatprep.subr.mxu0 0.0
          %2642 = vmatpush1.msra.mxu0 0.0
          %2643 = vmatprep.subr.mxu0 0.0
          %2644 = vmatpush1.msra.mxu0 0.0
          %2645 = vmatprep.subr.mxu0 0.0
          %2646 = vmatpush1.msra.mxu0 0.0
          %2647 = vmatprep.subr.mxu0 0.0
          %2648 = vmatpush1.msra.mxu0 0.0
          %2649 = vmatprep.subr.mxu0 0.0
          %2650 = vmatpush1.msra.mxu0 0.0
          %2651 = vmatprep.subr.mxu0 0.0
          %2652 = vmatpush1.msra.mxu0 0.0
          %2653 = vmatprep.subr.mxu0 0.0
          %2654 = vmatpush1.msra.mxu0 0.0
          %2655 = vmatprep.subr.mxu0 0.0
          %2656 = vmatpush1.msra.mxu0 0.0
          %2657 = vmatprep.subr.mxu0 0.0
          %2658 = vmatpush1.msra.mxu0 0.0
          %2659 = vmatprep.subr.mxu0 0.0
          %2660 = vmatpush1.msra.mxu0 0.0
          %2661 = vmatprep.subr.mxu0 0.0
          %2662 = vmatpush1.msra.mxu0 0.0
          %2663 = vmatprep.subr.mxu0 0.0
          %2664 = vmatpush1.msra.mxu0 0.0
          %2665 = vmatprep.subr.mxu0 0.0
          %2666 = vmatpush1.msra.mxu0 0.0
          %2667 = vmatprep.subr.mxu0 0.0
          %2668 = vmatpush1.msra.mxu0 0.0
          %2669 = vmatprep.subr.mxu0 0.0
          %2670 = vmatpush1.msra.mxu0 0.0
          %2671 = vmatprep.subr.mxu0 0.0
          %2672 = vmatpush1.msra.mxu0 0.0
          %2673 = vmatprep.subr.mxu0 0.0
          %2674 = vmatpush1.msra.mxu0 0.0
          %2675 = vmatprep.subr.mxu0 0.0
          %2676 = vmatpush1.msra.mxu0 0.0
          %2677 = vmatprep.subr.mxu0 0.0
          %2678 = vmatpush1.msra.mxu0 0.0
          %2679 = vmatprep.subr.mxu0 0.0
          %2680 = vmatpush1.msra.mxu0 0.0
          %2681 = vmatprep.subr.mxu0 0.0
          %2682 = vmatpush1.msra.mxu0 0.0
          %2683 = vmatprep.mubr.f32.mxu0 0.0
          %2684 = vmatmul.mubr.f32.gmra.mrb[0].mxu0 %v2617
          %v2685 = vpop.f32.mrb[0].mxu0
          %v2686 = vadd.f32 %v2613, %v2685
          %v2687 = vpop.f32.mrb[0].mxu0
          %2688 = vdwg.mxu0
          %2689 = vmatprep.subr.mxu0 0.0
          %2690 = vmatpush1.msra.mxu0 %v312
          %2691 = vmatprep.subr.mxu0 0.0
          %2692 = vmatpush1.msra.mxu0 %v313
          %2693 = vmatprep.subr.mxu0 0.0
          %2694 = vmatpush1.msra.mxu0 %v314
          %2695 = vmatprep.subr.mxu0 0.0
          %2696 = vmatpush1.msra.mxu0 %v315
          %2697 = vmatprep.subr.mxu0 0.0
          %2698 = vmatpush1.msra.mxu0 %v316
          %2699 = vmatprep.subr.mxu0 0.0
          %2700 = vmatpush1.msra.mxu0 %v317
          %2701 = vmatprep.subr.mxu0 0.0
          %2702 = vmatpush1.msra.mxu0 %v318
          %2703 = vmatprep.subr.mxu0 0.0
          %2704 = vmatpush1.msra.mxu0 %v319
          %2705 = vmatprep.subr.mxu0 0.0
          %2706 = vmatpush1.msra.mxu0 %v320
          %2707 = vmatprep.subr.mxu0 0.0
          %2708 = vmatpush1.msra.mxu0 %v321
          %2709 = vmatprep.subr.mxu0 0.0
          %2710 = vmatpush1.msra.mxu0 %v322
          %2711 = vmatprep.subr.mxu0 0.0
          %2712 = vmatpush1.msra.mxu0 %v323
          %2713 = vmatprep.subr.mxu0 0.0
          %2714 = vmatpush1.msra.mxu0 %v324
          %2715 = vmatprep.subr.mxu0 0.0
          %2716 = vmatpush1.msra.mxu0 %v325
          %2717 = vmatprep.subr.mxu0 0.0
          %2718 = vmatpush1.msra.mxu0 %v326
          %2719 = vmatprep.subr.mxu0 0.0
          %2720 = vmatpush1.msra.mxu0 %v327
          %2721 = vmatprep.subr.mxu0 0.0
          %2722 = vmatpush1.msra.mxu0 0.0
          %2723 = vmatprep.subr.mxu0 0.0
          %2724 = vmatpush1.msra.mxu0 0.0
          %2725 = vmatprep.subr.mxu0 0.0
          %2726 = vmatpush1.msra.mxu0 0.0
          %2727 = vmatprep.subr.mxu0 0.0
          %2728 = vmatpush1.msra.mxu0 0.0
          %2729 = vmatprep.subr.mxu0 0.0
          %2730 = vmatpush1.msra.mxu0 0.0
          %2731 = vmatprep.subr.mxu0 0.0
          %2732 = vmatpush1.msra.mxu0 0.0
          %2733 = vmatprep.subr.mxu0 0.0
          %2734 = vmatpush1.msra.mxu0 0.0
          %2735 = vmatprep.subr.mxu0 0.0
          %2736 = vmatpush1.msra.mxu0 0.0
          %2737 = vmatprep.subr.mxu0 0.0
          %2738 = vmatpush1.msra.mxu0 0.0
          %2739 = vmatprep.subr.mxu0 0.0
          %2740 = vmatpush1.msra.mxu0 0.0
          %2741 = vmatprep.subr.mxu0 0.0
          %2742 = vmatpush1.msra.mxu0 0.0
          %2743 = vmatprep.subr.mxu0 0.0
          %2744 = vmatpush1.msra.mxu0 0.0
          %2745 = vmatprep.subr.mxu0 0.0
          %2746 = vmatpush1.msra.mxu0 0.0
          %2747 = vmatprep.subr.mxu0 0.0
          %2748 = vmatpush1.msra.mxu0 0.0
          %2749 = vmatprep.subr.mxu0 0.0
          %2750 = vmatpush1.msra.mxu0 0.0
          %2751 = vmatprep.subr.mxu0 0.0
          %2752 = vmatpush1.msra.mxu0 0.0
          %2753 = vmatprep.mubr.f32.mxu0 0.0
          %2754 = vmatmul.mubr.f32.gmra.mrb[0].mxu0 %v2686
          %v2755 = vpop.f32.mrb[0].mxu0
          %v2756 = vadd.f32 0.0, %v2755
          %v2757 = vpop.f32.mrb[0].mxu0
          %2758 = vdwg.mxu0
          %v2759 = vadd.f32 %v2540, %v2756
          %v2760 = vadd.f32 %v2759, %v2341
          %v2761 = vmax.f32 %v2760, 0.0
          %2762 = vmatprep.subr.mxu0 0.0
          %2763 = vmatpush1.msra.mxu0 %v2395
          %2764 = vmatprep.subr.mxu0 0.0
          %2765 = vmatpush1.msra.mxu0 0.0
          %2766 = vmatprep.subr.mxu0 0.0
          %2767 = vmatpush1.msra.mxu0 0.0
          %2768 = vmatprep.subr.mxu0 0.0
          %2769 = vmatpush1.msra.mxu0 0.0
          %2770 = vmatprep.subr.mxu0 0.0
          %2771 = vmatpush1.msra.mxu0 0.0
          %2772 = vmatprep.subr.mxu0 0.0
          %2773 = vmatpush1.msra.mxu0 0.0
          %2774 = vmatprep.subr.mxu0 0.0
          %2775 = vmatpush1.msra.mxu0 0.0
          %2776 = vmatprep.subr.mxu0 0.0
          %2777 = vmatpush1.msra.mxu0 0.0
          %2778 = vmatprep.subr.mxu0 0.0
          %2779 = vmatpush1.msra.mxu0 0.0
          %2780 = vmatprep.subr.mxu0 0.0
          %2781 = vmatpush1.msra.mxu0 0.0
          %2782 = vmatprep.subr.mxu0 0.0
          %2783 = vmatpush1.msra.mxu0 0.0
          %2784 = vmatprep.subr.mxu0 0.0
          %2785 = vmatpush1.msra.mxu0 0.0
          %2786 = vmatprep.subr.mxu0 0.0
          %2787 = vmatpush1.msra.mxu0 0.0
          %2788 = vmatprep.subr.mxu0 0.0
          %2789 = vmatpush1.msra.mxu0 0.0
          %2790 = vmatprep.subr.mxu0 0.0
          %2791 = vmatpush1.msra.mxu0 0.0
          %2792 = vmatprep.subr.mxu0 0.0
          %2793 = vmatpush1.msra.mxu0 0.0
          %2794 = vmatprep.subr.mxu0 0.0
          %2795 = vmatpush1.msra.mxu0 0.0
          %2796 = vmatprep.subr.mxu0 0.0
          %2797 = vmatpush1.msra.mxu0 0.0
          %2798 = vmatprep.subr.mxu0 0.0
          %2799 = vmatpush1.msra.mxu0 0.0
          %2800 = vmatprep.subr.mxu0 0.0
          %2801 = vmatpush1.msra.mxu0 0.0
          %2802 = vmatprep.subr.mxu0 0.0
          %2803 = vmatpush1.msra.mxu0 0.0
          %2804 = vmatprep.subr.mxu0 0.0
          %2805 = vmatpush1.msra.mxu0 0.0
          %2806 = vmatprep.subr.mxu0 0.0
          %2807 = vmatpush1.msra.mxu0 0.0
          %2808 = vmatprep.subr.mxu0 0.0
          %2809 = vmatpush1.msra.mxu0 0.0
          %2810 = vmatprep.subr.mxu0 0.0
          %2811 = vmatpush1.msra.mxu0 0.0
          %2812 = vmatprep.subr.mxu0 0.0
          %2813 = vmatpush1.msra.mxu0 0.0
          %2814 = vmatprep.subr.mxu0 0.0
          %2815 = vmatpush1.msra.mxu0 0.0
          %2816 = vmatprep.subr.mxu0 0.0
          %2817 = vmatpush1.msra.mxu0 0.0
          %2818 = vmatprep.subr.mxu0 0.0
          %2819 = vmatpush1.msra.mxu0 0.0
          %2820 = vmatprep.subr.mxu0 0.0
          %2821 = vmatpush1.msra.mxu0 0.0
          %2822 = vmatprep.subr.mxu0 0.0
          %2823 = vmatpush1.msra.mxu0 0.0
          %2824 = vmatprep.subr.mxu0 0.0
          %2825 = vmatpush1.msra.mxu0 0.0
          %2826 = vmatprep.mubr.f32.mxu0 0.0
          %2827 = vmatmul.mubr.f32.gmra.mrb[0].mxu0 %v2398
          %v2828 = vpop.f32.mrb[0].mxu0
          %v2829 = vadd.f32 0.0, %v2828
          %v2830 = vpop.f32.mrb[0].mxu0
          %2831 = vdwg.mxu0
          %2832 = vmatprep.subr.mxu0 0.0
          %2833 = vmatpush1.msra.mxu0 %v2391
          %2834 = vmatprep.subr.mxu0 0.0
          %2835 = vmatpush1.msra.mxu0 0.0
          %2836 = vmatprep.subr.mxu0 0.0
          %2837 = vmatpush1.msra.mxu0 0.0
          %2838 = vmatprep.subr.mxu0 0.0
          %2839 = vmatpush1.msra.mxu0 0.0
          %2840 = vmatprep.subr.mxu0 0.0
          %2841 = vmatpush1.msra.mxu0 0.0
          %2842 = vmatprep.subr.mxu0 0.0
          %2843 = vmatpush1.msra.mxu0 0.0
          %2844 = vmatprep.subr.mxu0 0.0
          %2845 = vmatpush1.msra.mxu0 0.0
          %2846 = vmatprep.subr.mxu0 0.0
          %2847 = vmatpush1.msra.mxu0 0.0
          %2848 = vmatprep.subr.mxu0 0.0
          %2849 = vmatpush1.msra.mxu0 0.0
          %2850 = vmatprep.subr.mxu0 0.0
          %2851 = vmatpush1.msra.mxu0 0.0
          %2852 = vmatprep.subr.mxu0 0.0
          %2853 = vmatpush1.msra.mxu0 0.0
          %2854 = vmatprep.subr.mxu0 0.0
          %2855 = vmatpush1.msra.mxu0 0.0
          %2856 = vmatprep.subr.mxu0 0.0
          %2857 = vmatpush1.msra.mxu0 0.0
          %2858 = vmatprep.subr.mxu0 0.0
          %2859 = vmatpush1.msra.mxu0 0.0
          %2860 = vmatprep.subr.mxu0 0.0
          %2861 = vmatpush1.msra.mxu0 0.0
          %2862 = vmatprep.subr.mxu0 0.0
          %2863 = vmatpush1.msra.mxu0 0.0
          %2864 = vmatprep.subr.mxu0 0.0
          %2865 = vmatpush1.msra.mxu0 0.0
          %2866 = vmatprep.subr.mxu0 0.0
          %2867 = vmatpush1.msra.mxu0 0.0
          %2868 = vmatprep.subr.mxu0 0.0
          %2869 = vmatpush1.msra.mxu0 0.0
          %2870 = vmatprep.subr.mxu0 0.0
          %2871 = vmatpush1.msra.mxu0 0.0
          %2872 = vmatprep.subr.mxu0 0.0
          %2873 = vmatpush1.msra.mxu0 0.0
          %2874 = vmatprep.subr.mxu0 0.0
          %2875 = vmatpush1.msra.mxu0 0.0
          %2876 = vmatprep.subr.mxu0 0.0
          %2877 = vmatpush1.msra.mxu0 0.0
          %2878 = vmatprep.subr.mxu0 0.0
          %2879 = vmatpush1.msra.mxu0 0.0
          %2880 = vmatprep.subr.mxu0 0.0
          %2881 = vmatpush1.msra.mxu0 0.0
          %2882 = vmatprep.subr.mxu0 0.0
          %2883 = vmatpush1.msra.mxu0 0.0
          %2884 = vmatprep.subr.mxu0 0.0
          %2885 = vmatpush1.msra.mxu0 0.0
          %2886 = vmatprep.subr.mxu0 0.0
          %2887 = vmatpush1.msra.mxu0 0.0
          %2888 = vmatprep.subr.mxu0 0.0
          %2889 = vmatpush1.msra.mxu0 0.0
          %2890 = vmatprep.subr.mxu0 0.0
          %2891 = vmatpush1.msra.mxu0 0.0
          %2892 = vmatprep.subr.mxu0 0.0
          %2893 = vmatpush1.msra.mxu0 0.0
          %2894 = vmatprep.subr.mxu0 0.0
          %2895 = vmatpush1.msra.mxu0 0.0
          %2896 = vmatprep.mubr.f32.mxu0 0.0
          %2897 = vmatmul.mubr.f32.gmra.mrb[0].mxu0 %v2471
          %v2898 = vpop.f32.mrb[0].mxu0
          %v2899 = vadd.f32 %v2829, %v2898
          %v2900 = vpop.f32.mrb[0].mxu0
          %2901 = vdwg.mxu0
          %2902 = vmatprep.subr.mxu0 0.0
          %2903 = vmatpush1.msra.mxu0 %v2395
          %2904 = vmatprep.subr.mxu0 0.0
          %2905 = vmatpush1.msra.mxu0 0.0
          %2906 = vmatprep.subr.mxu0 0.0
          %2907 = vmatpush1.msra.mxu0 0.0
          %2908 = vmatprep.subr.mxu0 0.0
          %2909 = vmatpush1.msra.mxu0 0.0
          %2910 = vmatprep.subr.mxu0 0.0
          %2911 = vmatpush1.msra.mxu0 0.0
          %2912 = vmatprep.subr.mxu0 0.0
          %2913 = vmatpush1.msra.mxu0 0.0
          %2914 = vmatprep.subr.mxu0 0.0
          %2915 = vmatpush1.msra.mxu0 0.0
          %2916 = vmatprep.subr.mxu0 0.0
          %2917 = vmatpush1.msra.mxu0 0.0
          %2918 = vmatprep.subr.mxu0 0.0
          %2919 = vmatpush1.msra.mxu0 0.0
          %2920 = vmatprep.subr.mxu0 0.0
          %2921 = vmatpush1.msra.mxu0 0.0
          %2922 = vmatprep.subr.mxu0 0.0
          %2923 = vmatpush1.msra.mxu0 0.0
          %2924 = vmatprep.subr.mxu0 0.0
          %2925 = vmatpush1.msra.mxu0 0.0
          %2926 = vmatprep.subr.mxu0 0.0
          %2927 = vmatpush1.msra.mxu0 0.0
          %2928 = vmatprep.subr.mxu0 0.0
          %2929 = vmatpush1.msra.mxu0 0.0
          %2930 = vmatprep.subr.mxu0 0.0
          %2931 = vmatpush1.msra.mxu0 0.0
          %2932 = vmatprep.subr.mxu0 0.0
          %2933 = vmatpush1.msra.mxu0 0.0
          %2934 = vmatprep.subr.mxu0 0.0
          %2935 = vmatpush1.msra.mxu0 0.0
          %2936 = vmatprep.subr.mxu0 0.0
          %2937 = vmatpush1.msra.mxu0 0.0
          %2938 = vmatprep.subr.mxu0 0.0
          %2939 = vmatpush1.msra.mxu0 0.0
          %2940 = vmatprep.subr.mxu0 0.0
          %2941 = vmatpush1.msra.mxu0 0.0
          %2942 = vmatprep.subr.mxu0 0.0
          %2943 = vmatpush1.msra.mxu0 0.0
          %2944 = vmatprep.subr.mxu0 0.0
          %2945 = vmatpush1.msra.mxu0 0.0
          %2946 = vmatprep.subr.mxu0 0.0
          %2947 = vmatpush1.msra.mxu0 0.0
          %2948 = vmatprep.subr.mxu0 0.0
          %2949 = vmatpush1.msra.mxu0 0.0
          %2950 = vmatprep.subr.mxu0 0.0
          %2951 = vmatpush1.msra.mxu0 0.0
          %2952 = vmatprep.subr.mxu0 0.0
          %2953 = vmatpush1.msra.mxu0 0.0
          %2954 = vmatprep.subr.mxu0 0.0
          %2955 = vmatpush1.msra.mxu0 0.0
          %2956 = vmatprep.subr.mxu0 0.0
          %2957 = vmatpush1.msra.mxu0 0.0
          %2958 = vmatprep.subr.mxu0 0.0
          %2959 = vmatpush1.msra.mxu0 0.0
          %2960 = vmatprep.subr.mxu0 0.0
          %2961 = vmatpush1.msra.mxu0 0.0
          %2962 = vmatprep.subr.mxu0 0.0
          %2963 = vmatpush1.msra.mxu0 0.0
          %2964 = vmatprep.subr.mxu0 0.0
          %2965 = vmatpush1.msra.mxu0 0.0
          %2966 = vmatprep.mubr.f32.mxu0 0.0
          %2967 = vmatmul.mubr.f32.gmra.mrb[0].mxu0 %v2544
          %v2968 = vpop.f32.mrb[0].mxu0
          %v2969 = vadd.f32 0.0, %v2968
          %v2970 = vpop.f32.mrb[0].mxu0
          %2971 = vdwg.mxu0
          %2972 = vmatprep.subr.mxu0 0.0
          %2973 = vmatpush1.msra.mxu0 %v2391
          %2974 = vmatprep.subr.mxu0 0.0
          %2975 = vmatpush1.msra.mxu0 0.0
          %2976 = vmatprep.subr.mxu0 0.0
          %2977 = vmatpush1.msra.mxu0 0.0
          %2978 = vmatprep.subr.mxu0 0.0
          %2979 = vmatpush1.msra.mxu0 0.0
          %2980 = vmatprep.subr.mxu0 0.0
          %2981 = vmatpush1.msra.mxu0 0.0
          %2982 = vmatprep.subr.mxu0 0.0
          %2983 = vmatpush1.msra.mxu0 0.0
          %2984 = vmatprep.subr.mxu0 0.0
          %2985 = vmatpush1.msra.mxu0 0.0
          %2986 = vmatprep.subr.mxu0 0.0
          %2987 = vmatpush1.msra.mxu0 0.0
          %2988 = vmatprep.subr.mxu0 0.0
          %2989 = vmatpush1.msra.mxu0 0.0
          %2990 = vmatprep.subr.mxu0 0.0
          %2991 = vmatpush1.msra.mxu0 0.0
          %2992 = vmatprep.subr.mxu0 0.0
          %2993 = vmatpush1.msra.mxu0 0.0
          %2994 = vmatprep.subr.mxu0 0.0
          %2995 = vmatpush1.msra.mxu0 0.0
          %2996 = vmatprep.subr.mxu0 0.0
          %2997 = vmatpush1.msra.mxu0 0.0
          %2998 = vmatprep.subr.mxu0 0.0
          %2999 = vmatpush1.msra.mxu0 0.0
          %3000 = vmatprep.subr.mxu0 0.0
          %3001 = vmatpush1.msra.mxu0 0.0
          %3002 = vmatprep.subr.mxu0 0.0
          %3003 = vmatpush1.msra.mxu0 0.0
          %3004 = vmatprep.subr.mxu0 0.0
          %3005 = vmatpush1.msra.mxu0 0.0
          %3006 = vmatprep.subr.mxu0 0.0
          %3007 = vmatpush1.msra.mxu0 0.0
          %3008 = vmatprep.subr.mxu0 0.0
          %3009 = vmatpush1.msra.mxu0 0.0
          %3010 = vmatprep.subr.mxu0 0.0
          %3011 = vmatpush1.msra.mxu0 0.0
          %3012 = vmatprep.subr.mxu0 0.0
          %3013 = vmatpush1.msra.mxu0 0.0
          %3014 = vmatprep.subr.mxu0 0.0
          %3015 = vmatpush1.msra.mxu0 0.0
          %3016 = vmatprep.subr.mxu0 0.0
          %3017 = vmatpush1.msra.mxu0 0.0
          %3018 = vmatprep.subr.mxu0 0.0
          %3019 = vmatpush1.msra.mxu0 0.0
          %3020 = vmatprep.subr.mxu0 0.0
          %3021 = vmatpush1.msra.mxu0 0.0
          %3022 = vmatprep.subr.mxu0 0.0
          %3023 = vmatpush1.msra.mxu0 0.0
          %3024 = vmatprep.subr.mxu0 0.0
          %3025 = vmatpush1.msra.mxu0 0.0
          %3026 = vmatprep.subr.mxu0 0.0
          %3027 = vmatpush1.msra.mxu0 0.0
          %3028 = vmatprep.subr.mxu0 0.0
          %3029 = vmatpush1.msra.mxu0 0.0
          %3030 = vmatprep.subr.mxu0 0.0
          %3031 = vmatpush1.msra.mxu0 0.0
          %3032 = vmatprep.subr.mxu0 0.0
          %3033 = vmatpush1.msra.mxu0 0.0
          %3034 = vmatprep.subr.mxu0 0.0
          %3035 = vmatpush1.msra.mxu0 0.0
          %3036 = vmatprep.mubr.f32.mxu0 0.0
          %3037 = vmatmul.mubr.f32.gmra.mrb[0].mxu0 %v2617
          %v3038 = vpop.f32.mrb[0].mxu0
          %v3039 = vadd.f32 %v2969, %v3038
          %v3040 = vpop.f32.mrb[0].mxu0
          %3041 = vdwg.mxu0
          %3042 = vmatprep.subr.mxu0 0.0
          %3043 = vmatpush1.msra.mxu0 %v312
          %3044 = vmatprep.subr.mxu0 0.0
          %3045 = vmatpush1.msra.mxu0 %v313
          %3046 = vmatprep.subr.mxu0 0.0
          %3047 = vmatpush1.msra.mxu0 %v314
          %3048 = vmatprep.subr.mxu0 0.0
          %3049 = vmatpush1.msra.mxu0 %v315
          %3050 = vmatprep.subr.mxu0 0.0
          %3051 = vmatpush1.msra.mxu0 %v316
          %3052 = vmatprep.subr.mxu0 0.0
          %3053 = vmatpush1.msra.mxu0 %v317
          %3054 = vmatprep.subr.mxu0 0.0
          %3055 = vmatpush1.msra.mxu0 %v318
          %3056 = vmatprep.subr.mxu0 0.0
          %3057 = vmatpush1.msra.mxu0 %v319
          %3058 = vmatprep.subr.mxu0 0.0
          %3059 = vmatpush1.msra.mxu0 %v320
          %3060 = vmatprep.subr.mxu0 0.0
          %3061 = vmatpush1.msra.mxu0 %v321
          %3062 = vmatprep.subr.mxu0 0.0
          %3063 = vmatpush1.msra.mxu0 %v322
          %3064 = vmatprep.subr.mxu0 0.0
          %3065 = vmatpush1.msra.mxu0 %v323
          %3066 = vmatprep.subr.mxu0 0.0
          %3067 = vmatpush1.msra.mxu0 %v324
          %3068 = vmatprep.subr.mxu0 0.0
          %3069 = vmatpush1.msra.mxu0 %v325
          %3070 = vmatprep.subr.mxu0 0.0
          %3071 = vmatpush1.msra.mxu0 %v326
          %3072 = vmatprep.subr.mxu0 0.0
          %3073 = vmatpush1.msra.mxu0 %v327
          %3074 = vmatprep.subr.mxu0 0.0
          %3075 = vmatpush1.msra.mxu0 0.0
          %3076 = vmatprep.subr.mxu0 0.0
          %3077 = vmatpush1.msra.mxu0 0.0
          %3078 = vmatprep.subr.mxu0 0.0
          %3079 = vmatpush1.msra.mxu0 0.0
          %3080 = vmatprep.subr.mxu0 0.0
          %3081 = vmatpush1.msra.mxu0 0.0
          %3082 = vmatprep.subr.mxu0 0.0
          %3083 = vmatpush1.msra.mxu0 0.0
          %3084 = vmatprep.subr.mxu0 0.0
          %3085 = vmatpush1.msra.mxu0 0.0
          %3086 = vmatprep.subr.mxu0 0.0
          %3087 = vmatpush1.msra.mxu0 0.0
          %3088 = vmatprep.subr.mxu0 0.0
          %3089 = vmatpush1.msra.mxu0 0.0
          %3090 = vmatprep.subr.mxu0 0.0
          %3091 = vmatpush1.msra.mxu0 0.0
          %3092 = vmatprep.subr.mxu0 0.0
          %3093 = vmatpush1.msra.mxu0 0.0
          %3094 = vmatprep.subr.mxu0 0.0
          %3095 = vmatpush1.msra.mxu0 0.0
          %3096 = vmatprep.subr.mxu0 0.0
          %3097 = vmatpush1.msra.mxu0 0.0
          %3098 = vmatprep.subr.mxu0 0.0
          %3099 = vmatpush1.msra.mxu0 0.0
          %3100 = vmatprep.subr.mxu0 0.0
          %3101 = vmatpush1.msra.mxu0 0.0
          %3102 = vmatprep.subr.mxu0 0.0
          %3103 = vmatpush1.msra.mxu0 0.0
          %3104 = vmatprep.subr.mxu0 0.0
          %3105 = vmatpush1.msra.mxu0 0.0
          %3106 = vmatprep.mubr.f32.mxu0 0.0
          %3107 = vmatmul.mubr.f32.gmra.mrb[0].mxu0 %v3039
          %v3108 = vpop.f32.mrb[0].mxu0
          %v3109 = vadd.f32 0.0, %v3108
          %v3110 = vpop.f32.mrb[0].mxu0
          %3111 = vdwg.mxu0
          %v3112 = vadd.f32 %v2899, %v3109
          %v3113 = vadd.f32 %v3112, %v2341
          %v3114 = vmax.f32 %v3113, 0.0
          %v3115 = vmax.f32 %v2761, %v3114
          %3116 = vmatprep.subr.mxu0 0.0
          %3117 = vmatpush1.msra.mxu0 %v312
          %3118 = vmatprep.subr.mxu0 0.0
          %3119 = vmatpush1.msra.mxu0 %v313
          %3120 = vmatprep.subr.mxu0 0.0
          %3121 = vmatpush1.msra.mxu0 %v314
          %3122 = vmatprep.subr.mxu0 0.0
          %3123 = vmatpush1.msra.mxu0 %v315
          %3124 = vmatprep.subr.mxu0 0.0
          %3125 = vmatpush1.msra.mxu0 %v316
          %3126 = vmatprep.subr.mxu0 0.0
          %3127 = vmatpush1.msra.mxu0 %v317
          %3128 = vmatprep.subr.mxu0 0.0
          %3129 = vmatpush1.msra.mxu0 %v318
          %3130 = vmatprep.subr.mxu0 0.0
          %3131 = vmatpush1.msra.mxu0 %v319
          %3132 = vmatprep.subr.mxu0 0.0
          %3133 = vmatpush1.msra.mxu0 %v320
          %3134 = vmatprep.subr.mxu0 0.0
          %3135 = vmatpush1.msra.mxu0 %v321
          %3136 = vmatprep.subr.mxu0 0.0
          %3137 = vmatpush1.msra.mxu0 %v322
          %3138 = vmatprep.subr.mxu0 0.0
          %3139 = vmatpush1.msra.mxu0 %v323
          %3140 = vmatprep.subr.mxu0 0.0
          %3141 = vmatpush1.msra.mxu0 %v324
          %3142 = vmatprep.subr.mxu0 0.0
          %3143 = vmatpush1.msra.mxu0 %v325
          %3144 = vmatprep.subr.mxu0 0.0
          %3145 = vmatpush1.msra.mxu0 %v326
          %3146 = vmatprep.subr.mxu0 0.0
          %3147 = vmatpush1.msra.mxu0 %v327
          %3148 = vmatprep.subr.mxu0 0.0
          %3149 = vmatpush1.msra.mxu0 0.0
          %3150 = vmatprep.subr.mxu0 0.0
          %3151 = vmatpush1.msra.mxu0 0.0
          %3152 = vmatprep.subr.mxu0 0.0
          %3153 = vmatpush1.msra.mxu0 0.0
          %3154 = vmatprep.subr.mxu0 0.0
          %3155 = vmatpush1.msra.mxu0 0.0
          %3156 = vmatprep.subr.mxu0 0.0
          %3157 = vmatpush1.msra.mxu0 0.0
          %3158 = vmatprep.subr.mxu0 0.0
          %3159 = vmatpush1.msra.mxu0 0.0
          %3160 = vmatprep.subr.mxu0 0.0
          %3161 = vmatpush1.msra.mxu0 0.0
          %3162 = vmatprep.subr.mxu0 0.0
          %3163 = vmatpush1.msra.mxu0 0.0
          %3164 = vmatprep.subr.mxu0 0.0
          %3165 = vmatpush1.msra.mxu0 0.0
          %3166 = vmatprep.subr.mxu0 0.0
          %3167 = vmatpush1.msra.mxu0 0.0
          %3168 = vmatprep.subr.mxu0 0.0
          %3169 = vmatpush1.msra.mxu0 0.0
          %3170 = vmatprep.subr.mxu0 0.0
          %3171 = vmatpush1.msra.mxu0 0.0
          %3172 = vmatprep.subr.mxu0 0.0
          %3173 = vmatpush1.msra.mxu0 0.0
          %3174 = vmatprep.subr.mxu0 0.0
          %3175 = vmatpush1.msra.mxu0 0.0
          %3176 = vmatprep.subr.mxu0 0.0
          %3177 = vmatpush1.msra.mxu0 0.0
          %3178 = vmatprep.subr.mxu0 0.0
          %3179 = vmatpush1.msra.mxu0 0.0
          %3180 = vmatprep.mubr.f32.mxu0 0.0
          %3181 = vmatmul.mubr.f32.gmra.mrb[0].mxu0 %v3115
          %v3182 = vpop.f32.mrb[0].mxu0
          %v3183 = vadd.f32 0.0, %v3182
          %v3184 = vpop.f32.mrb[0].mxu0
          %3185 = vdwg.mxu0
          %v3186 = vmax.f32 %v3115, %v3183
          %3187 = vmatprep.subr.mxu0 0.0
          %3188 = vmatpush1.msra.mxu0 %v2359
          %3189 = vmatprep.subr.mxu0 0.0
          %3190 = vmatpush1.msra.mxu0 %v2360
          %3191 = vmatprep.subr.mxu0 0.0
          %3192 = vmatpush1.msra.mxu0 %v2361
          %3193 = vmatprep.subr.mxu0 0.0
          %3194 = vmatpush1.msra.mxu0 %v2362
          %3195 = vmatprep.subr.mxu0 0.0
          %3196 = vmatpush1.msra.mxu0 %v2363
          %3197 = vmatprep.subr.mxu0 0.0
          %3198 = vmatpush1.msra.mxu0 %v2364
          %3199 = vmatprep.subr.mxu0 0.0
          %3200 = vmatpush1.msra.mxu0 %v2365
          %3201 = vmatprep.subr.mxu0 0.0
          %3202 = vmatpush1.msra.mxu0 %v2366
          %3203 = vmatprep.subr.mxu0 0.0
          %3204 = vmatpush1.msra.mxu0 %v2367
          %3205 = vmatprep.subr.mxu0 0.0
          %3206 = vmatpush1.msra.mxu0 %v2368
          %3207 = vmatprep.subr.mxu0 0.0
          %3208 = vmatpush1.msra.mxu0 %v2369
          %3209 = vmatprep.subr.mxu0 0.0
          %3210 = vmatpush1.msra.mxu0 %v2370
          %3211 = vmatprep.subr.mxu0 0.0
          %3212 = vmatpush1.msra.mxu0 %v2371
          %3213 = vmatprep.subr.mxu0 0.0
          %3214 = vmatpush1.msra.mxu0 %v2372
          %3215 = vmatprep.subr.mxu0 0.0
          %3216 = vmatpush1.msra.mxu0 %v2373
          %3217 = vmatprep.subr.mxu0 0.0
          %3218 = vmatpush1.msra.mxu0 %v2374
          %3219 = vmatprep.subr.mxu0 0.0
          %3220 = vmatpush1.msra.mxu0 0.0
          %3221 = vmatprep.subr.mxu0 0.0
          %3222 = vmatpush1.msra.mxu0 0.0
          %3223 = vmatprep.subr.mxu0 0.0
          %3224 = vmatpush1.msra.mxu0 0.0
          %3225 = vmatprep.subr.mxu0 0.0
          %3226 = vmatpush1.msra.mxu0 0.0
          %3227 = vmatprep.subr.mxu0 0.0
          %3228 = vmatpush1.msra.mxu0 0.0
          %3229 = vmatprep.subr.mxu0 0.0
          %3230 = vmatpush1.msra.mxu0 0.0
          %3231 = vmatprep.subr.mxu0 0.0
          %3232 = vmatpush1.msra.mxu0 0.0
          %3233 = vmatprep.subr.mxu0 0.0
          %3234 = vmatpush1.msra.mxu0 0.0
          %3235 = vmatprep.subr.mxu0 0.0
          %3236 = vmatpush1.msra.mxu0 0.0
          %3237 = vmatprep.subr.mxu0 0.0
          %3238 = vmatpush1.msra.mxu0 0.0
          %3239 = vmatprep.subr.mxu0 0.0
          %3240 = vmatpush1.msra.mxu0 0.0
          %3241 = vmatprep.subr.mxu0 0.0
          %3242 = vmatpush1.msra.mxu0 0.0
          %3243 = vmatprep.subr.mxu0 0.0
          %3244 = vmatpush1.msra.mxu0 0.0
          %3245 = vmatprep.subr.mxu0 0.0
          %3246 = vmatpush1.msra.mxu0 0.0
          %3247 = vmatprep.subr.mxu0 0.0
          %3248 = vmatpush1.msra.mxu0 0.0
          %3249 = vmatprep.subr.mxu0 0.0
          %3250 = vmatpush1.msra.mxu0 0.0
          %3251 = vmatprep.mubr.f32.mxu0 0.0
          %3252 = vmatmul.mubr.f32.gmra.mrb[0].mxu0 %v3186
          %v3253 = vpop.f32.mrb[0].mxu0
          %v3254 = vadd.f32 0.0, %v3253
          %v3255 = vpop.f32.mrb[0].mxu0
          %3256 = vdwg.mxu0
          %s3257 = sadd.s32 %s2379, 1
          %s3258 = smul.u32 %s3257, 8
          %s3259 = scalar_lea.vmem [#allocation3], %s3258
          %3260 = vst [vmem:[%s3259] sm:$0xff] %v3254
        $region74: #{tiny_vgg_forward.1} parent=47 // loop_footer
          %s2383 = sadd.s32 1, %s2379
        $region75: #{tiny_vgg_forward.1} parent=47 // loop_footer_branch
          %2378 = sbr.rel target = $region71
        $region76: #{tiny_vgg_forward.1} parent=47 // loop_exit
          _
        %s3261 = scalar_lea.vmem %s1, 128
        %v3262 = vld [vmem:[%s3261] sm:$0xff]
        %s3263 = scalar_lea.vmem %s1, 136
        %v3264 = vld [vmem:[%s3263] sm:$0xff]
        %s3265 = scalar_lea.vmem %s1, 144
        %v3266 = vld [vmem:[%s3265] sm:$0xff]
        %s3267 = scalar_lea.vmem %s1, 152
        %v3268 = vld [vmem:[%s3267] sm:$0xff]
        %s3269 = scalar_lea.vmem %s2, 32
        %v3270 = vld [vmem:[%s3269] sm:$0xff]
        %vm3271 = vcmp.le.s32.totalorder %v294, 18
        %vm3272 = vmand %vm369, %vm3271
        %vm3273 = vmand %vm370, %vm3271
        %vm3274 = vmand %vm371, %vm3271
        %vm3275 = vmand %vm372, %vm3271
        %vm3276 = vmand %vm373, %vm3271
        %vm3277 = vmand %vm374, %vm3271
        %vm3278 = vmand %vm375, %vm3271
        %vm3279 = vmand %vm376, %vm3271
        %vm3280 = vmand %vm377, %vm3271
        %vm3281 = vmand %vm378, %vm3271
        %vm3282 = vmand %vm379, %vm3271
        %vm3283 = vmand %vm380, %vm3271
        %vm3284 = vmand %vm381, %vm3271
        %vm3285 = vmand %vm382, %vm3271
        %vm3286 = vmand %vm383, %vm3271
        %vm3287 = vmand %vm384, %vm3271
        %v3288 = vsel %vm3272, 1.0, 0.0
        %v3289 = vsel %vm3273, 1.0, 0.0
        %v3290 = vsel %vm3274, 1.0, 0.0
        %v3291 = vsel %vm3275, 1.0, 0.0
        %v3292 = vsel %vm3276, 1.0, 0.0
        %v3293 = vsel %vm3277, 1.0, 0.0
        %v3294 = vsel %vm3278, 1.0, 0.0
        %v3295 = vsel %vm3279, 1.0, 0.0
        %v3296 = vsel %vm3280, 1.0, 0.0
        %v3297 = vsel %vm3281, 1.0, 0.0
        %v3298 = vsel %vm3282, 1.0, 0.0
        %v3299 = vsel %vm3283, 1.0, 0.0
        %v3300 = vsel %vm3284, 1.0, 0.0
        %v3301 = vsel %vm3285, 1.0, 0.0
        %v3302 = vsel %vm3286, 1.0, 0.0
        %v3303 = vsel %vm3287, 1.0, 0.0
        %3304 = vst [vmem:[#allocation2] sm:$0xff] 0.0
        %s3305 = scalar_lea.vmem [#allocation2], 152
        %3306 = vst [vmem:[%s3305] sm:$0xff] 0.0
        loop: start=0, step=1, limit=18
        $region77: #{tiny_vgg_forward.1} parent=47 // loop_pre_header
          _
        $region78: #{tiny_vgg_forward.1} parent=47 // loop_header
          %s3308 = sphi 0, %s3312
          %p3309 = scmp.ge.s32.totalorder %s3308, 18
        $region79: #{tiny_vgg_forward.1} parent=47 // loop_header_branch
          %3311 = sbr.rel (%p3309) target = $region83
        $region80: #{tiny_vgg_forward.1} parent=47 // loop_body
          %s3313 = smul.u32 %s3308, 8
          %s3314 = scalar_lea.vmem [#allocation3], %s3313
          %v3315 = vld [vmem:[%s3314] sm:$0xff]
          %s3316 = sadd.s32 %s3308, 1
          %s3317 = smul.u32 %s3316, 8
          %s3318 = scalar_lea.vmem [#allocation3], %s3317
          %v3319 = vld [vmem:[%s3318] sm:$0xff]
          %vm3320 = vcmask 64512
          %v3322 = vsel %vm3320, %v3266, 0
          %3324 = vmatprep.subr.mxu0 0.0
          %3325 = vmatpush1.msra.mxu0 %v3319
          %3326 = vmatprep.subr.mxu0 0.0
          %3327 = vmatpush1.msra.mxu0 0.0
          %3328 = vmatprep.subr.mxu0 0.0
          %3329 = vmatpush1.msra.mxu0 0.0
          %3330 = vmatprep.subr.mxu0 0.0
          %3331 = vmatpush1.msra.mxu0 0.0
          %3332 = vmatprep.subr.mxu0 0.0
          %3333 = vmatpush1.msra.mxu0 0.0
          %3334 = vmatprep.subr.mxu0 0.0
          %3335 = vmatpush1.msra.mxu0 0.0
          %3336 = vmatprep.subr.mxu0 0.0
          %3337 = vmatpush1.msra.mxu0 0.0
          %3338 = vmatprep.subr.mxu0 0.0
          %3339 = vmatpush1.msra.mxu0 0.0
          %3340 = vmatprep.subr.mxu0 0.0
          %3341 = vmatpush1.msra.mxu0 0.0
          %3342 = vmatprep.subr.mxu0 0.0
          %3343 = vmatpush1.msra.mxu0 0.0
          %3344 = vmatprep.subr.mxu0 0.0
          %3345 = vmatpush1.msra.mxu0 0.0
          %3346 = vmatprep.subr.mxu0 0.0
          %3347 = vmatpush1.msra.mxu0 0.0
          %3348 = vmatprep.subr.mxu0 0.0
          %3349 = vmatpush1.msra.mxu0 0.0
          %3350 = vmatprep.subr.mxu0 0.0
          %3351 = vmatpush1.msra.mxu0 0.0
          %3352 = vmatprep.subr.mxu0 0.0
          %3353 = vmatpush1.msra.mxu0 0.0
          %3354 = vmatprep.subr.mxu0 0.0
          %3355 = vmatpush1.msra.mxu0 0.0
          %3356 = vmatprep.subr.mxu0 0.0
          %3357 = vmatpush1.msra.mxu0 0.0
          %3358 = vmatprep.subr.mxu0 0.0
          %3359 = vmatpush1.msra.mxu0 0.0
          %3360 = vmatprep.subr.mxu0 0.0
          %3361 = vmatpush1.msra.mxu0 0.0
          %3362 = vmatprep.subr.mxu0 0.0
          %3363 = vmatpush1.msra.mxu0 0.0
          %3364 = vmatprep.subr.mxu0 0.0
          %3365 = vmatpush1.msra.mxu0 0.0
          %3366 = vmatprep.subr.mxu0 0.0
          %3367 = vmatpush1.msra.mxu0 0.0
          %3368 = vmatprep.subr.mxu0 0.0
          %3369 = vmatpush1.msra.mxu0 0.0
          %3370 = vmatprep.subr.mxu0 0.0
          %3371 = vmatpush1.msra.mxu0 0.0
          %3372 = vmatprep.subr.mxu0 0.0
          %3373 = vmatpush1.msra.mxu0 0.0
          %3374 = vmatprep.subr.mxu0 0.0
          %3375 = vmatpush1.msra.mxu0 0.0
          %3376 = vmatprep.subr.mxu0 0.0
          %3377 = vmatpush1.msra.mxu0 0.0
          %3378 = vmatprep.subr.mxu0 0.0
          %3379 = vmatpush1.msra.mxu0 0.0
          %3380 = vmatprep.subr.mxu0 0.0
          %3381 = vmatpush1.msra.mxu0 0.0
          %3382 = vmatprep.subr.mxu0 0.0
          %3383 = vmatpush1.msra.mxu0 0.0
          %3384 = vmatprep.subr.mxu0 0.0
          %3385 = vmatpush1.msra.mxu0 0.0
          %3386 = vmatprep.subr.mxu0 0.0
          %3387 = vmatpush1.msra.mxu0 0.0
          %3388 = vmatprep.mubr.f32.mxu0 0.0
          %3389 = vmatmul.mubr.f32.gmra.mrb[0].mxu0 %v3322
          %v3390 = vpop.f32.mrb[0].mxu0
          %v3391 = vadd.f32 0.0, %v3390
          %v3392 = vpop.f32.mrb[0].mxu0
          %3393 = vdwg.mxu0
          %v3395 = vsel %vm3320, %v3262, 0
          %3397 = vmatprep.subr.mxu0 0.0
          %3398 = vmatpush1.msra.mxu0 %v3315
          %3399 = vmatprep.subr.mxu0 0.0
          %3400 = vmatpush1.msra.mxu0 0.0
          %3401 = vmatprep.subr.mxu0 0.0
          %3402 = vmatpush1.msra.mxu0 0.0
          %3403 = vmatprep.subr.mxu0 0.0
          %3404 = vmatpush1.msra.mxu0 0.0
          %3405 = vmatprep.subr.mxu0 0.0
          %3406 = vmatpush1.msra.mxu0 0.0
          %3407 = vmatprep.subr.mxu0 0.0
          %3408 = vmatpush1.msra.mxu0 0.0
          %3409 = vmatprep.subr.mxu0 0.0
          %3410 = vmatpush1.msra.mxu0 0.0
          %3411 = vmatprep.subr.mxu0 0.0
          %3412 = vmatpush1.msra.mxu0 0.0
          %3413 = vmatprep.subr.mxu0 0.0
          %3414 = vmatpush1.msra.mxu0 0.0
          %3415 = vmatprep.subr.mxu0 0.0
          %3416 = vmatpush1.msra.mxu0 0.0
          %3417 = vmatprep.subr.mxu0 0.0
          %3418 = vmatpush1.msra.mxu0 0.0
          %3419 = vmatprep.subr.mxu0 0.0
          %3420 = vmatpush1.msra.mxu0 0.0
          %3421 = vmatprep.subr.mxu0 0.0
          %3422 = vmatpush1.msra.mxu0 0.0
          %3423 = vmatprep.subr.mxu0 0.0
          %3424 = vmatpush1.msra.mxu0 0.0
          %3425 = vmatprep.subr.mxu0 0.0
          %3426 = vmatpush1.msra.mxu0 0.0
          %3427 = vmatprep.subr.mxu0 0.0
          %3428 = vmatpush1.msra.mxu0 0.0
          %3429 = vmatprep.subr.mxu0 0.0
          %3430 = vmatpush1.msra.mxu0 0.0
          %3431 = vmatprep.subr.mxu0 0.0
          %3432 = vmatpush1.msra.mxu0 0.0
          %3433 = vmatprep.subr.mxu0 0.0
          %3434 = vmatpush1.msra.mxu0 0.0
          %3435 = vmatprep.subr.mxu0 0.0
          %3436 = vmatpush1.msra.mxu0 0.0
          %3437 = vmatprep.subr.mxu0 0.0
          %3438 = vmatpush1.msra.mxu0 0.0
          %3439 = vmatprep.subr.mxu0 0.0
          %3440 = vmatpush1.msra.mxu0 0.0
          %3441 = vmatprep.subr.mxu0 0.0
          %3442 = vmatpush1.msra.mxu0 0.0
          %3443 = vmatprep.subr.mxu0 0.0
          %3444 = vmatpush1.msra.mxu0 0.0
          %3445 = vmatprep.subr.mxu0 0.0
          %3446 = vmatpush1.msra.mxu0 0.0
          %3447 = vmatprep.subr.mxu0 0.0
          %3448 = vmatpush1.msra.mxu0 0.0
          %3449 = vmatprep.subr.mxu0 0.0
          %3450 = vmatpush1.msra.mxu0 0.0
          %3451 = vmatprep.subr.mxu0 0.0
          %3452 = vmatpush1.msra.mxu0 0.0
          %3453 = vmatprep.subr.mxu0 0.0
          %3454 = vmatpush1.msra.mxu0 0.0
          %3455 = vmatprep.subr.mxu0 0.0
          %3456 = vmatpush1.msra.mxu0 0.0
          %3457 = vmatprep.subr.mxu0 0.0
          %3458 = vmatpush1.msra.mxu0 0.0
          %3459 = vmatprep.subr.mxu0 0.0
          %3460 = vmatpush1.msra.mxu0 0.0
          %3461 = vmatprep.mubr.f32.mxu0 0.0
          %3462 = vmatmul.mubr.f32.gmra.mrb[0].mxu0 %v3395
          %v3463 = vpop.f32.mrb[0].mxu0
          %v3464 = vadd.f32 %v3391, %v3463
          %v3465 = vpop.f32.mrb[0].mxu0
          %3466 = vdwg.mxu0
          %v3468 = vsel %vm3320, %v3268, 0
          %3470 = vmatprep.subr.mxu0 0.0
          %3471 = vmatpush1.msra.mxu0 %v3319
          %3472 = vmatprep.subr.mxu0 0.0
          %3473 = vmatpush1.msra.mxu0 0.0
          %3474 = vmatprep.subr.mxu0 0.0
          %3475 = vmatpush1.msra.mxu0 0.0
          %3476 = vmatprep.subr.mxu0 0.0
          %3477 = vmatpush1.msra.mxu0 0.0
          %3478 = vmatprep.subr.mxu0 0.0
          %3479 = vmatpush1.msra.mxu0 0.0
          %3480 = vmatprep.subr.mxu0 0.0
          %3481 = vmatpush1.msra.mxu0 0.0
          %3482 = vmatprep.subr.mxu0 0.0
          %3483 = vmatpush1.msra.mxu0 0.0
          %3484 = vmatprep.subr.mxu0 0.0
          %3485 = vmatpush1.msra.mxu0 0.0
          %3486 = vmatprep.subr.mxu0 0.0
          %3487 = vmatpush1.msra.mxu0 0.0
          %3488 = vmatprep.subr.mxu0 0.0
          %3489 = vmatpush1.msra.mxu0 0.0
          %3490 = vmatprep.subr.mxu0 0.0
          %3491 = vmatpush1.msra.mxu0 0.0
          %3492 = vmatprep.subr.mxu0 0.0
          %3493 = vmatpush1.msra.mxu0 0.0
          %3494 = vmatprep.subr.mxu0 0.0
          %3495 = vmatpush1.msra.mxu0 0.0
          %3496 = vmatprep.subr.mxu0 0.0
          %3497 = vmatpush1.msra.mxu0 0.0
          %3498 = vmatprep.subr.mxu0 0.0
          %3499 = vmatpush1.msra.mxu0 0.0
          %3500 = vmatprep.subr.mxu0 0.0
          %3501 = vmatpush1.msra.mxu0 0.0
          %3502 = vmatprep.subr.mxu0 0.0
          %3503 = vmatpush1.msra.mxu0 0.0
          %3504 = vmatprep.subr.mxu0 0.0
          %3505 = vmatpush1.msra.mxu0 0.0
          %3506 = vmatprep.subr.mxu0 0.0
          %3507 = vmatpush1.msra.mxu0 0.0
          %3508 = vmatprep.subr.mxu0 0.0
          %3509 = vmatpush1.msra.mxu0 0.0
          %3510 = vmatprep.subr.mxu0 0.0
          %3511 = vmatpush1.msra.mxu0 0.0
          %3512 = vmatprep.subr.mxu0 0.0
          %3513 = vmatpush1.msra.mxu0 0.0
          %3514 = vmatprep.subr.mxu0 0.0
          %3515 = vmatpush1.msra.mxu0 0.0
          %3516 = vmatprep.subr.mxu0 0.0
          %3517 = vmatpush1.msra.mxu0 0.0
          %3518 = vmatprep.subr.mxu0 0.0
          %3519 = vmatpush1.msra.mxu0 0.0
          %3520 = vmatprep.subr.mxu0 0.0
          %3521 = vmatpush1.msra.mxu0 0.0
          %3522 = vmatprep.subr.mxu0 0.0
          %3523 = vmatpush1.msra.mxu0 0.0
          %3524 = vmatprep.subr.mxu0 0.0
          %3525 = vmatpush1.msra.mxu0 0.0
          %3526 = vmatprep.subr.mxu0 0.0
          %3527 = vmatpush1.msra.mxu0 0.0
          %3528 = vmatprep.subr.mxu0 0.0
          %3529 = vmatpush1.msra.mxu0 0.0
          %3530 = vmatprep.subr.mxu0 0.0
          %3531 = vmatpush1.msra.mxu0 0.0
          %3532 = vmatprep.subr.mxu0 0.0
          %3533 = vmatpush1.msra.mxu0 0.0
          %3534 = vmatprep.mubr.f32.mxu0 0.0
          %3535 = vmatmul.mubr.f32.gmra.mrb[0].mxu0 %v3468
          %v3536 = vpop.f32.mrb[0].mxu0
          %v3537 = vadd.f32 0.0, %v3536
          %v3538 = vpop.f32.mrb[0].mxu0
          %3539 = vdwg.mxu0
          %v3541 = vsel %vm3320, %v3264, 0
          %3543 = vmatprep.subr.mxu0 0.0
          %3544 = vmatpush1.msra.mxu0 %v3315
          %3545 = vmatprep.subr.mxu0 0.0
          %3546 = vmatpush1.msra.mxu0 0.0
          %3547 = vmatprep.subr.mxu0 0.0
          %3548 = vmatpush1.msra.mxu0 0.0
          %3549 = vmatprep.subr.mxu0 0.0
          %3550 = vmatpush1.msra.mxu0 0.0
          %3551 = vmatprep.subr.mxu0 0.0
          %3552 = vmatpush1.msra.mxu0 0.0
          %3553 = vmatprep.subr.mxu0 0.0
          %3554 = vmatpush1.msra.mxu0 0.0
          %3555 = vmatprep.subr.mxu0 0.0
          %3556 = vmatpush1.msra.mxu0 0.0
          %3557 = vmatprep.subr.mxu0 0.0
          %3558 = vmatpush1.msra.mxu0 0.0
          %3559 = vmatprep.subr.mxu0 0.0
          %3560 = vmatpush1.msra.mxu0 0.0
          %3561 = vmatprep.subr.mxu0 0.0
          %3562 = vmatpush1.msra.mxu0 0.0
          %3563 = vmatprep.subr.mxu0 0.0
          %3564 = vmatpush1.msra.mxu0 0.0
          %3565 = vmatprep.subr.mxu0 0.0
          %3566 = vmatpush1.msra.mxu0 0.0
          %3567 = vmatprep.subr.mxu0 0.0
          %3568 = vmatpush1.msra.mxu0 0.0
          %3569 = vmatprep.subr.mxu0 0.0
          %3570 = vmatpush1.msra.mxu0 0.0
          %3571 = vmatprep.subr.mxu0 0.0
          %3572 = vmatpush1.msra.mxu0 0.0
          %3573 = vmatprep.subr.mxu0 0.0
          %3574 = vmatpush1.msra.mxu0 0.0
          %3575 = vmatprep.subr.mxu0 0.0
          %3576 = vmatpush1.msra.mxu0 0.0
          %3577 = vmatprep.subr.mxu0 0.0
          %3578 = vmatpush1.msra.mxu0 0.0
          %3579 = vmatprep.subr.mxu0 0.0
          %3580 = vmatpush1.msra.mxu0 0.0
          %3581 = vmatprep.subr.mxu0 0.0
          %3582 = vmatpush1.msra.mxu0 0.0
          %3583 = vmatprep.subr.mxu0 0.0
          %3584 = vmatpush1.msra.mxu0 0.0
          %3585 = vmatprep.subr.mxu0 0.0
          %3586 = vmatpush1.msra.mxu0 0.0
          %3587 = vmatprep.subr.mxu0 0.0
          %3588 = vmatpush1.msra.mxu0 0.0
          %3589 = vmatprep.subr.mxu0 0.0
          %3590 = vmatpush1.msra.mxu0 0.0
          %3591 = vmatprep.subr.mxu0 0.0
          %3592 = vmatpush1.msra.mxu0 0.0
          %3593 = vmatprep.subr.mxu0 0.0
          %3594 = vmatpush1.msra.mxu0 0.0
          %3595 = vmatprep.subr.mxu0 0.0
          %3596 = vmatpush1.msra.mxu0 0.0
          %3597 = vmatprep.subr.mxu0 0.0
          %3598 = vmatpush1.msra.mxu0 0.0
          %3599 = vmatprep.subr.mxu0 0.0
          %3600 = vmatpush1.msra.mxu0 0.0
          %3601 = vmatprep.subr.mxu0 0.0
          %3602 = vmatpush1.msra.mxu0 0.0
          %3603 = vmatprep.subr.mxu0 0.0
          %3604 = vmatpush1.msra.mxu0 0.0
          %3605 = vmatprep.subr.mxu0 0.0
          %3606 = vmatpush1.msra.mxu0 0.0
          %3607 = vmatprep.mubr.f32.mxu0 0.0
          %3608 = vmatmul.mubr.f32.gmra.mrb[0].mxu0 %v3541
          %v3609 = vpop.f32.mrb[0].mxu0
          %v3610 = vadd.f32 %v3537, %v3609
          %v3611 = vpop.f32.mrb[0].mxu0
          %3612 = vdwg.mxu0
          %3613 = vmatprep.subr.mxu0 0.0
          %3614 = vmatpush1.msra.mxu0 %v312
          %3615 = vmatprep.subr.mxu0 0.0
          %3616 = vmatpush1.msra.mxu0 %v313
          %3617 = vmatprep.subr.mxu0 0.0
          %3618 = vmatpush1.msra.mxu0 %v314
          %3619 = vmatprep.subr.mxu0 0.0
          %3620 = vmatpush1.msra.mxu0 %v315
          %3621 = vmatprep.subr.mxu0 0.0
          %3622 = vmatpush1.msra.mxu0 %v316
          %3623 = vmatprep.subr.mxu0 0.0
          %3624 = vmatpush1.msra.mxu0 %v317
          %3625 = vmatprep.subr.mxu0 0.0
          %3626 = vmatpush1.msra.mxu0 %v318
          %3627 = vmatprep.subr.mxu0 0.0
          %3628 = vmatpush1.msra.mxu0 %v319
          %3629 = vmatprep.subr.mxu0 0.0
          %3630 = vmatpush1.msra.mxu0 %v320
          %3631 = vmatprep.subr.mxu0 0.0
          %3632 = vmatpush1.msra.mxu0 %v321
          %3633 = vmatprep.subr.mxu0 0.0
          %3634 = vmatpush1.msra.mxu0 %v322
          %3635 = vmatprep.subr.mxu0 0.0
          %3636 = vmatpush1.msra.mxu0 %v323
          %3637 = vmatprep.subr.mxu0 0.0
          %3638 = vmatpush1.msra.mxu0 %v324
          %3639 = vmatprep.subr.mxu0 0.0
          %3640 = vmatpush1.msra.mxu0 %v325
          %3641 = vmatprep.subr.mxu0 0.0
          %3642 = vmatpush1.msra.mxu0 %v326
          %3643 = vmatprep.subr.mxu0 0.0
          %3644 = vmatpush1.msra.mxu0 %v327
          %3645 = vmatprep.subr.mxu0 0.0
          %3646 = vmatpush1.msra.mxu0 0.0
          %3647 = vmatprep.subr.mxu0 0.0
          %3648 = vmatpush1.msra.mxu0 0.0
          %3649 = vmatprep.subr.mxu0 0.0
          %3650 = vmatpush1.msra.mxu0 0.0
          %3651 = vmatprep.subr.mxu0 0.0
          %3652 = vmatpush1.msra.mxu0 0.0
          %3653 = vmatprep.subr.mxu0 0.0
          %3654 = vmatpush1.msra.mxu0 0.0
          %3655 = vmatprep.subr.mxu0 0.0
          %3656 = vmatpush1.msra.mxu0 0.0
          %3657 = vmatprep.subr.mxu0 0.0
          %3658 = vmatpush1.msra.mxu0 0.0
          %3659 = vmatprep.subr.mxu0 0.0
          %3660 = vmatpush1.msra.mxu0 0.0
          %3661 = vmatprep.subr.mxu0 0.0
          %3662 = vmatpush1.msra.mxu0 0.0
          %3663 = vmatprep.subr.mxu0 0.0
          %3664 = vmatpush1.msra.mxu0 0.0
          %3665 = vmatprep.subr.mxu0 0.0
          %3666 = vmatpush1.msra.mxu0 0.0
          %3667 = vmatprep.subr.mxu0 0.0
          %3668 = vmatpush1.msra.mxu0 0.0
          %3669 = vmatprep.subr.mxu0 0.0
          %3670 = vmatpush1.msra.mxu0 0.0
          %3671 = vmatprep.subr.mxu0 0.0
          %3672 = vmatpush1.msra.mxu0 0.0
          %3673 = vmatprep.subr.mxu0 0.0
          %3674 = vmatpush1.msra.mxu0 0.0
          %3675 = vmatprep.subr.mxu0 0.0
          %3676 = vmatpush1.msra.mxu0 0.0
          %3677 = vmatprep.mubr.f32.mxu0 0.0
          %3678 = vmatmul.mubr.f32.gmra.mrb[0].mxu0 %v3610
          %v3679 = vpop.f32.mrb[0].mxu0
          %v3680 = vadd.f32 0.0, %v3679
          %v3681 = vpop.f32.mrb[0].mxu0
          %3682 = vdwg.mxu0
          %v3683 = vadd.f32 %v3464, %v3680
          %v3684 = vadd.f32 %v3683, %v3270
          %v3685 = vmax.f32 %v3684, 0.0
          %3686 = vmatprep.subr.mxu0 0.0
          %3687 = vmatpush1.msra.mxu0 %v3288
          %3688 = vmatprep.subr.mxu0 0.0
          %3689 = vmatpush1.msra.mxu0 %v3289
          %3690 = vmatprep.subr.mxu0 0.0
          %3691 = vmatpush1.msra.mxu0 %v3290
          %3692 = vmatprep.subr.mxu0 0.0
          %3693 = vmatpush1.msra.mxu0 %v3291
          %3694 = vmatprep.subr.mxu0 0.0
          %3695 = vmatpush1.msra.mxu0 %v3292
          %3696 = vmatprep.subr.mxu0 0.0
          %3697 = vmatpush1.msra.mxu0 %v3293
          %3698 = vmatprep.subr.mxu0 0.0
          %3699 = vmatpush1.msra.mxu0 %v3294
          %3700 = vmatprep.subr.mxu0 0.0
          %3701 = vmatpush1.msra.mxu0 %v3295
          %3702 = vmatprep.subr.mxu0 0.0
          %3703 = vmatpush1.msra.mxu0 %v3296
          %3704 = vmatprep.subr.mxu0 0.0
          %3705 = vmatpush1.msra.mxu0 %v3297
          %3706 = vmatprep.subr.mxu0 0.0
          %3707 = vmatpush1.msra.mxu0 %v3298
          %3708 = vmatprep.subr.mxu0 0.0
          %3709 = vmatpush1.msra.mxu0 %v3299
          %3710 = vmatprep.subr.mxu0 0.0
          %3711 = vmatpush1.msra.mxu0 %v3300
          %3712 = vmatprep.subr.mxu0 0.0
          %3713 = vmatpush1.msra.mxu0 %v3301
          %3714 = vmatprep.subr.mxu0 0.0
          %3715 = vmatpush1.msra.mxu0 %v3302
          %3716 = vmatprep.subr.mxu0 0.0
          %3717 = vmatpush1.msra.mxu0 %v3303
          %3718 = vmatprep.subr.mxu0 0.0
          %3719 = vmatpush1.msra.mxu0 0.0
          %3720 = vmatprep.subr.mxu0 0.0
          %3721 = vmatpush1.msra.mxu0 0.0
          %3722 = vmatprep.subr.mxu0 0.0
          %3723 = vmatpush1.msra.mxu0 0.0
          %3724 = vmatprep.subr.mxu0 0.0
          %3725 = vmatpush1.msra.mxu0 0.0
          %3726 = vmatprep.subr.mxu0 0.0
          %3727 = vmatpush1.msra.mxu0 0.0
          %3728 = vmatprep.subr.mxu0 0.0
          %3729 = vmatpush1.msra.mxu0 0.0
          %3730 = vmatprep.subr.mxu0 0.0
          %3731 = vmatpush1.msra.mxu0 0.0
          %3732 = vmatprep.subr.mxu0 0.0
          %3733 = vmatpush1.msra.mxu0 0.0
          %3734 = vmatprep.subr.mxu0 0.0
          %3735 = vmatpush1.msra.mxu0 0.0
          %3736 = vmatprep.subr.mxu0 0.0
          %3737 = vmatpush1.msra.mxu0 0.0
          %3738 = vmatprep.subr.mxu0 0.0
          %3739 = vmatpush1.msra.mxu0 0.0
          %3740 = vmatprep.subr.mxu0 0.0
          %3741 = vmatpush1.msra.mxu0 0.0
          %3742 = vmatprep.subr.mxu0 0.0
          %3743 = vmatpush1.msra.mxu0 0.0
          %3744 = vmatprep.subr.mxu0 0.0
          %3745 = vmatpush1.msra.mxu0 0.0
          %3746 = vmatprep.subr.mxu0 0.0
          %3747 = vmatpush1.msra.mxu0 0.0
          %3748 = vmatprep.subr.mxu0 0.0
          %3749 = vmatpush1.msra.mxu0 0.0
          %3750 = vmatprep.mubr.f32.mxu0 0.0
          %3751 = vmatmul.mubr.f32.gmra.mrb[0].mxu0 %v3685
          %v3752 = vpop.f32.mrb[0].mxu0
          %v3753 = vadd.f32 0.0, %v3752
          %v3754 = vpop.f32.mrb[0].mxu0
          %3755 = vdwg.mxu0
          %s3756 = scalar_lea.vmem [#allocation2], %s3317
          %3757 = vst [vmem:[%s3756] sm:$0xff] %v3753
        $region81: #{tiny_vgg_forward.1} parent=47 // loop_footer
          %s3312 = sadd.s32 1, %s3308
        $region82: #{tiny_vgg_forward.1} parent=47 // loop_footer_branch
          %3307 = sbr.rel target = $region78
        $region83: #{tiny_vgg_forward.1} parent=47 // loop_exit
          _
        %s3758 = scalar_lea.vmem %s1, 160
        %v3759 = vld [vmem:[%s3758] sm:$0xff]
        %s3760 = scalar_lea.vmem %s1, 168
        %v3761 = vld [vmem:[%s3760] sm:$0xff]
        %s3762 = scalar_lea.vmem %s1, 176
        %v3763 = vld [vmem:[%s3762] sm:$0xff]
        %s3764 = scalar_lea.vmem %s1, 184
        %v3765 = vld [vmem:[%s3764] sm:$0xff]
        %s3766 = scalar_lea.vmem %s2, 40
        %v3767 = vld [vmem:[%s3766] sm:$0xff]
        %vm3768 = vcmp.le.s32.totalorder %v294, 9
        %vm3769 = vmand %vm900, %vm3768
        %vm3770 = vmand %vm901, %vm3768
        %vm3771 = vmand %vm902, %vm3768
        %vm3772 = vmand %vm903, %vm3768
        %vm3773 = vmand %vm904, %vm3768
        %vm3774 = vmand %vm905, %vm3768
        %vm3775 = vmand %vm906, %vm3768
        %vm3776 = vmand %vm907, %vm3768
        %vm3777 = vmand %vm908, %vm3768
        %vm3778 = vmand %vm909, %vm3768
        %vm3779 = vmand %vm910, %vm3768
        %vm3780 = vmand %vm911, %vm3768
        %vm3781 = vmand %vm912, %vm3768
        %vm3782 = vmand %vm913, %vm3768
        %vm3783 = vmand %vm914, %vm3768
        %vm3784 = vmand %vm915, %vm3768
        %v3785 = vsel %vm3769, 1.0, 0.0
        %v3786 = vsel %vm3770, 1.0, 0.0
        %v3787 = vsel %vm3771, 1.0, 0.0
        %v3788 = vsel %vm3772, 1.0, 0.0
        %v3789 = vsel %vm3773, 1.0, 0.0
        %v3790 = vsel %vm3774, 1.0, 0.0
        %v3791 = vsel %vm3775, 1.0, 0.0
        %v3792 = vsel %vm3776, 1.0, 0.0
        %v3793 = vsel %vm3777, 1.0, 0.0
        %v3794 = vsel %vm3778, 1.0, 0.0
        %v3795 = vsel %vm3779, 1.0, 0.0
        %v3796 = vsel %vm3780, 1.0, 0.0
        %v3797 = vsel %vm3781, 1.0, 0.0
        %v3798 = vsel %vm3782, 1.0, 0.0
        %v3799 = vsel %vm3783, 1.0, 0.0
        %v3800 = vsel %vm3784, 1.0, 0.0
        %3801 = vst [vmem:[#allocation3] sm:$0xff] 0.0
        %s3802 = scalar_lea.vmem [#allocation3], 80
        %3803 = vst [vmem:[%s3802] sm:$0xff] 0.0
        loop: start=0, step=1, limit=9
        $region84: #{tiny_vgg_forward.1} parent=47 // loop_pre_header
          _
        $region85: #{tiny_vgg_forward.1} parent=47 // loop_header
          %s3805 = sphi 0, %s3809
          %p3806 = scmp.ge.s32.totalorder %s3805, 9
        $region86: #{tiny_vgg_forward.1} parent=47 // loop_header_branch
          %3808 = sbr.rel (%p3806) target = $region90
        $region87: #{tiny_vgg_forward.1} parent=47 // loop_body
          %s3810 = smul.u32 %s3805, 2
          %s3811 = smul.u32 %s3810, 8
          %s3812 = scalar_lea.vmem [#allocation2], %s3811
          %v3813 = vld [vmem:[%s3812] sm:$0xff]
          %s3814 = sadd.s32 %s3810, 1
          %s3815 = smul.u32 %s3814, 8
          %s3816 = scalar_lea.vmem [#allocation2], %s3815
          %v3817 = vld [vmem:[%s3816] sm:$0xff]
          %s3818 = sadd.s32 %s3810, 2
          %s3819 = smul.u32 %s3818, 8
          %s3820 = scalar_lea.vmem [#allocation2], %s3819
          %v3821 = vld [vmem:[%s3820] sm:$0xff]
          %vm3822 = vcmask 64512
          %v3824 = vsel %vm3822, %v3763, 0
          %3826 = vmatprep.subr.mxu0 0.0
          %3827 = vmatpush1.msra.mxu0 %v3817
          %3828 = vmatprep.subr.mxu0 0.0
          %3829 = vmatpush1.msra.mxu0 0.0
          %3830 = vmatprep.subr.mxu0 0.0
          %3831 = vmatpush1.msra.mxu0 0.0
          %3832 = vmatprep.subr.mxu0 0.0
          %3833 = vmatpush1.msra.mxu0 0.0
          %3834 = vmatprep.subr.mxu0 0.0
          %3835 = vmatpush1.msra.mxu0 0.0
          %3836 = vmatprep.subr.mxu0 0.0
          %3837 = vmatpush1.msra.mxu0 0.0
          %3838 = vmatprep.subr.mxu0 0.0
          %3839 = vmatpush1.msra.mxu0 0.0
          %3840 = vmatprep.subr.mxu0 0.0
          %3841 = vmatpush1.msra.mxu0 0.0
          %3842 = vmatprep.subr.mxu0 0.0
          %3843 = vmatpush1.msra.mxu0 0.0
          %3844 = vmatprep.subr.mxu0 0.0
          %3845 = vmatpush1.msra.mxu0 0.0
          %3846 = vmatprep.subr.mxu0 0.0
          %3847 = vmatpush1.msra.mxu0 0.0
          %3848 = vmatprep.subr.mxu0 0.0
          %3849 = vmatpush1.msra.mxu0 0.0
          %3850 = vmatprep.subr.mxu0 0.0
          %3851 = vmatpush1.msra.mxu0 0.0
          %3852 = vmatprep.subr.mxu0 0.0
          %3853 = vmatpush1.msra.mxu0 0.0
          %3854 = vmatprep.subr.mxu0 0.0
          %3855 = vmatpush1.msra.mxu0 0.0
          %3856 = vmatprep.subr.mxu0 0.0
          %3857 = vmatpush1.msra.mxu0 0.0
          %3858 = vmatprep.subr.mxu0 0.0
          %3859 = vmatpush1.msra.mxu0 0.0
          %3860 = vmatprep.subr.mxu0 0.0
          %3861 = vmatpush1.msra.mxu0 0.0
          %3862 = vmatprep.subr.mxu0 0.0
          %3863 = vmatpush1.msra.mxu0 0.0
          %3864 = vmatprep.subr.mxu0 0.0
          %3865 = vmatpush1.msra.mxu0 0.0
          %3866 = vmatprep.subr.mxu0 0.0
          %3867 = vmatpush1.msra.mxu0 0.0
          %3868 = vmatprep.subr.mxu0 0.0
          %3869 = vmatpush1.msra.mxu0 0.0
          %3870 = vmatprep.subr.mxu0 0.0
          %3871 = vmatpush1.msra.mxu0 0.0
          %3872 = vmatprep.subr.mxu0 0.0
          %3873 = vmatpush1.msra.mxu0 0.0
          %3874 = vmatprep.subr.mxu0 0.0
          %3875 = vmatpush1.msra.mxu0 0.0
          %3876 = vmatprep.subr.mxu0 0.0
          %3877 = vmatpush1.msra.mxu0 0.0
          %3878 = vmatprep.subr.mxu0 0.0
          %3879 = vmatpush1.msra.mxu0 0.0
          %3880 = vmatprep.subr.mxu0 0.0
          %3881 = vmatpush1.msra.mxu0 0.0
          %3882 = vmatprep.subr.mxu0 0.0
          %3883 = vmatpush1.msra.mxu0 0.0
          %3884 = vmatprep.subr.mxu0 0.0
          %3885 = vmatpush1.msra.mxu0 0.0
          %3886 = vmatprep.subr.mxu0 0.0
          %3887 = vmatpush1.msra.mxu0 0.0
          %3888 = vmatprep.subr.mxu0 0.0
          %3889 = vmatpush1.msra.mxu0 0.0
          %3890 = vmatprep.mubr.f32.mxu0 0.0
          %3891 = vmatmul.mubr.f32.gmra.mrb[0].mxu0 %v3824
          %v3892 = vpop.f32.mrb[0].mxu0
          %v3893 = vadd.f32 0.0, %v3892
          %v3894 = vpop.f32.mrb[0].mxu0
          %3895 = vdwg.mxu0
          %v3897 = vsel %vm3822, %v3759, 0
          %3899 = vmatprep.subr.mxu0 0.0
          %3900 = vmatpush1.msra.mxu0 %v3813
          %3901 = vmatprep.subr.mxu0 0.0
          %3902 = vmatpush1.msra.mxu0 0.0
          %3903 = vmatprep.subr.mxu0 0.0
          %3904 = vmatpush1.msra.mxu0 0.0
          %3905 = vmatprep.subr.mxu0 0.0
          %3906 = vmatpush1.msra.mxu0 0.0
          %3907 = vmatprep.subr.mxu0 0.0
          %3908 = vmatpush1.msra.mxu0 0.0
          %3909 = vmatprep.subr.mxu0 0.0
          %3910 = vmatpush1.msra.mxu0 0.0
          %3911 = vmatprep.subr.mxu0 0.0
          %3912 = vmatpush1.msra.mxu0 0.0
          %3913 = vmatprep.subr.mxu0 0.0
          %3914 = vmatpush1.msra.mxu0 0.0
          %3915 = vmatprep.subr.mxu0 0.0
          %3916 = vmatpush1.msra.mxu0 0.0
          %3917 = vmatprep.subr.mxu0 0.0
          %3918 = vmatpush1.msra.mxu0 0.0
          %3919 = vmatprep.subr.mxu0 0.0
          %3920 = vmatpush1.msra.mxu0 0.0
          %3921 = vmatprep.subr.mxu0 0.0
          %3922 = vmatpush1.msra.mxu0 0.0
          %3923 = vmatprep.subr.mxu0 0.0
          %3924 = vmatpush1.msra.mxu0 0.0
          %3925 = vmatprep.subr.mxu0 0.0
          %3926 = vmatpush1.msra.mxu0 0.0
          %3927 = vmatprep.subr.mxu0 0.0
          %3928 = vmatpush1.msra.mxu0 0.0
          %3929 = vmatprep.subr.mxu0 0.0
          %3930 = vmatpush1.msra.mxu0 0.0
          %3931 = vmatprep.subr.mxu0 0.0
          %3932 = vmatpush1.msra.mxu0 0.0
          %3933 = vmatprep.subr.mxu0 0.0
          %3934 = vmatpush1.msra.mxu0 0.0
          %3935 = vmatprep.subr.mxu0 0.0
          %3936 = vmatpush1.msra.mxu0 0.0
          %3937 = vmatprep.subr.mxu0 0.0
          %3938 = vmatpush1.msra.mxu0 0.0
          %3939 = vmatprep.subr.mxu0 0.0
          %3940 = vmatpush1.msra.mxu0 0.0
          %3941 = vmatprep.subr.mxu0 0.0
          %3942 = vmatpush1.msra.mxu0 0.0
          %3943 = vmatprep.subr.mxu0 0.0
          %3944 = vmatpush1.msra.mxu0 0.0
          %3945 = vmatprep.subr.mxu0 0.0
          %3946 = vmatpush1.msra.mxu0 0.0
          %3947 = vmatprep.subr.mxu0 0.0
          %3948 = vmatpush1.msra.mxu0 0.0
          %3949 = vmatprep.subr.mxu0 0.0
          %3950 = vmatpush1.msra.mxu0 0.0
          %3951 = vmatprep.subr.mxu0 0.0
          %3952 = vmatpush1.msra.mxu0 0.0
          %3953 = vmatprep.subr.mxu0 0.0
          %3954 = vmatpush1.msra.mxu0 0.0
          %3955 = vmatprep.subr.mxu0 0.0
          %3956 = vmatpush1.msra.mxu0 0.0
          %3957 = vmatprep.subr.mxu0 0.0
          %3958 = vmatpush1.msra.mxu0 0.0
          %3959 = vmatprep.subr.mxu0 0.0
          %3960 = vmatpush1.msra.mxu0 0.0
          %3961 = vmatprep.subr.mxu0 0.0
          %3962 = vmatpush1.msra.mxu0 0.0
          %3963 = vmatprep.mubr.f32.mxu0 0.0
          %3964 = vmatmul.mubr.f32.gmra.mrb[0].mxu0 %v3897
          %v3965 = vpop.f32.mrb[0].mxu0
          %v3966 = vadd.f32 %v3893, %v3965
          %v3967 = vpop.f32.mrb[0].mxu0
          %3968 = vdwg.mxu0
          %v3970 = vsel %vm3822, %v3765, 0
          %3972 = vmatprep.subr.mxu0 0.0
          %3973 = vmatpush1.msra.mxu0 %v3817
          %3974 = vmatprep.subr.mxu0 0.0
          %3975 = vmatpush1.msra.mxu0 0.0
          %3976 = vmatprep.subr.mxu0 0.0
          %3977 = vmatpush1.msra.mxu0 0.0
          %3978 = vmatprep.subr.mxu0 0.0
          %3979 = vmatpush1.msra.mxu0 0.0
          %3980 = vmatprep.subr.mxu0 0.0
          %3981 = vmatpush1.msra.mxu0 0.0
          %3982 = vmatprep.subr.mxu0 0.0
          %3983 = vmatpush1.msra.mxu0 0.0
          %3984 = vmatprep.subr.mxu0 0.0
          %3985 = vmatpush1.msra.mxu0 0.0
          %3986 = vmatprep.subr.mxu0 0.0
          %3987 = vmatpush1.msra.mxu0 0.0
          %3988 = vmatprep.subr.mxu0 0.0
          %3989 = vmatpush1.msra.mxu0 0.0
          %3990 = vmatprep.subr.mxu0 0.0
          %3991 = vmatpush1.msra.mxu0 0.0
          %3992 = vmatprep.subr.mxu0 0.0
          %3993 = vmatpush1.msra.mxu0 0.0
          %3994 = vmatprep.subr.mxu0 0.0
          %3995 = vmatpush1.msra.mxu0 0.0
          %3996 = vmatprep.subr.mxu0 0.0
          %3997 = vmatpush1.msra.mxu0 0.0
          %3998 = vmatprep.subr.mxu0 0.0
          %3999 = vmatpush1.msra.mxu0 0.0
          %4000 = vmatprep.subr.mxu0 0.0
          %4001 = vmatpush1.msra.mxu0 0.0
          %4002 = vmatprep.subr.mxu0 0.0
          %4003 = vmatpush1.msra.mxu0 0.0
          %4004 = vmatprep.subr.mxu0 0.0
          %4005 = vmatpush1.msra.mxu0 0.0
          %4006 = vmatprep.subr.mxu0 0.0
          %4007 = vmatpush1.msra.mxu0 0.0
          %4008 = vmatprep.subr.mxu0 0.0
          %4009 = vmatpush1.msra.mxu0 0.0
          %4010 = vmatprep.subr.mxu0 0.0
          %4011 = vmatpush1.msra.mxu0 0.0
          %4012 = vmatprep.subr.mxu0 0.0
          %4013 = vmatpush1.msra.mxu0 0.0
          %4014 = vmatprep.subr.mxu0 0.0
          %4015 = vmatpush1.msra.mxu0 0.0
          %4016 = vmatprep.subr.mxu0 0.0
          %4017 = vmatpush1.msra.mxu0 0.0
          %4018 = vmatprep.subr.mxu0 0.0
          %4019 = vmatpush1.msra.mxu0 0.0
          %4020 = vmatprep.subr.mxu0 0.0
          %4021 = vmatpush1.msra.mxu0 0.0
          %4022 = vmatprep.subr.mxu0 0.0
          %4023 = vmatpush1.msra.mxu0 0.0
          %4024 = vmatprep.subr.mxu0 0.0
          %4025 = vmatpush1.msra.mxu0 0.0
          %4026 = vmatprep.subr.mxu0 0.0
          %4027 = vmatpush1.msra.mxu0 0.0
          %4028 = vmatprep.subr.mxu0 0.0
          %4029 = vmatpush1.msra.mxu0 0.0
          %4030 = vmatprep.subr.mxu0 0.0
          %4031 = vmatpush1.msra.mxu0 0.0
          %4032 = vmatprep.subr.mxu0 0.0
          %4033 = vmatpush1.msra.mxu0 0.0
          %4034 = vmatprep.subr.mxu0 0.0
          %4035 = vmatpush1.msra.mxu0 0.0
          %4036 = vmatprep.mubr.f32.mxu0 0.0
          %4037 = vmatmul.mubr.f32.gmra.mrb[0].mxu0 %v3970
          %v4038 = vpop.f32.mrb[0].mxu0
          %v4039 = vadd.f32 0.0, %v4038
          %v4040 = vpop.f32.mrb[0].mxu0
          %4041 = vdwg.mxu0
          %v4043 = vsel %vm3822, %v3761, 0
          %4045 = vmatprep.subr.mxu0 0.0
          %4046 = vmatpush1.msra.mxu0 %v3813
          %4047 = vmatprep.subr.mxu0 0.0
          %4048 = vmatpush1.msra.mxu0 0.0
          %4049 = vmatprep.subr.mxu0 0.0
          %4050 = vmatpush1.msra.mxu0 0.0
          %4051 = vmatprep.subr.mxu0 0.0
          %4052 = vmatpush1.msra.mxu0 0.0
          %4053 = vmatprep.subr.mxu0 0.0
          %4054 = vmatpush1.msra.mxu0 0.0
          %4055 = vmatprep.subr.mxu0 0.0
          %4056 = vmatpush1.msra.mxu0 0.0
          %4057 = vmatprep.subr.mxu0 0.0
          %4058 = vmatpush1.msra.mxu0 0.0
          %4059 = vmatprep.subr.mxu0 0.0
          %4060 = vmatpush1.msra.mxu0 0.0
          %4061 = vmatprep.subr.mxu0 0.0
          %4062 = vmatpush1.msra.mxu0 0.0
          %4063 = vmatprep.subr.mxu0 0.0
          %4064 = vmatpush1.msra.mxu0 0.0
          %4065 = vmatprep.subr.mxu0 0.0
          %4066 = vmatpush1.msra.mxu0 0.0
          %4067 = vmatprep.subr.mxu0 0.0
          %4068 = vmatpush1.msra.mxu0 0.0
          %4069 = vmatprep.subr.mxu0 0.0
          %4070 = vmatpush1.msra.mxu0 0.0
          %4071 = vmatprep.subr.mxu0 0.0
          %4072 = vmatpush1.msra.mxu0 0.0
          %4073 = vmatprep.subr.mxu0 0.0
          %4074 = vmatpush1.msra.mxu0 0.0
          %4075 = vmatprep.subr.mxu0 0.0
          %4076 = vmatpush1.msra.mxu0 0.0
          %4077 = vmatprep.subr.mxu0 0.0
          %4078 = vmatpush1.msra.mxu0 0.0
          %4079 = vmatprep.subr.mxu0 0.0
          %4080 = vmatpush1.msra.mxu0 0.0
          %4081 = vmatprep.subr.mxu0 0.0
          %4082 = vmatpush1.msra.mxu0 0.0
          %4083 = vmatprep.subr.mxu0 0.0
          %4084 = vmatpush1.msra.mxu0 0.0
          %4085 = vmatprep.subr.mxu0 0.0
          %4086 = vmatpush1.msra.mxu0 0.0
          %4087 = vmatprep.subr.mxu0 0.0
          %4088 = vmatpush1.msra.mxu0 0.0
          %4089 = vmatprep.subr.mxu0 0.0
          %4090 = vmatpush1.msra.mxu0 0.0
          %4091 = vmatprep.subr.mxu0 0.0
          %4092 = vmatpush1.msra.mxu0 0.0
          %4093 = vmatprep.subr.mxu0 0.0
          %4094 = vmatpush1.msra.mxu0 0.0
          %4095 = vmatprep.subr.mxu0 0.0
          %4096 = vmatpush1.msra.mxu0 0.0
          %4097 = vmatprep.subr.mxu0 0.0
          %4098 = vmatpush1.msra.mxu0 0.0
          %4099 = vmatprep.subr.mxu0 0.0
          %4100 = vmatpush1.msra.mxu0 0.0
          %4101 = vmatprep.subr.mxu0 0.0
          %4102 = vmatpush1.msra.mxu0 0.0
          %4103 = vmatprep.subr.mxu0 0.0
          %4104 = vmatpush1.msra.mxu0 0.0
          %4105 = vmatprep.subr.mxu0 0.0
          %4106 = vmatpush1.msra.mxu0 0.0
          %4107 = vmatprep.subr.mxu0 0.0
          %4108 = vmatpush1.msra.mxu0 0.0
          %4109 = vmatprep.mubr.f32.mxu0 0.0
          %4110 = vmatmul.mubr.f32.gmra.mrb[0].mxu0 %v4043
          %v4111 = vpop.f32.mrb[0].mxu0
          %v4112 = vadd.f32 %v4039, %v4111
          %v4113 = vpop.f32.mrb[0].mxu0
          %4114 = vdwg.mxu0
          %4115 = vmatprep.subr.mxu0 0.0
          %4116 = vmatpush1.msra.mxu0 %v312
          %4117 = vmatprep.subr.mxu0 0.0
          %4118 = vmatpush1.msra.mxu0 %v313
          %4119 = vmatprep.subr.mxu0 0.0
          %4120 = vmatpush1.msra.mxu0 %v314
          %4121 = vmatprep.subr.mxu0 0.0
          %4122 = vmatpush1.msra.mxu0 %v315
          %4123 = vmatprep.subr.mxu0 0.0
          %4124 = vmatpush1.msra.mxu0 %v316
          %4125 = vmatprep.subr.mxu0 0.0
          %4126 = vmatpush1.msra.mxu0 %v317
          %4127 = vmatprep.subr.mxu0 0.0
          %4128 = vmatpush1.msra.mxu0 %v318
          %4129 = vmatprep.subr.mxu0 0.0
          %4130 = vmatpush1.msra.mxu0 %v319
          %4131 = vmatprep.subr.mxu0 0.0
          %4132 = vmatpush1.msra.mxu0 %v320
          %4133 = vmatprep.subr.mxu0 0.0
          %4134 = vmatpush1.msra.mxu0 %v321
          %4135 = vmatprep.subr.mxu0 0.0
          %4136 = vmatpush1.msra.mxu0 %v322
          %4137 = vmatprep.subr.mxu0 0.0
          %4138 = vmatpush1.msra.mxu0 %v323
          %4139 = vmatprep.subr.mxu0 0.0
          %4140 = vmatpush1.msra.mxu0 %v324
          %4141 = vmatprep.subr.mxu0 0.0
          %4142 = vmatpush1.msra.mxu0 %v325
          %4143 = vmatprep.subr.mxu0 0.0
          %4144 = vmatpush1.msra.mxu0 %v326
          %4145 = vmatprep.subr.mxu0 0.0
          %4146 = vmatpush1.msra.mxu0 %v327
          %4147 = vmatprep.subr.mxu0 0.0
          %4148 = vmatpush1.msra.mxu0 0.0
          %4149 = vmatprep.subr.mxu0 0.0
          %4150 = vmatpush1.msra.mxu0 0.0
          %4151 = vmatprep.subr.mxu0 0.0
          %4152 = vmatpush1.msra.mxu0 0.0
          %4153 = vmatprep.subr.mxu0 0.0
          %4154 = vmatpush1.msra.mxu0 0.0
          %4155 = vmatprep.subr.mxu0 0.0
          %4156 = vmatpush1.msra.mxu0 0.0
          %4157 = vmatprep.subr.mxu0 0.0
          %4158 = vmatpush1.msra.mxu0 0.0
          %4159 = vmatprep.subr.mxu0 0.0
          %4160 = vmatpush1.msra.mxu0 0.0
          %4161 = vmatprep.subr.mxu0 0.0
          %4162 = vmatpush1.msra.mxu0 0.0
          %4163 = vmatprep.subr.mxu0 0.0
          %4164 = vmatpush1.msra.mxu0 0.0
          %4165 = vmatprep.subr.mxu0 0.0
          %4166 = vmatpush1.msra.mxu0 0.0
          %4167 = vmatprep.subr.mxu0 0.0
          %4168 = vmatpush1.msra.mxu0 0.0
          %4169 = vmatprep.subr.mxu0 0.0
          %4170 = vmatpush1.msra.mxu0 0.0
          %4171 = vmatprep.subr.mxu0 0.0
          %4172 = vmatpush1.msra.mxu0 0.0
          %4173 = vmatprep.subr.mxu0 0.0
          %4174 = vmatpush1.msra.mxu0 0.0
          %4175 = vmatprep.subr.mxu0 0.0
          %4176 = vmatpush1.msra.mxu0 0.0
          %4177 = vmatprep.subr.mxu0 0.0
          %4178 = vmatpush1.msra.mxu0 0.0
          %4179 = vmatprep.mubr.f32.mxu0 0.0
          %4180 = vmatmul.mubr.f32.gmra.mrb[0].mxu0 %v4112
          %v4181 = vpop.f32.mrb[0].mxu0
          %v4182 = vadd.f32 0.0, %v4181
          %v4183 = vpop.f32.mrb[0].mxu0
          %4184 = vdwg.mxu0
          %v4185 = vadd.f32 %v3966, %v4182
          %v4186 = vadd.f32 %v4185, %v3767
          %v4187 = vmax.f32 %v4186, 0.0
          %4188 = vmatprep.subr.mxu0 0.0
          %4189 = vmatpush1.msra.mxu0 %v3821
          %4190 = vmatprep.subr.mxu0 0.0
          %4191 = vmatpush1.msra.mxu0 0.0
          %4192 = vmatprep.subr.mxu0 0.0
          %4193 = vmatpush1.msra.mxu0 0.0
          %4194 = vmatprep.subr.mxu0 0.0
          %4195 = vmatpush1.msra.mxu0 0.0
          %4196 = vmatprep.subr.mxu0 0.0
          %4197 = vmatpush1.msra.mxu0 0.0
          %4198 = vmatprep.subr.mxu0 0.0
          %4199 = vmatpush1.msra.mxu0 0.0
          %4200 = vmatprep.subr.mxu0 0.0
          %4201 = vmatpush1.msra.mxu0 0.0
          %4202 = vmatprep.subr.mxu0 0.0
          %4203 = vmatpush1.msra.mxu0 0.0
          %4204 = vmatprep.subr.mxu0 0.0
          %4205 = vmatpush1.msra.mxu0 0.0
          %4206 = vmatprep.subr.mxu0 0.0
          %4207 = vmatpush1.msra.mxu0 0.0
          %4208 = vmatprep.subr.mxu0 0.0
          %4209 = vmatpush1.msra.mxu0 0.0
          %4210 = vmatprep.subr.mxu0 0.0
          %4211 = vmatpush1.msra.mxu0 0.0
          %4212 = vmatprep.subr.mxu0 0.0
          %4213 = vmatpush1.msra.mxu0 0.0
          %4214 = vmatprep.subr.mxu0 0.0
          %4215 = vmatpush1.msra.mxu0 0.0
          %4216 = vmatprep.subr.mxu0 0.0
          %4217 = vmatpush1.msra.mxu0 0.0
          %4218 = vmatprep.subr.mxu0 0.0
          %4219 = vmatpush1.msra.mxu0 0.0
          %4220 = vmatprep.subr.mxu0 0.0
          %4221 = vmatpush1.msra.mxu0 0.0
          %4222 = vmatprep.subr.mxu0 0.0
          %4223 = vmatpush1.msra.mxu0 0.0
          %4224 = vmatprep.subr.mxu0 0.0
          %4225 = vmatpush1.msra.mxu0 0.0
          %4226 = vmatprep.subr.mxu0 0.0
          %4227 = vmatpush1.msra.mxu0 0.0
          %4228 = vmatprep.subr.mxu0 0.0
          %4229 = vmatpush1.msra.mxu0 0.0
          %4230 = vmatprep.subr.mxu0 0.0
          %4231 = vmatpush1.msra.mxu0 0.0
          %4232 = vmatprep.subr.mxu0 0.0
          %4233 = vmatpush1.msra.mxu0 0.0
          %4234 = vmatprep.subr.mxu0 0.0
          %4235 = vmatpush1.msra.mxu0 0.0
          %4236 = vmatprep.subr.mxu0 0.0
          %4237 = vmatpush1.msra.mxu0 0.0
          %4238 = vmatprep.subr.mxu0 0.0
          %4239 = vmatpush1.msra.mxu0 0.0
          %4240 = vmatprep.subr.mxu0 0.0
          %4241 = vmatpush1.msra.mxu0 0.0
          %4242 = vmatprep.subr.mxu0 0.0
          %4243 = vmatpush1.msra.mxu0 0.0
          %4244 = vmatprep.subr.mxu0 0.0
          %4245 = vmatpush1.msra.mxu0 0.0
          %4246 = vmatprep.subr.mxu0 0.0
          %4247 = vmatpush1.msra.mxu0 0.0
          %4248 = vmatprep.subr.mxu0 0.0
          %4249 = vmatpush1.msra.mxu0 0.0
          %4250 = vmatprep.subr.mxu0 0.0
          %4251 = vmatpush1.msra.mxu0 0.0
          %4252 = vmatprep.mubr.f32.mxu0 0.0
          %4253 = vmatmul.mubr.f32.gmra.mrb[0].mxu0 %v3824
          %v4254 = vpop.f32.mrb[0].mxu0
          %v4255 = vadd.f32 0.0, %v4254
          %v4256 = vpop.f32.mrb[0].mxu0
          %4257 = vdwg.mxu0
          %4258 = vmatprep.subr.mxu0 0.0
          %4259 = vmatpush1.msra.mxu0 %v3817
          %4260 = vmatprep.subr.mxu0 0.0
          %4261 = vmatpush1.msra.mxu0 0.0
          %4262 = vmatprep.subr.mxu0 0.0
          %4263 = vmatpush1.msra.mxu0 0.0
          %4264 = vmatprep.subr.mxu0 0.0
          %4265 = vmatpush1.msra.mxu0 0.0
          %4266 = vmatprep.subr.mxu0 0.0
          %4267 = vmatpush1.msra.mxu0 0.0
          %4268 = vmatprep.subr.mxu0 0.0
          %4269 = vmatpush1.msra.mxu0 0.0
          %4270 = vmatprep.subr.mxu0 0.0
          %4271 = vmatpush1.msra.mxu0 0.0
          %4272 = vmatprep.subr.mxu0 0.0
          %4273 = vmatpush1.msra.mxu0 0.0
          %4274 = vmatprep.subr.mxu0 0.0
          %4275 = vmatpush1.msra.mxu0 0.0
          %4276 = vmatprep.subr.mxu0 0.0
          %4277 = vmatpush1.msra.mxu0 0.0
          %4278 = vmatprep.subr.mxu0 0.0
          %4279 = vmatpush1.msra.mxu0 0.0
          %4280 = vmatprep.subr.mxu0 0.0
          %4281 = vmatpush1.msra.mxu0 0.0
          %4282 = vmatprep.subr.mxu0 0.0
          %4283 = vmatpush1.msra.mxu0 0.0
          %4284 = vmatprep.subr.mxu0 0.0
          %4285 = vmatpush1.msra.mxu0 0.0
          %4286 = vmatprep.subr.mxu0 0.0
          %4287 = vmatpush1.msra.mxu0 0.0
          %4288 = vmatprep.subr.mxu0 0.0
          %4289 = vmatpush1.msra.mxu0 0.0
          %4290 = vmatprep.subr.mxu0 0.0
          %4291 = vmatpush1.msra.mxu0 0.0
          %4292 = vmatprep.subr.mxu0 0.0
          %4293 = vmatpush1.msra.mxu0 0.0
          %4294 = vmatprep.subr.mxu0 0.0
          %4295 = vmatpush1.msra.mxu0 0.0
          %4296 = vmatprep.subr.mxu0 0.0
          %4297 = vmatpush1.msra.mxu0 0.0
          %4298 = vmatprep.subr.mxu0 0.0
          %4299 = vmatpush1.msra.mxu0 0.0
          %4300 = vmatprep.subr.mxu0 0.0
          %4301 = vmatpush1.msra.mxu0 0.0
          %4302 = vmatprep.subr.mxu0 0.0
          %4303 = vmatpush1.msra.mxu0 0.0
          %4304 = vmatprep.subr.mxu0 0.0
          %4305 = vmatpush1.msra.mxu0 0.0
          %4306 = vmatprep.subr.mxu0 0.0
          %4307 = vmatpush1.msra.mxu0 0.0
          %4308 = vmatprep.subr.mxu0 0.0
          %4309 = vmatpush1.msra.mxu0 0.0
          %4310 = vmatprep.subr.mxu0 0.0
          %4311 = vmatpush1.msra.mxu0 0.0
          %4312 = vmatprep.subr.mxu0 0.0
          %4313 = vmatpush1.msra.mxu0 0.0
          %4314 = vmatprep.subr.mxu0 0.0
          %4315 = vmatpush1.msra.mxu0 0.0
          %4316 = vmatprep.subr.mxu0 0.0
          %4317 = vmatpush1.msra.mxu0 0.0
          %4318 = vmatprep.subr.mxu0 0.0
          %4319 = vmatpush1.msra.mxu0 0.0
          %4320 = vmatprep.subr.mxu0 0.0
          %4321 = vmatpush1.msra.mxu0 0.0
          %4322 = vmatprep.mubr.f32.mxu0 0.0
          %4323 = vmatmul.mubr.f32.gmra.mrb[0].mxu0 %v3897
          %v4324 = vpop.f32.mrb[0].mxu0
          %v4325 = vadd.f32 %v4255, %v4324
          %v4326 = vpop.f32.mrb[0].mxu0
          %4327 = vdwg.mxu0
          %4328 = vmatprep.subr.mxu0 0.0
          %4329 = vmatpush1.msra.mxu0 %v3821
          %4330 = vmatprep.subr.mxu0 0.0
          %4331 = vmatpush1.msra.mxu0 0.0
          %4332 = vmatprep.subr.mxu0 0.0
          %4333 = vmatpush1.msra.mxu0 0.0
          %4334 = vmatprep.subr.mxu0 0.0
          %4335 = vmatpush1.msra.mxu0 0.0
          %4336 = vmatprep.subr.mxu0 0.0
          %4337 = vmatpush1.msra.mxu0 0.0
          %4338 = vmatprep.subr.mxu0 0.0
          %4339 = vmatpush1.msra.mxu0 0.0
          %4340 = vmatprep.subr.mxu0 0.0
          %4341 = vmatpush1.msra.mxu0 0.0
          %4342 = vmatprep.subr.mxu0 0.0
          %4343 = vmatpush1.msra.mxu0 0.0
          %4344 = vmatprep.subr.mxu0 0.0
          %4345 = vmatpush1.msra.mxu0 0.0
          %4346 = vmatprep.subr.mxu0 0.0
          %4347 = vmatpush1.msra.mxu0 0.0
          %4348 = vmatprep.subr.mxu0 0.0
          %4349 = vmatpush1.msra.mxu0 0.0
          %4350 = vmatprep.subr.mxu0 0.0
          %4351 = vmatpush1.msra.mxu0 0.0
          %4352 = vmatprep.subr.mxu0 0.0
          %4353 = vmatpush1.msra.mxu0 0.0
          %4354 = vmatprep.subr.mxu0 0.0
          %4355 = vmatpush1.msra.mxu0 0.0
          %4356 = vmatprep.subr.mxu0 0.0
          %4357 = vmatpush1.msra.mxu0 0.0
          %4358 = vmatprep.subr.mxu0 0.0
          %4359 = vmatpush1.msra.mxu0 0.0
          %4360 = vmatprep.subr.mxu0 0.0
          %4361 = vmatpush1.msra.mxu0 0.0
          %4362 = vmatprep.subr.mxu0 0.0
          %4363 = vmatpush1.msra.mxu0 0.0
          %4364 = vmatprep.subr.mxu0 0.0
          %4365 = vmatpush1.msra.mxu0 0.0
          %4366 = vmatprep.subr.mxu0 0.0
          %4367 = vmatpush1.msra.mxu0 0.0
          %4368 = vmatprep.subr.mxu0 0.0
          %4369 = vmatpush1.msra.mxu0 0.0
          %4370 = vmatprep.subr.mxu0 0.0
          %4371 = vmatpush1.msra.mxu0 0.0
          %4372 = vmatprep.subr.mxu0 0.0
          %4373 = vmatpush1.msra.mxu0 0.0
          %4374 = vmatprep.subr.mxu0 0.0
          %4375 = vmatpush1.msra.mxu0 0.0
          %4376 = vmatprep.subr.mxu0 0.0
          %4377 = vmatpush1.msra.mxu0 0.0
          %4378 = vmatprep.subr.mxu0 0.0
          %4379 = vmatpush1.msra.mxu0 0.0
          %4380 = vmatprep.subr.mxu0 0.0
          %4381 = vmatpush1.msra.mxu0 0.0
          %4382 = vmatprep.subr.mxu0 0.0
          %4383 = vmatpush1.msra.mxu0 0.0
          %4384 = vmatprep.subr.mxu0 0.0
          %4385 = vmatpush1.msra.mxu0 0.0
          %4386 = vmatprep.subr.mxu0 0.0
          %4387 = vmatpush1.msra.mxu0 0.0
          %4388 = vmatprep.subr.mxu0 0.0
          %4389 = vmatpush1.msra.mxu0 0.0
          %4390 = vmatprep.subr.mxu0 0.0
          %4391 = vmatpush1.msra.mxu0 0.0
          %4392 = vmatprep.mubr.f32.mxu0 0.0
          %4393 = vmatmul.mubr.f32.gmra.mrb[0].mxu0 %v3970
          %v4394 = vpop.f32.mrb[0].mxu0
          %v4395 = vadd.f32 0.0, %v4394
          %v4396 = vpop.f32.mrb[0].mxu0
          %4397 = vdwg.mxu0
          %4398 = vmatprep.subr.mxu0 0.0
          %4399 = vmatpush1.msra.mxu0 %v3817
          %4400 = vmatprep.subr.mxu0 0.0
          %4401 = vmatpush1.msra.mxu0 0.0
          %4402 = vmatprep.subr.mxu0 0.0
          %4403 = vmatpush1.msra.mxu0 0.0
          %4404 = vmatprep.subr.mxu0 0.0
          %4405 = vmatpush1.msra.mxu0 0.0
          %4406 = vmatprep.subr.mxu0 0.0
          %4407 = vmatpush1.msra.mxu0 0.0
          %4408 = vmatprep.subr.mxu0 0.0
          %4409 = vmatpush1.msra.mxu0 0.0
          %4410 = vmatprep.subr.mxu0 0.0
          %4411 = vmatpush1.msra.mxu0 0.0
          %4412 = vmatprep.subr.mxu0 0.0
          %4413 = vmatpush1.msra.mxu0 0.0
          %4414 = vmatprep.subr.mxu0 0.0
          %4415 = vmatpush1.msra.mxu0 0.0
          %4416 = vmatprep.subr.mxu0 0.0
          %4417 = vmatpush1.msra.mxu0 0.0
          %4418 = vmatprep.subr.mxu0 0.0
          %4419 = vmatpush1.msra.mxu0 0.0
          %4420 = vmatprep.subr.mxu0 0.0
          %4421 = vmatpush1.msra.mxu0 0.0
          %4422 = vmatprep.subr.mxu0 0.0
          %4423 = vmatpush1.msra.mxu0 0.0
          %4424 = vmatprep.subr.mxu0 0.0
          %4425 = vmatpush1.msra.mxu0 0.0
          %4426 = vmatprep.subr.mxu0 0.0
          %4427 = vmatpush1.msra.mxu0 0.0
          %4428 = vmatprep.subr.mxu0 0.0
          %4429 = vmatpush1.msra.mxu0 0.0
          %4430 = vmatprep.subr.mxu0 0.0
          %4431 = vmatpush1.msra.mxu0 0.0
          %4432 = vmatprep.subr.mxu0 0.0
          %4433 = vmatpush1.msra.mxu0 0.0
          %4434 = vmatprep.subr.mxu0 0.0
          %4435 = vmatpush1.msra.mxu0 0.0
          %4436 = vmatprep.subr.mxu0 0.0
          %4437 = vmatpush1.msra.mxu0 0.0
          %4438 = vmatprep.subr.mxu0 0.0
          %4439 = vmatpush1.msra.mxu0 0.0
          %4440 = vmatprep.subr.mxu0 0.0
          %4441 = vmatpush1.msra.mxu0 0.0
          %4442 = vmatprep.subr.mxu0 0.0
          %4443 = vmatpush1.msra.mxu0 0.0
          %4444 = vmatprep.subr.mxu0 0.0
          %4445 = vmatpush1.msra.mxu0 0.0
          %4446 = vmatprep.subr.mxu0 0.0
          %4447 = vmatpush1.msra.mxu0 0.0
          %4448 = vmatprep.subr.mxu0 0.0
          %4449 = vmatpush1.msra.mxu0 0.0
          %4450 = vmatprep.subr.mxu0 0.0
          %4451 = vmatpush1.msra.mxu0 0.0
          %4452 = vmatprep.subr.mxu0 0.0
          %4453 = vmatpush1.msra.mxu0 0.0
          %4454 = vmatprep.subr.mxu0 0.0
          %4455 = vmatpush1.msra.mxu0 0.0
          %4456 = vmatprep.subr.mxu0 0.0
          %4457 = vmatpush1.msra.mxu0 0.0
          %4458 = vmatprep.subr.mxu0 0.0
          %4459 = vmatpush1.msra.mxu0 0.0
          %4460 = vmatprep.subr.mxu0 0.0
          %4461 = vmatpush1.msra.mxu0 0.0
          %4462 = vmatprep.mubr.f32.mxu0 0.0
          %4463 = vmatmul.mubr.f32.gmra.mrb[0].mxu0 %v4043
          %v4464 = vpop.f32.mrb[0].mxu0
          %v4465 = vadd.f32 %v4395, %v4464
          %v4466 = vpop.f32.mrb[0].mxu0
          %4467 = vdwg.mxu0
          %4468 = vmatprep.subr.mxu0 0.0
          %4469 = vmatpush1.msra.mxu0 %v312
          %4470 = vmatprep.subr.mxu0 0.0
          %4471 = vmatpush1.msra.mxu0 %v313
          %4472 = vmatprep.subr.mxu0 0.0
          %4473 = vmatpush1.msra.mxu0 %v314
          %4474 = vmatprep.subr.mxu0 0.0
          %4475 = vmatpush1.msra.mxu0 %v315
          %4476 = vmatprep.subr.mxu0 0.0
          %4477 = vmatpush1.msra.mxu0 %v316
          %4478 = vmatprep.subr.mxu0 0.0
          %4479 = vmatpush1.msra.mxu0 %v317
          %4480 = vmatprep.subr.mxu0 0.0
          %4481 = vmatpush1.msra.mxu0 %v318
          %4482 = vmatprep.subr.mxu0 0.0
          %4483 = vmatpush1.msra.mxu0 %v319
          %4484 = vmatprep.subr.mxu0 0.0
          %4485 = vmatpush1.msra.mxu0 %v320
          %4486 = vmatprep.subr.mxu0 0.0
          %4487 = vmatpush1.msra.mxu0 %v321
          %4488 = vmatprep.subr.mxu0 0.0
          %4489 = vmatpush1.msra.mxu0 %v322
          %4490 = vmatprep.subr.mxu0 0.0
          %4491 = vmatpush1.msra.mxu0 %v323
          %4492 = vmatprep.subr.mxu0 0.0
          %4493 = vmatpush1.msra.mxu0 %v324
          %4494 = vmatprep.subr.mxu0 0.0
          %4495 = vmatpush1.msra.mxu0 %v325
          %4496 = vmatprep.subr.mxu0 0.0
          %4497 = vmatpush1.msra.mxu0 %v326
          %4498 = vmatprep.subr.mxu0 0.0
          %4499 = vmatpush1.msra.mxu0 %v327
          %4500 = vmatprep.subr.mxu0 0.0
          %4501 = vmatpush1.msra.mxu0 0.0
          %4502 = vmatprep.subr.mxu0 0.0
          %4503 = vmatpush1.msra.mxu0 0.0
          %4504 = vmatprep.subr.mxu0 0.0
          %4505 = vmatpush1.msra.mxu0 0.0
          %4506 = vmatprep.subr.mxu0 0.0
          %4507 = vmatpush1.msra.mxu0 0.0
          %4508 = vmatprep.subr.mxu0 0.0
          %4509 = vmatpush1.msra.mxu0 0.0
          %4510 = vmatprep.subr.mxu0 0.0
          %4511 = vmatpush1.msra.mxu0 0.0
          %4512 = vmatprep.subr.mxu0 0.0
          %4513 = vmatpush1.msra.mxu0 0.0
          %4514 = vmatprep.subr.mxu0 0.0
          %4515 = vmatpush1.msra.mxu0 0.0
          %4516 = vmatprep.subr.mxu0 0.0
          %4517 = vmatpush1.msra.mxu0 0.0
          %4518 = vmatprep.subr.mxu0 0.0
          %4519 = vmatpush1.msra.mxu0 0.0
          %4520 = vmatprep.subr.mxu0 0.0
          %4521 = vmatpush1.msra.mxu0 0.0
          %4522 = vmatprep.subr.mxu0 0.0
          %4523 = vmatpush1.msra.mxu0 0.0
          %4524 = vmatprep.subr.mxu0 0.0
          %4525 = vmatpush1.msra.mxu0 0.0
          %4526 = vmatprep.subr.mxu0 0.0
          %4527 = vmatpush1.msra.mxu0 0.0
          %4528 = vmatprep.subr.mxu0 0.0
          %4529 = vmatpush1.msra.mxu0 0.0
          %4530 = vmatprep.subr.mxu0 0.0
          %4531 = vmatpush1.msra.mxu0 0.0
          %4532 = vmatprep.mubr.f32.mxu0 0.0
          %4533 = vmatmul.mubr.f32.gmra.mrb[0].mxu0 %v4465
          %v4534 = vpop.f32.mrb[0].mxu0
          %v4535 = vadd.f32 0.0, %v4534
          %v4536 = vpop.f32.mrb[0].mxu0
          %4537 = vdwg.mxu0
          %v4538 = vadd.f32 %v4325, %v4535
          %v4539 = vadd.f32 %v4538, %v3767
          %v4540 = vmax.f32 %v4539, 0.0
          %v4541 = vmax.f32 %v4187, %v4540
          %4542 = vmatprep.subr.mxu0 0.0
          %4543 = vmatpush1.msra.mxu0 %v312
          %4544 = vmatprep.subr.mxu0 0.0
          %4545 = vmatpush1.msra.mxu0 %v313
          %4546 = vmatprep.subr.mxu0 0.0
          %4547 = vmatpush1.msra.mxu0 %v314
          %4548 = vmatprep.subr.mxu0 0.0
          %4549 = vmatpush1.msra.mxu0 %v315
          %4550 = vmatprep.subr.mxu0 0.0
          %4551 = vmatpush1.msra.mxu0 %v316
          %4552 = vmatprep.subr.mxu0 0.0
          %4553 = vmatpush1.msra.mxu0 %v317
          %4554 = vmatprep.subr.mxu0 0.0
          %4555 = vmatpush1.msra.mxu0 %v318
          %4556 = vmatprep.subr.mxu0 0.0
          %4557 = vmatpush1.msra.mxu0 %v319
          %4558 = vmatprep.subr.mxu0 0.0
          %4559 = vmatpush1.msra.mxu0 %v320
          %4560 = vmatprep.subr.mxu0 0.0
          %4561 = vmatpush1.msra.mxu0 %v321
          %4562 = vmatprep.subr.mxu0 0.0
          %4563 = vmatpush1.msra.mxu0 %v322
          %4564 = vmatprep.subr.mxu0 0.0
          %4565 = vmatpush1.msra.mxu0 %v323
          %4566 = vmatprep.subr.mxu0 0.0
          %4567 = vmatpush1.msra.mxu0 %v324
          %4568 = vmatprep.subr.mxu0 0.0
          %4569 = vmatpush1.msra.mxu0 %v325
          %4570 = vmatprep.subr.mxu0 0.0
          %4571 = vmatpush1.msra.mxu0 %v326
          %4572 = vmatprep.subr.mxu0 0.0
          %4573 = vmatpush1.msra.mxu0 %v327
          %4574 = vmatprep.subr.mxu0 0.0
          %4575 = vmatpush1.msra.mxu0 0.0
          %4576 = vmatprep.subr.mxu0 0.0
          %4577 = vmatpush1.msra.mxu0 0.0
          %4578 = vmatprep.subr.mxu0 0.0
          %4579 = vmatpush1.msra.mxu0 0.0
          %4580 = vmatprep.subr.mxu0 0.0
          %4581 = vmatpush1.msra.mxu0 0.0
          %4582 = vmatprep.subr.mxu0 0.0
          %4583 = vmatpush1.msra.mxu0 0.0
          %4584 = vmatprep.subr.mxu0 0.0
          %4585 = vmatpush1.msra.mxu0 0.0
          %4586 = vmatprep.subr.mxu0 0.0
          %4587 = vmatpush1.msra.mxu0 0.0
          %4588 = vmatprep.subr.mxu0 0.0
          %4589 = vmatpush1.msra.mxu0 0.0
          %4590 = vmatprep.subr.mxu0 0.0
          %4591 = vmatpush1.msra.mxu0 0.0
          %4592 = vmatprep.subr.mxu0 0.0
          %4593 = vmatpush1.msra.mxu0 0.0
          %4594 = vmatprep.subr.mxu0 0.0
          %4595 = vmatpush1.msra.mxu0 0.0
          %4596 = vmatprep.subr.mxu0 0.0
          %4597 = vmatpush1.msra.mxu0 0.0
          %4598 = vmatprep.subr.mxu0 0.0
          %4599 = vmatpush1.msra.mxu0 0.0
          %4600 = vmatprep.subr.mxu0 0.0
          %4601 = vmatpush1.msra.mxu0 0.0
          %4602 = vmatprep.subr.mxu0 0.0
          %4603 = vmatpush1.msra.mxu0 0.0
          %4604 = vmatprep.subr.mxu0 0.0
          %4605 = vmatpush1.msra.mxu0 0.0
          %4606 = vmatprep.mubr.f32.mxu0 0.0
          %4607 = vmatmul.mubr.f32.gmra.mrb[0].mxu0 %v4541
          %v4608 = vpop.f32.mrb[0].mxu0
          %v4609 = vadd.f32 0.0, %v4608
          %v4610 = vpop.f32.mrb[0].mxu0
          %4611 = vdwg.mxu0
          %v4612 = vmax.f32 %v4541, %v4609
          %4613 = vmatprep.subr.mxu0 0.0
          %4614 = vmatpush1.msra.mxu0 %v3785
          %4615 = vmatprep.subr.mxu0 0.0
          %4616 = vmatpush1.msra.mxu0 %v3786
          %4617 = vmatprep.subr.mxu0 0.0
          %4618 = vmatpush1.msra.mxu0 %v3787
          %4619 = vmatprep.subr.mxu0 0.0
          %4620 = vmatpush1.msra.mxu0 %v3788
          %4621 = vmatprep.subr.mxu0 0.0
          %4622 = vmatpush1.msra.mxu0 %v3789
          %4623 = vmatprep.subr.mxu0 0.0
          %4624 = vmatpush1.msra.mxu0 %v3790
          %4625 = vmatprep.subr.mxu0 0.0
          %4626 = vmatpush1.msra.mxu0 %v3791
          %4627 = vmatprep.subr.mxu0 0.0
          %4628 = vmatpush1.msra.mxu0 %v3792
          %4629 = vmatprep.subr.mxu0 0.0
          %4630 = vmatpush1.msra.mxu0 %v3793
          %4631 = vmatprep.subr.mxu0 0.0
          %4632 = vmatpush1.msra.mxu0 %v3794
          %4633 = vmatprep.subr.mxu0 0.0
          %4634 = vmatpush1.msra.mxu0 %v3795
          %4635 = vmatprep.subr.mxu0 0.0
          %4636 = vmatpush1.msra.mxu0 %v3796
          %4637 = vmatprep.subr.mxu0 0.0
          %4638 = vmatpush1.msra.mxu0 %v3797
          %4639 = vmatprep.subr.mxu0 0.0
          %4640 = vmatpush1.msra.mxu0 %v3798
          %4641 = vmatprep.subr.mxu0 0.0
          %4642 = vmatpush1.msra.mxu0 %v3799
          %4643 = vmatprep.subr.mxu0 0.0
          %4644 = vmatpush1.msra.mxu0 %v3800
          %4645 = vmatprep.subr.mxu0 0.0
          %4646 = vmatpush1.msra.mxu0 0.0
          %4647 = vmatprep.subr.mxu0 0.0
          %4648 = vmatpush1.msra.mxu0 0.0
          %4649 = vmatprep.subr.mxu0 0.0
          %4650 = vmatpush1.msra.mxu0 0.0
          %4651 = vmatprep.subr.mxu0 0.0
          %4652 = vmatpush1.msra.mxu0 0.0
          %4653 = vmatprep.subr.mxu0 0.0
          %4654 = vmatpush1.msra.mxu0 0.0
          %4655 = vmatprep.subr.mxu0 0.0
          %4656 = vmatpush1.msra.mxu0 0.0
          %4657 = vmatprep.subr.mxu0 0.0
          %4658 = vmatpush1.msra.mxu0 0.0
          %4659 = vmatprep.subr.mxu0 0.0
          %4660 = vmatpush1.msra.mxu0 0.0
          %4661 = vmatprep.subr.mxu0 0.0
          %4662 = vmatpush1.msra.mxu0 0.0
          %4663 = vmatprep.subr.mxu0 0.0
          %4664 = vmatpush1.msra.mxu0 0.0
          %4665 = vmatprep.subr.mxu0 0.0
          %4666 = vmatpush1.msra.mxu0 0.0
          %4667 = vmatprep.subr.mxu0 0.0
          %4668 = vmatpush1.msra.mxu0 0.0
          %4669 = vmatprep.subr.mxu0 0.0
          %4670 = vmatpush1.msra.mxu0 0.0
          %4671 = vmatprep.subr.mxu0 0.0
          %4672 = vmatpush1.msra.mxu0 0.0
          %4673 = vmatprep.subr.mxu0 0.0
          %4674 = vmatpush1.msra.mxu0 0.0
          %4675 = vmatprep.subr.mxu0 0.0
          %4676 = vmatpush1.msra.mxu0 0.0
          %4677 = vmatprep.mubr.f32.mxu0 0.0
          %4678 = vmatmul.mubr.f32.gmra.mrb[0].mxu0 %v4612
          %v4679 = vpop.f32.mrb[0].mxu0
          %v4680 = vadd.f32 0.0, %v4679
          %v4681 = vpop.f32.mrb[0].mxu0
          %4682 = vdwg.mxu0
          %s4683 = sadd.s32 %s3805, 1
          %s4684 = smul.u32 %s4683, 8
          %s4685 = scalar_lea.vmem [#allocation3], %s4684
          %4686 = vst [vmem:[%s4685] sm:$0xff] %v4680
        $region88: #{tiny_vgg_forward.1} parent=47 // loop_footer
          %s3809 = sadd.s32 1, %s3805
        $region89: #{tiny_vgg_forward.1} parent=47 // loop_footer_branch
          %3804 = sbr.rel target = $region85
        $region90: #{tiny_vgg_forward.1} parent=47 // loop_exit
          _
        %s4687 = scalar_lea.vmem [#allocation3], 8
        %v4688 = vld [vmem:[%s4687] sm:$0xff]
        %v4689 = vld [vmem:[%s3] sm:$0xff]
        %v4690 = vld [vmem:[%s3 + $0x8] sm:$0xff]
        %v4691 = vld [vmem:[%s3 + $0x10] sm:$0xff]
        %v4692 = vld [vmem:[%s3 + $0x18] sm:$0xff]
        %v4693 = vld [vmem:[%s3 + $0x20] sm:$0xff]
        %v4694 = vld [vmem:[%s3 + $0x28] sm:$0xff]
        %v4695 = vld [vmem:[%s3 + $0x30] sm:$0xff]
        %v4696 = vld [vmem:[%s3 + $0x38] sm:$0xff]
        %v4697 = vld [vmem:[%s3 + $0x40] sm:$0xff]
        %v4698 = vld [vmem:[%s3 + $0x48] sm:$0xff]
        %v4699 = vld [vmem:[%s3 + $0x50] sm:$0xff]
        %v4700 = vld [vmem:[%s3 + $0x58] sm:$0xff]
        %v4701 = vld [vmem:[%s3 + $0x60] sm:$0xff]
        %v4702 = vld [vmem:[%s3 + $0x68] sm:$0xff]
        %v4703 = vld [vmem:[%s3 + $0x70] sm:$0xff]
        %v4704 = vld [vmem:[%s3 + $0x78] sm:$0xff]
        %s4705 = scalar_lea.vmem [#allocation3], 16
        %v4706 = vld [vmem:[%s4705] sm:$0xff]
        %s4707 = scalar_lea.vmem %s3, 128
        %v4708 = vld [vmem:[%s4707] sm:$0xff]
        %v4709 = vld [vmem:[%s4707 + $0x8] sm:$0xff]
        %v4710 = vld [vmem:[%s4707 + $0x10] sm:$0xff]
        %v4711 = vld [vmem:[%s4707 + $0x18] sm:$0xff]
        %v4712 = vld [vmem:[%s4707 + $0x20] sm:$0xff]
        %v4713 = vld [vmem:[%s4707 + $0x28] sm:$0xff]
        %v4714 = vld [vmem:[%s4707 + $0x30] sm:$0xff]
        %v4715 = vld [vmem:[%s4707 + $0x38] sm:$0xff]
        %v4716 = vld [vmem:[%s4707 + $0x40] sm:$0xff]
        %v4717 = vld [vmem:[%s4707 + $0x48] sm:$0xff]
        %v4718 = vld [vmem:[%s4707 + $0x50] sm:$0xff]
        %v4719 = vld [vmem:[%s4707 + $0x58] sm:$0xff]
        %v4720 = vld [vmem:[%s4707 + $0x60] sm:$0xff]
        %v4721 = vld [vmem:[%s4707 + $0x68] sm:$0xff]
        %v4722 = vld [vmem:[%s4707 + $0x70] sm:$0xff]
        %v4723 = vld [vmem:[%s4707 + $0x78] sm:$0xff]
        %4724 = vmatprep.subr.mxu0 0.0
        %4725 = vmatpush1.msra.mxu0 %v4708
        %4726 = vmatprep.subr.mxu0 0.0
        %4727 = vmatpush1.msra.mxu0 %v4709
        %4728 = vmatprep.subr.mxu0 0.0
        %4729 = vmatpush1.msra.mxu0 %v4710
        %4730 = vmatprep.subr.mxu0 0.0
        %4731 = vmatpush1.msra.mxu0 %v4711
        %4732 = vmatprep.subr.mxu0 0.0
        %4733 = vmatpush1.msra.mxu0 %v4712
        %4734 = vmatprep.subr.mxu0 0.0
        %4735 = vmatpush1.msra.mxu0 %v4713
        %4736 = vmatprep.subr.mxu0 0.0
        %4737 = vmatpush1.msra.mxu0 %v4714
        %4738 = vmatprep.subr.mxu0 0.0
        %4739 = vmatpush1.msra.mxu0 %v4715
        %4740 = vmatprep.subr.mxu0 0.0
        %4741 = vmatpush1.msra.mxu0 %v4716
        %4742 = vmatprep.subr.mxu0 0.0
        %4743 = vmatpush1.msra.mxu0 %v4717
        %4744 = vmatprep.subr.mxu0 0.0
        %4745 = vmatpush1.msra.mxu0 %v4718
        %4746 = vmatprep.subr.mxu0 0.0
        %4747 = vmatpush1.msra.mxu0 %v4719
        %4748 = vmatprep.subr.mxu0 0.0
        %4749 = vmatpush1.msra.mxu0 %v4720
        %4750 = vmatprep.subr.mxu0 0.0
        %4751 = vmatpush1.msra.mxu0 %v4721
        %4752 = vmatprep.subr.mxu0 0.0
        %4753 = vmatpush1.msra.mxu0 %v4722
        %4754 = vmatprep.subr.mxu0 0.0
        %4755 = vmatpush1.msra.mxu0 %v4723
        %4756 = vmatprep.subr.mxu0 0.0
        %4757 = vmatpush1.msra.mxu0 0.0
        %4758 = vmatprep.subr.mxu0 0.0
        %4759 = vmatpush1.msra.mxu0 0.0
        %4760 = vmatprep.subr.mxu0 0.0
        %4761 = vmatpush1.msra.mxu0 0.0
        %4762 = vmatprep.subr.mxu0 0.0
        %4763 = vmatpush1.msra.mxu0 0.0
        %4764 = vmatprep.subr.mxu0 0.0
        %4765 = vmatpush1.msra.mxu0 0.0
        %4766 = vmatprep.subr.mxu0 0.0
        %4767 = vmatpush1.msra.mxu0 0.0
        %4768 = vmatprep.subr.mxu0 0.0
        %4769 = vmatpush1.msra.mxu0 0.0
        %4770 = vmatprep.subr.mxu0 0.0
        %4771 = vmatpush1.msra.mxu0 0.0
        %4772 = vmatprep.subr.mxu0 0.0
        %4773 = vmatpush1.msra.mxu0 0.0
        %4774 = vmatprep.subr.mxu0 0.0
        %4775 = vmatpush1.msra.mxu0 0.0
        %4776 = vmatprep.subr.mxu0 0.0
        %4777 = vmatpush1.msra.mxu0 0.0
        %4778 = vmatprep.subr.mxu0 0.0
        %4779 = vmatpush1.msra.mxu0 0.0
        %4780 = vmatprep.subr.mxu0 0.0
        %4781 = vmatpush1.msra.mxu0 0.0
        %4782 = vmatprep.subr.mxu0 0.0
        %4783 = vmatpush1.msra.mxu0 0.0
        %4784 = vmatprep.subr.mxu0 0.0
        %4785 = vmatpush1.msra.mxu0 0.0
        %4786 = vmatprep.subr.mxu0 0.0
        %4787 = vmatpush1.msra.mxu0 0.0
        %4788 = vmatprep.mubr.f32.mxu0 0.0
        %4789 = vmatmul.mubr.f32.gmra.mrb[0].mxu0 %v4706
        %v4790 = vpop.f32.mrb[0].mxu0
        %v4791 = vadd.f32 0.0, %v4790
        %v4792 = vpop.f32.mrb[0].mxu0
        %4793 = vdwg.mxu0
        %4794 = vmatprep.subr.mxu0 0.0
        %4795 = vmatpush1.msra.mxu0 %v4689
        %4796 = vmatprep.subr.mxu0 0.0
        %4797 = vmatpush1.msra.mxu0 %v4690
        %4798 = vmatprep.subr.mxu0 0.0
        %4799 = vmatpush1.msra.mxu0 %v4691
        %4800 = vmatprep.subr.mxu0 0.0
        %4801 = vmatpush1.msra.mxu0 %v4692
        %4802 = vmatprep.subr.mxu0 0.0
        %4803 = vmatpush1.msra.mxu0 %v4693
        %4804 = vmatprep.subr.mxu0 0.0
        %4805 = vmatpush1.msra.mxu0 %v4694
        %4806 = vmatprep.subr.mxu0 0.0
        %4807 = vmatpush1.msra.mxu0 %v4695
        %4808 = vmatprep.subr.mxu0 0.0
        %4809 = vmatpush1.msra.mxu0 %v4696
        %4810 = vmatprep.subr.mxu0 0.0
        %4811 = vmatpush1.msra.mxu0 %v4697
        %4812 = vmatprep.subr.mxu0 0.0
        %4813 = vmatpush1.msra.mxu0 %v4698
        %4814 = vmatprep.subr.mxu0 0.0
        %4815 = vmatpush1.msra.mxu0 %v4699
        %4816 = vmatprep.subr.mxu0 0.0
        %4817 = vmatpush1.msra.mxu0 %v4700
        %4818 = vmatprep.subr.mxu0 0.0
        %4819 = vmatpush1.msra.mxu0 %v4701
        %4820 = vmatprep.subr.mxu0 0.0
        %4821 = vmatpush1.msra.mxu0 %v4702
        %4822 = vmatprep.subr.mxu0 0.0
        %4823 = vmatpush1.msra.mxu0 %v4703
        %4824 = vmatprep.subr.mxu0 0.0
        %4825 = vmatpush1.msra.mxu0 %v4704
        %4826 = vmatprep.subr.mxu0 0.0
        %4827 = vmatpush1.msra.mxu0 0.0
        %4828 = vmatprep.subr.mxu0 0.0
        %4829 = vmatpush1.msra.mxu0 0.0
        %4830 = vmatprep.subr.mxu0 0.0
        %4831 = vmatpush1.msra.mxu0 0.0
        %4832 = vmatprep.subr.mxu0 0.0
        %4833 = vmatpush1.msra.mxu0 0.0
        %4834 = vmatprep.subr.mxu0 0.0
        %4835 = vmatpush1.msra.mxu0 0.0
        %4836 = vmatprep.subr.mxu0 0.0
        %4837 = vmatpush1.msra.mxu0 0.0
        %4838 = vmatprep.subr.mxu0 0.0
        %4839 = vmatpush1.msra.mxu0 0.0
        %4840 = vmatprep.subr.mxu0 0.0
        %4841 = vmatpush1.msra.mxu0 0.0
        %4842 = vmatprep.subr.mxu0 0.0
        %4843 = vmatpush1.msra.mxu0 0.0
        %4844 = vmatprep.subr.mxu0 0.0
        %4845 = vmatpush1.msra.mxu0 0.0
        %4846 = vmatprep.subr.mxu0 0.0
        %4847 = vmatpush1.msra.mxu0 0.0
        %4848 = vmatprep.subr.mxu0 0.0
        %4849 = vmatpush1.msra.mxu0 0.0
        %4850 = vmatprep.subr.mxu0 0.0
        %4851 = vmatpush1.msra.mxu0 0.0
        %4852 = vmatprep.subr.mxu0 0.0
        %4853 = vmatpush1.msra.mxu0 0.0
        %4854 = vmatprep.subr.mxu0 0.0
        %4855 = vmatpush1.msra.mxu0 0.0
        %4856 = vmatprep.subr.mxu0 0.0
        %4857 = vmatpush1.msra.mxu0 0.0
        %4858 = vmatprep.mubr.f32.mxu0 0.0
        %4859 = vmatmul.mubr.f32.gmra.mrb[0].mxu0 %v4688
        %v4860 = vpop.f32.mrb[0].mxu0
        %v4861 = vadd.f32 %v4791, %v4860
        %v4862 = vpop.f32.mrb[0].mxu0
        %4863 = vdwg.mxu0
        %s4864 = scalar_lea.vmem [#allocation3], 24
        %v4865 = vld [vmem:[%s4864] sm:$0xff]
        %s4866 = scalar_lea.vmem %s3, 256
        %v4867 = vld [vmem:[%s4866] sm:$0xff]
        %v4868 = vld [vmem:[%s4866 + $0x8] sm:$0xff]
        %v4869 = vld [vmem:[%s4866 + $0x10] sm:$0xff]
        %v4870 = vld [vmem:[%s4866 + $0x18] sm:$0xff]
        %v4871 = vld [vmem:[%s4866 + $0x20] sm:$0xff]
        %v4872 = vld [vmem:[%s4866 + $0x28] sm:$0xff]
        %v4873 = vld [vmem:[%s4866 + $0x30] sm:$0xff]
        %v4874 = vld [vmem:[%s4866 + $0x38] sm:$0xff]
        %v4875 = vld [vmem:[%s4866 + $0x40] sm:$0xff]
        %v4876 = vld [vmem:[%s4866 + $0x48] sm:$0xff]
        %v4877 = vld [vmem:[%s4866 + $0x50] sm:$0xff]
        %v4878 = vld [vmem:[%s4866 + $0x58] sm:$0xff]
        %v4879 = vld [vmem:[%s4866 + $0x60] sm:$0xff]
        %v4880 = vld [vmem:[%s4866 + $0x68] sm:$0xff]
        %v4881 = vld [vmem:[%s4866 + $0x70] sm:$0xff]
        %v4882 = vld [vmem:[%s4866 + $0x78] sm:$0xff]
        %4883 = vmatprep.subr.mxu0 0.0
        %4884 = vmatpush1.msra.mxu0 %v4867
        %4885 = vmatprep.subr.mxu0 0.0
        %4886 = vmatpush1.msra.mxu0 %v4868
        %4887 = vmatprep.subr.mxu0 0.0
        %4888 = vmatpush1.msra.mxu0 %v4869
        %4889 = vmatprep.subr.mxu0 0.0
        %4890 = vmatpush1.msra.mxu0 %v4870
        %4891 = vmatprep.subr.mxu0 0.0
        %4892 = vmatpush1.msra.mxu0 %v4871
        %4893 = vmatprep.subr.mxu0 0.0
        %4894 = vmatpush1.msra.mxu0 %v4872
        %4895 = vmatprep.subr.mxu0 0.0
        %4896 = vmatpush1.msra.mxu0 %v4873
        %4897 = vmatprep.subr.mxu0 0.0
        %4898 = vmatpush1.msra.mxu0 %v4874
        %4899 = vmatprep.subr.mxu0 0.0
        %4900 = vmatpush1.msra.mxu0 %v4875
        %4901 = vmatprep.subr.mxu0 0.0
        %4902 = vmatpush1.msra.mxu0 %v4876
        %4903 = vmatprep.subr.mxu0 0.0
        %4904 = vmatpush1.msra.mxu0 %v4877
        %4905 = vmatprep.subr.mxu0 0.0
        %4906 = vmatpush1.msra.mxu0 %v4878
        %4907 = vmatprep.subr.mxu0 0.0
        %4908 = vmatpush1.msra.mxu0 %v4879
        %4909 = vmatprep.subr.mxu0 0.0
        %4910 = vmatpush1.msra.mxu0 %v4880
        %4911 = vmatprep.subr.mxu0 0.0
        %4912 = vmatpush1.msra.mxu0 %v4881
        %4913 = vmatprep.subr.mxu0 0.0
        %4914 = vmatpush1.msra.mxu0 %v4882
        %4915 = vmatprep.subr.mxu0 0.0
        %4916 = vmatpush1.msra.mxu0 0.0
        %4917 = vmatprep.subr.mxu0 0.0
        %4918 = vmatpush1.msra.mxu0 0.0
        %4919 = vmatprep.subr.mxu0 0.0
        %4920 = vmatpush1.msra.mxu0 0.0
        %4921 = vmatprep.subr.mxu0 0.0
        %4922 = vmatpush1.msra.mxu0 0.0
        %4923 = vmatprep.subr.mxu0 0.0
        %4924 = vmatpush1.msra.mxu0 0.0
        %4925 = vmatprep.subr.mxu0 0.0
        %4926 = vmatpush1.msra.mxu0 0.0
        %4927 = vmatprep.subr.mxu0 0.0
        %4928 = vmatpush1.msra.mxu0 0.0
        %4929 = vmatprep.subr.mxu0 0.0
        %4930 = vmatpush1.msra.mxu0 0.0
        %4931 = vmatprep.subr.mxu0 0.0
        %4932 = vmatpush1.msra.mxu0 0.0
        %4933 = vmatprep.subr.mxu0 0.0
        %4934 = vmatpush1.msra.mxu0 0.0
        %4935 = vmatprep.subr.mxu0 0.0
        %4936 = vmatpush1.msra.mxu0 0.0
        %4937 = vmatprep.subr.mxu0 0.0
        %4938 = vmatpush1.msra.mxu0 0.0
        %4939 = vmatprep.subr.mxu0 0.0
        %4940 = vmatpush1.msra.mxu0 0.0
        %4941 = vmatprep.subr.mxu0 0.0
        %4942 = vmatpush1.msra.mxu0 0.0
        %4943 = vmatprep.subr.mxu0 0.0
        %4944 = vmatpush1.msra.mxu0 0.0
        %4945 = vmatprep.subr.mxu0 0.0
        %4946 = vmatpush1.msra.mxu0 0.0
        %4947 = vmatprep.mubr.f32.mxu0 0.0
        %4948 = vmatmul.mubr.f32.gmra.mrb[0].mxu0 %v4865
        %v4949 = vpop.f32.mrb[0].mxu0
        %v4950 = vadd.f32 0.0, %v4949
        %v4951 = vpop.f32.mrb[0].mxu0
        %4952 = vdwg.mxu0
        %v4953 = vadd.f32 %v4861, %v4950
        %s4954 = scalar_lea.vmem [#allocation3], 32
        %v4955 = vld [vmem:[%s4954] sm:$0xff]
        %s4956 = scalar_lea.vmem %s3, 384
        %v4957 = vld [vmem:[%s4956] sm:$0xff]
        %v4958 = vld [vmem:[%s4956 + $0x8] sm:$0xff]
        %v4959 = vld [vmem:[%s4956 + $0x10] sm:$0xff]
        %v4960 = vld [vmem:[%s4956 + $0x18] sm:$0xff]
        %v4961 = vld [vmem:[%s4956 + $0x20] sm:$0xff]
        %v4962 = vld [vmem:[%s4956 + $0x28] sm:$0xff]
        %v4963 = vld [vmem:[%s4956 + $0x30] sm:$0xff]
        %v4964 = vld [vmem:[%s4956 + $0x38] sm:$0xff]
        %v4965 = vld [vmem:[%s4956 + $0x40] sm:$0xff]
        %v4966 = vld [vmem:[%s4956 + $0x48] sm:$0xff]
        %v4967 = vld [vmem:[%s4956 + $0x50] sm:$0xff]
        %v4968 = vld [vmem:[%s4956 + $0x58] sm:$0xff]
        %v4969 = vld [vmem:[%s4956 + $0x60] sm:$0xff]
        %v4970 = vld [vmem:[%s4956 + $0x68] sm:$0xff]
        %v4971 = vld [vmem:[%s4956 + $0x70] sm:$0xff]
        %v4972 = vld [vmem:[%s4956 + $0x78] sm:$0xff]
        %4973 = vmatprep.subr.mxu0 0.0
        %4974 = vmatpush1.msra.mxu0 %v4957
        %4975 = vmatprep.subr.mxu0 0.0
        %4976 = vmatpush1.msra.mxu0 %v4958
        %4977 = vmatprep.subr.mxu0 0.0
        %4978 = vmatpush1.msra.mxu0 %v4959
        %4979 = vmatprep.subr.mxu0 0.0
        %4980 = vmatpush1.msra.mxu0 %v4960
        %4981 = vmatprep.subr.mxu0 0.0
        %4982 = vmatpush1.msra.mxu0 %v4961
        %4983 = vmatprep.subr.mxu0 0.0
        %4984 = vmatpush1.msra.mxu0 %v4962
        %4985 = vmatprep.subr.mxu0 0.0
        %4986 = vmatpush1.msra.mxu0 %v4963
        %4987 = vmatprep.subr.mxu0 0.0
        %4988 = vmatpush1.msra.mxu0 %v4964
        %4989 = vmatprep.subr.mxu0 0.0
        %4990 = vmatpush1.msra.mxu0 %v4965
        %4991 = vmatprep.subr.mxu0 0.0
        %4992 = vmatpush1.msra.mxu0 %v4966
        %4993 = vmatprep.subr.mxu0 0.0
        %4994 = vmatpush1.msra.mxu0 %v4967
        %4995 = vmatprep.subr.mxu0 0.0
        %4996 = vmatpush1.msra.mxu0 %v4968
        %4997 = vmatprep.subr.mxu0 0.0
        %4998 = vmatpush1.msra.mxu0 %v4969
        %4999 = vmatprep.subr.mxu0 0.0
        %5000 = vmatpush1.msra.mxu0 %v4970
        %5001 = vmatprep.subr.mxu0 0.0
        %5002 = vmatpush1.msra.mxu0 %v4971
        %5003 = vmatprep.subr.mxu0 0.0
        %5004 = vmatpush1.msra.mxu0 %v4972
        %5005 = vmatprep.subr.mxu0 0.0
        %5006 = vmatpush1.msra.mxu0 0.0
        %5007 = vmatprep.subr.mxu0 0.0
        %5008 = vmatpush1.msra.mxu0 0.0
        %5009 = vmatprep.subr.mxu0 0.0
        %5010 = vmatpush1.msra.mxu0 0.0
        %5011 = vmatprep.subr.mxu0 0.0
        %5012 = vmatpush1.msra.mxu0 0.0
        %5013 = vmatprep.subr.mxu0 0.0
        %5014 = vmatpush1.msra.mxu0 0.0
        %5015 = vmatprep.subr.mxu0 0.0
        %5016 = vmatpush1.msra.mxu0 0.0
        %5017 = vmatprep.subr.mxu0 0.0
        %5018 = vmatpush1.msra.mxu0 0.0
        %5019 = vmatprep.subr.mxu0 0.0
        %5020 = vmatpush1.msra.mxu0 0.0
        %5021 = vmatprep.subr.mxu0 0.0
        %5022 = vmatpush1.msra.mxu0 0.0
        %5023 = vmatprep.subr.mxu0 0.0
        %5024 = vmatpush1.msra.mxu0 0.0
        %5025 = vmatprep.subr.mxu0 0.0
        %5026 = vmatpush1.msra.mxu0 0.0
        %5027 = vmatprep.subr.mxu0 0.0
        %5028 = vmatpush1.msra.mxu0 0.0
        %5029 = vmatprep.subr.mxu0 0.0
        %5030 = vmatpush1.msra.mxu0 0.0
        %5031 = vmatprep.subr.mxu0 0.0
        %5032 = vmatpush1.msra.mxu0 0.0
        %5033 = vmatprep.subr.mxu0 0.0
        %5034 = vmatpush1.msra.mxu0 0.0
        %5035 = vmatprep.subr.mxu0 0.0
        %5036 = vmatpush1.msra.mxu0 0.0
        %5037 = vmatprep.mubr.f32.mxu0 0.0
        %5038 = vmatmul.mubr.f32.gmra.mrb[0].mxu0 %v4955
        %v5039 = vpop.f32.mrb[0].mxu0
        %v5040 = vadd.f32 0.0, %v5039
        %v5041 = vpop.f32.mrb[0].mxu0
        %5042 = vdwg.mxu0
        %v5043 = vadd.f32 %v4953, %v5040
        %s5044 = scalar_lea.vmem [#allocation3], 40
        %v5045 = vld [vmem:[%s5044] sm:$0xff]
        %s5046 = scalar_lea.vmem %s3, 512
        %v5047 = vld [vmem:[%s5046] sm:$0xff]
        %v5048 = vld [vmem:[%s5046 + $0x8] sm:$0xff]
        %v5049 = vld [vmem:[%s5046 + $0x10] sm:$0xff]
        %v5050 = vld [vmem:[%s5046 + $0x18] sm:$0xff]
        %v5051 = vld [vmem:[%s5046 + $0x20] sm:$0xff]
        %v5052 = vld [vmem:[%s5046 + $0x28] sm:$0xff]
        %v5053 = vld [vmem:[%s5046 + $0x30] sm:$0xff]
        %v5054 = vld [vmem:[%s5046 + $0x38] sm:$0xff]
        %v5055 = vld [vmem:[%s5046 + $0x40] sm:$0xff]
        %v5056 = vld [vmem:[%s5046 + $0x48] sm:$0xff]
        %v5057 = vld [vmem:[%s5046 + $0x50] sm:$0xff]
        %v5058 = vld [vmem:[%s5046 + $0x58] sm:$0xff]
        %v5059 = vld [vmem:[%s5046 + $0x60] sm:$0xff]
        %v5060 = vld [vmem:[%s5046 + $0x68] sm:$0xff]
        %v5061 = vld [vmem:[%s5046 + $0x70] sm:$0xff]
        %v5062 = vld [vmem:[%s5046 + $0x78] sm:$0xff]
        %5063 = vmatprep.subr.mxu0 0.0
        %5064 = vmatpush1.msra.mxu0 %v5047
        %5065 = vmatprep.subr.mxu0 0.0
        %5066 = vmatpush1.msra.mxu0 %v5048
        %5067 = vmatprep.subr.mxu0 0.0
        %5068 = vmatpush1.msra.mxu0 %v5049
        %5069 = vmatprep.subr.mxu0 0.0
        %5070 = vmatpush1.msra.mxu0 %v5050
        %5071 = vmatprep.subr.mxu0 0.0
        %5072 = vmatpush1.msra.mxu0 %v5051
        %5073 = vmatprep.subr.mxu0 0.0
        %5074 = vmatpush1.msra.mxu0 %v5052
        %5075 = vmatprep.subr.mxu0 0.0
        %5076 = vmatpush1.msra.mxu0 %v5053
        %5077 = vmatprep.subr.mxu0 0.0
        %5078 = vmatpush1.msra.mxu0 %v5054
        %5079 = vmatprep.subr.mxu0 0.0
        %5080 = vmatpush1.msra.mxu0 %v5055
        %5081 = vmatprep.subr.mxu0 0.0
        %5082 = vmatpush1.msra.mxu0 %v5056
        %5083 = vmatprep.subr.mxu0 0.0
        %5084 = vmatpush1.msra.mxu0 %v5057
        %5085 = vmatprep.subr.mxu0 0.0
        %5086 = vmatpush1.msra.mxu0 %v5058
        %5087 = vmatprep.subr.mxu0 0.0
        %5088 = vmatpush1.msra.mxu0 %v5059
        %5089 = vmatprep.subr.mxu0 0.0
        %5090 = vmatpush1.msra.mxu0 %v5060
        %5091 = vmatprep.subr.mxu0 0.0
        %5092 = vmatpush1.msra.mxu0 %v5061
        %5093 = vmatprep.subr.mxu0 0.0
        %5094 = vmatpush1.msra.mxu0 %v5062
        %5095 = vmatprep.subr.mxu0 0.0
        %5096 = vmatpush1.msra.mxu0 0.0
        %5097 = vmatprep.subr.mxu0 0.0
        %5098 = vmatpush1.msra.mxu0 0.0
        %5099 = vmatprep.subr.mxu0 0.0
        %5100 = vmatpush1.msra.mxu0 0.0
        %5101 = vmatprep.subr.mxu0 0.0
        %5102 = vmatpush1.msra.mxu0 0.0
        %5103 = vmatprep.subr.mxu0 0.0
        %5104 = vmatpush1.msra.mxu0 0.0
        %5105 = vmatprep.subr.mxu0 0.0
        %5106 = vmatpush1.msra.mxu0 0.0
        %5107 = vmatprep.subr.mxu0 0.0
        %5108 = vmatpush1.msra.mxu0 0.0
        %5109 = vmatprep.subr.mxu0 0.0
        %5110 = vmatpush1.msra.mxu0 0.0
        %5111 = vmatprep.subr.mxu0 0.0
        %5112 = vmatpush1.msra.mxu0 0.0
        %5113 = vmatprep.subr.mxu0 0.0
        %5114 = vmatpush1.msra.mxu0 0.0
        %5115 = vmatprep.subr.mxu0 0.0
        %5116 = vmatpush1.msra.mxu0 0.0
        %5117 = vmatprep.subr.mxu0 0.0
        %5118 = vmatpush1.msra.mxu0 0.0
        %5119 = vmatprep.subr.mxu0 0.0
        %5120 = vmatpush1.msra.mxu0 0.0
        %5121 = vmatprep.subr.mxu0 0.0
        %5122 = vmatpush1.msra.mxu0 0.0
        %5123 = vmatprep.subr.mxu0 0.0
        %5124 = vmatpush1.msra.mxu0 0.0
        %5125 = vmatprep.subr.mxu0 0.0
        %5126 = vmatpush1.msra.mxu0 0.0
        %5127 = vmatprep.mubr.f32.mxu0 0.0
        %5128 = vmatmul.mubr.f32.gmra.mrb[0].mxu0 %v5045
        %v5129 = vpop.f32.mrb[0].mxu0
        %v5130 = vadd.f32 0.0, %v5129
        %v5131 = vpop.f32.mrb[0].mxu0
        %5132 = vdwg.mxu0
        %v5133 = vadd.f32 %v5043, %v5130
        %s5134 = scalar_lea.vmem [#allocation3], 48
        %v5135 = vld [vmem:[%s5134] sm:$0xff]
        %s5136 = scalar_lea.vmem %s3, 640
        %v5137 = vld [vmem:[%s5136] sm:$0xff]
        %v5138 = vld [vmem:[%s5136 + $0x8] sm:$0xff]
        %v5139 = vld [vmem:[%s5136 + $0x10] sm:$0xff]
        %v5140 = vld [vmem:[%s5136 + $0x18] sm:$0xff]
        %v5141 = vld [vmem:[%s5136 + $0x20] sm:$0xff]
        %v5142 = vld [vmem:[%s5136 + $0x28] sm:$0xff]
        %v5143 = vld [vmem:[%s5136 + $0x30] sm:$0xff]
        %v5144 = vld [vmem:[%s5136 + $0x38] sm:$0xff]
        %v5145 = vld [vmem:[%s5136 + $0x40] sm:$0xff]
        %v5146 = vld [vmem:[%s5136 + $0x48] sm:$0xff]
        %v5147 = vld [vmem:[%s5136 + $0x50] sm:$0xff]
        %v5148 = vld [vmem:[%s5136 + $0x58] sm:$0xff]
        %v5149 = vld [vmem:[%s5136 + $0x60] sm:$0xff]
        %v5150 = vld [vmem:[%s5136 + $0x68] sm:$0xff]
        %v5151 = vld [vmem:[%s5136 + $0x70] sm:$0xff]
        %v5152 = vld [vmem:[%s5136 + $0x78] sm:$0xff]
        %5153 = vmatprep.subr.mxu0 0.0
        %5154 = vmatpush1.msra.mxu0 %v5137
        %5155 = vmatprep.subr.mxu0 0.0
        %5156 = vmatpush1.msra.mxu0 %v5138
        %5157 = vmatprep.subr.mxu0 0.0
        %5158 = vmatpush1.msra.mxu0 %v5139
        %5159 = vmatprep.subr.mxu0 0.0
        %5160 = vmatpush1.msra.mxu0 %v5140
        %5161 = vmatprep.subr.mxu0 0.0
        %5162 = vmatpush1.msra.mxu0 %v5141
        %5163 = vmatprep.subr.mxu0 0.0
        %5164 = vmatpush1.msra.mxu0 %v5142
        %5165 = vmatprep.subr.mxu0 0.0
        %5166 = vmatpush1.msra.mxu0 %v5143
        %5167 = vmatprep.subr.mxu0 0.0
        %5168 = vmatpush1.msra.mxu0 %v5144
        %5169 = vmatprep.subr.mxu0 0.0
        %5170 = vmatpush1.msra.mxu0 %v5145
        %5171 = vmatprep.subr.mxu0 0.0
        %5172 = vmatpush1.msra.mxu0 %v5146
        %5173 = vmatprep.subr.mxu0 0.0
        %5174 = vmatpush1.msra.mxu0 %v5147
        %5175 = vmatprep.subr.mxu0 0.0
        %5176 = vmatpush1.msra.mxu0 %v5148
        %5177 = vmatprep.subr.mxu0 0.0
        %5178 = vmatpush1.msra.mxu0 %v5149
        %5179 = vmatprep.subr.mxu0 0.0
        %5180 = vmatpush1.msra.mxu0 %v5150
        %5181 = vmatprep.subr.mxu0 0.0
        %5182 = vmatpush1.msra.mxu0 %v5151
        %5183 = vmatprep.subr.mxu0 0.0
        %5184 = vmatpush1.msra.mxu0 %v5152
        %5185 = vmatprep.subr.mxu0 0.0
        %5186 = vmatpush1.msra.mxu0 0.0
        %5187 = vmatprep.subr.mxu0 0.0
        %5188 = vmatpush1.msra.mxu0 0.0
        %5189 = vmatprep.subr.mxu0 0.0
        %5190 = vmatpush1.msra.mxu0 0.0
        %5191 = vmatprep.subr.mxu0 0.0
        %5192 = vmatpush1.msra.mxu0 0.0
        %5193 = vmatprep.subr.mxu0 0.0
        %5194 = vmatpush1.msra.mxu0 0.0
        %5195 = vmatprep.subr.mxu0 0.0
        %5196 = vmatpush1.msra.mxu0 0.0
        %5197 = vmatprep.subr.mxu0 0.0
        %5198 = vmatpush1.msra.mxu0 0.0
        %5199 = vmatprep.subr.mxu0 0.0
        %5200 = vmatpush1.msra.mxu0 0.0
        %5201 = vmatprep.subr.mxu0 0.0
        %5202 = vmatpush1.msra.mxu0 0.0
        %5203 = vmatprep.subr.mxu0 0.0
        %5204 = vmatpush1.msra.mxu0 0.0
        %5205 = vmatprep.subr.mxu0 0.0
        %5206 = vmatpush1.msra.mxu0 0.0
        %5207 = vmatprep.subr.mxu0 0.0
        %5208 = vmatpush1.msra.mxu0 0.0
        %5209 = vmatprep.subr.mxu0 0.0
        %5210 = vmatpush1.msra.mxu0 0.0
        %5211 = vmatprep.subr.mxu0 0.0
        %5212 = vmatpush1.msra.mxu0 0.0
        %5213 = vmatprep.subr.mxu0 0.0
        %5214 = vmatpush1.msra.mxu0 0.0
        %5215 = vmatprep.subr.mxu0 0.0
        %5216 = vmatpush1.msra.mxu0 0.0
        %5217 = vmatprep.mubr.f32.mxu0 0.0
        %5218 = vmatmul.mubr.f32.gmra.mrb[0].mxu0 %v5135
        %v5219 = vpop.f32.mrb[0].mxu0
        %v5220 = vadd.f32 0.0, %v5219
        %v5221 = vpop.f32.mrb[0].mxu0
        %5222 = vdwg.mxu0
        %v5223 = vadd.f32 %v5133, %v5220
        %s5224 = scalar_lea.vmem [#allocation3], 56
        %v5225 = vld [vmem:[%s5224] sm:$0xff]
        %s5226 = scalar_lea.vmem %s3, 768
        %v5227 = vld [vmem:[%s5226] sm:$0xff]
        %v5228 = vld [vmem:[%s5226 + $0x8] sm:$0xff]
        %v5229 = vld [vmem:[%s5226 + $0x10] sm:$0xff]
        %v5230 = vld [vmem:[%s5226 + $0x18] sm:$0xff]
        %v5231 = vld [vmem:[%s5226 + $0x20] sm:$0xff]
        %v5232 = vld [vmem:[%s5226 + $0x28] sm:$0xff]
        %v5233 = vld [vmem:[%s5226 + $0x30] sm:$0xff]
        %v5234 = vld [vmem:[%s5226 + $0x38] sm:$0xff]
        %v5235 = vld [vmem:[%s5226 + $0x40] sm:$0xff]
        %v5236 = vld [vmem:[%s5226 + $0x48] sm:$0xff]
        %v5237 = vld [vmem:[%s5226 + $0x50] sm:$0xff]
        %v5238 = vld [vmem:[%s5226 + $0x58] sm:$0xff]
        %v5239 = vld [vmem:[%s5226 + $0x60] sm:$0xff]
        %v5240 = vld [vmem:[%s5226 + $0x68] sm:$0xff]
        %v5241 = vld [vmem:[%s5226 + $0x70] sm:$0xff]
        %v5242 = vld [vmem:[%s5226 + $0x78] sm:$0xff]
        %5243 = vmatprep.subr.mxu0 0.0
        %5244 = vmatpush1.msra.mxu0 %v5227
        %5245 = vmatprep.subr.mxu0 0.0
        %5246 = vmatpush1.msra.mxu0 %v5228
        %5247 = vmatprep.subr.mxu0 0.0
        %5248 = vmatpush1.msra.mxu0 %v5229
        %5249 = vmatprep.subr.mxu0 0.0
        %5250 = vmatpush1.msra.mxu0 %v5230
        %5251 = vmatprep.subr.mxu0 0.0
        %5252 = vmatpush1.msra.mxu0 %v5231
        %5253 = vmatprep.subr.mxu0 0.0
        %5254 = vmatpush1.msra.mxu0 %v5232
        %5255 = vmatprep.subr.mxu0 0.0
        %5256 = vmatpush1.msra.mxu0 %v5233
        %5257 = vmatprep.subr.mxu0 0.0
        %5258 = vmatpush1.msra.mxu0 %v5234
        %5259 = vmatprep.subr.mxu0 0.0
        %5260 = vmatpush1.msra.mxu0 %v5235
        %5261 = vmatprep.subr.mxu0 0.0
        %5262 = vmatpush1.msra.mxu0 %v5236
        %5263 = vmatprep.subr.mxu0 0.0
        %5264 = vmatpush1.msra.mxu0 %v5237
        %5265 = vmatprep.subr.mxu0 0.0
        %5266 = vmatpush1.msra.mxu0 %v5238
        %5267 = vmatprep.subr.mxu0 0.0
        %5268 = vmatpush1.msra.mxu0 %v5239
        %5269 = vmatprep.subr.mxu0 0.0
        %5270 = vmatpush1.msra.mxu0 %v5240
        %5271 = vmatprep.subr.mxu0 0.0
        %5272 = vmatpush1.msra.mxu0 %v5241
        %5273 = vmatprep.subr.mxu0 0.0
        %5274 = vmatpush1.msra.mxu0 %v5242
        %5275 = vmatprep.subr.mxu0 0.0
        %5276 = vmatpush1.msra.mxu0 0.0
        %5277 = vmatprep.subr.mxu0 0.0
        %5278 = vmatpush1.msra.mxu0 0.0
        %5279 = vmatprep.subr.mxu0 0.0
        %5280 = vmatpush1.msra.mxu0 0.0
        %5281 = vmatprep.subr.mxu0 0.0
        %5282 = vmatpush1.msra.mxu0 0.0
        %5283 = vmatprep.subr.mxu0 0.0
        %5284 = vmatpush1.msra.mxu0 0.0
        %5285 = vmatprep.subr.mxu0 0.0
        %5286 = vmatpush1.msra.mxu0 0.0
        %5287 = vmatprep.subr.mxu0 0.0
        %5288 = vmatpush1.msra.mxu0 0.0
        %5289 = vmatprep.subr.mxu0 0.0
        %5290 = vmatpush1.msra.mxu0 0.0
        %5291 = vmatprep.subr.mxu0 0.0
        %5292 = vmatpush1.msra.mxu0 0.0
        %5293 = vmatprep.subr.mxu0 0.0
        %5294 = vmatpush1.msra.mxu0 0.0
        %5295 = vmatprep.subr.mxu0 0.0
        %5296 = vmatpush1.msra.mxu0 0.0
        %5297 = vmatprep.subr.mxu0 0.0
        %5298 = vmatpush1.msra.mxu0 0.0
        %5299 = vmatprep.subr.mxu0 0.0
        %5300 = vmatpush1.msra.mxu0 0.0
        %5301 = vmatprep.subr.mxu0 0.0
        %5302 = vmatpush1.msra.mxu0 0.0
        %5303 = vmatprep.subr.mxu0 0.0
        %5304 = vmatpush1.msra.mxu0 0.0
        %5305 = vmatprep.subr.mxu0 0.0
        %5306 = vmatpush1.msra.mxu0 0.0
        %5307 = vmatprep.mubr.f32.mxu0 0.0
        %5308 = vmatmul.mubr.f32.gmra.mrb[0].mxu0 %v5225
        %v5309 = vpop.f32.mrb[0].mxu0
        %v5310 = vadd.f32 0.0, %v5309
        %v5311 = vpop.f32.mrb[0].mxu0
        %5312 = vdwg.mxu0
        %v5313 = vadd.f32 %v5223, %v5310
        %s5314 = scalar_lea.vmem [#allocation3], 64
        %v5315 = vld [vmem:[%s5314] sm:$0xff]
        %s5316 = scalar_lea.vmem %s3, 896
        %v5317 = vld [vmem:[%s5316] sm:$0xff]
        %v5318 = vld [vmem:[%s5316 + $0x8] sm:$0xff]
        %v5319 = vld [vmem:[%s5316 + $0x10] sm:$0xff]
        %v5320 = vld [vmem:[%s5316 + $0x18] sm:$0xff]
        %v5321 = vld [vmem:[%s5316 + $0x20] sm:$0xff]
        %v5322 = vld [vmem:[%s5316 + $0x28] sm:$0xff]
        %v5323 = vld [vmem:[%s5316 + $0x30] sm:$0xff]
        %v5324 = vld [vmem:[%s5316 + $0x38] sm:$0xff]
        %v5325 = vld [vmem:[%s5316 + $0x40] sm:$0xff]
        %v5326 = vld [vmem:[%s5316 + $0x48] sm:$0xff]
        %v5327 = vld [vmem:[%s5316 + $0x50] sm:$0xff]
        %v5328 = vld [vmem:[%s5316 + $0x58] sm:$0xff]
        %v5329 = vld [vmem:[%s5316 + $0x60] sm:$0xff]
        %v5330 = vld [vmem:[%s5316 + $0x68] sm:$0xff]
        %v5331 = vld [vmem:[%s5316 + $0x70] sm:$0xff]
        %v5332 = vld [vmem:[%s5316 + $0x78] sm:$0xff]
        %5333 = vmatprep.subr.mxu0 0.0
        %5334 = vmatpush1.msra.mxu0 %v5317
        %5335 = vmatprep.subr.mxu0 0.0
        %5336 = vmatpush1.msra.mxu0 %v5318
        %5337 = vmatprep.subr.mxu0 0.0
        %5338 = vmatpush1.msra.mxu0 %v5319
        %5339 = vmatprep.subr.mxu0 0.0
        %5340 = vmatpush1.msra.mxu0 %v5320
        %5341 = vmatprep.subr.mxu0 0.0
        %5342 = vmatpush1.msra.mxu0 %v5321
        %5343 = vmatprep.subr.mxu0 0.0
        %5344 = vmatpush1.msra.mxu0 %v5322
        %5345 = vmatprep.subr.mxu0 0.0
        %5346 = vmatpush1.msra.mxu0 %v5323
        %5347 = vmatprep.subr.mxu0 0.0
        %5348 = vmatpush1.msra.mxu0 %v5324
        %5349 = vmatprep.subr.mxu0 0.0
        %5350 = vmatpush1.msra.mxu0 %v5325
        %5351 = vmatprep.subr.mxu0 0.0
        %5352 = vmatpush1.msra.mxu0 %v5326
        %5353 = vmatprep.subr.mxu0 0.0
        %5354 = vmatpush1.msra.mxu0 %v5327
        %5355 = vmatprep.subr.mxu0 0.0
        %5356 = vmatpush1.msra.mxu0 %v5328
        %5357 = vmatprep.subr.mxu0 0.0
        %5358 = vmatpush1.msra.mxu0 %v5329
        %5359 = vmatprep.subr.mxu0 0.0
        %5360 = vmatpush1.msra.mxu0 %v5330
        %5361 = vmatprep.subr.mxu0 0.0
        %5362 = vmatpush1.msra.mxu0 %v5331
        %5363 = vmatprep.subr.mxu0 0.0
        %5364 = vmatpush1.msra.mxu0 %v5332
        %5365 = vmatprep.subr.mxu0 0.0
        %5366 = vmatpush1.msra.mxu0 0.0
        %5367 = vmatprep.subr.mxu0 0.0
        %5368 = vmatpush1.msra.mxu0 0.0
        %5369 = vmatprep.subr.mxu0 0.0
        %5370 = vmatpush1.msra.mxu0 0.0
        %5371 = vmatprep.subr.mxu0 0.0
        %5372 = vmatpush1.msra.mxu0 0.0
        %5373 = vmatprep.subr.mxu0 0.0
        %5374 = vmatpush1.msra.mxu0 0.0
        %5375 = vmatprep.subr.mxu0 0.0
        %5376 = vmatpush1.msra.mxu0 0.0
        %5377 = vmatprep.subr.mxu0 0.0
        %5378 = vmatpush1.msra.mxu0 0.0
        %5379 = vmatprep.subr.mxu0 0.0
        %5380 = vmatpush1.msra.mxu0 0.0
        %5381 = vmatprep.subr.mxu0 0.0
        %5382 = vmatpush1.msra.mxu0 0.0
        %5383 = vmatprep.subr.mxu0 0.0
        %5384 = vmatpush1.msra.mxu0 0.0
        %5385 = vmatprep.subr.mxu0 0.0
        %5386 = vmatpush1.msra.mxu0 0.0
        %5387 = vmatprep.subr.mxu0 0.0
        %5388 = vmatpush1.msra.mxu0 0.0
        %5389 = vmatprep.subr.mxu0 0.0
        %5390 = vmatpush1.msra.mxu0 0.0
        %5391 = vmatprep.subr.mxu0 0.0
        %5392 = vmatpush1.msra.mxu0 0.0
        %5393 = vmatprep.subr.mxu0 0.0
        %5394 = vmatpush1.msra.mxu0 0.0
        %5395 = vmatprep.subr.mxu0 0.0
        %5396 = vmatpush1.msra.mxu0 0.0
        %5397 = vmatprep.mubr.f32.mxu0 0.0
        %5398 = vmatmul.mubr.f32.gmra.mrb[0].mxu0 %v5315
        %v5399 = vpop.f32.mrb[0].mxu0
        %v5400 = vadd.f32 0.0, %v5399
        %v5401 = vpop.f32.mrb[0].mxu0
        %5402 = vdwg.mxu0
        %v5403 = vadd.f32 %v5313, %v5400
        %s5404 = scalar_lea.vmem [#allocation3], 72
        %v5405 = vld [vmem:[%s5404] sm:$0xff]
        %s5406 = scalar_lea.vmem %s3, 1024
        %v5407 = vld [vmem:[%s5406] sm:$0xff]
        %v5408 = vld [vmem:[%s5406 + $0x8] sm:$0xff]
        %v5409 = vld [vmem:[%s5406 + $0x10] sm:$0xff]
        %v5410 = vld [vmem:[%s5406 + $0x18] sm:$0xff]
        %v5411 = vld [vmem:[%s5406 + $0x20] sm:$0xff]
        %v5412 = vld [vmem:[%s5406 + $0x28] sm:$0xff]
        %v5413 = vld [vmem:[%s5406 + $0x30] sm:$0xff]
        %v5414 = vld [vmem:[%s5406 + $0x38] sm:$0xff]
        %v5415 = vld [vmem:[%s5406 + $0x40] sm:$0xff]
        %v5416 = vld [vmem:[%s5406 + $0x48] sm:$0xff]
        %v5417 = vld [vmem:[%s5406 + $0x50] sm:$0xff]
        %v5418 = vld [vmem:[%s5406 + $0x58] sm:$0xff]
        %v5419 = vld [vmem:[%s5406 + $0x60] sm:$0xff]
        %v5420 = vld [vmem:[%s5406 + $0x68] sm:$0xff]
        %v5421 = vld [vmem:[%s5406 + $0x70] sm:$0xff]
        %v5422 = vld [vmem:[%s5406 + $0x78] sm:$0xff]
        %5423 = vmatprep.subr.mxu0 0.0
        %5424 = vmatpush1.msra.mxu0 %v5407
        %5425 = vmatprep.subr.mxu0 0.0
        %5426 = vmatpush1.msra.mxu0 %v5408
        %5427 = vmatprep.subr.mxu0 0.0
        %5428 = vmatpush1.msra.mxu0 %v5409
        %5429 = vmatprep.subr.mxu0 0.0
        %5430 = vmatpush1.msra.mxu0 %v5410
        %5431 = vmatprep.subr.mxu0 0.0
        %5432 = vmatpush1.msra.mxu0 %v5411
        %5433 = vmatprep.subr.mxu0 0.0
        %5434 = vmatpush1.msra.mxu0 %v5412
        %5435 = vmatprep.subr.mxu0 0.0
        %5436 = vmatpush1.msra.mxu0 %v5413
        %5437 = vmatprep.subr.mxu0 0.0
        %5438 = vmatpush1.msra.mxu0 %v5414
        %5439 = vmatprep.subr.mxu0 0.0
        %5440 = vmatpush1.msra.mxu0 %v5415
        %5441 = vmatprep.subr.mxu0 0.0
        %5442 = vmatpush1.msra.mxu0 %v5416
        %5443 = vmatprep.subr.mxu0 0.0
        %5444 = vmatpush1.msra.mxu0 %v5417
        %5445 = vmatprep.subr.mxu0 0.0
        %5446 = vmatpush1.msra.mxu0 %v5418
        %5447 = vmatprep.subr.mxu0 0.0
        %5448 = vmatpush1.msra.mxu0 %v5419
        %5449 = vmatprep.subr.mxu0 0.0
        %5450 = vmatpush1.msra.mxu0 %v5420
        %5451 = vmatprep.subr.mxu0 0.0
        %5452 = vmatpush1.msra.mxu0 %v5421
        %5453 = vmatprep.subr.mxu0 0.0
        %5454 = vmatpush1.msra.mxu0 %v5422
        %5455 = vmatprep.subr.mxu0 0.0
        %5456 = vmatpush1.msra.mxu0 0.0
        %5457 = vmatprep.subr.mxu0 0.0
        %5458 = vmatpush1.msra.mxu0 0.0
        %5459 = vmatprep.subr.mxu0 0.0
        %5460 = vmatpush1.msra.mxu0 0.0
        %5461 = vmatprep.subr.mxu0 0.0
        %5462 = vmatpush1.msra.mxu0 0.0
        %5463 = vmatprep.subr.mxu0 0.0
        %5464 = vmatpush1.msra.mxu0 0.0
        %5465 = vmatprep.subr.mxu0 0.0
        %5466 = vmatpush1.msra.mxu0 0.0
        %5467 = vmatprep.subr.mxu0 0.0
        %5468 = vmatpush1.msra.mxu0 0.0
        %5469 = vmatprep.subr.mxu0 0.0
        %5470 = vmatpush1.msra.mxu0 0.0
        %5471 = vmatprep.subr.mxu0 0.0
        %5472 = vmatpush1.msra.mxu0 0.0
        %5473 = vmatprep.subr.mxu0 0.0
        %5474 = vmatpush1.msra.mxu0 0.0
        %5475 = vmatprep.subr.mxu0 0.0
        %5476 = vmatpush1.msra.mxu0 0.0
        %5477 = vmatprep.subr.mxu0 0.0
        %5478 = vmatpush1.msra.mxu0 0.0
        %5479 = vmatprep.subr.mxu0 0.0
        %5480 = vmatpush1.msra.mxu0 0.0
        %5481 = vmatprep.subr.mxu0 0.0
        %5482 = vmatpush1.msra.mxu0 0.0
        %5483 = vmatprep.subr.mxu0 0.0
        %5484 = vmatpush1.msra.mxu0 0.0
        %5485 = vmatprep.subr.mxu0 0.0
        %5486 = vmatpush1.msra.mxu0 0.0
        %5487 = vmatprep.mubr.f32.mxu0 0.0
        %5488 = vmatmul.mubr.f32.gmra.mrb[0].mxu0 %v5405
        %v5489 = vpop.f32.mrb[0].mxu0
        %v5490 = vadd.f32 0.0, %v5489
        %v5491 = vpop.f32.mrb[0].mxu0
        %5492 = vdwg.mxu0
        %v5493 = vadd.f32 %v5403, %v5490
        %v5494 = vld [vmem:[%s4] sm:$0xff]
        %v5495 = vmul.f32 %v5493, %v5494
        %v5496 = vld [vmem:[%s5] sm:$0xff]
        %v5497 = vld [vmem:[%s5 + $0x8] sm:$0xff]
        %v5498 = vld [vmem:[%s5 + $0x10] sm:$0xff]
        %vm5499 = vcmask 195584
        %v5501 = vsel %vm5499, %v5495, 0
        %5503 = vmatprep.subr.mxu0 0.0
        %5504 = vmatpush1.msra.mxu0 %v5496
        %5505 = vmatprep.subr.mxu0 0.0
        %5506 = vmatpush1.msra.mxu0 %v5497
        %5507 = vmatprep.subr.mxu0 0.0
        %5508 = vmatpush1.msra.mxu0 %v5498
        %5509 = vmatprep.subr.mxu0 0.0
        %5510 = vmatpush1.msra.mxu0 0.0
        %5511 = vmatprep.subr.mxu0 0.0
        %5512 = vmatpush1.msra.mxu0 0.0
        %5513 = vmatprep.subr.mxu0 0.0
        %5514 = vmatpush1.msra.mxu0 0.0
        %5515 = vmatprep.subr.mxu0 0.0
        %5516 = vmatpush1.msra.mxu0 0.0
        %5517 = vmatprep.subr.mxu0 0.0
        %5518 = vmatpush1.msra.mxu0 0.0
        %5519 = vmatprep.subr.mxu0 0.0
        %5520 = vmatpush1.msra.mxu0 0.0
        %5521 = vmatprep.subr.mxu0 0.0
        %5522 = vmatpush1.msra.mxu0 0.0
        %5523 = vmatprep.subr.mxu0 0.0
        %5524 = vmatpush1.msra.mxu0 0.0
        %5525 = vmatprep.subr.mxu0 0.0
        %5526 = vmatpush1.msra.mxu0 0.0
        %5527 = vmatprep.subr.mxu0 0.0
        %5528 = vmatpush1.msra.mxu0 0.0
        %5529 = vmatprep.subr.mxu0 0.0
        %5530 = vmatpush1.msra.mxu0 0.0
        %5531 = vmatprep.subr.mxu0 0.0
        %5532 = vmatpush1.msra.mxu0 0.0
        %5533 = vmatprep.subr.mxu0 0.0
        %5534 = vmatpush1.msra.mxu0 0.0
        %5535 = vmatprep.subr.mxu0 0.0
        %5536 = vmatpush1.msra.mxu0 0.0
        %5537 = vmatprep.subr.mxu0 0.0
        %5538 = vmatpush1.msra.mxu0 0.0
        %5539 = vmatprep.subr.mxu0 0.0
        %5540 = vmatpush1.msra.mxu0 0.0
        %5541 = vmatprep.subr.mxu0 0.0
        %5542 = vmatpush1.msra.mxu0 0.0
        %5543 = vmatprep.subr.mxu0 0.0
        %5544 = vmatpush1.msra.mxu0 0.0
        %5545 = vmatprep.subr.mxu0 0.0
        %5546 = vmatpush1.msra.mxu0 0.0
        %5547 = vmatprep.subr.mxu0 0.0
        %5548 = vmatpush1.msra.mxu0 0.0
        %5549 = vmatprep.subr.mxu0 0.0
        %5550 = vmatpush1.msra.mxu0 0.0
        %5551 = vmatprep.subr.mxu0 0.0
        %5552 = vmatpush1.msra.mxu0 0.0
        %5553 = vmatprep.subr.mxu0 0.0
        %5554 = vmatpush1.msra.mxu0 0.0
        %5555 = vmatprep.subr.mxu0 0.0
        %5556 = vmatpush1.msra.mxu0 0.0
        %5557 = vmatprep.subr.mxu0 0.0
        %5558 = vmatpush1.msra.mxu0 0.0
        %5559 = vmatprep.subr.mxu0 0.0
        %5560 = vmatpush1.msra.mxu0 0.0
        %5561 = vmatprep.subr.mxu0 0.0
        %5562 = vmatpush1.msra.mxu0 0.0
        %5563 = vmatprep.subr.mxu0 0.0
        %5564 = vmatpush1.msra.mxu0 0.0
        %5565 = vmatprep.subr.mxu0 0.0
        %5566 = vmatpush1.msra.mxu0 0.0
        %5567 = vmatprep.mubr.f32.mxu0 0.0
        %5568 = vmatmul.mubr.f32.gmra.mrb[0].mxu0 %v5501
        %v5569 = vpop.f32.mrb[0].mxu0
        %v5570 = vadd.f32 0.0, %v5569
        %v5571 = vpop.f32.mrb[0].mxu0
        %5572 = vdwg.mxu0
        %vm5573 = vcmask 23552
        %v5574 = vsel %vm5573, %v5570, 0.0
        %v5575 = vrot.slane %v5574, 4
        %v5576 = vadd.f32 %v5574, %v5575
        %v5577 = vrot.slane %v5576, 2
        %v5578 = vadd.f32 %v5576, %v5577
        %v5579 = vrot.slane %v5578, 1
        %v5580 = vadd.f32 %v5578, %v5579
        %v5581 = vld [vmem:[%s6] sm:$0x1]
        %v5582 = vadd.f32 %v5580, %v5581
        %vm5583 = vcmask 16384
        %5584 = vst.msk [vmem:[%s270] sm:$0x1] %vm5583, %v5582
        %s5585 = sand.u32 %s181, 1
        %s5586 = scalar_lea.sflag [#allocation5], %s5585
        %s5587 = sand.u32 %s181, 1
        %s5588 = scalar_lea.vmem [#allocation4], %s5587
        // Predicated region
        $region91: #{tiny_vgg_forward.1} parent=47 // pred_check
          %p5589 = pneg %p191
        $region92: #{tiny_vgg_forward.1} parent=47 // pred_check_branch
          %5591 = sbr.rel (%p5589) target = $region94
        $region93: #{tiny_vgg_forward.1} parent=47 // pred_region
          %s5593 = ssub.s32 16, 16
          %5594 = vsyncadd %s5586, %s5593
          %s5595 = smul.addr %s21, 16
          %s5596 = scalar_lea.hbm %s7, %s5595
          %s5598 = sshll.u32 %s5588, 4
          %s5599 = int_to_ptr.vmem [resolvable:$true] %s5598
          %5601 = dma.vmem_to_hbm [thread:$0]  %s5599, 16, %s5596, %s5586
        $region94: #{tiny_vgg_forward.1} parent=47 // pred_fallthru
          _
      $region48: #{tiny_vgg_forward.1} parent=5 // pred_fallthru
        _
      %p5602 = scmp.le.s32.totalorder 2, %s16
      // Predicated region
      $region95: #{tiny_vgg_forward.1} parent=5 // pred_check
        %p5603 = pneg %p5602
      $region96: #{tiny_vgg_forward.1} parent=5 // pred_check_branch
        %5605 = sbr.rel (%p5603) target = $region98
      $region97: #{tiny_vgg_forward.1} parent=5 // pred_region
        %s5606 = ssub.s32 %s16, 2
        // Predicated region
        $region99: #{tiny_vgg_forward.1} parent=97 // pred_check
          %p5607 = pneg %p197
        $region100: #{tiny_vgg_forward.1} parent=97 // pred_check_branch
          %5609 = sbr.rel (%p5607) target = $region102
        $region101: #{tiny_vgg_forward.1} parent=97 // pred_region
          %s5610 = sand.u32 %s182, 1
          %s5611 = scalar_lea.sflag [#allocation5], %s5610
          %s5612 = sand.u32 %s182, 1
          %s5613 = scalar_lea.vmem [#allocation4], %s5612
          %5614 = dma.done %s5611, 16
        $region102: #{tiny_vgg_forward.1} parent=97 // pred_fallthru
          _
      $region98: #{tiny_vgg_forward.1} parent=5 // pred_fallthru
        _
    $region6: #{tiny_vgg_forward.1} parent=1 // loop_footer
      %s20 = sadd.s32 1, %s16
    $region7: #{tiny_vgg_forward.1} parent=1 // loop_footer_branch
      %15 = sbr.rel target = $region3
    $region8: #{tiny_vgg_forward.1} parent=1 // loop_exit
      _
    %5615 = vsyncpa [#allocation5], 1
    %s5616 = scalar_lea.sflag [#allocation5], 1
    %5617 = vsyncpa %s5616, 1

</llo_original>
